<compile_context>
chip_gen: v5e
topology: v5e:2x2
jax: 0.10.0
libtpu: 0.0.40
codegen_flags: <defaults>
</compile_context>

<pallas_src>
import jax
import jax.numpy as jnp
from jax.experimental import pallas as pl
from jax.experimental.pallas import tpu as pltpu

EPS = 1e-5
MATMUL_DTYPE = jnp.bfloat16          # MXU-native matmul inputs; accumulation stays f32
_DIM_SEM = ("parallel", "parallel")  # (batch, row-tile) grid axes are independent

_VMEM_CAP = None


def _vmem_limit_bytes():
    """Generation-aware VMEM limit (leaves headroom for compiler scratch)."""
    global _VMEM_CAP
    if _VMEM_CAP is None:
        cap = 64 * 1024 * 1024                       # safe fallback (v7x per-core VMEM)
        try:
            cap = int(pltpu.get_tpu_info().vmem_capacity_bytes)
        except Exception:
            pass
        _VMEM_CAP = cap
    # v5e/v6e (128 MiB) -> ~90 MiB, v7x (64 MiB) -> ~45 MiB
    return min(int(_VMEM_CAP * 0.70), 100 * 1024 * 1024)


def _compiler_params():
    return pltpu.CompilerParams(dimension_semantics=_DIM_SEM,
                                vmem_limit_bytes=_vmem_limit_bytes())


def _pick_row_tile(n, h, w, vmem_limit):
    """Largest row-tile (divisor of H) that fits a conservative VMEM budget."""
    # ~bytes of VMEM per input image row per grid step: double-buffered in/out blocks,
    # bf16 shifted-tap copies and f32 matmul accumulators; narrow channel dims pad to
    # 128 lanes inside VMEM.
    per_row = w * 4608
    max_rows = max(1, int(vmem_limit * 0.6) // per_row)
    th = 1
    for d in range(1, h + 1):
        if h % d == 0 and d <= max_rows:
            th = d
    # megacore: keep at least 2 independent grid steps when the batch alone cannot.
    if n * (h // th) < 2:
        for d in range(th - 1, 0, -1):
            if h % d == 0:
                th = d
                break
    return th


# ----------------------------------------------------------------------------
# In-kernel building block: fused tap-gather + phase matmul
# ----------------------------------------------------------------------------
def _phase_dot(x_blk, x_halo, w_ref, zero_halo):
    """Transposed-conv phase matmul on one row slab.

    x_blk:  (th, W, Cin) bf16  image rows [i0, i0+th)
    x_halo: (1,  W, Cin) bf16  image row i0+th (zero-masked on the last tile)
    w_ref:  (4*Cin, 4*Cout) bf16 phase weights (row blocks = taps, col blocks = phases)
    returns (th*W, 4*Cout) f32; rows ordered (row, col), cols ordered (a, b, cout),
    `a` (output-row parity) major.
    """
    th, w, cin = x_blk.shape
    halo = jnp.where(zero_halo, jnp.zeros_like(x_halo), x_halo)
    x_ext = jnp.concatenate([x_blk, halo], axis=0)               # (th+1, W, Cin)
    # j+1 taps: append 8 zero columns (tile-aligned concat) then slice at offset 1 so
    # column W-1 picks up the transposed conv's implicit zero padding.
    zpad = jnp.zeros((th + 1, 8, cin), x_ext.dtype)
    x_wide = jnp.concatenate([x_ext, zpad], axis=1)              # (th+1, W+8, Cin)
    x_ext_r = x_wide[:, 1:w + 1, :]                              # (th+1, W, Cin)

    def flat(v):                                                 # (th, W, C) -> (th*W, C)
        return v.reshape(th * w, cin)

    wm = w_ref[...]
    f32 = jnp.float32
    y = jnp.dot(flat(x_ext[:-1]), wm[0 * cin:1 * cin, :], preferred_element_type=f32)
    y += jnp.dot(flat(x_ext_r[:-1]), wm[1 * cin:2 * cin, :], preferred_element_type=f32)
    y += jnp.dot(flat(x_ext[1:]), wm[2 * cin:3 * cin, :], preferred_element_type=f32)
    y += jnp.dot(flat(x_ext_r[1:]), wm[3 * cin:4 * cin, :], preferred_element_type=f32)
    return y


# ----------------------------------------------------------------------------
# Pallas kernels
# ----------------------------------------------------------------------------
def _stats_kernel(x_ref, xh_ref, w_ref, stats_ref):
    # pass 1: recomputable matmul; emit only per-tile Welford partials (mean, M2).
    zero_halo = pl.program_id(1) == pl.num_programs(1) - 1
    y = _phase_dot(x_ref[...], xh_ref[...], w_ref, zero_halo)
    rows = float(y.shape[0])
    mean = jnp.sum(y, axis=0, keepdims=True) / rows              # (1, 4*Cout)
    m2 = jnp.sum((y - mean) ** 2, axis=0, keepdims=True)         # (1, 4*Cout)
    stats_ref[0:1, :] = mean
    stats_ref[1:2, :] = m2


def _bn_relu_kernel(x_ref, xh_ref, w_ref, scale_ref, shift_ref, o_ref):
    # pass 2: recompute matmul, folded BN + ReLU, store with fused depth-to-space
    # (output layout (th, 2, W, 2*Cout) reshapes to NHWC for free afterwards).
    zero_halo = pl.program_id(1) == pl.num_programs(1) - 1
    y = _phase_dot(x_ref[...], xh_ref[...], w_ref, zero_halo)
    t = jnp.maximum(y * scale_ref[...] + shift_ref[...], 0.0).astype(o_ref.dtype)
    th, w, _ = x_ref.shape
    c2 = scale_ref.shape[-1] // 2                                # 2 * Cout
    o_ref[:, 0, :, :] = t[:, :c2].reshape(th, w, c2)             # output rows 2i
    o_ref[:, 1, :, :] = t[:, c2:].reshape(th, w, c2)             # output rows 2i+1


def _bn_relu_final_kernel(x_ref, xh_ref, w_ref, scale_ref, shift_ref,
                          wf_ref, bf_ref, o_ref):
    # last layer: pass 2 fused with the final 1x1 conv (bf16 block-diagonal weights).
    zero_halo = pl.program_id(1) == pl.num_programs(1) - 1
    y = _phase_dot(x_ref[...], xh_ref[...], w_ref, zero_halo)
    t = jnp.maximum(y * scale_ref[...] + shift_ref[...], 0.0)
    z = jnp.dot(t.astype(MATMUL_DTYPE), wf_ref[...],
                preferred_element_type=jnp.float32) + bf_ref[...]
    z = z.astype(o_ref.dtype)
    th, w, _ = x_ref.shape
    c2 = bf_ref.shape[-1] // 2                                   # 2 * n_classes
    o_ref[:, 0, :, :] = z[:, :c2].reshape(th, w, c2)
    o_ref[:, 1, :, :] = z[:, c2:].reshape(th, w, c2)


# ----------------------------------------------------------------------------
# pallas_call wrappers (row-tiled, pipelined, halo via clamped index_map)
# ----------------------------------------------------------------------------
def _activation_specs(h, w, cin, th):
    x_spec = pl.BlockSpec((None, th, w, cin), lambda bn, bi: (bn, bi, 0, 0))
    halo_spec = pl.BlockSpec(
        (None, 1, w, cin),
        lambda bn, bi: (bn, jnp.minimum((bi + 1) * th, h - 1), 0, 0))
    return x_spec, halo_spec


def _pass1_stats(x, wmat, th):
    n, h, w, cin = x.shape
    c4 = wmat.shape[1]
    nt = h // th
    x_spec, halo_spec = _activation_specs(h, w, cin, th)
    return pl.pallas_call(
        _stats_kernel,
        out_shape=jax.ShapeDtypeStruct((n, nt, 2, c4), jnp.float32),
        grid=(n, nt),
        in_specs=[x_spec, halo_spec,
                  pl.BlockSpec((4 * cin, c4), lambda bn, bi: (0, 0))],
        out_specs=pl.BlockSpec((None, None, 2, c4), lambda bn, bi: (bn, bi, 0, 0)),
        compiler_params=_compiler_params(),
    )(x, x, wmat)


def _pass2_bn_relu(x, wmat, scale4, shift4, th):
    n, h, w, cin = x.shape
    c4 = wmat.shape[1]
    cout = c4 // 4
    nt = h // th
    x_spec, halo_spec = _activation_specs(h, w, cin, th)
    return pl.pallas_call(
        _bn_relu_kernel,
        out_shape=jax.ShapeDtypeStruct((n, h, 2, w, 2 * cout), MATMUL_DTYPE),
        grid=(n, nt),
        in_specs=[x_spec, halo_spec,
                  pl.BlockSpec((4 * cin, c4), lambda bn, bi: (0, 0)),
                  pl.BlockSpec((1, c4), lambda bn, bi: (0, 0)),
                  pl.BlockSpec((1, c4), lambda bn, bi: (0, 0))],
        out_specs=pl.BlockSpec((None, th, 2, w, 2 * cout),
                               lambda bn, bi: (bn, bi, 0, 0, 0)),
        compiler_params=_compiler_params(),
    )(x, x, wmat, scale4, shift4)


def _pass2_bn_relu_final(x, wmat, scale4, shift4, w1b, b1, th):
    n, h, w, cin = x.shape
    c4 = wmat.shape[1]
    ncls4 = w1b.shape[1]
    nt = h // th
    x_spec, halo_spec = _activation_specs(h, w, cin, th)
    return pl.pallas_call(
        _bn_relu_final_kernel,
        out_shape=jax.ShapeDtypeStruct((n, h, 2, w, ncls4 // 2), jnp.float32),
        grid=(n, nt),
        in_specs=[x_spec, halo_spec,
                  pl.BlockSpec((4 * cin, c4), lambda bn, bi: (0, 0)),
                  pl.BlockSpec((1, c4), lambda bn, bi: (0, 0)),
                  pl.BlockSpec((1, c4), lambda bn, bi: (0, 0)),
                  pl.BlockSpec((c4, ncls4), lambda bn, bi: (0, 0)),
                  pl.BlockSpec((1, ncls4), lambda bn, bi: (0, 0))],
        out_specs=pl.BlockSpec((None, th, 2, w, ncls4 // 2),
                               lambda bn, bi: (bn, bi, 0, 0, 0)),
        compiler_params=_compiler_params(),
    )(x, x, wmat, scale4, shift4, w1b, b1)


# ----------------------------------------------------------------------------
# Weight lowering for ConvTranspose2d(k=3, s=2, p=1, output_padding=1)
#   out[n, 2i+a, 2j+b, :] = sum_{dh,dw in {0,1}} x[n, i+dh, j+dw, :] @ W[:, :, a+1-2dh, b+1-2dw]
# ----------------------------------------------------------------------------
def _tconv_weight_phase_matrix(w_t):
    """PyTorch ConvTranspose2d weight (Cin,Cout,3,3) -> (4*Cin, 4*Cout) phase matrix.
    Row blocks = input taps (dh,dw); column blocks = output-parity phases (a,b)."""
    cin, cout = w_t.shape[0], w_t.shape[1]
    rows = []
    for dh in (0, 1):
        for dw in (0, 1):                       # tap index = 2*dh + dw
            cols = []
            for a in (0, 1):
                for b in (0, 1):                # phase index = 2*a + b
                    kh, kw = a + 1 - 2 * dh, b + 1 - 2 * dw
                    if 0 <= kh <= 2 and 0 <= kw <= 2:
                        cols.append(w_t[:, :, kh, kw])
                    else:
                        cols.append(jnp.zeros((cin, cout), w_t.dtype))
            rows.append(jnp.concatenate(cols, axis=1))
    return jnp.concatenate(rows, axis=0)        # (4*Cin, 4*Cout)


# ----------------------------------------------------------------------------
# Parameters and full forward
# ----------------------------------------------------------------------------
def init_params(key, channels_chain, out_classes):
    params = []
    c_in = channels_chain[0]
    for c_out in channels_chain[1:]:
        key, k1, k2, k3, k4 = jax.random.split(key, 5)
        params.append({
            "w_t": 0.1 * jax.random.normal(k1, (c_in, c_out, 3, 3), jnp.float32),
            # conv-transpose bias is exactly cancelled by training-mode BN; kept for parity
            "b_t": 0.1 * jax.random.normal(k2, (c_out,), jnp.float32),
            "gamma": 1.0 + 0.1 * jax.random.normal(k3, (c_out,), jnp.float32),
            "beta": 0.1 * jax.random.normal(k4, (c_out,), jnp.float32),
        })
        c_in = c_out
    key, k1, k2 = jax.random.split(key, 3)
    final = {
        "w": 0.1 * jax.random.normal(k1, (out_classes, c_in, 1, 1), jnp.float32),
        "b": 0.1 * jax.random.normal(k2, (out_classes,), jnp.float32),
    }
    return params, final


@jax.jit
def unet_decoder_forward(x_nchw, params, final):
    x = jnp.transpose(x_nchw, (0, 2, 3, 1)).astype(MATMUL_DTYPE)      # NCHW -> NHWC bf16
    n_layers = len(params)
    vmem_limit = _vmem_limit_bytes()
    out_nhwc = None
    for li, p in enumerate(params):
        n, h, w, cin = x.shape
        assert w % 8 == 0, "kernel assumes the image width is a multiple of 8"
        cout = p["w_t"].shape[1]
        c4 = 4 * cout
        wmat = _tconv_weight_phase_matrix(p["w_t"]).astype(MATMUL_DTYPE)
        th = _pick_row_tile(n, h, w, vmem_limit)

        # ---- pass 1: fused tap-gather + matmul; per-tile Welford partials only ----
        stats = _pass1_stats(x, wmat, th)                              # (n, nt, 2, 4*cout)

        # ---- tiny Chan-style merge + BN folding in XLA (f32) ----
        cnt_g = float(th * w)                                          # rows per tile & phase
        mg = stats[:, :, 0, :].reshape(-1, cout)                       # (groups, cout)
        m2g = stats[:, :, 1, :].reshape(-1, cout)
        groups = mg.shape[0]
        mean = jnp.mean(mg, axis=0)
        m2 = jnp.sum(m2g, axis=0) + cnt_g * jnp.sum((mg - mean[None, :]) ** 2, axis=0)
        var = jnp.maximum(m2 / (groups * cnt_g), 0.0)                  # biased (training) var
        scale = p["gamma"] * jax.lax.rsqrt(var + EPS)
        shift = p["beta"] - mean * scale                               # t-conv bias cancels
        scale4 = jnp.tile(scale, 4).reshape(1, c4)
        shift4 = jnp.tile(shift, 4).reshape(1, c4)

        if li < n_layers - 1:
            # pass 2: recompute + BN + ReLU, store with fused depth-to-space
            y = _pass2_bn_relu(x, wmat, scale4, shift4, th)            # (n, h, 2, w, 2*cout)
            x = y.reshape(n, 2 * h, 2 * w, cout)                       # free row-major reshape
        else:
            # pass 2 fused with the final 1x1 conv (per-phase block-diagonal weights)
            ncls = final["w"].shape[0]
            w1 = jnp.transpose(final["w"][:, :, 0, 0], (1, 0))         # (cout, ncls)
            w1b = jnp.kron(jnp.eye(4, dtype=jnp.float32), w1).astype(MATMUL_DTYPE)
            b1 = jnp.tile(final["b"], 4).reshape(1, 4 * ncls)
            z = _pass2_bn_relu_final(x, wmat, scale4, shift4, w1b, b1, th)
            out_nhwc = z.reshape(n, 2 * h, 2 * w, ncls)                # free row-major reshape
    return jnp.transpose(out_nhwc, (0, 3, 1, 2))                       # back to NCHW (f32)


# ----------------------------------------------------------------------------
# Pure-JAX reference via the *direct* dilate+pad+im2col lowering (independent of the
# phase decomposition above).  Uses the same dtype policy (bf16 matmul inputs).
# ----------------------------------------------------------------------------
def _dilate_pad_im2col(x_nhwc):
    n, h, w, c = x_nhwc.shape
    s, k, p, op = 2, 3, 1, 1
    oh, ow = 2 * h, 2 * w
    hd, wd = (h - 1) * s + 1, (w - 1) * s + 1
    xd = jnp.zeros((n, hd, wd, c), x_nhwc.dtype).at[:, ::s, ::s, :].set(x_nhwc)
    lo, hi = k - 1 - p, k - 1 - p + op
    xp = jnp.pad(xd, ((0, 0), (lo, hi), (lo, hi), (0, 0)))
    cols = []
    for kh in range(k):
        for kw in range(k):
            cols.append(xp[:, kh:kh + oh, kw:kw + ow, :])
    return jnp.concatenate(cols, axis=-1).reshape(n * oh * ow, 9 * c), (n, oh, ow)


def _tconv_weight_to_matmul(w_t):
    w_flip = w_t[:, :, ::-1, ::-1]
    return jnp.transpose(w_flip, (2, 3, 0, 1)).reshape(-1, w_t.shape[1])


def _reference_forward(x_nchw, params, final):
    x = jnp.transpose(x_nchw, (0, 2, 3, 1)).astype(jnp.float32)
    for p in params:
        patches, (n, oh, ow) = _dilate_pad_im2col(x)
        wmat = _tconv_weight_to_matmul(p["w_t"])
        y = jnp.dot(patches.astype(MATMUL_DTYPE), wmat.astype(MATMUL_DTYPE),
                    preferred_element_type=jnp.float32) + p["b_t"][None, :]
        mean = y.mean(0, keepdims=True)
        var = ((y - mean) ** 2).mean(0, keepdims=True)
        y = (y - mean) / jnp.sqrt(var + EPS) * p["gamma"][None, :] + p["beta"][None, :]
        x = jnp.maximum(y, 0.0).reshape(n, oh, ow, -1)
    n, h, w, c = x.shape
    w1 = jnp.transpose(final["w"][:, :, 0, 0], (1, 0))
    out = jnp.dot(x.reshape(n * h * w, c).astype(MATMUL_DTYPE), w1.astype(MATMUL_DTYPE),
                  preferred_element_type=jnp.float32) + final["b"][None, :]
    return jnp.transpose(out.reshape(n, h, w, -1), (0, 3, 1, 2))


if __name__ == "__main__":
    channels_chain = [16, 8, 4]
    out_classes = 3

    key = jax.random.PRNGKey(0)
    key, kx = jax.random.split(key)
    x = jax.random.normal(kx, (2, channels_chain[0], 16, 16), jnp.float32)   # NCHW

    params, final = init_params(key, channels_chain, out_classes)

    out = jax.block_until_ready(unet_decoder_forward(x, params, final))
    assert out.shape == (2, out_classes, 64, 64), out.shape

    ref = jax.block_until_ready(_reference_forward(x, params, final))
    err = float(jnp.max(jnp.abs(out - ref)))
    assert jnp.allclose(out, ref, atol=1e-2, rtol=1e-2), err

    print("KERNEL_OK")
</pallas_src>

<mosaic_0001>
module attributes {stable_mosaic.version = 11 : i64} {
  func.func @_stats_kernel(%arg0: i32, %arg1: i32, %arg2: memref<1x16x16x16xbf16, #tpu.memory_space<vmem>>, %arg3: memref<1x1x16x16xbf16, #tpu.memory_space<vmem>>, %arg4: memref<64x32xbf16, #tpu.memory_space<vmem>>, %arg5: memref<1x1x2x32xf32, #tpu.memory_space<vmem>>) attributes {dimension_semantics = [#tpu.dimension_semantics<parallel>, #tpu.dimension_semantics<parallel>], iteration_bounds = array<i64: 2, 1>, scalar_prefetch = 0 : i64, scratch_operands = 0 : i64, tpu.core_type = #tpu.core_type<tc>, window_params = [{transform_indices = @transform_0, window_bounds = array<i64: 1, 16, 16, 16>}, {transform_indices = @transform_1, window_bounds = array<i64: 1, 1, 16, 16>}, {pipeline_mode = #tpu.pipeline_mode<synchronous>, transform_indices = @transform_2, window_bounds = array<i64: 64, 32>}, {transform_indices = @transform_3, window_bounds = array<i64: 1, 1, 2, 32>}]} {
    %c0_i32 = arith.constant 0 : i32
    %0 = arith.cmpi eq, %arg1, %c0_i32 : i32
    %c0 = arith.constant 0 : index
    %c0_0 = arith.constant 0 : index
    %c0_1 = arith.constant 0 : index
    %c0_2 = arith.constant 0 : index
    %1 = vector.load %arg2[%c0, %c0_0, %c0_1, %c0_2] : memref<1x16x16x16xbf16, #tpu.memory_space<vmem>>, vector<1x16x16x16xbf16>
    %2 = vector.shape_cast %1 : vector<1x16x16x16xbf16> to vector<16x16x16xbf16>
    %c0_3 = arith.constant 0 : index
    %c0_4 = arith.constant 0 : index
    %c0_5 = arith.constant 0 : index
    %c0_6 = arith.constant 0 : index
    %3 = vector.load %arg3[%c0_3, %c0_4, %c0_5, %c0_6] : memref<1x1x16x16xbf16, #tpu.memory_space<vmem>>, vector<1x1x16x16xbf16>
    %4 = vector.shape_cast %3 : vector<1x1x16x16xbf16> to vector<1x16x16xbf16>
    %cst = arith.constant 0.000000e+00 : bf16
    %5 = vector.broadcast %cst : bf16 to vector<1x16x16xbf16>
    %6 = arith.select %0, %5, %4 : vector<1x16x16xbf16>
    %7 = tpu.concatenate %2, %6 in 0 : vector<16x16x16xbf16>, vector<1x16x16xbf16> -> vector<17x16x16xbf16>
    %cst_7 = arith.constant 0.000000e+00 : bf16
    %8 = vector.broadcast %cst_7 : bf16 to vector<17x8x16xbf16>
    %9 = tpu.concatenate %7, %8 in 1 : vector<17x16x16xbf16>, vector<17x8x16xbf16> -> vector<17x24x16xbf16>
    %10 = vector.extract_strided_slice %9 {offsets = [0, 1, 0], sizes = [17, 16, 16], strides = [1, 1, 1]} : vector<17x24x16xbf16> to vector<17x16x16xbf16>
    %c0_8 = arith.constant 0 : index
    %c0_9 = arith.constant 0 : index
    %11 = vector.load %arg4[%c0_8, %c0_9] : memref<64x32xbf16, #tpu.memory_space<vmem>>, vector<64x32xbf16>
    %12 = vector.extract_strided_slice %7 {offsets = [0, 0, 0], sizes = [16, 16, 16], strides = [1, 1, 1]} : vector<17x16x16xbf16> to vector<16x16x16xbf16>
    %13 = vector.shape_cast %12 : vector<16x16x16xbf16> to vector<256x16xbf16>
    %14 = vector.extract_strided_slice %11 {offsets = [0, 0], sizes = [16, 32], strides = [1, 1]} : vector<64x32xbf16> to vector<16x32xbf16>
    %cst_10 = arith.constant dense<0.000000e+00> : vector<256x32xf32>
    %15 = tpu.matmul %13, %14, %cst_10 {dimension_numbers = #tpu.dot_dimension_numbers<[1], [0], [0], [1], [0, 0, 1, 1], [], []>} : vector<256x16xbf16>, vector<16x32xbf16>, vector<256x32xf32> -> vector<256x32xf32>
    %16 = vector.extract_strided_slice %10 {offsets = [0, 0, 0], sizes = [16, 16, 16], strides = [1, 1, 1]} : vector<17x16x16xbf16> to vector<16x16x16xbf16>
    %17 = vector.shape_cast %16 : vector<16x16x16xbf16> to vector<256x16xbf16>
    %18 = vector.extract_strided_slice %11 {offsets = [16, 0], sizes = [16, 32], strides = [1, 1]} : vector<64x32xbf16> to vector<16x32xbf16>
    %cst_11 = arith.constant dense<0.000000e+00> : vector<256x32xf32>
    %19 = tpu.matmul %17, %18, %cst_11 {dimension_numbers = #tpu.dot_dimension_numbers<[1], [0], [0], [1], [0, 0, 1, 1], [], []>} : vector<256x16xbf16>, vector<16x32xbf16>, vector<256x32xf32> -> vector<256x32xf32>
    %20 = arith.addf %15, %19 : vector<256x32xf32>
    %21 = vector.extract_strided_slice %7 {offsets = [1, 0, 0], sizes = [16, 16, 16], strides = [1, 1, 1]} : vector<17x16x16xbf16> to vector<16x16x16xbf16>
    %22 = vector.shape_cast %21 : vector<16x16x16xbf16> to vector<256x16xbf16>
    %23 = vector.extract_strided_slice %11 {offsets = [32, 0], sizes = [16, 32], strides = [1, 1]} : vector<64x32xbf16> to vector<16x32xbf16>
    %cst_12 = arith.constant dense<0.000000e+00> : vector<256x32xf32>
    %24 = tpu.matmul %22, %23, %cst_12 {dimension_numbers = #tpu.dot_dimension_numbers<[1], [0], [0], [1], [0, 0, 1, 1], [], []>} : vector<256x16xbf16>, vector<16x32xbf16>, vector<256x32xf32> -> vector<256x32xf32>
    %25 = arith.addf %20, %24 : vector<256x32xf32>
    %26 = vector.extract_strided_slice %10 {offsets = [1, 0, 0], sizes = [16, 16, 16], strides = [1, 1, 1]} : vector<17x16x16xbf16> to vector<16x16x16xbf16>
    %27 = vector.shape_cast %26 : vector<16x16x16xbf16> to vector<256x16xbf16>
    %28 = vector.extract_strided_slice %11 {offsets = [48, 0], sizes = [16, 32], strides = [1, 1]} : vector<64x32xbf16> to vector<16x32xbf16>
    %cst_13 = arith.constant dense<0.000000e+00> : vector<256x32xf32>
    %29 = tpu.matmul %27, %28, %cst_13 {dimension_numbers = #tpu.dot_dimension_numbers<[1], [0], [0], [1], [0, 0, 1, 1], [], []>} : vector<256x16xbf16>, vector<16x32xbf16>, vector<256x32xf32> -> vector<256x32xf32>
    %30 = arith.addf %25, %29 : vector<256x32xf32>
    %cst_14 = arith.constant dense<0.000000e+00> : vector<32xf32>
    %31 = vector.multi_reduction <add>, %30, %cst_14 [0] : vector<256x32xf32> to vector<32xf32>
    %32 = vector.shape_cast %31 : vector<32xf32> to vector<1x32xf32>
    %cst_15 = arith.constant 2.560000e+02 : f32
    %33 = vector.broadcast %cst_15 : f32 to vector<1x32xf32>
    %34 = arith.divf %32, %33 : vector<1x32xf32>
    %35 = vector.broadcast %34 : vector<1x32xf32> to vector<256x32xf32>
    %36 = arith.subf %30, %35 : vector<256x32xf32>
    %37 = arith.mulf %36, %36 : vector<256x32xf32>
    %cst_16 = arith.constant dense<0.000000e+00> : vector<32xf32>
    %38 = vector.multi_reduction <add>, %37, %cst_16 [0] : vector<256x32xf32> to vector<32xf32>
    %39 = vector.shape_cast %38 : vector<32xf32> to vector<1x32xf32>
    %c0_17 = arith.constant 0 : index
    %c0_18 = arith.constant 0 : index
    %c0_19 = arith.constant 0 : index
    %c0_20 = arith.constant 0 : index
    %40 = vector.load %arg5[%c0_17, %c0_18, %c0_19, %c0_20] : memref<1x1x2x32xf32, #tpu.memory_space<vmem>>, vector<1x1x1x32xf32>
    %41 = vector.shape_cast %40 : vector<1x1x1x32xf32> to vector<1x32xf32>
    %42 = vector.shape_cast %34 : vector<1x32xf32> to vector<1x1x1x32xf32>
    tpu.vector_store %arg5[%c0_17, %c0_18, %c0_19, %c0_20], %42 {strides = array<i32>} : memref<1x1x2x32xf32, #tpu.memory_space<vmem>>, vector<1x1x1x32xf32>,
    %c0_21 = arith.constant 0 : index
    %c0_22 = arith.constant 0 : index
    %c1 = arith.constant 1 : index
    %c0_23 = arith.constant 0 : index
    %43 = vector.load %arg5[%c0_21, %c0_22, %c1, %c0_23] : memref<1x1x2x32xf32, #tpu.memory_space<vmem>>, vector<1x1x1x32xf32>
    %44 = vector.shape_cast %43 : vector<1x1x1x32xf32> to vector<1x32xf32>
    %45 = vector.shape_cast %39 : vector<1x32xf32> to vector<1x1x1x32xf32>
    tpu.vector_store %arg5[%c0_21, %c0_22, %c1, %c0_23], %45 {strides = array<i32>} : memref<1x1x2x32xf32, #tpu.memory_space<vmem>>, vector<1x1x1x32xf32>,
    return
  }
  func.func @transform_0(%arg0: i32, %arg1: i32) -> (i32, i32, i32, i32) {
    %c0_i32 = arith.constant 0 : i32
    %c0_i32_0 = arith.constant 0 : i32
    %c0_i32_1 = arith.constant 0 : i32
    return %arg0, %arg1, %c0_i32, %c0_i32_0 : i32, i32, i32, i32
  }
  func.func @transform_1(%arg0: i32, %arg1: i32) -> (i32, i32, i32, i32) {
    %c1_i32 = arith.constant 1 : i32
    %0 = arith.addi %arg1, %c1_i32 : i32
    %c16_i32 = arith.constant 16 : i32
    %1 = arith.muli %0, %c16_i32 : i32
    %c15_i32 = arith.constant 15 : i32
    %2 = arith.minsi %1, %c15_i32 : i32
    %c0_i32 = arith.constant 0 : i32
    %c0_i32_0 = arith.constant 0 : i32
    %c0_i32_1 = arith.constant 0 : i32
    return %arg0, %2, %c0_i32, %c0_i32_0 : i32, i32, i32, i32
  }
  func.func @transform_2(%arg0: i32, %arg1: i32) -> (i32, i32) {
    %c0_i32 = arith.constant 0 : i32
    %c0_i32_0 = arith.constant 0 : i32
    %c0_i32_1 = arith.constant 0 : i32
    return %c0_i32, %c0_i32_0 : i32, i32
  }
  func.func @transform_3(%arg0: i32, %arg1: i32) -> (i32, i32, i32, i32) {
    %c0_i32 = arith.constant 0 : i32
    %c0_i32_0 = arith.constant 0 : i32
    %c0_i32_1 = arith.constant 0 : i32
    return %arg0, %arg1, %c0_i32, %c0_i32_0 : i32, i32, i32, i32
  }
}

module attributes {stable_mosaic.version = 11 : i64} {
  func.func @_bn_relu_kernel(%arg0: i32, %arg1: i32, %arg2: memref<1x16x16x16xbf16, #tpu.memory_space<vmem>>, %arg3: memref<1x1x16x16xbf16, #tpu.memory_space<vmem>>, %arg4: memref<64x32xbf16, #tpu.memory_space<vmem>>, %arg5: memref<1x32xf32, #tpu.memory_space<vmem>>, %arg6: memref<1x32xf32, #tpu.memory_space<vmem>>, %arg7: memref<1x16x2x16x16xbf16, #tpu.memory_space<vmem>>) attributes {dimension_semantics = [#tpu.dimension_semantics<parallel>, #tpu.dimension_semantics<parallel>], iteration_bounds = array<i64: 2, 1>, scalar_prefetch = 0 : i64, scratch_operands = 0 : i64, tpu.core_type = #tpu.core_type<tc>, window_params = [{transform_indices = @transform_0, window_bounds = array<i64: 1, 16, 16, 16>}, {transform_indices = @transform_1, window_bounds = array<i64: 1, 1, 16, 16>}, {pipeline_mode = #tpu.pipeline_mode<synchronous>, transform_indices = @transform_2, window_bounds = array<i64: 64, 32>}, {pipeline_mode = #tpu.pipeline_mode<synchronous>, transform_indices = @transform_3, window_bounds = array<i64: 1, 32>}, {pipeline_mode = #tpu.pipeline_mode<synchronous>, transform_indices = @transform_4, window_bounds = array<i64: 1, 32>}, {transform_indices = @transform_5, window_bounds = array<i64: 1, 16, 2, 16, 16>}]} {
    %c0_i32 = arith.constant 0 : i32
    %0 = arith.cmpi eq, %arg1, %c0_i32 : i32
    %c0 = arith.constant 0 : index
    %c0_0 = arith.constant 0 : index
    %c0_1 = arith.constant 0 : index
    %c0_2 = arith.constant 0 : index
    %1 = vector.load %arg2[%c0, %c0_0, %c0_1, %c0_2] : memref<1x16x16x16xbf16, #tpu.memory_space<vmem>>, vector<1x16x16x16xbf16>
    %2 = vector.shape_cast %1 : vector<1x16x16x16xbf16> to vector<16x16x16xbf16>
    %c0_3 = arith.constant 0 : index
    %c0_4 = arith.constant 0 : index
    %c0_5 = arith.constant 0 : index
    %c0_6 = arith.constant 0 : index
    %3 = vector.load %arg3[%c0_3, %c0_4, %c0_5, %c0_6] : memref<1x1x16x16xbf16, #tpu.memory_space<vmem>>, vector<1x1x16x16xbf16>
    %4 = vector.shape_cast %3 : vector<1x1x16x16xbf16> to vector<1x16x16xbf16>
    %cst = arith.constant 0.000000e+00 : bf16
    %5 = vector.broadcast %cst : bf16 to vector<1x16x16xbf16>
    %6 = arith.select %0, %5, %4 : vector<1x16x16xbf16>
    %7 = tpu.concatenate %2, %6 in 0 : vector<16x16x16xbf16>, vector<1x16x16xbf16> -> vector<17x16x16xbf16>
    %cst_7 = arith.constant 0.000000e+00 : bf16
    %8 = vector.broadcast %cst_7 : bf16 to vector<17x8x16xbf16>
    %9 = tpu.concatenate %7, %8 in 1 : vector<17x16x16xbf16>, vector<17x8x16xbf16> -> vector<17x24x16xbf16>
    %10 = vector.extract_strided_slice %9 {offsets = [0, 1, 0], sizes = [17, 16, 16], strides = [1, 1, 1]} : vector<17x24x16xbf16> to vector<17x16x16xbf16>
    %c0_8 = arith.constant 0 : index
    %c0_9 = arith.constant 0 : index
    %11 = vector.load %arg4[%c0_8, %c0_9] : memref<64x32xbf16, #tpu.memory_space<vmem>>, vector<64x32xbf16>
    %12 = vector.extract_strided_slice %7 {offsets = [0, 0, 0], sizes = [16, 16, 16], strides = [1, 1, 1]} : vector<17x16x16xbf16> to vector<16x16x16xbf16>
    %13 = vector.shape_cast %12 : vector<16x16x16xbf16> to vector<256x16xbf16>
    %14 = vector.extract_strided_slice %11 {offsets = [0, 0], sizes = [16, 32], strides = [1, 1]} : vector<64x32xbf16> to vector<16x32xbf16>
    %cst_10 = arith.constant dense<0.000000e+00> : vector<256x32xf32>
    %15 = tpu.matmul %13, %14, %cst_10 {dimension_numbers = #tpu.dot_dimension_numbers<[1], [0], [0], [1], [0, 0, 1, 1], [], []>} : vector<256x16xbf16>, vector<16x32xbf16>, vector<256x32xf32> -> vector<256x32xf32>
    %16 = vector.extract_strided_slice %10 {offsets = [0, 0, 0], sizes = [16, 16, 16], strides = [1, 1, 1]} : vector<17x16x16xbf16> to vector<16x16x16xbf16>
    %17 = vector.shape_cast %16 : vector<16x16x16xbf16> to vector<256x16xbf16>
    %18 = vector.extract_strided_slice %11 {offsets = [16, 0], sizes = [16, 32], strides = [1, 1]} : vector<64x32xbf16> to vector<16x32xbf16>
    %cst_11 = arith.constant dense<0.000000e+00> : vector<256x32xf32>
    %19 = tpu.matmul %17, %18, %cst_11 {dimension_numbers = #tpu.dot_dimension_numbers<[1], [0], [0], [1], [0, 0, 1, 1], [], []>} : vector<256x16xbf16>, vector<16x32xbf16>, vector<256x32xf32> -> vector<256x32xf32>
    %20 = arith.addf %15, %19 : vector<256x32xf32>
    %21 = vector.extract_strided_slice %7 {offsets = [1, 0, 0], sizes = [16, 16, 16], strides = [1, 1, 1]} : vector<17x16x16xbf16> to vector<16x16x16xbf16>
    %22 = vector.shape_cast %21 : vector<16x16x16xbf16> to vector<256x16xbf16>
    %23 = vector.extract_strided_slice %11 {offsets = [32, 0], sizes = [16, 32], strides = [1, 1]} : vector<64x32xbf16> to vector<16x32xbf16>
    %cst_12 = arith.constant dense<0.000000e+00> : vector<256x32xf32>
    %24 = tpu.matmul %22, %23, %cst_12 {dimension_numbers = #tpu.dot_dimension_numbers<[1], [0], [0], [1], [0, 0, 1, 1], [], []>} : vector<256x16xbf16>, vector<16x32xbf16>, vector<256x32xf32> -> vector<256x32xf32>
    %25 = arith.addf %20, %24 : vector<256x32xf32>
    %26 = vector.extract_strided_slice %10 {offsets = [1, 0, 0], sizes = [16, 16, 16], strides = [1, 1, 1]} : vector<17x16x16xbf16> to vector<16x16x16xbf16>
    %27 = vector.shape_cast %26 : vector<16x16x16xbf16> to vector<256x16xbf16>
    %28 = vector.extract_strided_slice %11 {offsets = [48, 0], sizes = [16, 32], strides = [1, 1]} : vector<64x32xbf16> to vector<16x32xbf16>
    %cst_13 = arith.constant dense<0.000000e+00> : vector<256x32xf32>
    %29 = tpu.matmul %27, %28, %cst_13 {dimension_numbers = #tpu.dot_dimension_numbers<[1], [0], [0], [1], [0, 0, 1, 1], [], []>} : vector<256x16xbf16>, vector<16x32xbf16>, vector<256x32xf32> -> vector<256x32xf32>
    %30 = arith.addf %25, %29 : vector<256x32xf32>
    %c0_14 = arith.constant 0 : index
    %c0_15 = arith.constant 0 : index
    %31 = vector.load %arg5[%c0_14, %c0_15] : memref<1x32xf32, #tpu.memory_space<vmem>>, vector<1x32xf32>
    %32 = vector.broadcast %31 : vector<1x32xf32> to vector<256x32xf32>
    %33 = arith.mulf %30, %32 : vector<256x32xf32>
    %c0_16 = arith.constant 0 : index
    %c0_17 = arith.constant 0 : index
    %34 = vector.load %arg6[%c0_16, %c0_17] : memref<1x32xf32, #tpu.memory_space<vmem>>, vector<1x32xf32>
    %35 = vector.broadcast %34 : vector<1x32xf32> to vector<256x32xf32>
    %36 = arith.addf %33, %35 : vector<256x32xf32>
    %cst_18 = arith.constant 0.000000e+00 : f32
    %37 = vector.broadcast %cst_18 : f32 to vector<256x32xf32>
    %38 = arith.maximumf %36, %37 : vector<256x32xf32>
    %39 = arith.truncf %38 : vector<256x32xf32> to vector<256x32xbf16>
    %40 = vector.extract_strided_slice %39 {offsets = [0, 0], sizes = [256, 16], strides = [1, 1]} : vector<256x32xbf16> to vector<256x16xbf16>
    %41 = vector.shape_cast %40 : vector<256x16xbf16> to vector<16x16x16xbf16>
    %c0_19 = arith.constant 0 : index
    %c0_20 = arith.constant 0 : index
    %c0_21 = arith.constant 0 : index
    %c0_22 = arith.constant 0 : index
    %c0_23 = arith.constant 0 : index
    %42 = vector.load %arg7[%c0_19, %c0_20, %c0_21, %c0_22, %c0_23] : memref<1x16x2x16x16xbf16, #tpu.memory_space<vmem>>, vector<1x16x1x16x16xbf16>
    %43 = vector.shape_cast %42 : vector<1x16x1x16x16xbf16> to vector<16x16x16xbf16>
    %44 = vector.shape_cast %41 : vector<16x16x16xbf16> to vector<1x16x1x16x16xbf16>
    tpu.vector_store %arg7[%c0_19, %c0_20, %c0_21, %c0_22, %c0_23], %44 {strides = array<i32>} : memref<1x16x2x16x16xbf16, #tpu.memory_space<vmem>>, vector<1x16x1x16x16xbf16>,
    %45 = vector.extract_strided_slice %39 {offsets = [0, 16], sizes = [256, 16], strides = [1, 1]} : vector<256x32xbf16> to vector<256x16xbf16>
    %46 = vector.shape_cast %45 : vector<256x16xbf16> to vector<16x16x16xbf16>
    %c0_24 = arith.constant 0 : index
    %c0_25 = arith.constant 0 : index
    %c1 = arith.constant 1 : index
    %c0_26 = arith.constant 0 : index
    %c0_27 = arith.constant 0 : index
    %47 = vector.load %arg7[%c0_24, %c0_25, %c1, %c0_26, %c0_27] : memref<1x16x2x16x16xbf16, #tpu.memory_space<vmem>>, vector<1x16x1x16x16xbf16>
    %48 = vector.shape_cast %47 : vector<1x16x1x16x16xbf16> to vector<16x16x16xbf16>
    %49 = vector.shape_cast %46 : vector<16x16x16xbf16> to vector<1x16x1x16x16xbf16>
    tpu.vector_store %arg7[%c0_24, %c0_25, %c1, %c0_26, %c0_27], %49 {strides = array<i32>} : memref<1x16x2x16x16xbf16, #tpu.memory_space<vmem>>, vector<1x16x1x16x16xbf16>,
    return
  }
  func.func @transform_0(%arg0: i32, %arg1: i32) -> (i32, i32, i32, i32) {
    %c0_i32 = arith.constant 0 : i32
    %c0_i32_0 = arith.constant 0 : i32
    %c0_i32_1 = arith.constant 0 : i32
    return %arg0, %arg1, %c0_i32, %c0_i32_0 : i32, i32, i32, i32
  }
  func.func @transform_1(%arg0: i32, %arg1: i32) -> (i32, i32, i32, i32) {
    %c1_i32 = arith.constant 1 : i32
    %0 = arith.addi %arg1, %c1_i32 : i32
    %c16_i32 = arith.constant 16 : i32
    %1 = arith.muli %0, %c16_i32 : i32
    %c15_i32 = arith.constant 15 : i32
    %2 = arith.minsi %1, %c15_i32 : i32
    %c0_i32 = arith.constant 0 : i32
    %c0_i32_0 = arith.constant 0 : i32
    %c0_i32_1 = arith.constant 0 : i32
    return %arg0, %2, %c0_i32, %c0_i32_0 : i32, i32, i32, i32
  }
  func.func @transform_2(%arg0: i32, %arg1: i32) -> (i32, i32) {
    %c0_i32 = arith.constant 0 : i32
    %c0_i32_0 = arith.constant 0 : i32
    %c0_i32_1 = arith.constant 0 : i32
    return %c0_i32, %c0_i32_0 : i32, i32
  }
  func.func @transform_3(%arg0: i32, %arg1: i32) -> (i32, i32) {
    %c0_i32 = arith.constant 0 : i32
    %c0_i32_0 = arith.constant 0 : i32
    %c0_i32_1 = arith.constant 0 : i32
    return %c0_i32, %c0_i32_0 : i32, i32
  }
  func.func @transform_4(%arg0: i32, %arg1: i32) -> (i32, i32) {
    %c0_i32 = arith.constant 0 : i32
    %c0_i32_0 = arith.constant 0 : i32
    %c0_i32_1 = arith.constant 0 : i32
    return %c0_i32, %c0_i32_0 : i32, i32
  }
  func.func @transform_5(%arg0: i32, %arg1: i32) -> (i32, i32, i32, i32, i32) {
    %c0_i32 = arith.constant 0 : i32
    %c0_i32_0 = arith.constant 0 : i32
    %c0_i32_1 = arith.constant 0 : i32
    %c0_i32_2 = arith.constant 0 : i32
    return %arg0, %arg1, %c0_i32, %c0_i32_0, %c0_i32_1 : i32, i32, i32, i32, i32
  }
}

module attributes {stable_mosaic.version = 11 : i64} {
  func.func @_stats_kernel(%arg0: i32, %arg1: i32, %arg2: memref<1x32x32x8xbf16, #tpu.memory_space<vmem>>, %arg3: memref<1x1x32x8xbf16, #tpu.memory_space<vmem>>, %arg4: memref<32x16xbf16, #tpu.memory_space<vmem>>, %arg5: memref<1x1x2x16xf32, #tpu.memory_space<vmem>>) attributes {dimension_semantics = [#tpu.dimension_semantics<parallel>, #tpu.dimension_semantics<parallel>], iteration_bounds = array<i64: 2, 1>, scalar_prefetch = 0 : i64, scratch_operands = 0 : i64, tpu.core_type = #tpu.core_type<tc>, window_params = [{transform_indices = @transform_0, window_bounds = array<i64: 1, 32, 32, 8>}, {transform_indices = @transform_1, window_bounds = array<i64: 1, 1, 32, 8>}, {pipeline_mode = #tpu.pipeline_mode<synchronous>, transform_indices = @transform_2, window_bounds = array<i64: 32, 16>}, {transform_indices = @transform_3, window_bounds = array<i64: 1, 1, 2, 16>}]} {
    %c0_i32 = arith.constant 0 : i32
    %0 = arith.cmpi eq, %arg1, %c0_i32 : i32
    %c0 = arith.constant 0 : index
    %c0_0 = arith.constant 0 : index
    %c0_1 = arith.constant 0 : index
    %c0_2 = arith.constant 0 : index
    %1 = vector.load %arg2[%c0, %c0_0, %c0_1, %c0_2] : memref<1x32x32x8xbf16, #tpu.memory_space<vmem>>, vector<1x32x32x8xbf16>
    %2 = vector.shape_cast %1 : vector<1x32x32x8xbf16> to vector<32x32x8xbf16>
    %c0_3 = arith.constant 0 : index
    %c0_4 = arith.constant 0 : index
    %c0_5 = arith.constant 0 : index
    %c0_6 = arith.constant 0 : index
    %3 = vector.load %arg3[%c0_3, %c0_4, %c0_5, %c0_6] : memref<1x1x32x8xbf16, #tpu.memory_space<vmem>>, vector<1x1x32x8xbf16>
    %4 = vector.shape_cast %3 : vector<1x1x32x8xbf16> to vector<1x32x8xbf16>
    %cst = arith.constant 0.000000e+00 : bf16
    %5 = vector.broadcast %cst : bf16 to vector<1x32x8xbf16>
    %6 = arith.select %0, %5, %4 : vector<1x32x8xbf16>
    %7 = tpu.concatenate %2, %6 in 0 : vector<32x32x8xbf16>, vector<1x32x8xbf16> -> vector<33x32x8xbf16>
    %cst_7 = arith.constant 0.000000e+00 : bf16
    %8 = vector.broadcast %cst_7 : bf16 to vector<33x8x8xbf16>
    %9 = tpu.concatenate %7, %8 in 1 : vector<33x32x8xbf16>, vector<33x8x8xbf16> -> vector<33x40x8xbf16>
    %10 = vector.extract_strided_slice %9 {offsets = [0, 1, 0], sizes = [33, 32, 8], strides = [1, 1, 1]} : vector<33x40x8xbf16> to vector<33x32x8xbf16>
    %c0_8 = arith.constant 0 : index
    %c0_9 = arith.constant 0 : index
    %11 = vector.load %arg4[%c0_8, %c0_9] : memref<32x16xbf16, #tpu.memory_space<vmem>>, vector<32x16xbf16>
    %12 = vector.extract_strided_slice %7 {offsets = [0, 0, 0], sizes = [32, 32, 8], strides = [1, 1, 1]} : vector<33x32x8xbf16> to vector<32x32x8xbf16>
    %13 = vector.shape_cast %12 : vector<32x32x8xbf16> to vector<1024x8xbf16>
    %14 = vector.extract_strided_slice %11 {offsets = [0, 0], sizes = [8, 16], strides = [1, 1]} : vector<32x16xbf16> to vector<8x16xbf16>
    %cst_10 = arith.constant dense<0.000000e+00> : vector<1024x16xf32>
    %15 = tpu.matmul %13, %14, %cst_10 {dimension_numbers = #tpu.dot_dimension_numbers<[1], [0], [0], [1], [0, 0, 1, 1], [], []>} : vector<1024x8xbf16>, vector<8x16xbf16>, vector<1024x16xf32> -> vector<1024x16xf32>
    %16 = vector.extract_strided_slice %10 {offsets = [0, 0, 0], sizes = [32, 32, 8], strides = [1, 1, 1]} : vector<33x32x8xbf16> to vector<32x32x8xbf16>
    %17 = vector.shape_cast %16 : vector<32x32x8xbf16> to vector<1024x8xbf16>
    %18 = vector.extract_strided_slice %11 {offsets = [8, 0], sizes = [8, 16], strides = [1, 1]} : vector<32x16xbf16> to vector<8x16xbf16>
    %cst_11 = arith.constant dense<0.000000e+00> : vector<1024x16xf32>
    %19 = tpu.matmul %17, %18, %cst_11 {dimension_numbers = #tpu.dot_dimension_numbers<[1], [0], [0], [1], [0, 0, 1, 1], [], []>} : vector<1024x8xbf16>, vector<8x16xbf16>, vector<1024x16xf32> -> vector<1024x16xf32>
    %20 = arith.addf %15, %19 : vector<1024x16xf32>
    %21 = vector.extract_strided_slice %7 {offsets = [1, 0, 0], sizes = [32, 32, 8], strides = [1, 1, 1]} : vector<33x32x8xbf16> to vector<32x32x8xbf16>
    %22 = vector.shape_cast %21 : vector<32x32x8xbf16> to vector<1024x8xbf16>
    %23 = vector.extract_strided_slice %11 {offsets = [16, 0], sizes = [8, 16], strides = [1, 1]} : vector<32x16xbf16> to vector<8x16xbf16>
    %cst_12 = arith.constant dense<0.000000e+00> : vector<1024x16xf32>
    %24 = tpu.matmul %22, %23, %cst_12 {dimension_numbers = #tpu.dot_dimension_numbers<[1], [0], [0], [1], [0, 0, 1, 1], [], []>} : vector<1024x8xbf16>, vector<8x16xbf16>, vector<1024x16xf32> -> vector<1024x16xf32>
    %25 = arith.addf %20, %24 : vector<1024x16xf32>
    %26 = vector.extract_strided_slice %10 {offsets = [1, 0, 0], sizes = [32, 32, 8], strides = [1, 1, 1]} : vector<33x32x8xbf16> to vector<32x32x8xbf16>
    %27 = vector.shape_cast %26 : vector<32x32x8xbf16> to vector<1024x8xbf16>
    %28 = vector.extract_strided_slice %11 {offsets = [24, 0], sizes = [8, 16], strides = [1, 1]} : vector<32x16xbf16> to vector<8x16xbf16>
    %cst_13 = arith.constant dense<0.000000e+00> : vector<1024x16xf32>
    %29 = tpu.matmul %27, %28, %cst_13 {dimension_numbers = #tpu.dot_dimension_numbers<[1], [0], [0], [1], [0, 0, 1, 1], [], []>} : vector<1024x8xbf16>, vector<8x16xbf16>, vector<1024x16xf32> -> vector<1024x16xf32>
    %30 = arith.addf %25, %29 : vector<1024x16xf32>
    %cst_14 = arith.constant dense<0.000000e+00> : vector<16xf32>
    %31 = vector.multi_reduction <add>, %30, %cst_14 [0] : vector<1024x16xf32> to vector<16xf32>
    %32 = vector.shape_cast %31 : vector<16xf32> to vector<1x16xf32>
    %cst_15 = arith.constant 1.024000e+03 : f32
    %33 = vector.broadcast %cst_15 : f32 to vector<1x16xf32>
    %34 = arith.divf %32, %33 : vector<1x16xf32>
    %35 = vector.broadcast %34 : vector<1x16xf32> to vector<1024x16xf32>
    %36 = arith.subf %30, %35 : vector<1024x16xf32>
    %37 = arith.mulf %36, %36 : vector<1024x16xf32>
    %cst_16 = arith.constant dense<0.000000e+00> : vector<16xf32>
    %38 = vector.multi_reduction <add>, %37, %cst_16 [0] : vector<1024x16xf32> to vector<16xf32>
    %39 = vector.shape_cast %38 : vector<16xf32> to vector<1x16xf32>
    %c0_17 = arith.constant 0 : index
    %c0_18 = arith.constant 0 : index
    %c0_19 = arith.constant 0 : index
    %c0_20 = arith.constant 0 : index
    %40 = vector.load %arg5[%c0_17, %c0_18, %c0_19, %c0_20] : memref<1x1x2x16xf32, #tpu.memory_space<vmem>>, vector<1x1x1x16xf32>
    %41 = vector.shape_cast %40 : vector<1x1x1x16xf32> to vector<1x16xf32>
    %42 = vector.shape_cast %34 : vector<1x16xf32> to vector<1x1x1x16xf32>
    tpu.vector_store %arg5[%c0_17, %c0_18, %c0_19, %c0_20], %42 {strides = array<i32>} : memref<1x1x2x16xf32, #tpu.memory_space<vmem>>, vector<1x1x1x16xf32>,
    %c0_21 = arith.constant 0 : index
    %c0_22 = arith.constant 0 : index
    %c1 = arith.constant 1 : index
    %c0_23 = arith.constant 0 : index
    %43 = vector.load %arg5[%c0_21, %c0_22, %c1, %c0_23] : memref<1x1x2x16xf32, #tpu.memory_space<vmem>>, vector<1x1x1x16xf32>
    %44 = vector.shape_cast %43 : vector<1x1x1x16xf32> to vector<1x16xf32>
    %45 = vector.shape_cast %39 : vector<1x16xf32> to vector<1x1x1x16xf32>
    tpu.vector_store %arg5[%c0_21, %c0_22, %c1, %c0_23], %45 {strides = array<i32>} : memref<1x1x2x16xf32, #tpu.memory_space<vmem>>, vector<1x1x1x16xf32>,
    return
  }
  func.func @transform_0(%arg0: i32, %arg1: i32) -> (i32, i32, i32, i32) {
    %c0_i32 = arith.constant 0 : i32
    %c0_i32_0 = arith.constant 0 : i32
    %c0_i32_1 = arith.constant 0 : i32
    return %arg0, %arg1, %c0_i32, %c0_i32_0 : i32, i32, i32, i32
  }
  func.func @transform_1(%arg0: i32, %arg1: i32) -> (i32, i32, i32, i32) {
    %c1_i32 = arith.constant 1 : i32
    %0 = arith.addi %arg1, %c1_i32 : i32
    %c32_i32 = arith.constant 32 : i32
    %1 = arith.muli %0, %c32_i32 : i32
    %c31_i32 = arith.constant 31 : i32
    %2 = arith.minsi %1, %c31_i32 : i32
    %c0_i32 = arith.constant 0 : i32
    %c0_i32_0 = arith.constant 0 : i32
    %c0_i32_1 = arith.constant 0 : i32
    return %arg0, %2, %c0_i32, %c0_i32_0 : i32, i32, i32, i32
  }
  func.func @transform_2(%arg0: i32, %arg1: i32) -> (i32, i32) {
    %c0_i32 = arith.constant 0 : i32
    %c0_i32_0 = arith.constant 0 : i32
    %c0_i32_1 = arith.constant 0 : i32
    return %c0_i32, %c0_i32_0 : i32, i32
  }
  func.func @transform_3(%arg0: i32, %arg1: i32) -> (i32, i32, i32, i32) {
    %c0_i32 = arith.constant 0 : i32
    %c0_i32_0 = arith.constant 0 : i32
    %c0_i32_1 = arith.constant 0 : i32
    return %arg0, %arg1, %c0_i32, %c0_i32_0 : i32, i32, i32, i32
  }
}

module attributes {stable_mosaic.version = 11 : i64} {
  func.func @_bn_relu_final_kernel(%arg0: i32, %arg1: i32, %arg2: memref<1x32x32x8xbf16, #tpu.memory_space<vmem>>, %arg3: memref<1x1x32x8xbf16, #tpu.memory_space<vmem>>, %arg4: memref<32x16xbf16, #tpu.memory_space<vmem>>, %arg5: memref<1x16xf32, #tpu.memory_space<vmem>>, %arg6: memref<1x16xf32, #tpu.memory_space<vmem>>, %arg7: memref<16x12xbf16, #tpu.memory_space<vmem>>, %arg8: memref<1x12xf32, #tpu.memory_space<vmem>>, %arg9: memref<1x32x2x32x6xf32, #tpu.memory_space<vmem>>) attributes {dimension_semantics = [#tpu.dimension_semantics<parallel>, #tpu.dimension_semantics<parallel>], iteration_bounds = array<i64: 2, 1>, scalar_prefetch = 0 : i64, scratch_operands = 0 : i64, tpu.core_type = #tpu.core_type<tc>, window_params = [{transform_indices = @transform_0, window_bounds = array<i64: 1, 32, 32, 8>}, {transform_indices = @transform_1, window_bounds = array<i64: 1, 1, 32, 8>}, {pipeline_mode = #tpu.pipeline_mode<synchronous>, transform_indices = @transform_2, window_bounds = array<i64: 32, 16>}, {pipeline_mode = #tpu.pipeline_mode<synchronous>, transform_indices = @transform_3, window_bounds = array<i64: 1, 16>}, {pipeline_mode = #tpu.pipeline_mode<synchronous>, transform_indices = @transform_4, window_bounds = array<i64: 1, 16>}, {pipeline_mode = #tpu.pipeline_mode<synchronous>, transform_indices = @transform_5, window_bounds = array<i64: 16, 12>}, {pipeline_mode = #tpu.pipeline_mode<synchronous>, transform_indices = @transform_6, window_bounds = array<i64: 1, 12>}, {transform_indices = @transform_7, window_bounds = array<i64: 1, 32, 2, 32, 6>}]} {
    %c0_i32 = arith.constant 0 : i32
    %0 = arith.cmpi eq, %arg1, %c0_i32 : i32
    %c0 = arith.constant 0 : index
    %c0_0 = arith.constant 0 : index
    %c0_1 = arith.constant 0 : index
    %c0_2 = arith.constant 0 : index
    %1 = vector.load %arg2[%c0, %c0_0, %c0_1, %c0_2] : memref<1x32x32x8xbf16, #tpu.memory_space<vmem>>, vector<1x32x32x8xbf16>
    %2 = vector.shape_cast %1 : vector<1x32x32x8xbf16> to vector<32x32x8xbf16>
    %c0_3 = arith.constant 0 : index
    %c0_4 = arith.constant 0 : index
    %c0_5 = arith.constant 0 : index
    %c0_6 = arith.constant 0 : index
    %3 = vector.load %arg3[%c0_3, %c0_4, %c0_5, %c0_6] : memref<1x1x32x8xbf16, #tpu.memory_space<vmem>>, vector<1x1x32x8xbf16>
    %4 = vector.shape_cast %3 : vector<1x1x32x8xbf16> to vector<1x32x8xbf16>
    %cst = arith.constant 0.000000e+00 : bf16
    %5 = vector.broadcast %cst : bf16 to vector<1x32x8xbf16>
    %6 = arith.select %0, %5, %4 : vector<1x32x8xbf16>
    %7 = tpu.concatenate %2, %6 in 0 : vector<32x32x8xbf16>, vector<1x32x8xbf16> -> vector<33x32x8xbf16>
    %cst_7 = arith.constant 0.000000e+00 : bf16
    %8 = vector.broadcast %cst_7 : bf16 to vector<33x8x8xbf16>
    %9 = tpu.concatenate %7, %8 in 1 : vector<33x32x8xbf16>, vector<33x8x8xbf16> -> vector<33x40x8xbf16>
    %10 = vector.extract_strided_slice %9 {offsets = [0, 1, 0], sizes = [33, 32, 8], strides = [1, 1, 1]} : vector<33x40x8xbf16> to vector<33x32x8xbf16>
    %c0_8 = arith.constant 0 : index
    %c0_9 = arith.constant 0 : index
    %11 = vector.load %arg4[%c0_8, %c0_9] : memref<32x16xbf16, #tpu.memory_space<vmem>>, vector<32x16xbf16>
    %12 = vector.extract_strided_slice %7 {offsets = [0, 0, 0], sizes = [32, 32, 8], strides = [1, 1, 1]} : vector<33x32x8xbf16> to vector<32x32x8xbf16>
    %13 = vector.shape_cast %12 : vector<32x32x8xbf16> to vector<1024x8xbf16>
    %14 = vector.extract_strided_slice %11 {offsets = [0, 0], sizes = [8, 16], strides = [1, 1]} : vector<32x16xbf16> to vector<8x16xbf16>
    %cst_10 = arith.constant dense<0.000000e+00> : vector<1024x16xf32>
    %15 = tpu.matmul %13, %14, %cst_10 {dimension_numbers = #tpu.dot_dimension_numbers<[1], [0], [0], [1], [0, 0, 1, 1], [], []>} : vector<1024x8xbf16>, vector<8x16xbf16>, vector<1024x16xf32> -> vector<1024x16xf32>
    %16 = vector.extract_strided_slice %10 {offsets = [0, 0, 0], sizes = [32, 32, 8], strides = [1, 1, 1]} : vector<33x32x8xbf16> to vector<32x32x8xbf16>
    %17 = vector.shape_cast %16 : vector<32x32x8xbf16> to vector<1024x8xbf16>
    %18 = vector.extract_strided_slice %11 {offsets = [8, 0], sizes = [8, 16], strides = [1, 1]} : vector<32x16xbf16> to vector<8x16xbf16>
    %cst_11 = arith.constant dense<0.000000e+00> : vector<1024x16xf32>
    %19 = tpu.matmul %17, %18, %cst_11 {dimension_numbers = #tpu.dot_dimension_numbers<[1], [0], [0], [1], [0, 0, 1, 1], [], []>} : vector<1024x8xbf16>, vector<8x16xbf16>, vector<1024x16xf32> -> vector<1024x16xf32>
    %20 = arith.addf %15, %19 : vector<1024x16xf32>
    %21 = vector.extract_strided_slice %7 {offsets = [1, 0, 0], sizes = [32, 32, 8], strides = [1, 1, 1]} : vector<33x32x8xbf16> to vector<32x32x8xbf16>
    %22 = vector.shape_cast %21 : vector<32x32x8xbf16> to vector<1024x8xbf16>
    %23 = vector.extract_strided_slice %11 {offsets = [16, 0], sizes = [8, 16], strides = [1, 1]} : vector<32x16xbf16> to vector<8x16xbf16>
    %cst_12 = arith.constant dense<0.000000e+00> : vector<1024x16xf32>
    %24 = tpu.matmul %22, %23, %cst_12 {dimension_numbers = #tpu.dot_dimension_numbers<[1], [0], [0], [1], [0, 0, 1, 1], [], []>} : vector<1024x8xbf16>, vector<8x16xbf16>, vector<1024x16xf32> -> vector<1024x16xf32>
    %25 = arith.addf %20, %24 : vector<1024x16xf32>
    %26 = vector.extract_strided_slice %10 {offsets = [1, 0, 0], sizes = [32, 32, 8], strides = [1, 1, 1]} : vector<33x32x8xbf16> to vector<32x32x8xbf16>
    %27 = vector.shape_cast %26 : vector<32x32x8xbf16> to vector<1024x8xbf16>
    %28 = vector.extract_strided_slice %11 {offsets = [24, 0], sizes = [8, 16], strides = [1, 1]} : vector<32x16xbf16> to vector<8x16xbf16>
    %cst_13 = arith.constant dense<0.000000e+00> : vector<1024x16xf32>
    %29 = tpu.matmul %27, %28, %cst_13 {dimension_numbers = #tpu.dot_dimension_numbers<[1], [0], [0], [1], [0, 0, 1, 1], [], []>} : vector<1024x8xbf16>, vector<8x16xbf16>, vector<1024x16xf32> -> vector<1024x16xf32>
    %30 = arith.addf %25, %29 : vector<1024x16xf32>
    %c0_14 = arith.constant 0 : index
    %c0_15 = arith.constant 0 : index
    %31 = vector.load %arg5[%c0_14, %c0_15] : memref<1x16xf32, #tpu.memory_space<vmem>>, vector<1x16xf32>
    %32 = vector.broadcast %31 : vector<1x16xf32> to vector<1024x16xf32>
    %33 = arith.mulf %30, %32 : vector<1024x16xf32>
    %c0_16 = arith.constant 0 : index
    %c0_17 = arith.constant 0 : index
    %34 = vector.load %arg6[%c0_16, %c0_17] : memref<1x16xf32, #tpu.memory_space<vmem>>, vector<1x16xf32>
    %35 = vector.broadcast %34 : vector<1x16xf32> to vector<1024x16xf32>
    %36 = arith.addf %33, %35 : vector<1024x16xf32>
    %cst_18 = arith.constant 0.000000e+00 : f32
    %37 = vector.broadcast %cst_18 : f32 to vector<1024x16xf32>
    %38 = arith.maximumf %36, %37 : vector<1024x16xf32>
    %39 = arith.truncf %38 : vector<1024x16xf32> to vector<1024x16xbf16>
    %c0_19 = arith.constant 0 : index
    %c0_20 = arith.constant 0 : index
    %40 = vector.load %arg7[%c0_19, %c0_20] : memref<16x12xbf16, #tpu.memory_space<vmem>>, vector<16x12xbf16>
    %cst_21 = arith.constant dense<0.000000e+00> : vector<1024x12xf32>
    %41 = tpu.matmul %39, %40, %cst_21 {dimension_numbers = #tpu.dot_dimension_numbers<[1], [0], [0], [1], [0, 0, 1, 1], [], []>} : vector<1024x16xbf16>, vector<16x12xbf16>, vector<1024x12xf32> -> vector<1024x12xf32>
    %c0_22 = arith.constant 0 : index
    %c0_23 = arith.constant 0 : index
    %42 = vector.load %arg8[%c0_22, %c0_23] : memref<1x12xf32, #tpu.memory_space<vmem>>, vector<1x12xf32>
    %43 = vector.broadcast %42 : vector<1x12xf32> to vector<1024x12xf32>
    %44 = arith.addf %41, %43 : vector<1024x12xf32>
    %45 = vector.extract_strided_slice %44 {offsets = [0, 0], sizes = [1024, 6], strides = [1, 1]} : vector<1024x12xf32> to vector<1024x6xf32>
    %46 = vector.shape_cast %45 : vector<1024x6xf32> to vector<32x32x6xf32>
    %c0_24 = arith.constant 0 : index
    %c0_25 = arith.constant 0 : index
    %c0_26 = arith.constant 0 : index
    %c0_27 = arith.constant 0 : index
    %c0_28 = arith.constant 0 : index
    %47 = vector.load %arg9[%c0_24, %c0_25, %c0_26, %c0_27, %c0_28] : memref<1x32x2x32x6xf32, #tpu.memory_space<vmem>>, vector<1x32x1x32x6xf32>
    %48 = vector.shape_cast %47 : vector<1x32x1x32x6xf32> to vector<32x32x6xf32>
    %49 = vector.shape_cast %46 : vector<32x32x6xf32> to vector<1x32x1x32x6xf32>
    tpu.vector_store %arg9[%c0_24, %c0_25, %c0_26, %c0_27, %c0_28], %49 {strides = array<i32>} : memref<1x32x2x32x6xf32, #tpu.memory_space<vmem>>, vector<1x32x1x32x6xf32>,
    %50 = vector.extract_strided_slice %44 {offsets = [0, 6], sizes = [1024, 6], strides = [1, 1]} : vector<1024x12xf32> to vector<1024x6xf32>
    %51 = vector.shape_cast %50 : vector<1024x6xf32> to vector<32x32x6xf32>
    %c0_29 = arith.constant 0 : index
    %c0_30 = arith.constant 0 : index
    %c1 = arith.constant 1 : index
    %c0_31 = arith.constant 0 : index
    %c0_32 = arith.constant 0 : index
    %52 = vector.load %arg9[%c0_29, %c0_30, %c1, %c0_31, %c0_32] : memref<1x32x2x32x6xf32, #tpu.memory_space<vmem>>, vector<1x32x1x32x6xf32>
    %53 = vector.shape_cast %52 : vector<1x32x1x32x6xf32> to vector<32x32x6xf32>
    %54 = vector.shape_cast %51 : vector<32x32x6xf32> to vector<1x32x1x32x6xf32>
    tpu.vector_store %arg9[%c0_29, %c0_30, %c1, %c0_31, %c0_32], %54 {strides = array<i32>} : memref<1x32x2x32x6xf32, #tpu.memory_space<vmem>>, vector<1x32x1x32x6xf32>,
    return
  }
  func.func @transform_0(%arg0: i32, %arg1: i32) -> (i32, i32, i32, i32) {
    %c0_i32 = arith.constant 0 : i32
    %c0_i32_0 = arith.constant 0 : i32
    %c0_i32_1 = arith.constant 0 : i32
    return %arg0, %arg1, %c0_i32, %c0_i32_0 : i32, i32, i32, i32
  }
  func.func @transform_1(%arg0: i32, %arg1: i32) -> (i32, i32, i32, i32) {
    %c1_i32 = arith.constant 1 : i32
    %0 = arith.addi %arg1, %c1_i32 : i32
    %c32_i32 = arith.constant 32 : i32
    %1 = arith.muli %0, %c32_i32 : i32
    %c31_i32 = arith.constant 31 : i32
    %2 = arith.minsi %1, %c31_i32 : i32
    %c0_i32 = arith.constant 0 : i32
    %c0_i32_0 = arith.constant 0 : i32
    %c0_i32_1 = arith.constant 0 : i32
    return %arg0, %2, %c0_i32, %c0_i32_0 : i32, i32, i32, i32
  }
  func.func @transform_2(%arg0: i32, %arg1: i32) -> (i32, i32) {
    %c0_i32 = arith.constant 0 : i32
    %c0_i32_0 = arith.constant 0 : i32
    %c0_i32_1 = arith.constant 0 : i32
    return %c0_i32, %c0_i32_0 : i32, i32
  }
  func.func @transform_3(%arg0: i32, %arg1: i32) -> (i32, i32) {
    %c0_i32 = arith.constant 0 : i32
    %c0_i32_0 = arith.constant 0 : i32
    %c0_i32_1 = arith.constant 0 : i32
    return %c0_i32, %c0_i32_0 : i32, i32
  }
  func.func @transform_4(%arg0: i32, %arg1: i32) -> (i32, i32) {
    %c0_i32 = arith.constant 0 : i32
    %c0_i32_0 = arith.constant 0 : i32
    %c0_i32_1 = arith.constant 0 : i32
    return %c0_i32, %c0_i32_0 : i32, i32
  }
  func.func @transform_5(%arg0: i32, %arg1: i32) -> (i32, i32) {
    %c0_i32 = arith.constant 0 : i32
    %c0_i32_0 = arith.constant 0 : i32
    %c0_i32_1 = arith.constant 0 : i32
    return %c0_i32, %c0_i32_0 : i32, i32
  }
  func.func @transform_6(%arg0: i32, %arg1: i32) -> (i32, i32) {
    %c0_i32 = arith.constant 0 : i32
    %c0_i32_0 = arith.constant 0 : i32
    %c0_i32_1 = arith.constant 0 : i32
    return %c0_i32, %c0_i32_0 : i32, i32
  }
  func.func @transform_7(%arg0: i32, %arg1: i32) -> (i32, i32, i32, i32, i32) {
    %c0_i32 = arith.constant 0 : i32
    %c0_i32_0 = arith.constant 0 : i32
    %c0_i32_1 = arith.constant 0 : i32
    %c0_i32_2 = arith.constant 0 : i32
    return %arg0, %arg1, %c0_i32, %c0_i32_0, %c0_i32_1 : i32, i32, i32, i32, i32
  }
}

</mosaic_0001>

<llo_original>
// kernel: tile.48
$region0: #{tile.48}
  #allocation2 [shape = 's32[1]{0}', space=sflag, size = 0x4, scoped, tag = 'scoped memory for tile.48']
  %s0 = inlined_call_operand.hbm [shape: f32[3], index: 0, kind: input, shape index: {}]
  %s1 = inlined_call_operand.vmem [shape: f32[4,3], index: 1, kind: output, shape index: {}]
  $region1: #{tile.48} parent=0
    #allocation0 [shape = 'u8[512]{0}', space=vmem, size = 0x400, scoped, tag = 'operand span for operand 0']
    #allocation1 [shape = 's32[1]{0}', space=sflag, size = 0x4, scoped, tag = 'scoped memory for tile.48']
    %2 = vsyncpa [#allocation1], 0
    // Predicated region
    $region2: #{tile.48} parent=1 // pred_check
      _
    $region3: #{tile.48} parent=1 // pred_check_branch
      %4 = sbr.rel (0) target = $region5
    $region4: #{tile.48} parent=1 // pred_region
      %6 = vsyncadd [#allocation1], 0
      %s8 = sshll.u32 %s0, 4
      %s9 = int_to_ptr.hbm [resolvable:$true] %s8
      %s10 = sshll.u32 [#allocation0], 4
      %s11 = int_to_ptr.vmem [resolvable:$true] %s10
      %13 = dma.hbm_to_vmem [thread:$0]  %s9, 16, %s11, [#allocation1]
    $region5: #{tile.48} parent=1 // pred_fallthru
      _
    // Predicated region
    $region6: #{tile.48} parent=1 // pred_check
      _
    $region7: #{tile.48} parent=1 // pred_check_branch
      %15 = sbr.rel (0) target = $region9
    $region8: #{tile.48} parent=1 // pred_region
      %17 = dma.done [#allocation1], 16
    $region9: #{tile.48} parent=1 // pred_fallthru
      _
    %v18 = vld [vmem:[#allocation0] ss:$0 sm:$0xff]
    %19 = vst [vmem:[%s1] sm:$0xf] %v18
    %20 = vsyncpa [#allocation1], 1

// kernel: tile.49
$region0: #{tile.49}
  %s0 = inlined_call_operand.vmem [shape: f32[4,3], index: 0, kind: input, shape index: {}]
  %s1 = inlined_call_operand.vmem [shape: f32[1,12], index: 1, kind: output, shape index: {}]
  $region1: #{tile.49} parent=0
    #allocation0 [shape = 'u8[4096]{0}', space=vmem, size = 0x1000, scoped, tag = 'scoped mem for output reshape']
    #allocation1 [shape = 'u8[4096]{0}', space=vmem, size = 0x1000, scoped, tag = 'scoped mem for input reshape']
    %s3 = ssub.s32 16, 1
    %v4 = vld [vmem:[%s0] sm:%s3]
    %5 = vst [vmem:[#allocation1] sm:%s3] %v4
    %v6 = vld [vmem:[#allocation1] sm:$0x1]
    %vm7 = vcmask 23552
    %8 = vst.msk [vmem:[#allocation0] sm:$0x1] %vm7, %v6
    %s9 = scalar_lea.vmem [#allocation1], 3
    %v10 = vld [vmem:[%s9] sm:$0x1]
    %11 = vrot.lane.b32.xlu0 %v10, 9
    %v12 = vpop.permute.xlu0 %11
    %vm13 = vcmask 97352
    %14 = vst.msk [vmem:[#allocation0] sm:$0x1] %vm13, %v12
    %s15 = scalar_lea.vmem [#allocation1], 2
    %v16 = vld [vmem:[%s15] sm:$0x1]
    %17 = vrot.lane.b32.xlu0 %v16, 6
    %v18 = vpop.permute.xlu0 %17
    %vm19 = vcmask 72752
    %20 = vst.msk [vmem:[#allocation0] sm:$0x1] %vm19, %v18
    %s21 = scalar_lea.vmem [#allocation1], 1
    %v22 = vld [vmem:[%s21] sm:$0x1]
    %23 = vrot.lane.b32.xlu0 %v22, 3
    %v24 = vpop.permute.xlu0 %23
    %vm25 = vcmask 48152
    %26 = vst.msk [vmem:[#allocation0] sm:$0x1] %vm25, %v24
    %s28 = ssub.s32 2, 1
    %v29 = vld [vmem:[#allocation0] sm:%s28]
    %s31 = ssub.s32 2, 1
    %32 = vst [vmem:[%s1] sm:%s31] %v29

// kernel: squeeze.32
$region0: #{squeeze.32}
  %s0 = inlined_call_operand.vmem [shape: f32[2,32], index: 0, kind: input, shape index: {}]
  %s1 = inlined_call_operand.vmem [shape: f32[8,8], index: 1, kind: output, shape index: {}]
  $region1: #{squeeze.32} parent=0
    #allocation0 [shape = 'u8[4096]{0}', space=vmem, size = 0x1000, scoped, tag = 'scoped mem for input reshape']
    %s3 = ssub.s32 4, 1
    %v4 = vld [vmem:[%s0] sm:%s3]
    %5 = vst [vmem:[#allocation0] sm:%s3] %v4
    %v6 = vld [vmem:[#allocation0] sm:$0x3]
    %vm7 = vcmask 64512
    %8 = vst.msk [vmem:[%s1] ss:$4 sm:$0x3] %vm7, %v6
    %v9 = vld [vmem:[#allocation0] sm:$0x3]
    %10 = vrot.lane.b32.xlu0 %v9, 120
    %v11 = vpop.permute.xlu0 %10
    %vm12 = vcmask 64512
    %s13 = scalar_lea.vmem %s1, 1
    %14 = vst.msk [vmem:[%s13] ss:$4 sm:$0x3] %vm12, %v11
    %v15 = vld [vmem:[#allocation0] sm:$0x3]
    %16 = vrot.lane.b32.xlu0 %v15, 112
    %v17 = vpop.permute.xlu0 %16
    %vm18 = vcmask 64512
    %s19 = scalar_lea.vmem %s1, 2
    %20 = vst.msk [vmem:[%s19] ss:$4 sm:$0x3] %vm18, %v17
    %v21 = vld [vmem:[#allocation0] sm:$0x3]
    %22 = vrot.lane.b32.xlu0 %v21, 104
    %v23 = vpop.permute.xlu0 %22
    %vm24 = vcmask 64512
    %s25 = scalar_lea.vmem %s1, 3
    %26 = vst.msk [vmem:[%s25] ss:$4 sm:$0x3] %vm24, %v23

// kernel: tile.33
$region0: #{tile.33}
  #allocation0 [shape = 's32[1]{0}', space=sflag, size = 0x4, scoped, tag = 'scoped memory for tile.33']
  %s0 = inlined_call_operand.vmem [shape: f32[8], index: 0, kind: input, shape index: {}]
  %s1 = inlined_call_operand.vmem [shape: f32[4,8], index: 1, kind: output, shape index: {}]
  // Predicated region
  $region2: #{tile.33} parent=0 // pred_check
    _
  $region3: #{tile.33} parent=0 // pred_check_branch
    %3 = sbr.rel (0) target = $region5
  $region4: #{tile.33} parent=0 // pred_region
    _
  $region5: #{tile.33} parent=0 // pred_fallthru
    _
  %v4 = vld [vmem:[%s0] ss:$0 sm:$0xff]
  %5 = vst [vmem:[%s1] sm:$0xf] %v4

// kernel: tile.34
$region0: #{tile.34}
  %s0 = inlined_call_operand.vmem [shape: f32[4,8], index: 0, kind: input, shape index: {}]
  %s1 = inlined_call_operand.vmem [shape: f32[1,32], index: 1, kind: output, shape index: {}]
  $region1: #{tile.34} parent=0
    #allocation0 [shape = 'u8[4096]{0}', space=vmem, size = 0x1000, scoped, tag = 'scoped mem for output reshape']
    #allocation1 [shape = 'u8[4096]{0}', space=vmem, size = 0x1000, scoped, tag = 'scoped mem for input reshape']
    %s3 = ssub.s32 16, 1
    %v4 = vld [vmem:[%s0] sm:%s3]
    %5 = vst [vmem:[#allocation1] sm:%s3] %v4
    %v6 = vld [vmem:[#allocation1] sm:$0x1]
    %vm7 = vcmask 64512
    %8 = vst.msk [vmem:[#allocation0] sm:$0x1] %vm7, %v6
    %s9 = scalar_lea.vmem [#allocation1], 3
    %v10 = vld [vmem:[%s9] sm:$0x1]
    %11 = vrot.lane.b32.xlu0 %v10, 24
    %v12 = vpop.permute.xlu0 %11
    %vm13 = vcmask 261312
    %14 = vst.msk [vmem:[#allocation0] sm:$0x1] %vm13, %v12
    %s15 = scalar_lea.vmem [#allocation1], 2
    %v16 = vld [vmem:[%s15] sm:$0x1]
    %17 = vrot.lane.b32.xlu0 %v16, 16
    %v18 = vpop.permute.xlu0 %17
    %vm19 = vcmask 195712
    %20 = vst.msk [vmem:[#allocation0] sm:$0x1] %vm19, %v18
    %s21 = scalar_lea.vmem [#allocation1], 1
    %v22 = vld [vmem:[%s21] sm:$0x1]
    %23 = vrot.lane.b32.xlu0 %v22, 8
    %v24 = vpop.permute.xlu0 %23
    %vm25 = vcmask 130112
    %26 = vst.msk [vmem:[#allocation0] sm:$0x1] %vm25, %v24
    %s28 = ssub.s32 2, 1
    %v29 = vld [vmem:[#allocation0] sm:%s28]
    %s31 = ssub.s32 2, 1
    %32 = vst [vmem:[%s1] sm:%s31] %v29

// kernel: unet_decoder_forward.4
$region0: #{unet_decoder_forward.4}
  #allocation0 [shape = 'u32[]', space=smem, size = 0x4, offset = 0x4, fixed_abs, tag = 'smem constant byte address 0x4 - core index']
  #allocation1 [shape = 'u32[72,128]{1,0:T(1,128)}', space=vmem, size = 0x9000, scoped, tag = 'internal scratch']
  %s0 = inlined_call_operand.vmem [shape: bf16[2,16,16,16], index: 0, kind: input, shape index: {}, may-alias: {0,1}]
  %s1 = inlined_call_operand.vmem [shape: bf16[2,16,16,16], index: 1, kind: input, shape index: {}, may-alias: {0,1}]
  %s2 = inlined_call_operand.vmem [shape: bf16[64,32], index: 2, kind: input, shape index: {}]
  %s3 = inlined_call_operand.vmem [shape: f32[2,1,2,32], index: 3, kind: output, shape index: {}]
  %s4 = sld [smem:[#allocation0]]
  $region45: #{unet_decoder_forward.4} parent=0
    _
  %s6 = ssub.s32 1, %s4
  %s7 = scalar_select 0, %s6, %s4
  loop: start=0, step=1, limit=4
  $region2: #{unet_decoder_forward.4} parent=0 // loop_pre_header
    _
  $region3: #{unet_decoder_forward.4} parent=0 // loop_header
    %s9 = sphi 0, %s13
    %p10 = scmp.ge.s32.totalorder %s9, 4
    %s16 = sphi 0, %s28
    %s17 = sphi 0, %s24
    %s18 = sphi 0, %s16
    %s19 = sphi 0, %s17
    %s20 = sphi 0, %s18
    %s21 = sphi 0, %s19
    %s33 = sphi 0, %s35
    %s36 = sphi 0, %s33
    %s37 = sphi 0, %s36
    %s53 = sphi 0, %s37
    %s69 = sphi 0, %s71
    %s72 = sphi 0, %s69
    %s73 = sphi 0, %s72
    %s89 = sphi 0, %s73
    %s93 = sphi 0, %s93
    %s95 = sphi 0, %s93
    %s96 = sphi 0, %s95
    %s110 = sphi 0, %s96
    %s118 = sphi 0, %s120
    %s121 = sphi 0, %s118
    %s122 = sphi 0, %s121
    %s138 = sphi 0, %s122
  $region4: #{unet_decoder_forward.4} parent=0 // loop_header_branch
    %12 = sbr.rel (%p10) target = $region8
  $region5: #{unet_decoder_forward.4} parent=0 // loop_body
    %s14 = ssub.s32 %s9, 1
    %s15 = ssub.s32 %s9, 2
    %s22 = sadd.s32 1, %s17
    %p23 = scmp.ge.s32.totalorder %s22, 1
    %s24 = scalar_select %p23, 0, %s22
    %s25 = sadd.s32 1, %s16
    %s26 = scalar_select %p23, %s25, %s16
    %p27 = scmp.ge.s32.totalorder %s26, 2
    %s28 = scalar_select %p27, 0, %s26
    %s29 = ssub.s32 %s16, %s28
    %s30 = ssub.s32 %s17, %s24
    %s31 = sor.u32 %s29, %s30
    %p32 = scmp.eq.s32.totalorder %s31, 0
    %s34 = sadd.s32 %s33, 1
    %s35 = scalar_select %p32, %s33, %s34
    %p38 = pneg %p32
    %p39 = scmp.eq.s32.totalorder %s9, 1
    %p40 = por %p38, %p39
    %p41 = scmp.ne.s32.totalorder %s33, %s36
    %p42 = scmp.eq.s32.totalorder %s9, 0
    %p43 = por %p41, %p42
    %p44 = scmp.ne.s32.totalorder %s33, %s36
    %p45 = scmp.eq.s32.totalorder %s14, 1
    %p46 = por %p44, %p45
    %p47 = scmp.ne.s32.totalorder %s36, %s37
    %p48 = scmp.eq.s32.totalorder %s14, 0
    %p49 = por %p47, %p48
    %p50 = scmp.ne.s32.totalorder %s36, %s37
    %p51 = scmp.eq.s32.totalorder %s15, 1
    %p52 = por %p50, %p51
    %p54 = scmp.ne.s32.totalorder %s37, %s53
    %p55 = scmp.eq.s32.totalorder %s15, 0
    %p56 = por %p54, %p55
    %s57 = sadd.s32 %s17, 1
    %s58 = smul.u32 %s57, 16
    %p59 = scmp.lt.s32.totalorder %s58, 15
    %s60 = scalar_select %p59, %s58, 15
    %s61 = sadd.s32 %s24, 1
    %s62 = smul.u32 %s61, 16
    %p63 = scmp.lt.s32.totalorder %s62, 15
    %s64 = scalar_select %p63, %s62, 15
    %s65 = ssub.s32 %s16, %s28
    %s66 = ssub.s32 %s60, %s64
    %s67 = sor.u32 %s65, %s66
    %p68 = scmp.eq.s32.totalorder %s67, 0
    %s70 = sadd.s32 %s69, 1
    %s71 = scalar_select %p68, %s69, %s70
    %p74 = pneg %p68
    %p75 = scmp.eq.s32.totalorder %s9, 1
    %p76 = por %p74, %p75
    %p77 = scmp.ne.s32.totalorder %s69, %s72
    %p78 = scmp.eq.s32.totalorder %s9, 0
    %p79 = por %p77, %p78
    %p80 = scmp.ne.s32.totalorder %s69, %s72
    %p81 = scmp.eq.s32.totalorder %s14, 1
    %p82 = por %p80, %p81
    %p83 = scmp.ne.s32.totalorder %s72, %s73
    %p84 = scmp.eq.s32.totalorder %s14, 0
    %p85 = por %p83, %p84
    %p86 = scmp.ne.s32.totalorder %s72, %s73
    %p87 = scmp.eq.s32.totalorder %s15, 1
    %p88 = por %p86, %p87
    %p90 = scmp.ne.s32.totalorder %s73, %s89
    %p91 = scmp.eq.s32.totalorder %s15, 0
    %p92 = por %p90, %p91
    %s94 = sadd.s32 %s93, 1
    %p97 = scmp.eq.s32.totalorder %s9, 1
    %p98 = scmp.ne.s32.totalorder %s93, %s95
    %p99 = scmp.eq.s32.totalorder %s9, 0
    %p100 = por %p98, %p99
    %p101 = scmp.ne.s32.totalorder %s93, %s95
    %p102 = scmp.eq.s32.totalorder %s14, 1
    %p103 = por %p101, %p102
    %p104 = scmp.ne.s32.totalorder %s95, %s96
    %p105 = scmp.eq.s32.totalorder %s14, 0
    %p106 = por %p104, %p105
    %p107 = scmp.ne.s32.totalorder %s95, %s96
    %p108 = scmp.eq.s32.totalorder %s15, 1
    %p109 = por %p107, %p108
    %p111 = scmp.ne.s32.totalorder %s96, %s110
    %p112 = scmp.eq.s32.totalorder %s15, 0
    %p113 = por %p111, %p112
    %s114 = ssub.s32 %s16, %s28
    %s115 = ssub.s32 %s17, %s24
    %s116 = sor.u32 %s114, %s115
    %p117 = scmp.eq.s32.totalorder %s116, 0
    %s119 = sadd.s32 %s118, 1
    %s120 = scalar_select %p117, %s118, %s119
    %p123 = pneg %p117
    %p124 = scmp.eq.s32.totalorder %s9, 1
    %p125 = por %p123, %p124
    %p126 = scmp.ne.s32.totalorder %s118, %s121
    %p127 = scmp.eq.s32.totalorder %s9, 0
    %p128 = por %p126, %p127
    %p129 = scmp.ne.s32.totalorder %s118, %s121
    %p130 = scmp.eq.s32.totalorder %s14, 1
    %p131 = por %p129, %p130
    %p132 = scmp.ne.s32.totalorder %s121, %s122
    %p133 = scmp.eq.s32.totalorder %s14, 0
    %p134 = por %p132, %p133
    %p135 = scmp.ne.s32.totalorder %s121, %s122
    %p136 = scmp.eq.s32.totalorder %s15, 1
    %p137 = por %p135, %p136
    %p139 = scmp.ne.s32.totalorder %s122, %s138
    %p140 = scmp.eq.s32.totalorder %s15, 0
    %p141 = por %p139, %p140
    %p142 = scmp.le.s32.totalorder 1, %s9
    %p143 = scmp.lt.s32.totalorder %s9, 3
    %p144 = pnand %p142, %p143
    %p145 = pneg %p144
    // Predicated region
    $region9: #{unet_decoder_forward.4} parent=5 // pred_check
      _
    $region10: #{unet_decoder_forward.4} parent=5 // pred_check_branch
      %147 = sbr.rel (%p144) target = $region12
    $region11: #{unet_decoder_forward.4} parent=5 // pred_region
      %s148 = ssub.s32 %s9, 1
      // Predicated region
      $region13: #{unet_decoder_forward.4} parent=11 // pred_check
        %p149 = pneg %p106
      $region14: #{unet_decoder_forward.4} parent=11 // pred_check_branch
        %151 = sbr.rel (%p149) target = $region16
      $region15: #{unet_decoder_forward.4} parent=11 // pred_region
        _
      $region16: #{unet_decoder_forward.4} parent=11 // pred_fallthru
        _
    $region12: #{unet_decoder_forward.4} parent=5 // pred_fallthru
      _
    %p152 = scmp.lt.s32.totalorder %s9, 2
    // Predicated region
    $region17: #{unet_decoder_forward.4} parent=5 // pred_check
      %p153 = pneg %p152
    $region18: #{unet_decoder_forward.4} parent=5 // pred_check_branch
      %155 = sbr.rel (%p153) target = $region20
    $region19: #{unet_decoder_forward.4} parent=5 // pred_region
      // Predicated region
      $region21: #{unet_decoder_forward.4} parent=19 // pred_check
        %p156 = pneg %p43
      $region22: #{unet_decoder_forward.4} parent=19 // pred_check_branch
        %158 = sbr.rel (%p156) target = $region24
      $region23: #{unet_decoder_forward.4} parent=19 // pred_region
        %s159 = smul.u32 16, %s17
        %p160 = scmp.lt.s32.totalorder %s16, 1
        %s161 = scalar_select %p160, %s16, 1
        %p162 = scmp.lt.s32.totalorder %s159, 15
        %s163 = scalar_select %p162, %s159, 15
        %s164 = smul.addr %s163, 2
        %s165 = smul.addr %s161, 32
        %s166 = sadd.s32 %s164, %s165
        %s167 = smul.addr %s166, 4
        %s168 = scalar_lea.vmem %s0, %s167
        %s169 = smul.u32 16, %s17
      $region24: #{unet_decoder_forward.4} parent=19 // pred_fallthru
        _
      // Predicated region
      $region25: #{unet_decoder_forward.4} parent=19 // pred_check
        %p170 = pneg %p79
      $region26: #{unet_decoder_forward.4} parent=19 // pred_check_branch
        %172 = sbr.rel (%p170) target = $region28
      $region27: #{unet_decoder_forward.4} parent=19 // pred_region
        %s173 = sadd.s32 %s17, 1
        %s174 = smul.u32 %s173, 16
        %p175 = scmp.lt.s32.totalorder %s174, 15
        %s176 = scalar_select %p175, %s174, 15
        %p177 = scmp.lt.s32.totalorder %s16, 1
        %s178 = scalar_select %p177, %s16, 1
        %p179 = scmp.lt.s32.totalorder %s176, 15
        %s180 = scalar_select %p179, %s176, 15
        %s181 = smul.addr %s180, 2
        %s182 = smul.addr %s178, 32
        %s183 = sadd.s32 %s181, %s182
        %s184 = smul.addr %s183, 4
        %s185 = scalar_lea.vmem %s1, %s184
        %s186 = sadd.s32 %s17, 1
        %s187 = smul.u32 %s186, 16
        %p188 = scmp.lt.s32.totalorder %s187, 15
        %s189 = scalar_select %p188, %s187, 15
      $region28: #{unet_decoder_forward.4} parent=19 // pred_fallthru
        _
    $region20: #{unet_decoder_forward.4} parent=5 // pred_fallthru
      _
    %p190 = scmp.le.s32.totalorder 1, %s9
    %p191 = scmp.lt.s32.totalorder %s9, 3
    %p192 = pnand %p190, %p191
    %p193 = pneg %p192
    // Predicated region
    $region29: #{unet_decoder_forward.4} parent=5 // pred_check
      _
    $region30: #{unet_decoder_forward.4} parent=5 // pred_check_branch
      %195 = sbr.rel (%p192) target = $region32
    $region31: #{unet_decoder_forward.4} parent=5 // pred_region
      %s196 = ssub.s32 %s9, 1
      %s197 = smul.u32 16, %s19
      %p198 = scmp.lt.s32.totalorder %s18, 1
      %s199 = scalar_select %p198, %s18, 1
      %p200 = scmp.lt.s32.totalorder %s197, 15
      %s201 = scalar_select %p200, %s197, 15
      %s202 = smul.addr %s201, 2
      %s203 = smul.addr %s199, 32
      %s204 = sadd.s32 %s202, %s203
      %s205 = smul.addr %s204, 4
      %s206 = scalar_lea.vmem %s0, %s205
      %p207 = pneg %p49
      %p208 = pneg %p46
      %s209 = sadd.s32 %s19, 1
      %s210 = smul.u32 %s209, 16
      %p211 = scmp.lt.s32.totalorder %s210, 15
      %s212 = scalar_select %p211, %s210, 15
      %p213 = scmp.lt.s32.totalorder %s18, 1
      %s214 = scalar_select %p213, %s18, 1
      %p215 = scmp.lt.s32.totalorder %s212, 15
      %s216 = scalar_select %p215, %s212, 15
      %s217 = smul.addr %s216, 2
      %s218 = smul.addr %s214, 32
      %s219 = sadd.s32 %s217, %s218
      %s220 = smul.addr %s219, 4
      %s221 = scalar_lea.vmem %s1, %s220
      %p222 = pneg %p85
      %p223 = pneg %p82
      %p224 = pneg %p106
      %p225 = pneg %p103
      %p226 = pneg %p134
      %p227 = pneg %p131
      %p228 = scmp.lt.s32.totalorder %s18, 1
      %s229 = scalar_select %p228, %s18, 1
      %p230 = scmp.lt.s32.totalorder %s19, 0
      %s231 = scalar_select %p230, %s19, 0
      %s232 = sadd.s32 %s231, %s229
      %s233 = smul.addr %s232, 2
      %s234 = scalar_lea.vmem %s3, %s233
      %s235 = smul.u32 16, %s19
      %p236 = scmp.lt.s32.totalorder %s18, 1
      %s237 = scalar_select %p236, %s18, 1
      %p238 = scmp.lt.s32.totalorder %s235, 15
      %s239 = scalar_select %p238, %s235, 15
      %s240 = smul.addr %s239, 2
      %s241 = smul.addr %s237, 32
      %s242 = sadd.s32 %s240, %s241
      %s243 = smul.addr %s242, 4
      %s244 = scalar_lea.vmem %s0, %s243
      %s245 = smul.u32 16, %s19
      %s246 = sadd.s32 %s19, 1
      %s247 = smul.u32 %s246, 16
      %p248 = scmp.lt.s32.totalorder %s247, 15
      %s249 = scalar_select %p248, %s247, 15
      %p250 = scmp.lt.s32.totalorder %s18, 1
      %s251 = scalar_select %p250, %s18, 1
      %p252 = scmp.lt.s32.totalorder %s249, 15
      %s253 = scalar_select %p252, %s249, 15
      %s254 = smul.addr %s253, 2
      %s255 = smul.addr %s251, 32
      %s256 = sadd.s32 %s254, %s255
      %s257 = smul.addr %s256, 4
      %s258 = scalar_lea.vmem %s1, %s257
      %s259 = sadd.s32 %s19, 1
      %s260 = smul.u32 %s259, 16
      %p261 = scmp.lt.s32.totalorder %s260, 15
      %s262 = scalar_select %p261, %s260, 15
      %p263 = scmp.lt.s32.totalorder %s18, 1
      %s264 = scalar_select %p263, %s18, 1
      %p265 = scmp.lt.s32.totalorder %s19, 0
      %s266 = scalar_select %p265, %s19, 0
      %s267 = sadd.s32 %s266, %s264
      %s268 = smul.addr %s267, 2
      %s269 = scalar_lea.vmem %s3, %s268
      %p271 = scmp.eq.s32.totalorder %s19, 0
      %v272 = vld [vmem:[%s244] sm:$0xf]
      %v273 = vld [vmem:[%s244 + $0x4] sm:$0xf]
      %v274 = vld [vmem:[%s244 + $0x8] sm:$0xf]
      %v275 = vld [vmem:[%s244 + $0xc] sm:$0xf]
      %v276 = vld [vmem:[%s244 + $0x10] sm:$0xf]
      %v277 = vld [vmem:[%s244 + $0x14] sm:$0xf]
      %v278 = vld [vmem:[%s244 + $0x18] sm:$0xf]
      %v279 = vld [vmem:[%s244 + $0x1c] sm:$0xf]
      %v280 = vld [vmem:[%s244 + $0x20] sm:$0xf]
      %v281 = vld [vmem:[%s244 + $0x24] sm:$0xf]
      %v282 = vld [vmem:[%s244 + $0x28] sm:$0xf]
      %v283 = vld [vmem:[%s244 + $0x2c] sm:$0xf]
      %v284 = vld [vmem:[%s244 + $0x30] sm:$0xf]
      %v285 = vld [vmem:[%s244 + $0x34] sm:$0xf]
      %v286 = vld [vmem:[%s244 + $0x38] sm:$0xf]
      %v287 = vld [vmem:[%s244 + $0x3c] sm:$0xf]
      %v288 = vld [vmem:[%s244 + $0x40] sm:$0xf]
      %v289 = vld [vmem:[%s244 + $0x44] sm:$0xf]
      %v290 = vld [vmem:[%s244 + $0x48] sm:$0xf]
      %v291 = vld [vmem:[%s244 + $0x4c] sm:$0xf]
      %v292 = vld [vmem:[%s244 + $0x50] sm:$0xf]
      %v293 = vld [vmem:[%s244 + $0x54] sm:$0xf]
      %v294 = vld [vmem:[%s244 + $0x58] sm:$0xf]
      %v295 = vld [vmem:[%s244 + $0x5c] sm:$0xf]
      %v296 = vld [vmem:[%s244 + $0x60] sm:$0xf]
      %v297 = vld [vmem:[%s244 + $0x64] sm:$0xf]
      %v298 = vld [vmem:[%s244 + $0x68] sm:$0xf]
      %v299 = vld [vmem:[%s244 + $0x6c] sm:$0xf]
      %v300 = vld [vmem:[%s244 + $0x70] sm:$0xf]
      %v301 = vld [vmem:[%s244 + $0x74] sm:$0xf]
      %v302 = vld [vmem:[%s244 + $0x78] sm:$0xf]
      %v303 = vld [vmem:[%s244 + $0x7c] sm:$0xf]
      %v304 = vld [vmem:[%s258] sm:$0xf]
      %v305 = vld [vmem:[%s258 + $0x4] sm:$0xf]
      %s306 = scalar_select %p271, 1, 0
      %v307 = vstv %s306
      %vm308 = vcmp.eq.s32.totalorder %v307, 1
      %v309 = vsel %vm308, 0, %v304
      %v310 = vsel %vm308, 0, %v305
      %v345 = vunpack.c.l.b16 %v272
      %v346 = vunpack.c.l.b16 %v273
      %v347 = vunpack.c.l.b16 %v274
      %v348 = vunpack.c.l.b16 %v275
      %v349 = vunpack.c.l.b16 %v276
      %v350 = vunpack.c.l.b16 %v277
      %v351 = vunpack.c.l.b16 %v278
      %v352 = vunpack.c.l.b16 %v279
      %v353 = vunpack.c.l.b16 %v280
      %v354 = vunpack.c.l.b16 %v281
      %v355 = vunpack.c.l.b16 %v282
      %v356 = vunpack.c.l.b16 %v283
      %v357 = vunpack.c.l.b16 %v284
      %v358 = vunpack.c.l.b16 %v285
      %v359 = vunpack.c.l.b16 %v286
      %v360 = vunpack.c.l.b16 %v287
      %v361 = vunpack.c.l.b16 %v288
      %v362 = vunpack.c.l.b16 %v289
      %v363 = vunpack.c.l.b16 %v290
      %v364 = vunpack.c.l.b16 %v291
      %v365 = vunpack.c.l.b16 %v292
      %v366 = vunpack.c.l.b16 %v293
      %v367 = vunpack.c.l.b16 %v294
      %v368 = vunpack.c.l.b16 %v295
      %v369 = vunpack.c.l.b16 %v296
      %v370 = vunpack.c.l.b16 %v297
      %v371 = vunpack.c.l.b16 %v298
      %v372 = vunpack.c.l.b16 %v299
      %v373 = vunpack.c.l.b16 %v300
      %v374 = vunpack.c.l.b16 %v301
      %v375 = vunpack.c.l.b16 %v302
      %v376 = vunpack.c.l.b16 %v303
      %v377 = vunpack.c.l.b16 %v309
      %v378 = vunpack.c.l.b16 %v310
      %v379 = vpack.c.b16 %v346, %v345
      %v380 = vpack.c.b16 %v348, %v347
      %v381 = vpack.c.b16 %v350, %v349
      %v382 = vpack.c.b16 %v352, %v351
      %v383 = vpack.c.b16 %v354, %v353
      %v384 = vpack.c.b16 %v356, %v355
      %v385 = vpack.c.b16 %v358, %v357
      %v386 = vpack.c.b16 %v360, %v359
      %v387 = vpack.c.b16 %v362, %v361
      %v388 = vpack.c.b16 %v364, %v363
      %v389 = vpack.c.b16 %v366, %v365
      %v390 = vpack.c.b16 %v368, %v367
      %v391 = vpack.c.b16 %v370, %v369
      %v392 = vpack.c.b16 %v372, %v371
      %v393 = vpack.c.b16 %v374, %v373
      %v394 = vpack.c.b16 %v376, %v375
      %v395 = vpack.c.b16 %v378, %v377
      %v396 = vld [vmem:[%s2] sm:$0xf]
      %v397 = vld [vmem:[%s2 + $0x4] sm:$0xf]
      %v398 = vld [vmem:[%s2 + $0x8] sm:$0xf]
      %v399 = vld [vmem:[%s2 + $0xc] sm:$0xf]
      %v400 = vld [vmem:[%s2 + $0x10] sm:$0xf]
      %v401 = vld [vmem:[%s2 + $0x14] sm:$0xf]
      %v402 = vld [vmem:[%s2 + $0x18] sm:$0xf]
      %v403 = vld [vmem:[%s2 + $0x1c] sm:$0xf]
      %vm404 = vsmask.f32 7424
      %v406 = vshrl.u32 %v379, 16
      %v408 = vshll.u32 %v379, 16
      %v410 = vrot.slane %v408, 1
      %v411 = vor.u32 %v406, %v410
      %v413 = vshll.u32 0, 16
      %v415 = vrot.slane %v413, 1
      %v416 = vsel %vm404, %v411, %v415
      %v418 = vshrl.u32 %v380, 16
      %v420 = vshll.u32 %v380, 16
      %v422 = vrot.slane %v420, 1
      %v423 = vor.u32 %v418, %v422
      %v424 = vsel %vm404, %v423, %v415
      %v426 = vshrl.u32 %v381, 16
      %v428 = vshll.u32 %v381, 16
      %v430 = vrot.slane %v428, 1
      %v431 = vor.u32 %v426, %v430
      %v432 = vsel %vm404, %v431, %v415
      %v434 = vshrl.u32 %v382, 16
      %v436 = vshll.u32 %v382, 16
      %v438 = vrot.slane %v436, 1
      %v439 = vor.u32 %v434, %v438
      %v440 = vsel %vm404, %v439, %v415
      %v442 = vshrl.u32 %v383, 16
      %v444 = vshll.u32 %v383, 16
      %v446 = vrot.slane %v444, 1
      %v447 = vor.u32 %v442, %v446
      %v448 = vsel %vm404, %v447, %v415
      %v450 = vshrl.u32 %v384, 16
      %v452 = vshll.u32 %v384, 16
      %v454 = vrot.slane %v452, 1
      %v455 = vor.u32 %v450, %v454
      %v456 = vsel %vm404, %v455, %v415
      %v458 = vshrl.u32 %v385, 16
      %v460 = vshll.u32 %v385, 16
      %v462 = vrot.slane %v460, 1
      %v463 = vor.u32 %v458, %v462
      %v464 = vsel %vm404, %v463, %v415
      %v466 = vshrl.u32 %v386, 16
      %v468 = vshll.u32 %v386, 16
      %v470 = vrot.slane %v468, 1
      %v471 = vor.u32 %v466, %v470
      %v472 = vsel %vm404, %v471, %v415
      %v474 = vshrl.u32 %v387, 16
      %v476 = vshll.u32 %v387, 16
      %v478 = vrot.slane %v476, 1
      %v479 = vor.u32 %v474, %v478
      %v480 = vsel %vm404, %v479, %v415
      %v482 = vshrl.u32 %v388, 16
      %v484 = vshll.u32 %v388, 16
      %v486 = vrot.slane %v484, 1
      %v487 = vor.u32 %v482, %v486
      %v488 = vsel %vm404, %v487, %v415
      %v490 = vshrl.u32 %v389, 16
      %v492 = vshll.u32 %v389, 16
      %v494 = vrot.slane %v492, 1
      %v495 = vor.u32 %v490, %v494
      %v496 = vsel %vm404, %v495, %v415
      %v498 = vshrl.u32 %v390, 16
      %v500 = vshll.u32 %v390, 16
      %v502 = vrot.slane %v500, 1
      %v503 = vor.u32 %v498, %v502
      %v504 = vsel %vm404, %v503, %v415
      %v506 = vshrl.u32 %v391, 16
      %v508 = vshll.u32 %v391, 16
      %v510 = vrot.slane %v508, 1
      %v511 = vor.u32 %v506, %v510
      %v512 = vsel %vm404, %v511, %v415
      %v514 = vshrl.u32 %v392, 16
      %v516 = vshll.u32 %v392, 16
      %v518 = vrot.slane %v516, 1
      %v519 = vor.u32 %v514, %v518
      %v520 = vsel %vm404, %v519, %v415
      %v522 = vshrl.u32 %v393, 16
      %v524 = vshll.u32 %v393, 16
      %v526 = vrot.slane %v524, 1
      %v527 = vor.u32 %v522, %v526
      %v528 = vsel %vm404, %v527, %v415
      %v530 = vshrl.u32 %v394, 16
      %v532 = vshll.u32 %v394, 16
      %v534 = vrot.slane %v532, 1
      %v535 = vor.u32 %v530, %v534
      %v536 = vsel %vm404, %v535, %v415
      %v539 = vunpack.c.l.b16 %v398
      %v540 = vunpack.c.l.b16 %v399
      %v541 = vpack.c.b16 %v540, %v539
      %vm543 = vcmask 130048
      %v545 = vsel %vm543, %v416, 0
      %v548 = vsel %vm543, %v424, 0
      %v551 = vsel %vm543, %v432, 0
      %v554 = vsel %vm543, %v440, 0
      %v557 = vsel %vm543, %v448, 0
      %v560 = vsel %vm543, %v456, 0
      %v563 = vsel %vm543, %v464, 0
      %v566 = vsel %vm543, %v472, 0
      %v569 = vsel %vm543, %v480, 0
      %v572 = vsel %vm543, %v488, 0
      %v575 = vsel %vm543, %v496, 0
      %v578 = vsel %vm543, %v504, 0
      %v581 = vsel %vm543, %v512, 0
      %v584 = vsel %vm543, %v520, 0
      %v587 = vsel %vm543, %v528, 0
      %v590 = vsel %vm543, %v536, 0
      %592 = vmatpush.bf16.msra.mxu0 0
      %593 = vmatpush.bf16.msra.mxu0 0
      %594 = vmatpush.bf16.msra.mxu0 0
      %595 = vmatpush.bf16.msra.mxu0 0
      %596 = vmatpush.bf16.msra.mxu0 0
      %597 = vmatpush.bf16.msra.mxu0 0
      %598 = vmatpush.bf16.msra.mxu0 0
      %599 = vmatpush.bf16.msra.mxu0 %v541
      %600 = vmatmul.bf16.gmra.mxu0 %v545
      %v601 = vpop.f32.mrf.mxu0
      %v602 = vadd.f32 0.0, %v601
      %v603 = vpop.f32.mrf.mxu0
      %v604 = vadd.f32 0.0, %v603
      %605 = vmatmul.bf16.gmra.mxu0 %v548
      %v606 = vpop.f32.mrf.mxu0
      %v607 = vadd.f32 0.0, %v606
      %v608 = vpop.f32.mrf.mxu0
      %v609 = vadd.f32 0.0, %v608
      %610 = vmatmul.bf16.gmra.mxu0 %v551
      %v611 = vpop.f32.mrf.mxu0
      %v612 = vadd.f32 0.0, %v611
      %v613 = vpop.f32.mrf.mxu0
      %v614 = vadd.f32 0.0, %v613
      %615 = vmatmul.bf16.gmra.mxu0 %v554
      %v616 = vpop.f32.mrf.mxu0
      %v617 = vadd.f32 0.0, %v616
      %v618 = vpop.f32.mrf.mxu0
      %v619 = vadd.f32 0.0, %v618
      %620 = vmatmul.bf16.gmra.mxu0 %v557
      %v621 = vpop.f32.mrf.mxu0
      %v622 = vadd.f32 0.0, %v621
      %v623 = vpop.f32.mrf.mxu0
      %v624 = vadd.f32 0.0, %v623
      %625 = vmatmul.bf16.gmra.mxu0 %v560
      %v626 = vpop.f32.mrf.mxu0
      %v627 = vadd.f32 0.0, %v626
      %v628 = vpop.f32.mrf.mxu0
      %v629 = vadd.f32 0.0, %v628
      %630 = vmatmul.bf16.gmra.mxu0 %v563
      %v631 = vpop.f32.mrf.mxu0
      %v632 = vadd.f32 0.0, %v631
      %v633 = vpop.f32.mrf.mxu0
      %v634 = vadd.f32 0.0, %v633
      %635 = vmatmul.bf16.gmra.mxu0 %v566
      %v636 = vpop.f32.mrf.mxu0
      %v637 = vadd.f32 0.0, %v636
      %v638 = vpop.f32.mrf.mxu0
      %v639 = vadd.f32 0.0, %v638
      %640 = vmatmul.bf16.gmra.mxu0 %v569
      %v641 = vpop.f32.mrf.mxu0
      %v642 = vadd.f32 0.0, %v641
      %v643 = vpop.f32.mrf.mxu0
      %v644 = vadd.f32 0.0, %v643
      %645 = vmatmul.bf16.gmra.mxu0 %v572
      %v646 = vpop.f32.mrf.mxu0
      %v647 = vadd.f32 0.0, %v646
      %v648 = vpop.f32.mrf.mxu0
      %v649 = vadd.f32 0.0, %v648
      %650 = vmatmul.bf16.gmra.mxu0 %v575
      %v651 = vpop.f32.mrf.mxu0
      %v652 = vadd.f32 0.0, %v651
      %v653 = vpop.f32.mrf.mxu0
      %v654 = vadd.f32 0.0, %v653
      %655 = vmatmul.bf16.gmra.mxu0 %v578
      %v656 = vpop.f32.mrf.mxu0
      %v657 = vadd.f32 0.0, %v656
      %v658 = vpop.f32.mrf.mxu0
      %v659 = vadd.f32 0.0, %v658
      %660 = vmatmul.bf16.gmra.mxu0 %v581
      %v661 = vpop.f32.mrf.mxu0
      %v662 = vadd.f32 0.0, %v661
      %v663 = vpop.f32.mrf.mxu0
      %v664 = vadd.f32 0.0, %v663
      %665 = vmatmul.bf16.gmra.mxu0 %v584
      %v666 = vpop.f32.mrf.mxu0
      %v667 = vadd.f32 0.0, %v666
      %v668 = vpop.f32.mrf.mxu0
      %v669 = vadd.f32 0.0, %v668
      %670 = vmatmul.bf16.gmra.mxu0 %v587
      %v671 = vpop.f32.mrf.mxu0
      %v672 = vadd.f32 0.0, %v671
      %v673 = vpop.f32.mrf.mxu0
      %v674 = vadd.f32 0.0, %v673
      %675 = vmatmul.bf16.gmra.mxu0 %v590
      %v676 = vpop.f32.mrf.mxu0
      %v677 = vadd.f32 0.0, %v676
      %v678 = vpop.f32.mrf.mxu0
      %v679 = vadd.f32 0.0, %v678
      %680 = vdwg.mxu0
      %v683 = vunpack.c.l.b16 %v396
      %v684 = vunpack.c.l.b16 %v397
      %v685 = vpack.c.b16 %v684, %v683
      %v687 = vsel %vm543, %v379, 0
      %v689 = vsel %vm543, %v380, 0
      %v691 = vsel %vm543, %v381, 0
      %v693 = vsel %vm543, %v382, 0
      %v695 = vsel %vm543, %v383, 0
      %v697 = vsel %vm543, %v384, 0
      %v699 = vsel %vm543, %v385, 0
      %v701 = vsel %vm543, %v386, 0
      %v703 = vsel %vm543, %v387, 0
      %v705 = vsel %vm543, %v388, 0
      %v707 = vsel %vm543, %v389, 0
      %v709 = vsel %vm543, %v390, 0
      %v711 = vsel %vm543, %v391, 0
      %v713 = vsel %vm543, %v392, 0
      %v715 = vsel %vm543, %v393, 0
      %v717 = vsel %vm543, %v394, 0
      %719 = vmatpush.bf16.msra.mxu0 0
      %720 = vmatpush.bf16.msra.mxu0 0
      %721 = vmatpush.bf16.msra.mxu0 0
      %722 = vmatpush.bf16.msra.mxu0 0
      %723 = vmatpush.bf16.msra.mxu0 0
      %724 = vmatpush.bf16.msra.mxu0 0
      %725 = vmatpush.bf16.msra.mxu0 0
      %726 = vmatpush.bf16.msra.mxu0 %v685
      %727 = vmatmul.bf16.gmra.mxu0 %v687
      %v728 = vpop.f32.mrf.mxu0
      %v729 = vadd.f32 %v602, %v728
      %v730 = vpop.f32.mrf.mxu0
      %v731 = vadd.f32 %v604, %v730
      %732 = vmatmul.bf16.gmra.mxu0 %v689
      %v733 = vpop.f32.mrf.mxu0
      %v734 = vadd.f32 %v607, %v733
      %v735 = vpop.f32.mrf.mxu0
      %v736 = vadd.f32 %v609, %v735
      %737 = vmatmul.bf16.gmra.mxu0 %v691
      %v738 = vpop.f32.mrf.mxu0
      %v739 = vadd.f32 %v612, %v738
      %v740 = vpop.f32.mrf.mxu0
      %v741 = vadd.f32 %v614, %v740
      %742 = vmatmul.bf16.gmra.mxu0 %v693
      %v743 = vpop.f32.mrf.mxu0
      %v744 = vadd.f32 %v617, %v743
      %v745 = vpop.f32.mrf.mxu0
      %v746 = vadd.f32 %v619, %v745
      %747 = vmatmul.bf16.gmra.mxu0 %v695
      %v748 = vpop.f32.mrf.mxu0
      %v749 = vadd.f32 %v622, %v748
      %v750 = vpop.f32.mrf.mxu0
      %v751 = vadd.f32 %v624, %v750
      %752 = vmatmul.bf16.gmra.mxu0 %v697
      %v753 = vpop.f32.mrf.mxu0
      %v754 = vadd.f32 %v627, %v753
      %v755 = vpop.f32.mrf.mxu0
      %v756 = vadd.f32 %v629, %v755
      %757 = vmatmul.bf16.gmra.mxu0 %v699
      %v758 = vpop.f32.mrf.mxu0
      %v759 = vadd.f32 %v632, %v758
      %v760 = vpop.f32.mrf.mxu0
      %v761 = vadd.f32 %v634, %v760
      %762 = vmatmul.bf16.gmra.mxu0 %v701
      %v763 = vpop.f32.mrf.mxu0
      %v764 = vadd.f32 %v637, %v763
      %v765 = vpop.f32.mrf.mxu0
      %v766 = vadd.f32 %v639, %v765
      %767 = vmatmul.bf16.gmra.mxu0 %v703
      %v768 = vpop.f32.mrf.mxu0
      %v769 = vadd.f32 %v642, %v768
      %v770 = vpop.f32.mrf.mxu0
      %v771 = vadd.f32 %v644, %v770
      %772 = vmatmul.bf16.gmra.mxu0 %v705
      %v773 = vpop.f32.mrf.mxu0
      %v774 = vadd.f32 %v647, %v773
      %v775 = vpop.f32.mrf.mxu0
      %v776 = vadd.f32 %v649, %v775
      %777 = vmatmul.bf16.gmra.mxu0 %v707
      %v778 = vpop.f32.mrf.mxu0
      %v779 = vadd.f32 %v652, %v778
      %v780 = vpop.f32.mrf.mxu0
      %v781 = vadd.f32 %v654, %v780
      %782 = vmatmul.bf16.gmra.mxu0 %v709
      %v783 = vpop.f32.mrf.mxu0
      %v784 = vadd.f32 %v657, %v783
      %v785 = vpop.f32.mrf.mxu0
      %v786 = vadd.f32 %v659, %v785
      %787 = vmatmul.bf16.gmra.mxu0 %v711
      %v788 = vpop.f32.mrf.mxu0
      %v789 = vadd.f32 %v662, %v788
      %v790 = vpop.f32.mrf.mxu0
      %v791 = vadd.f32 %v664, %v790
      %792 = vmatmul.bf16.gmra.mxu0 %v713
      %v793 = vpop.f32.mrf.mxu0
      %v794 = vadd.f32 %v667, %v793
      %v795 = vpop.f32.mrf.mxu0
      %v796 = vadd.f32 %v669, %v795
      %797 = vmatmul.bf16.gmra.mxu0 %v715
      %v798 = vpop.f32.mrf.mxu0
      %v799 = vadd.f32 %v672, %v798
      %v800 = vpop.f32.mrf.mxu0
      %v801 = vadd.f32 %v674, %v800
      %802 = vmatmul.bf16.gmra.mxu0 %v717
      %v803 = vpop.f32.mrf.mxu0
      %v804 = vadd.f32 %v677, %v803
      %v805 = vpop.f32.mrf.mxu0
      %v806 = vadd.f32 %v679, %v805
      %807 = vdwg.mxu0
      %v810 = vunpack.c.l.b16 %v400
      %v811 = vunpack.c.l.b16 %v401
      %v812 = vpack.c.b16 %v811, %v810
      %v815 = vsel %vm543, %v395, 0
      %817 = vmatpush.bf16.msra.mxu0 0
      %818 = vmatpush.bf16.msra.mxu0 0
      %819 = vmatpush.bf16.msra.mxu0 0
      %820 = vmatpush.bf16.msra.mxu0 0
      %821 = vmatpush.bf16.msra.mxu0 0
      %822 = vmatpush.bf16.msra.mxu0 0
      %823 = vmatpush.bf16.msra.mxu0 0
      %824 = vmatpush.bf16.msra.mxu0 %v812
      %825 = vmatmul.bf16.gmra.mxu0 %v689
      %v826 = vpop.f32.mrf.mxu0
      %v827 = vadd.f32 0.0, %v826
      %v828 = vpop.f32.mrf.mxu0
      %v829 = vadd.f32 0.0, %v828
      %830 = vmatmul.bf16.gmra.mxu0 %v691
      %v831 = vpop.f32.mrf.mxu0
      %v832 = vadd.f32 0.0, %v831
      %v833 = vpop.f32.mrf.mxu0
      %v834 = vadd.f32 0.0, %v833
      %835 = vmatmul.bf16.gmra.mxu0 %v693
      %v836 = vpop.f32.mrf.mxu0
      %v837 = vadd.f32 0.0, %v836
      %v838 = vpop.f32.mrf.mxu0
      %v839 = vadd.f32 0.0, %v838
      %840 = vmatmul.bf16.gmra.mxu0 %v695
      %v841 = vpop.f32.mrf.mxu0
      %v842 = vadd.f32 0.0, %v841
      %v843 = vpop.f32.mrf.mxu0
      %v844 = vadd.f32 0.0, %v843
      %845 = vmatmul.bf16.gmra.mxu0 %v697
      %v846 = vpop.f32.mrf.mxu0
      %v847 = vadd.f32 0.0, %v846
      %v848 = vpop.f32.mrf.mxu0
      %v849 = vadd.f32 0.0, %v848
      %850 = vmatmul.bf16.gmra.mxu0 %v699
      %v851 = vpop.f32.mrf.mxu0
      %v852 = vadd.f32 0.0, %v851
      %v853 = vpop.f32.mrf.mxu0
      %v854 = vadd.f32 0.0, %v853
      %855 = vmatmul.bf16.gmra.mxu0 %v701
      %v856 = vpop.f32.mrf.mxu0
      %v857 = vadd.f32 0.0, %v856
      %v858 = vpop.f32.mrf.mxu0
      %v859 = vadd.f32 0.0, %v858
      %860 = vmatmul.bf16.gmra.mxu0 %v703
      %v861 = vpop.f32.mrf.mxu0
      %v862 = vadd.f32 0.0, %v861
      %v863 = vpop.f32.mrf.mxu0
      %v864 = vadd.f32 0.0, %v863
      %865 = vmatmul.bf16.gmra.mxu0 %v705
      %v866 = vpop.f32.mrf.mxu0
      %v867 = vadd.f32 0.0, %v866
      %v868 = vpop.f32.mrf.mxu0
      %v869 = vadd.f32 0.0, %v868
      %870 = vmatmul.bf16.gmra.mxu0 %v707
      %v871 = vpop.f32.mrf.mxu0
      %v872 = vadd.f32 0.0, %v871
      %v873 = vpop.f32.mrf.mxu0
      %v874 = vadd.f32 0.0, %v873
      %875 = vmatmul.bf16.gmra.mxu0 %v709
      %v876 = vpop.f32.mrf.mxu0
      %v877 = vadd.f32 0.0, %v876
      %v878 = vpop.f32.mrf.mxu0
      %v879 = vadd.f32 0.0, %v878
      %880 = vmatmul.bf16.gmra.mxu0 %v711
      %v881 = vpop.f32.mrf.mxu0
      %v882 = vadd.f32 0.0, %v881
      %v883 = vpop.f32.mrf.mxu0
      %v884 = vadd.f32 0.0, %v883
      %885 = vmatmul.bf16.gmra.mxu0 %v713
      %v886 = vpop.f32.mrf.mxu0
      %v887 = vadd.f32 0.0, %v886
      %v888 = vpop.f32.mrf.mxu0
      %v889 = vadd.f32 0.0, %v888
      %890 = vmatmul.bf16.gmra.mxu0 %v715
      %v891 = vpop.f32.mrf.mxu0
      %v892 = vadd.f32 0.0, %v891
      %v893 = vpop.f32.mrf.mxu0
      %v894 = vadd.f32 0.0, %v893
      %895 = vmatmul.bf16.gmra.mxu0 %v717
      %v896 = vpop.f32.mrf.mxu0
      %v897 = vadd.f32 0.0, %v896
      %v898 = vpop.f32.mrf.mxu0
      %v899 = vadd.f32 0.0, %v898
      %900 = vmatmul.bf16.gmra.mxu0 %v815
      %v901 = vpop.f32.mrf.mxu0
      %v902 = vadd.f32 0.0, %v901
      %v903 = vpop.f32.mrf.mxu0
      %v904 = vadd.f32 0.0, %v903
      %905 = vdwg.mxu0
      %v906 = vadd.f32 %v729, %v827
      %v907 = vadd.f32 %v731, %v829
      %v908 = vadd.f32 %v734, %v832
      %v909 = vadd.f32 %v736, %v834
      %v910 = vadd.f32 %v739, %v837
      %v911 = vadd.f32 %v741, %v839
      %v912 = vadd.f32 %v744, %v842
      %v913 = vadd.f32 %v746, %v844
      %v914 = vadd.f32 %v749, %v847
      %v915 = vadd.f32 %v751, %v849
      %v916 = vadd.f32 %v754, %v852
      %v917 = vadd.f32 %v756, %v854
      %v918 = vadd.f32 %v759, %v857
      %v919 = vadd.f32 %v761, %v859
      %v920 = vadd.f32 %v764, %v862
      %v921 = vadd.f32 %v766, %v864
      %v922 = vadd.f32 %v769, %v867
      %v923 = vadd.f32 %v771, %v869
      %v924 = vadd.f32 %v774, %v872
      %v925 = vadd.f32 %v776, %v874
      %v926 = vadd.f32 %v779, %v877
      %v927 = vadd.f32 %v781, %v879
      %v928 = vadd.f32 %v784, %v882
      %v929 = vadd.f32 %v786, %v884
      %v930 = vadd.f32 %v789, %v887
      %v931 = vadd.f32 %v791, %v889
      %v932 = vadd.f32 %v794, %v892
      %v933 = vadd.f32 %v796, %v894
      %v934 = vadd.f32 %v799, %v897
      %v935 = vadd.f32 %v801, %v899
      %v936 = vadd.f32 %v804, %v902
      %v937 = vadd.f32 %v806, %v904
      %v938 = vshrl.u32 %v395, 16
      %v940 = vshll.u32 %v395, 16
      %v942 = vrot.slane %v940, 1
      %v943 = vor.u32 %v938, %v942
      %v944 = vsel %vm404, %v943, %v415
      %v947 = vunpack.c.l.b16 %v402
      %v948 = vunpack.c.l.b16 %v403
      %v949 = vpack.c.b16 %v948, %v947
      %v952 = vsel %vm543, %v944, 0
      %954 = vmatpush.bf16.msra.mxu0 0
      %955 = vmatpush.bf16.msra.mxu0 0
      %956 = vmatpush.bf16.msra.mxu0 0
      %957 = vmatpush.bf16.msra.mxu0 0
      %958 = vmatpush.bf16.msra.mxu0 0
      %959 = vmatpush.bf16.msra.mxu0 0
      %960 = vmatpush.bf16.msra.mxu0 0
      %961 = vmatpush.bf16.msra.mxu0 %v949
      %962 = vmatmul.bf16.gmra.mxu0 %v548
      %v963 = vpop.f32.mrf.mxu0
      %v964 = vadd.f32 0.0, %v963
      %v965 = vpop.f32.mrf.mxu0
      %v966 = vadd.f32 0.0, %v965
      %967 = vmatmul.bf16.gmra.mxu0 %v551
      %v968 = vpop.f32.mrf.mxu0
      %v969 = vadd.f32 0.0, %v968
      %v970 = vpop.f32.mrf.mxu0
      %v971 = vadd.f32 0.0, %v970
      %972 = vmatmul.bf16.gmra.mxu0 %v554
      %v973 = vpop.f32.mrf.mxu0
      %v974 = vadd.f32 0.0, %v973
      %v975 = vpop.f32.mrf.mxu0
      %v976 = vadd.f32 0.0, %v975
      %977 = vmatmul.bf16.gmra.mxu0 %v557
      %v978 = vpop.f32.mrf.mxu0
      %v979 = vadd.f32 0.0, %v978
      %v980 = vpop.f32.mrf.mxu0
      %v981 = vadd.f32 0.0, %v980
      %982 = vmatmul.bf16.gmra.mxu0 %v560
      %v983 = vpop.f32.mrf.mxu0
      %v984 = vadd.f32 0.0, %v983
      %v985 = vpop.f32.mrf.mxu0
      %v986 = vadd.f32 0.0, %v985
      %987 = vmatmul.bf16.gmra.mxu0 %v563
      %v988 = vpop.f32.mrf.mxu0
      %v989 = vadd.f32 0.0, %v988
      %v990 = vpop.f32.mrf.mxu0
      %v991 = vadd.f32 0.0, %v990
      %992 = vmatmul.bf16.gmra.mxu0 %v566
      %v993 = vpop.f32.mrf.mxu0
      %v994 = vadd.f32 0.0, %v993
      %v995 = vpop.f32.mrf.mxu0
      %v996 = vadd.f32 0.0, %v995
      %997 = vmatmul.bf16.gmra.mxu0 %v569
      %v998 = vpop.f32.mrf.mxu0
      %v999 = vadd.f32 0.0, %v998
      %v1000 = vpop.f32.mrf.mxu0
      %v1001 = vadd.f32 0.0, %v1000
      %1002 = vmatmul.bf16.gmra.mxu0 %v572
      %v1003 = vpop.f32.mrf.mxu0
      %v1004 = vadd.f32 0.0, %v1003
      %v1005 = vpop.f32.mrf.mxu0
      %v1006 = vadd.f32 0.0, %v1005
      %1007 = vmatmul.bf16.gmra.mxu0 %v575
      %v1008 = vpop.f32.mrf.mxu0
      %v1009 = vadd.f32 0.0, %v1008
      %v1010 = vpop.f32.mrf.mxu0
      %v1011 = vadd.f32 0.0, %v1010
      %1012 = vmatmul.bf16.gmra.mxu0 %v578
      %v1013 = vpop.f32.mrf.mxu0
      %v1014 = vadd.f32 0.0, %v1013
      %v1015 = vpop.f32.mrf.mxu0
      %v1016 = vadd.f32 0.0, %v1015
      %1017 = vmatmul.bf16.gmra.mxu0 %v581
      %v1018 = vpop.f32.mrf.mxu0
      %v1019 = vadd.f32 0.0, %v1018
      %v1020 = vpop.f32.mrf.mxu0
      %v1021 = vadd.f32 0.0, %v1020
      %1022 = vmatmul.bf16.gmra.mxu0 %v584
      %v1023 = vpop.f32.mrf.mxu0
      %v1024 = vadd.f32 0.0, %v1023
      %v1025 = vpop.f32.mrf.mxu0
      %v1026 = vadd.f32 0.0, %v1025
      %1027 = vmatmul.bf16.gmra.mxu0 %v587
      %v1028 = vpop.f32.mrf.mxu0
      %v1029 = vadd.f32 0.0, %v1028
      %v1030 = vpop.f32.mrf.mxu0
      %v1031 = vadd.f32 0.0, %v1030
      %1032 = vmatmul.bf16.gmra.mxu0 %v590
      %v1033 = vpop.f32.mrf.mxu0
      %v1034 = vadd.f32 0.0, %v1033
      %v1035 = vpop.f32.mrf.mxu0
      %v1036 = vadd.f32 0.0, %v1035
      %1037 = vmatmul.bf16.gmra.mxu0 %v952
      %v1038 = vpop.f32.mrf.mxu0
      %v1039 = vadd.f32 0.0, %v1038
      %v1040 = vpop.f32.mrf.mxu0
      %v1041 = vadd.f32 0.0, %v1040
      %1042 = vdwg.mxu0
      %v1043 = vadd.f32 %v906, %v964
      %v1044 = vadd.f32 %v907, %v966
      %v1045 = vadd.f32 %v908, %v969
      %v1046 = vadd.f32 %v909, %v971
      %v1047 = vadd.f32 %v910, %v974
      %v1048 = vadd.f32 %v911, %v976
      %v1049 = vadd.f32 %v912, %v979
      %v1050 = vadd.f32 %v913, %v981
      %v1051 = vadd.f32 %v914, %v984
      %v1052 = vadd.f32 %v915, %v986
      %v1053 = vadd.f32 %v916, %v989
      %v1054 = vadd.f32 %v917, %v991
      %v1055 = vadd.f32 %v918, %v994
      %v1056 = vadd.f32 %v919, %v996
      %v1057 = vadd.f32 %v920, %v999
      %v1058 = vadd.f32 %v921, %v1001
      %v1059 = vadd.f32 %v922, %v1004
      %v1060 = vadd.f32 %v923, %v1006
      %v1061 = vadd.f32 %v924, %v1009
      %v1062 = vadd.f32 %v925, %v1011
      %v1063 = vadd.f32 %v926, %v1014
      %v1064 = vadd.f32 %v927, %v1016
      %v1065 = vadd.f32 %v928, %v1019
      %v1066 = vadd.f32 %v929, %v1021
      %v1067 = vadd.f32 %v930, %v1024
      %v1068 = vadd.f32 %v931, %v1026
      %v1069 = vadd.f32 %v932, %v1029
      %v1070 = vadd.f32 %v933, %v1031
      %v1071 = vadd.f32 %v934, %v1034
      %v1072 = vadd.f32 %v935, %v1036
      %v1073 = vadd.f32 %v936, %v1039
      %v1074 = vadd.f32 %v937, %v1041
      %vm1075 = vcmask 261120
      %v1076 = vsel %vm1075, %v1043, 0.0
      %v1077 = vsel %vm1075, %v1044, 0.0
      %v1078 = vadd.f32 %v1076, %v1077
      %v1079 = vsel %vm1075, %v1045, 0.0
      %v1080 = vadd.f32 %v1078, %v1079
      %v1081 = vsel %vm1075, %v1046, 0.0
      %v1082 = vadd.f32 %v1080, %v1081
      %v1083 = vsel %vm1075, %v1047, 0.0
      %v1084 = vadd.f32 %v1082, %v1083
      %v1085 = vsel %vm1075, %v1048, 0.0
      %v1086 = vadd.f32 %v1084, %v1085
      %v1087 = vsel %vm1075, %v1049, 0.0
      %v1088 = vadd.f32 %v1086, %v1087
      %v1089 = vsel %vm1075, %v1050, 0.0
      %v1090 = vadd.f32 %v1088, %v1089
      %v1091 = vsel %vm1075, %v1051, 0.0
      %v1092 = vadd.f32 %v1090, %v1091
      %v1093 = vsel %vm1075, %v1052, 0.0
      %v1094 = vadd.f32 %v1092, %v1093
      %v1095 = vsel %vm1075, %v1053, 0.0
      %v1096 = vadd.f32 %v1094, %v1095
      %v1097 = vsel %vm1075, %v1054, 0.0
      %v1098 = vadd.f32 %v1096, %v1097
      %v1099 = vsel %vm1075, %v1055, 0.0
      %v1100 = vadd.f32 %v1098, %v1099
      %v1101 = vsel %vm1075, %v1056, 0.0
      %v1102 = vadd.f32 %v1100, %v1101
      %v1103 = vsel %vm1075, %v1057, 0.0
      %v1104 = vadd.f32 %v1102, %v1103
      %v1105 = vsel %vm1075, %v1058, 0.0
      %v1106 = vadd.f32 %v1104, %v1105
      %v1107 = vsel %vm1075, %v1059, 0.0
      %v1108 = vadd.f32 %v1106, %v1107
      %v1109 = vsel %vm1075, %v1060, 0.0
      %v1110 = vadd.f32 %v1108, %v1109
      %v1111 = vsel %vm1075, %v1061, 0.0
      %v1112 = vadd.f32 %v1110, %v1111
      %v1113 = vsel %vm1075, %v1062, 0.0
      %v1114 = vadd.f32 %v1112, %v1113
      %v1115 = vsel %vm1075, %v1063, 0.0
      %v1116 = vadd.f32 %v1114, %v1115
      %v1117 = vsel %vm1075, %v1064, 0.0
      %v1118 = vadd.f32 %v1116, %v1117
      %v1119 = vsel %vm1075, %v1065, 0.0
      %v1120 = vadd.f32 %v1118, %v1119
      %v1121 = vsel %vm1075, %v1066, 0.0
      %v1122 = vadd.f32 %v1120, %v1121
      %v1123 = vsel %vm1075, %v1067, 0.0
      %v1124 = vadd.f32 %v1122, %v1123
      %v1125 = vsel %vm1075, %v1068, 0.0
      %v1126 = vadd.f32 %v1124, %v1125
      %v1127 = vsel %vm1075, %v1069, 0.0
      %v1128 = vadd.f32 %v1126, %v1127
      %v1129 = vsel %vm1075, %v1070, 0.0
      %v1130 = vadd.f32 %v1128, %v1129
      %v1131 = vsel %vm1075, %v1071, 0.0
      %v1132 = vadd.f32 %v1130, %v1131
      %v1133 = vsel %vm1075, %v1072, 0.0
      %v1134 = vadd.f32 %v1132, %v1133
      %v1135 = vsel %vm1075, %v1073, 0.0
      %v1136 = vadd.f32 %v1134, %v1135
      %v1137 = vsel %vm1075, %v1074, 0.0
      %v1138 = vadd.f32 %v1136, %v1137
      %v1139 = vrot.slane %v1138, 4
      %v1140 = vadd.f32 %v1138, %v1139
      %v1141 = vrot.slane %v1140, 2
      %v1142 = vadd.f32 %v1140, %v1141
      %v1143 = vrot.slane %v1142, 1
      %v1144 = vadd.f32 %v1142, %v1143
      %v1145 = vrcp.pop 256.0
      %v1146 = vmul.f32 256.0, %v1145
      %v1147 = vsub.f32 1.0, %v1146
      %v1148 = vmul.f32 %v1145, %v1147
      %v1149 = vadd.f32 %v1145, %v1148
      %vm1150 = vweird.f32 %v1145
      %v1151 = vsel %vm1150, %v1145, %v1149
      %v1152 = vmul.f32 %v1144, %v1151
      %v1153 = vsub.f32 %v1043, %v1152
      %v1154 = vsub.f32 %v1044, %v1152
      %v1155 = vsub.f32 %v1045, %v1152
      %v1156 = vsub.f32 %v1046, %v1152
      %v1157 = vsub.f32 %v1047, %v1152
      %v1158 = vsub.f32 %v1048, %v1152
      %v1159 = vsub.f32 %v1049, %v1152
      %v1160 = vsub.f32 %v1050, %v1152
      %v1161 = vsub.f32 %v1051, %v1152
      %v1162 = vsub.f32 %v1052, %v1152
      %v1163 = vsub.f32 %v1053, %v1152
      %v1164 = vsub.f32 %v1054, %v1152
      %v1165 = vsub.f32 %v1055, %v1152
      %v1166 = vsub.f32 %v1056, %v1152
      %v1167 = vsub.f32 %v1057, %v1152
      %v1168 = vsub.f32 %v1058, %v1152
      %v1169 = vsub.f32 %v1059, %v1152
      %v1170 = vsub.f32 %v1060, %v1152
      %v1171 = vsub.f32 %v1061, %v1152
      %v1172 = vsub.f32 %v1062, %v1152
      %v1173 = vsub.f32 %v1063, %v1152
      %v1174 = vsub.f32 %v1064, %v1152
      %v1175 = vsub.f32 %v1065, %v1152
      %v1176 = vsub.f32 %v1066, %v1152
      %v1177 = vsub.f32 %v1067, %v1152
      %v1178 = vsub.f32 %v1068, %v1152
      %v1179 = vsub.f32 %v1069, %v1152
      %v1180 = vsub.f32 %v1070, %v1152
      %v1181 = vsub.f32 %v1071, %v1152
      %v1182 = vsub.f32 %v1072, %v1152
      %v1183 = vsub.f32 %v1073, %v1152
      %v1184 = vsub.f32 %v1074, %v1152
      %v1185 = vmul.f32 %v1153, %v1153
      %v1186 = vmul.f32 %v1154, %v1154
      %v1187 = vmul.f32 %v1155, %v1155
      %v1188 = vmul.f32 %v1156, %v1156
      %v1189 = vmul.f32 %v1157, %v1157
      %v1190 = vmul.f32 %v1158, %v1158
      %v1191 = vmul.f32 %v1159, %v1159
      %v1192 = vmul.f32 %v1160, %v1160
      %v1193 = vmul.f32 %v1161, %v1161
      %v1194 = vmul.f32 %v1162, %v1162
      %v1195 = vmul.f32 %v1163, %v1163
      %v1196 = vmul.f32 %v1164, %v1164
      %v1197 = vmul.f32 %v1165, %v1165
      %v1198 = vmul.f32 %v1166, %v1166
      %v1199 = vmul.f32 %v1167, %v1167
      %v1200 = vmul.f32 %v1168, %v1168
      %v1201 = vmul.f32 %v1169, %v1169
      %v1202 = vmul.f32 %v1170, %v1170
      %v1203 = vmul.f32 %v1171, %v1171
      %v1204 = vmul.f32 %v1172, %v1172
      %v1205 = vmul.f32 %v1173, %v1173
      %v1206 = vmul.f32 %v1174, %v1174
      %v1207 = vmul.f32 %v1175, %v1175
      %v1208 = vmul.f32 %v1176, %v1176
      %v1209 = vmul.f32 %v1177, %v1177
      %v1210 = vmul.f32 %v1178, %v1178
      %v1211 = vmul.f32 %v1179, %v1179
      %v1212 = vmul.f32 %v1180, %v1180
      %v1213 = vmul.f32 %v1181, %v1181
      %v1214 = vmul.f32 %v1182, %v1182
      %v1215 = vmul.f32 %v1183, %v1183
      %v1216 = vmul.f32 %v1184, %v1184
      %v1217 = vsel %vm1075, %v1185, 0.0
      %v1218 = vsel %vm1075, %v1186, 0.0
      %v1219 = vadd.f32 %v1217, %v1218
      %v1220 = vsel %vm1075, %v1187, 0.0
      %v1221 = vadd.f32 %v1219, %v1220
      %v1222 = vsel %vm1075, %v1188, 0.0
      %v1223 = vadd.f32 %v1221, %v1222
      %v1224 = vsel %vm1075, %v1189, 0.0
      %v1225 = vadd.f32 %v1223, %v1224
      %v1226 = vsel %vm1075, %v1190, 0.0
      %v1227 = vadd.f32 %v1225, %v1226
      %v1228 = vsel %vm1075, %v1191, 0.0
      %v1229 = vadd.f32 %v1227, %v1228
      %v1230 = vsel %vm1075, %v1192, 0.0
      %v1231 = vadd.f32 %v1229, %v1230
      %v1232 = vsel %vm1075, %v1193, 0.0
      %v1233 = vadd.f32 %v1231, %v1232
      %v1234 = vsel %vm1075, %v1194, 0.0
      %v1235 = vadd.f32 %v1233, %v1234
      %v1236 = vsel %vm1075, %v1195, 0.0
      %v1237 = vadd.f32 %v1235, %v1236
      %v1238 = vsel %vm1075, %v1196, 0.0
      %v1239 = vadd.f32 %v1237, %v1238
      %v1240 = vsel %vm1075, %v1197, 0.0
      %v1241 = vadd.f32 %v1239, %v1240
      %v1242 = vsel %vm1075, %v1198, 0.0
      %v1243 = vadd.f32 %v1241, %v1242
      %v1244 = vsel %vm1075, %v1199, 0.0
      %v1245 = vadd.f32 %v1243, %v1244
      %v1246 = vsel %vm1075, %v1200, 0.0
      %v1247 = vadd.f32 %v1245, %v1246
      %v1248 = vsel %vm1075, %v1201, 0.0
      %v1249 = vadd.f32 %v1247, %v1248
      %v1250 = vsel %vm1075, %v1202, 0.0
      %v1251 = vadd.f32 %v1249, %v1250
      %v1252 = vsel %vm1075, %v1203, 0.0
      %v1253 = vadd.f32 %v1251, %v1252
      %v1254 = vsel %vm1075, %v1204, 0.0
      %v1255 = vadd.f32 %v1253, %v1254
      %v1256 = vsel %vm1075, %v1205, 0.0
      %v1257 = vadd.f32 %v1255, %v1256
      %v1258 = vsel %vm1075, %v1206, 0.0
      %v1259 = vadd.f32 %v1257, %v1258
      %v1260 = vsel %vm1075, %v1207, 0.0
      %v1261 = vadd.f32 %v1259, %v1260
      %v1262 = vsel %vm1075, %v1208, 0.0
      %v1263 = vadd.f32 %v1261, %v1262
      %v1264 = vsel %vm1075, %v1209, 0.0
      %v1265 = vadd.f32 %v1263, %v1264
      %v1266 = vsel %vm1075, %v1210, 0.0
      %v1267 = vadd.f32 %v1265, %v1266
      %v1268 = vsel %vm1075, %v1211, 0.0
      %v1269 = vadd.f32 %v1267, %v1268
      %v1270 = vsel %vm1075, %v1212, 0.0
      %v1271 = vadd.f32 %v1269, %v1270
      %v1272 = vsel %vm1075, %v1213, 0.0
      %v1273 = vadd.f32 %v1271, %v1272
      %v1274 = vsel %vm1075, %v1214, 0.0
      %v1275 = vadd.f32 %v1273, %v1274
      %v1276 = vsel %vm1075, %v1215, 0.0
      %v1277 = vadd.f32 %v1275, %v1276
      %v1278 = vsel %vm1075, %v1216, 0.0
      %v1279 = vadd.f32 %v1277, %v1278
      %v1280 = vrot.slane %v1279, 4
      %v1281 = vadd.f32 %v1279, %v1280
      %v1282 = vrot.slane %v1281, 2
      %v1283 = vadd.f32 %v1281, %v1282
      %v1284 = vrot.slane %v1283, 1
      %v1285 = vadd.f32 %v1283, %v1284
      %vm1286 = vcmask 253952
      %1287 = vst.msk [vmem:[%s269] sm:$0x1] %vm1286, %v1152
      %1288 = vst.msk [vmem:[%s269 + $0x1] sm:$0x1] %vm1286, %v1285
      %p1289 = scmp.lt.s32.totalorder %s18, 1
      %s1290 = scalar_select %p1289, %s18, 1
      %p1291 = scmp.lt.s32.totalorder %s19, 0
      %s1292 = scalar_select %p1291, %s19, 0
      %s1293 = sadd.s32 %s1292, %s1290
      %s1294 = smul.addr %s1293, 2
      %s1295 = scalar_lea.vmem %s3, %s1294
      // Predicated region
      $region33: #{unet_decoder_forward.4} parent=31 // pred_check
        %p1296 = pneg %p131
      $region34: #{unet_decoder_forward.4} parent=31 // pred_check_branch
        %1298 = sbr.rel (%p1296) target = $region36
      $region35: #{unet_decoder_forward.4} parent=31 // pred_region
        _
      $region36: #{unet_decoder_forward.4} parent=31 // pred_fallthru
        _
    $region32: #{unet_decoder_forward.4} parent=5 // pred_fallthru
      _
    %p1299 = scmp.le.s32.totalorder 2, %s9
    // Predicated region
    $region37: #{unet_decoder_forward.4} parent=5 // pred_check
      %p1300 = pneg %p1299
    $region38: #{unet_decoder_forward.4} parent=5 // pred_check_branch
      %1302 = sbr.rel (%p1300) target = $region40
    $region39: #{unet_decoder_forward.4} parent=5 // pred_region
      %s1303 = ssub.s32 %s9, 2
      // Predicated region
      $region41: #{unet_decoder_forward.4} parent=39 // pred_check
        %p1304 = pneg %p137
      $region42: #{unet_decoder_forward.4} parent=39 // pred_check_branch
        %1306 = sbr.rel (%p1304) target = $region44
      $region43: #{unet_decoder_forward.4} parent=39 // pred_region
        %p1307 = scmp.lt.s32.totalorder %s20, 1
        %s1308 = scalar_select %p1307, %s20, 1
        %p1309 = scmp.lt.s32.totalorder %s21, 0
        %s1310 = scalar_select %p1309, %s21, 0
        %s1311 = sadd.s32 %s1310, %s1308
        %s1312 = smul.addr %s1311, 2
        %s1313 = scalar_lea.vmem %s3, %s1312
      $region44: #{unet_decoder_forward.4} parent=39 // pred_fallthru
        _
    $region40: #{unet_decoder_forward.4} parent=5 // pred_fallthru
      _
  $region6: #{unet_decoder_forward.4} parent=0 // loop_footer
    %s13 = sadd.s32 1, %s9
  $region7: #{unet_decoder_forward.4} parent=0 // loop_footer_branch
    %8 = sbr.rel target = $region3
  $region8: #{unet_decoder_forward.4} parent=0 // loop_exit
    _

// kernel: squeeze.43
$region0: #{squeeze.43}
  %s0 = inlined_call_operand.vmem [shape: f32[2,16], index: 0, kind: input, shape index: {}]
  %s1 = inlined_call_operand.vmem [shape: f32[8,4], index: 1, kind: output, shape index: {}]
  $region1: #{squeeze.43} parent=0
    #allocation0 [shape = 'u8[4096]{0}', space=vmem, size = 0x1000, scoped, tag = 'scoped mem for input reshape']
    %s3 = ssub.s32 4, 1
    %v4 = vld [vmem:[%s0] sm:%s3]
    %5 = vst [vmem:[#allocation0] sm:%s3] %v4
    %v6 = vld [vmem:[#allocation0] sm:$0x3]
    %vm7 = vcmask 31744
    %8 = vst.msk [vmem:[%s1] ss:$4 sm:$0x3] %vm7, %v6
    %v9 = vld [vmem:[#allocation0] sm:$0x3]
    %10 = vrot.lane.b32.xlu0 %v9, 124
    %v11 = vpop.permute.xlu0 %10
    %vm12 = vcmask 31744
    %s13 = scalar_lea.vmem %s1, 1
    %14 = vst.msk [vmem:[%s13] ss:$4 sm:$0x3] %vm12, %v11
    %v15 = vld [vmem:[#allocation0] sm:$0x3]
    %16 = vrot.lane.b32.xlu0 %v15, 120
    %v17 = vpop.permute.xlu0 %16
    %vm18 = vcmask 31744
    %s19 = scalar_lea.vmem %s1, 2
    %20 = vst.msk [vmem:[%s19] ss:$4 sm:$0x3] %vm18, %v17
    %v21 = vld [vmem:[#allocation0] sm:$0x3]
    %22 = vrot.lane.b32.xlu0 %v21, 116
    %v23 = vpop.permute.xlu0 %22
    %vm24 = vcmask 31744
    %s25 = scalar_lea.vmem %s1, 3
    %26 = vst.msk [vmem:[%s25] ss:$4 sm:$0x3] %vm24, %v23

// kernel: unet_decoder_forward.5
$region0: #{unet_decoder_forward.5}
  #allocation0 [shape = 'u32[]', space=smem, size = 0x4, offset = 0x4, fixed_abs, tag = 'smem constant byte address 0x4 - core index']
  #allocation1 [shape = 'u32[72,128]{1,0:T(1,128)}', space=vmem, size = 0x9000, scoped, tag = 'internal scratch']
  %s0 = inlined_call_operand.vmem [shape: bf16[2,16,16,16], index: 0, kind: input, shape index: {}, may-alias: {0,1}]
  %s1 = inlined_call_operand.vmem [shape: bf16[2,16,16,16], index: 1, kind: input, shape index: {}, may-alias: {0,1}]
  %s2 = inlined_call_operand.vmem [shape: bf16[64,32], index: 2, kind: input, shape index: {}]
  %s3 = inlined_call_operand.vmem [shape: f32[1,32], index: 3, kind: input, shape index: {}]
  %s4 = inlined_call_operand.vmem [shape: f32[1,32], index: 4, kind: input, shape index: {}]
  %s5 = inlined_call_operand.vmem [shape: bf16[2,16,2,16,16], index: 5, kind: output, shape index: {}]
  %s6 = sld [smem:[#allocation0]]
  $region53: #{unet_decoder_forward.5} parent=0
    _
  %s8 = ssub.s32 1, %s6
  %s9 = scalar_select 0, %s8, %s6
  loop: start=0, step=1, limit=4
  $region2: #{unet_decoder_forward.5} parent=0 // loop_pre_header
    _
  $region3: #{unet_decoder_forward.5} parent=0 // loop_header
    %s11 = sphi 0, %s15
    %p12 = scmp.ge.s32.totalorder %s11, 4
    %s18 = sphi 0, %s30
    %s19 = sphi 0, %s26
    %s20 = sphi 0, %s18
    %s21 = sphi 0, %s19
    %s22 = sphi 0, %s20
    %s23 = sphi 0, %s21
    %s35 = sphi 0, %s37
    %s38 = sphi 0, %s35
    %s39 = sphi 0, %s38
    %s55 = sphi 0, %s39
    %s71 = sphi 0, %s73
    %s74 = sphi 0, %s71
    %s75 = sphi 0, %s74
    %s91 = sphi 0, %s75
    %s95 = sphi 0, %s95
    %s97 = sphi 0, %s95
    %s98 = sphi 0, %s97
    %s112 = sphi 0, %s98
    %s116 = sphi 0, %s116
    %s118 = sphi 0, %s116
    %s119 = sphi 0, %s118
    %s133 = sphi 0, %s119
    %s137 = sphi 0, %s137
    %s139 = sphi 0, %s137
    %s140 = sphi 0, %s139
    %s154 = sphi 0, %s140
    %s162 = sphi 0, %s164
    %s165 = sphi 0, %s162
    %s166 = sphi 0, %s165
    %s182 = sphi 0, %s166
  $region4: #{unet_decoder_forward.5} parent=0 // loop_header_branch
    %14 = sbr.rel (%p12) target = $region8
  $region5: #{unet_decoder_forward.5} parent=0 // loop_body
    %s16 = ssub.s32 %s11, 1
    %s17 = ssub.s32 %s11, 2
    %s24 = sadd.s32 1, %s19
    %p25 = scmp.ge.s32.totalorder %s24, 1
    %s26 = scalar_select %p25, 0, %s24
    %s27 = sadd.s32 1, %s18
    %s28 = scalar_select %p25, %s27, %s18
    %p29 = scmp.ge.s32.totalorder %s28, 2
    %s30 = scalar_select %p29, 0, %s28
    %s31 = ssub.s32 %s18, %s30
    %s32 = ssub.s32 %s19, %s26
    %s33 = sor.u32 %s31, %s32
    %p34 = scmp.eq.s32.totalorder %s33, 0
    %s36 = sadd.s32 %s35, 1
    %s37 = scalar_select %p34, %s35, %s36
    %p40 = pneg %p34
    %p41 = scmp.eq.s32.totalorder %s11, 1
    %p42 = por %p40, %p41
    %p43 = scmp.ne.s32.totalorder %s35, %s38
    %p44 = scmp.eq.s32.totalorder %s11, 0
    %p45 = por %p43, %p44
    %p46 = scmp.ne.s32.totalorder %s35, %s38
    %p47 = scmp.eq.s32.totalorder %s16, 1
    %p48 = por %p46, %p47
    %p49 = scmp.ne.s32.totalorder %s38, %s39
    %p50 = scmp.eq.s32.totalorder %s16, 0
    %p51 = por %p49, %p50
    %p52 = scmp.ne.s32.totalorder %s38, %s39
    %p53 = scmp.eq.s32.totalorder %s17, 1
    %p54 = por %p52, %p53
    %p56 = scmp.ne.s32.totalorder %s39, %s55
    %p57 = scmp.eq.s32.totalorder %s17, 0
    %p58 = por %p56, %p57
    %s59 = sadd.s32 %s19, 1
    %s60 = smul.u32 %s59, 16
    %p61 = scmp.lt.s32.totalorder %s60, 15
    %s62 = scalar_select %p61, %s60, 15
    %s63 = sadd.s32 %s26, 1
    %s64 = smul.u32 %s63, 16
    %p65 = scmp.lt.s32.totalorder %s64, 15
    %s66 = scalar_select %p65, %s64, 15
    %s67 = ssub.s32 %s18, %s30
    %s68 = ssub.s32 %s62, %s66
    %s69 = sor.u32 %s67, %s68
    %p70 = scmp.eq.s32.totalorder %s69, 0
    %s72 = sadd.s32 %s71, 1
    %s73 = scalar_select %p70, %s71, %s72
    %p76 = pneg %p70
    %p77 = scmp.eq.s32.totalorder %s11, 1
    %p78 = por %p76, %p77
    %p79 = scmp.ne.s32.totalorder %s71, %s74
    %p80 = scmp.eq.s32.totalorder %s11, 0
    %p81 = por %p79, %p80
    %p82 = scmp.ne.s32.totalorder %s71, %s74
    %p83 = scmp.eq.s32.totalorder %s16, 1
    %p84 = por %p82, %p83
    %p85 = scmp.ne.s32.totalorder %s74, %s75
    %p86 = scmp.eq.s32.totalorder %s16, 0
    %p87 = por %p85, %p86
    %p88 = scmp.ne.s32.totalorder %s74, %s75
    %p89 = scmp.eq.s32.totalorder %s17, 1
    %p90 = por %p88, %p89
    %p92 = scmp.ne.s32.totalorder %s75, %s91
    %p93 = scmp.eq.s32.totalorder %s17, 0
    %p94 = por %p92, %p93
    %s96 = sadd.s32 %s95, 1
    %p99 = scmp.eq.s32.totalorder %s11, 1
    %p100 = scmp.ne.s32.totalorder %s95, %s97
    %p101 = scmp.eq.s32.totalorder %s11, 0
    %p102 = por %p100, %p101
    %p103 = scmp.ne.s32.totalorder %s95, %s97
    %p104 = scmp.eq.s32.totalorder %s16, 1
    %p105 = por %p103, %p104
    %p106 = scmp.ne.s32.totalorder %s97, %s98
    %p107 = scmp.eq.s32.totalorder %s16, 0
    %p108 = por %p106, %p107
    %p109 = scmp.ne.s32.totalorder %s97, %s98
    %p110 = scmp.eq.s32.totalorder %s17, 1
    %p111 = por %p109, %p110
    %p113 = scmp.ne.s32.totalorder %s98, %s112
    %p114 = scmp.eq.s32.totalorder %s17, 0
    %p115 = por %p113, %p114
    %s117 = sadd.s32 %s116, 1
    %p120 = scmp.eq.s32.totalorder %s11, 1
    %p121 = scmp.ne.s32.totalorder %s116, %s118
    %p122 = scmp.eq.s32.totalorder %s11, 0
    %p123 = por %p121, %p122
    %p124 = scmp.ne.s32.totalorder %s116, %s118
    %p125 = scmp.eq.s32.totalorder %s16, 1
    %p126 = por %p124, %p125
    %p127 = scmp.ne.s32.totalorder %s118, %s119
    %p128 = scmp.eq.s32.totalorder %s16, 0
    %p129 = por %p127, %p128
    %p130 = scmp.ne.s32.totalorder %s118, %s119
    %p131 = scmp.eq.s32.totalorder %s17, 1
    %p132 = por %p130, %p131
    %p134 = scmp.ne.s32.totalorder %s119, %s133
    %p135 = scmp.eq.s32.totalorder %s17, 0
    %p136 = por %p134, %p135
    %s138 = sadd.s32 %s137, 1
    %p141 = scmp.eq.s32.totalorder %s11, 1
    %p142 = scmp.ne.s32.totalorder %s137, %s139
    %p143 = scmp.eq.s32.totalorder %s11, 0
    %p144 = por %p142, %p143
    %p145 = scmp.ne.s32.totalorder %s137, %s139
    %p146 = scmp.eq.s32.totalorder %s16, 1
    %p147 = por %p145, %p146
    %p148 = scmp.ne.s32.totalorder %s139, %s140
    %p149 = scmp.eq.s32.totalorder %s16, 0
    %p150 = por %p148, %p149
    %p151 = scmp.ne.s32.totalorder %s139, %s140
    %p152 = scmp.eq.s32.totalorder %s17, 1
    %p153 = por %p151, %p152
    %p155 = scmp.ne.s32.totalorder %s140, %s154
    %p156 = scmp.eq.s32.totalorder %s17, 0
    %p157 = por %p155, %p156
    %s158 = ssub.s32 %s18, %s30
    %s159 = ssub.s32 %s19, %s26
    %s160 = sor.u32 %s158, %s159
    %p161 = scmp.eq.s32.totalorder %s160, 0
    %s163 = sadd.s32 %s162, 1
    %s164 = scalar_select %p161, %s162, %s163
    %p167 = pneg %p161
    %p168 = scmp.eq.s32.totalorder %s11, 1
    %p169 = por %p167, %p168
    %p170 = scmp.ne.s32.totalorder %s162, %s165
    %p171 = scmp.eq.s32.totalorder %s11, 0
    %p172 = por %p170, %p171
    %p173 = scmp.ne.s32.totalorder %s162, %s165
    %p174 = scmp.eq.s32.totalorder %s16, 1
    %p175 = por %p173, %p174
    %p176 = scmp.ne.s32.totalorder %s165, %s166
    %p177 = scmp.eq.s32.totalorder %s16, 0
    %p178 = por %p176, %p177
    %p179 = scmp.ne.s32.totalorder %s165, %s166
    %p180 = scmp.eq.s32.totalorder %s17, 1
    %p181 = por %p179, %p180
    %p183 = scmp.ne.s32.totalorder %s166, %s182
    %p184 = scmp.eq.s32.totalorder %s17, 0
    %p185 = por %p183, %p184
    %p186 = scmp.le.s32.totalorder 1, %s11
    %p187 = scmp.lt.s32.totalorder %s11, 3
    %p188 = pnand %p186, %p187
    %p189 = pneg %p188
    // Predicated region
    $region9: #{unet_decoder_forward.5} parent=5 // pred_check
      _
    $region10: #{unet_decoder_forward.5} parent=5 // pred_check_branch
      %191 = sbr.rel (%p188) target = $region12
    $region11: #{unet_decoder_forward.5} parent=5 // pred_region
      %s192 = ssub.s32 %s11, 1
      // Predicated region
      $region13: #{unet_decoder_forward.5} parent=11 // pred_check
        %p193 = pneg %p108
      $region14: #{unet_decoder_forward.5} parent=11 // pred_check_branch
        %195 = sbr.rel (%p193) target = $region16
      $region15: #{unet_decoder_forward.5} parent=11 // pred_region
        _
      $region16: #{unet_decoder_forward.5} parent=11 // pred_fallthru
        _
      // Predicated region
      $region17: #{unet_decoder_forward.5} parent=11 // pred_check
        %p196 = pneg %p129
      $region18: #{unet_decoder_forward.5} parent=11 // pred_check_branch
        %198 = sbr.rel (%p196) target = $region20
      $region19: #{unet_decoder_forward.5} parent=11 // pred_region
        _
      $region20: #{unet_decoder_forward.5} parent=11 // pred_fallthru
        _
      // Predicated region
      $region21: #{unet_decoder_forward.5} parent=11 // pred_check
        %p199 = pneg %p150
      $region22: #{unet_decoder_forward.5} parent=11 // pred_check_branch
        %201 = sbr.rel (%p199) target = $region24
      $region23: #{unet_decoder_forward.5} parent=11 // pred_region
        _
      $region24: #{unet_decoder_forward.5} parent=11 // pred_fallthru
        _
    $region12: #{unet_decoder_forward.5} parent=5 // pred_fallthru
      _
    %p202 = scmp.lt.s32.totalorder %s11, 2
    // Predicated region
    $region25: #{unet_decoder_forward.5} parent=5 // pred_check
      %p203 = pneg %p202
    $region26: #{unet_decoder_forward.5} parent=5 // pred_check_branch
      %205 = sbr.rel (%p203) target = $region28
    $region27: #{unet_decoder_forward.5} parent=5 // pred_region
      // Predicated region
      $region29: #{unet_decoder_forward.5} parent=27 // pred_check
        %p206 = pneg %p45
      $region30: #{unet_decoder_forward.5} parent=27 // pred_check_branch
        %208 = sbr.rel (%p206) target = $region32
      $region31: #{unet_decoder_forward.5} parent=27 // pred_region
        %s209 = smul.u32 16, %s19
        %p210 = scmp.lt.s32.totalorder %s18, 1
        %s211 = scalar_select %p210, %s18, 1
        %p212 = scmp.lt.s32.totalorder %s209, 15
        %s213 = scalar_select %p212, %s209, 15
        %s214 = smul.addr %s213, 2
        %s215 = smul.addr %s211, 32
        %s216 = sadd.s32 %s214, %s215
        %s217 = smul.addr %s216, 4
        %s218 = scalar_lea.vmem %s0, %s217
        %s219 = smul.u32 16, %s19
      $region32: #{unet_decoder_forward.5} parent=27 // pred_fallthru
        _
      // Predicated region
      $region33: #{unet_decoder_forward.5} parent=27 // pred_check
        %p220 = pneg %p81
      $region34: #{unet_decoder_forward.5} parent=27 // pred_check_branch
        %222 = sbr.rel (%p220) target = $region36
      $region35: #{unet_decoder_forward.5} parent=27 // pred_region
        %s223 = sadd.s32 %s19, 1
        %s224 = smul.u32 %s223, 16
        %p225 = scmp.lt.s32.totalorder %s224, 15
        %s226 = scalar_select %p225, %s224, 15
        %p227 = scmp.lt.s32.totalorder %s18, 1
        %s228 = scalar_select %p227, %s18, 1
        %p229 = scmp.lt.s32.totalorder %s226, 15
        %s230 = scalar_select %p229, %s226, 15
        %s231 = smul.addr %s230, 2
        %s232 = smul.addr %s228, 32
        %s233 = sadd.s32 %s231, %s232
        %s234 = smul.addr %s233, 4
        %s235 = scalar_lea.vmem %s1, %s234
        %s236 = sadd.s32 %s19, 1
        %s237 = smul.u32 %s236, 16
        %p238 = scmp.lt.s32.totalorder %s237, 15
        %s239 = scalar_select %p238, %s237, 15
      $region36: #{unet_decoder_forward.5} parent=27 // pred_fallthru
        _
    $region28: #{unet_decoder_forward.5} parent=5 // pred_fallthru
      _
    %p240 = scmp.le.s32.totalorder 1, %s11
    %p241 = scmp.lt.s32.totalorder %s11, 3
    %p242 = pnand %p240, %p241
    %p243 = pneg %p242
    // Predicated region
    $region37: #{unet_decoder_forward.5} parent=5 // pred_check
      _
    $region38: #{unet_decoder_forward.5} parent=5 // pred_check_branch
      %245 = sbr.rel (%p242) target = $region40
    $region39: #{unet_decoder_forward.5} parent=5 // pred_region
      %s246 = ssub.s32 %s11, 1
      %s247 = smul.u32 16, %s21
      %p248 = scmp.lt.s32.totalorder %s20, 1
      %s249 = scalar_select %p248, %s20, 1
      %p250 = scmp.lt.s32.totalorder %s247, 15
      %s251 = scalar_select %p250, %s247, 15
      %s252 = smul.addr %s251, 2
      %s253 = smul.addr %s249, 32
      %s254 = sadd.s32 %s252, %s253
      %s255 = smul.addr %s254, 4
      %s256 = scalar_lea.vmem %s0, %s255
      %p257 = pneg %p51
      %p258 = pneg %p48
      %s259 = sadd.s32 %s21, 1
      %s260 = smul.u32 %s259, 16
      %p261 = scmp.lt.s32.totalorder %s260, 15
      %s262 = scalar_select %p261, %s260, 15
      %p263 = scmp.lt.s32.totalorder %s20, 1
      %s264 = scalar_select %p263, %s20, 1
      %p265 = scmp.lt.s32.totalorder %s262, 15
      %s266 = scalar_select %p265, %s262, 15
      %s267 = smul.addr %s266, 2
      %s268 = smul.addr %s264, 32
      %s269 = sadd.s32 %s267, %s268
      %s270 = smul.addr %s269, 4
      %s271 = scalar_lea.vmem %s1, %s270
      %p272 = pneg %p87
      %p273 = pneg %p84
      %p274 = pneg %p108
      %p275 = pneg %p105
      %p276 = pneg %p129
      %p277 = pneg %p126
      %p278 = pneg %p150
      %p279 = pneg %p147
      %p280 = pneg %p178
      %p281 = pneg %p175
      %s282 = smul.u32 16, %s21
      %p283 = scmp.lt.s32.totalorder %s20, 1
      %s284 = scalar_select %p283, %s20, 1
      %p285 = scmp.lt.s32.totalorder %s282, 15
      %s286 = scalar_select %p285, %s282, 15
      %s287 = smul.addr %s286, 4
      %s288 = smul.addr %s284, 64
      %s289 = sadd.s32 %s287, %s288
      %s290 = smul.addr %s289, 4
      %s291 = scalar_lea.vmem %s5, %s290
      %s292 = smul.u32 16, %s21
      %p293 = scmp.lt.s32.totalorder %s20, 1
      %s294 = scalar_select %p293, %s20, 1
      %p295 = scmp.lt.s32.totalorder %s292, 15
      %s296 = scalar_select %p295, %s292, 15
      %s297 = smul.addr %s296, 2
      %s298 = smul.addr %s294, 32
      %s299 = sadd.s32 %s297, %s298
      %s300 = smul.addr %s299, 4
      %s301 = scalar_lea.vmem %s0, %s300
      %s302 = smul.u32 16, %s21
      %s303 = sadd.s32 %s21, 1
      %s304 = smul.u32 %s303, 16
      %p305 = scmp.lt.s32.totalorder %s304, 15
      %s306 = scalar_select %p305, %s304, 15
      %p307 = scmp.lt.s32.totalorder %s20, 1
      %s308 = scalar_select %p307, %s20, 1
      %p309 = scmp.lt.s32.totalorder %s306, 15
      %s310 = scalar_select %p309, %s306, 15
      %s311 = smul.addr %s310, 2
      %s312 = smul.addr %s308, 32
      %s313 = sadd.s32 %s311, %s312
      %s314 = smul.addr %s313, 4
      %s315 = scalar_lea.vmem %s1, %s314
      %s316 = sadd.s32 %s21, 1
      %s317 = smul.u32 %s316, 16
      %p318 = scmp.lt.s32.totalorder %s317, 15
      %s319 = scalar_select %p318, %s317, 15
      %s320 = smul.u32 16, %s21
      %p321 = scmp.lt.s32.totalorder %s20, 1
      %s322 = scalar_select %p321, %s20, 1
      %p323 = scmp.lt.s32.totalorder %s320, 15
      %s324 = scalar_select %p323, %s320, 15
      %s325 = smul.addr %s324, 4
      %s326 = smul.addr %s322, 64
      %s327 = sadd.s32 %s325, %s326
      %s328 = smul.addr %s327, 4
      %s329 = scalar_lea.vmem %s5, %s328
      %s330 = smul.u32 16, %s21
      %p332 = scmp.eq.s32.totalorder %s21, 0
      %v333 = vld [vmem:[%s301] sm:$0xf]
      %v334 = vld [vmem:[%s301 + $0x4] sm:$0xf]
      %v335 = vld [vmem:[%s301 + $0x8] sm:$0xf]
      %v336 = vld [vmem:[%s301 + $0xc] sm:$0xf]
      %v337 = vld [vmem:[%s301 + $0x10] sm:$0xf]
      %v338 = vld [vmem:[%s301 + $0x14] sm:$0xf]
      %v339 = vld [vmem:[%s301 + $0x18] sm:$0xf]
      %v340 = vld [vmem:[%s301 + $0x1c] sm:$0xf]
      %v341 = vld [vmem:[%s301 + $0x20] sm:$0xf]
      %v342 = vld [vmem:[%s301 + $0x24] sm:$0xf]
      %v343 = vld [vmem:[%s301 + $0x28] sm:$0xf]
      %v344 = vld [vmem:[%s301 + $0x2c] sm:$0xf]
      %v345 = vld [vmem:[%s301 + $0x30] sm:$0xf]
      %v346 = vld [vmem:[%s301 + $0x34] sm:$0xf]
      %v347 = vld [vmem:[%s301 + $0x38] sm:$0xf]
      %v348 = vld [vmem:[%s301 + $0x3c] sm:$0xf]
      %v349 = vld [vmem:[%s301 + $0x40] sm:$0xf]
      %v350 = vld [vmem:[%s301 + $0x44] sm:$0xf]
      %v351 = vld [vmem:[%s301 + $0x48] sm:$0xf]
      %v352 = vld [vmem:[%s301 + $0x4c] sm:$0xf]
      %v353 = vld [vmem:[%s301 + $0x50] sm:$0xf]
      %v354 = vld [vmem:[%s301 + $0x54] sm:$0xf]
      %v355 = vld [vmem:[%s301 + $0x58] sm:$0xf]
      %v356 = vld [vmem:[%s301 + $0x5c] sm:$0xf]
      %v357 = vld [vmem:[%s301 + $0x60] sm:$0xf]
      %v358 = vld [vmem:[%s301 + $0x64] sm:$0xf]
      %v359 = vld [vmem:[%s301 + $0x68] sm:$0xf]
      %v360 = vld [vmem:[%s301 + $0x6c] sm:$0xf]
      %v361 = vld [vmem:[%s301 + $0x70] sm:$0xf]
      %v362 = vld [vmem:[%s301 + $0x74] sm:$0xf]
      %v363 = vld [vmem:[%s301 + $0x78] sm:$0xf]
      %v364 = vld [vmem:[%s301 + $0x7c] sm:$0xf]
      %v365 = vld [vmem:[%s315] sm:$0xf]
      %v366 = vld [vmem:[%s315 + $0x4] sm:$0xf]
      %s367 = scalar_select %p332, 1, 0
      %v368 = vstv %s367
      %vm369 = vcmp.eq.s32.totalorder %v368, 1
      %v370 = vsel %vm369, 0, %v365
      %v371 = vsel %vm369, 0, %v366
      %v406 = vunpack.c.l.b16 %v333
      %v407 = vunpack.c.l.b16 %v334
      %v408 = vunpack.c.l.b16 %v335
      %v409 = vunpack.c.l.b16 %v336
      %v410 = vunpack.c.l.b16 %v337
      %v411 = vunpack.c.l.b16 %v338
      %v412 = vunpack.c.l.b16 %v339
      %v413 = vunpack.c.l.b16 %v340
      %v414 = vunpack.c.l.b16 %v341
      %v415 = vunpack.c.l.b16 %v342
      %v416 = vunpack.c.l.b16 %v343
      %v417 = vunpack.c.l.b16 %v344
      %v418 = vunpack.c.l.b16 %v345
      %v419 = vunpack.c.l.b16 %v346
      %v420 = vunpack.c.l.b16 %v347
      %v421 = vunpack.c.l.b16 %v348
      %v422 = vunpack.c.l.b16 %v349
      %v423 = vunpack.c.l.b16 %v350
      %v424 = vunpack.c.l.b16 %v351
      %v425 = vunpack.c.l.b16 %v352
      %v426 = vunpack.c.l.b16 %v353
      %v427 = vunpack.c.l.b16 %v354
      %v428 = vunpack.c.l.b16 %v355
      %v429 = vunpack.c.l.b16 %v356
      %v430 = vunpack.c.l.b16 %v357
      %v431 = vunpack.c.l.b16 %v358
      %v432 = vunpack.c.l.b16 %v359
      %v433 = vunpack.c.l.b16 %v360
      %v434 = vunpack.c.l.b16 %v361
      %v435 = vunpack.c.l.b16 %v362
      %v436 = vunpack.c.l.b16 %v363
      %v437 = vunpack.c.l.b16 %v364
      %v438 = vunpack.c.l.b16 %v370
      %v439 = vunpack.c.l.b16 %v371
      %v440 = vpack.c.b16 %v407, %v406
      %v441 = vpack.c.b16 %v409, %v408
      %v442 = vpack.c.b16 %v411, %v410
      %v443 = vpack.c.b16 %v413, %v412
      %v444 = vpack.c.b16 %v415, %v414
      %v445 = vpack.c.b16 %v417, %v416
      %v446 = vpack.c.b16 %v419, %v418
      %v447 = vpack.c.b16 %v421, %v420
      %v448 = vpack.c.b16 %v423, %v422
      %v449 = vpack.c.b16 %v425, %v424
      %v450 = vpack.c.b16 %v427, %v426
      %v451 = vpack.c.b16 %v429, %v428
      %v452 = vpack.c.b16 %v431, %v430
      %v453 = vpack.c.b16 %v433, %v432
      %v454 = vpack.c.b16 %v435, %v434
      %v455 = vpack.c.b16 %v437, %v436
      %v456 = vpack.c.b16 %v439, %v438
      %v457 = vld [vmem:[%s2] sm:$0xf]
      %v458 = vld [vmem:[%s2 + $0x4] sm:$0xf]
      %v459 = vld [vmem:[%s2 + $0x8] sm:$0xf]
      %v460 = vld [vmem:[%s2 + $0xc] sm:$0xf]
      %v461 = vld [vmem:[%s2 + $0x10] sm:$0xf]
      %v462 = vld [vmem:[%s2 + $0x14] sm:$0xf]
      %v463 = vld [vmem:[%s2 + $0x18] sm:$0xf]
      %v464 = vld [vmem:[%s2 + $0x1c] sm:$0xf]
      %vm465 = vsmask.f32 7424
      %v467 = vshrl.u32 %v440, 16
      %v469 = vshll.u32 %v440, 16
      %v471 = vrot.slane %v469, 1
      %v472 = vor.u32 %v467, %v471
      %v474 = vshll.u32 0, 16
      %v476 = vrot.slane %v474, 1
      %v477 = vsel %vm465, %v472, %v476
      %v479 = vshrl.u32 %v441, 16
      %v481 = vshll.u32 %v441, 16
      %v483 = vrot.slane %v481, 1
      %v484 = vor.u32 %v479, %v483
      %v485 = vsel %vm465, %v484, %v476
      %v487 = vshrl.u32 %v442, 16
      %v489 = vshll.u32 %v442, 16
      %v491 = vrot.slane %v489, 1
      %v492 = vor.u32 %v487, %v491
      %v493 = vsel %vm465, %v492, %v476
      %v495 = vshrl.u32 %v443, 16
      %v497 = vshll.u32 %v443, 16
      %v499 = vrot.slane %v497, 1
      %v500 = vor.u32 %v495, %v499
      %v501 = vsel %vm465, %v500, %v476
      %v503 = vshrl.u32 %v444, 16
      %v505 = vshll.u32 %v444, 16
      %v507 = vrot.slane %v505, 1
      %v508 = vor.u32 %v503, %v507
      %v509 = vsel %vm465, %v508, %v476
      %v511 = vshrl.u32 %v445, 16
      %v513 = vshll.u32 %v445, 16
      %v515 = vrot.slane %v513, 1
      %v516 = vor.u32 %v511, %v515
      %v517 = vsel %vm465, %v516, %v476
      %v519 = vshrl.u32 %v446, 16
      %v521 = vshll.u32 %v446, 16
      %v523 = vrot.slane %v521, 1
      %v524 = vor.u32 %v519, %v523
      %v525 = vsel %vm465, %v524, %v476
      %v527 = vshrl.u32 %v447, 16
      %v529 = vshll.u32 %v447, 16
      %v531 = vrot.slane %v529, 1
      %v532 = vor.u32 %v527, %v531
      %v533 = vsel %vm465, %v532, %v476
      %v535 = vshrl.u32 %v448, 16
      %v537 = vshll.u32 %v448, 16
      %v539 = vrot.slane %v537, 1
      %v540 = vor.u32 %v535, %v539
      %v541 = vsel %vm465, %v540, %v476
      %v543 = vshrl.u32 %v449, 16
      %v545 = vshll.u32 %v449, 16
      %v547 = vrot.slane %v545, 1
      %v548 = vor.u32 %v543, %v547
      %v549 = vsel %vm465, %v548, %v476
      %v551 = vshrl.u32 %v450, 16
      %v553 = vshll.u32 %v450, 16
      %v555 = vrot.slane %v553, 1
      %v556 = vor.u32 %v551, %v555
      %v557 = vsel %vm465, %v556, %v476
      %v559 = vshrl.u32 %v451, 16
      %v561 = vshll.u32 %v451, 16
      %v563 = vrot.slane %v561, 1
      %v564 = vor.u32 %v559, %v563
      %v565 = vsel %vm465, %v564, %v476
      %v567 = vshrl.u32 %v452, 16
      %v569 = vshll.u32 %v452, 16
      %v571 = vrot.slane %v569, 1
      %v572 = vor.u32 %v567, %v571
      %v573 = vsel %vm465, %v572, %v476
      %v575 = vshrl.u32 %v453, 16
      %v577 = vshll.u32 %v453, 16
      %v579 = vrot.slane %v577, 1
      %v580 = vor.u32 %v575, %v579
      %v581 = vsel %vm465, %v580, %v476
      %v583 = vshrl.u32 %v454, 16
      %v585 = vshll.u32 %v454, 16
      %v587 = vrot.slane %v585, 1
      %v588 = vor.u32 %v583, %v587
      %v589 = vsel %vm465, %v588, %v476
      %v591 = vshrl.u32 %v455, 16
      %v593 = vshll.u32 %v455, 16
      %v595 = vrot.slane %v593, 1
      %v596 = vor.u32 %v591, %v595
      %v597 = vsel %vm465, %v596, %v476
      %v600 = vunpack.c.l.b16 %v459
      %v601 = vunpack.c.l.b16 %v460
      %v602 = vpack.c.b16 %v601, %v600
      %vm604 = vcmask 130048
      %v606 = vsel %vm604, %v477, 0
      %v609 = vsel %vm604, %v485, 0
      %v612 = vsel %vm604, %v493, 0
      %v615 = vsel %vm604, %v501, 0
      %v618 = vsel %vm604, %v509, 0
      %v621 = vsel %vm604, %v517, 0
      %v624 = vsel %vm604, %v525, 0
      %v627 = vsel %vm604, %v533, 0
      %v630 = vsel %vm604, %v541, 0
      %v633 = vsel %vm604, %v549, 0
      %v636 = vsel %vm604, %v557, 0
      %v639 = vsel %vm604, %v565, 0
      %v642 = vsel %vm604, %v573, 0
      %v645 = vsel %vm604, %v581, 0
      %v648 = vsel %vm604, %v589, 0
      %v651 = vsel %vm604, %v597, 0
      %653 = vmatpush.bf16.msra.mxu0 0
      %654 = vmatpush.bf16.msra.mxu0 0
      %655 = vmatpush.bf16.msra.mxu0 0
      %656 = vmatpush.bf16.msra.mxu0 0
      %657 = vmatpush.bf16.msra.mxu0 0
      %658 = vmatpush.bf16.msra.mxu0 0
      %659 = vmatpush.bf16.msra.mxu0 0
      %660 = vmatpush.bf16.msra.mxu0 %v602
      %661 = vmatmul.bf16.gmra.mxu0 %v606
      %v662 = vpop.f32.mrf.mxu0
      %v663 = vadd.f32 0.0, %v662
      %v664 = vpop.f32.mrf.mxu0
      %v665 = vadd.f32 0.0, %v664
      %666 = vmatmul.bf16.gmra.mxu0 %v609
      %v667 = vpop.f32.mrf.mxu0
      %v668 = vadd.f32 0.0, %v667
      %v669 = vpop.f32.mrf.mxu0
      %v670 = vadd.f32 0.0, %v669
      %671 = vmatmul.bf16.gmra.mxu0 %v612
      %v672 = vpop.f32.mrf.mxu0
      %v673 = vadd.f32 0.0, %v672
      %v674 = vpop.f32.mrf.mxu0
      %v675 = vadd.f32 0.0, %v674
      %676 = vmatmul.bf16.gmra.mxu0 %v615
      %v677 = vpop.f32.mrf.mxu0
      %v678 = vadd.f32 0.0, %v677
      %v679 = vpop.f32.mrf.mxu0
      %v680 = vadd.f32 0.0, %v679
      %681 = vmatmul.bf16.gmra.mxu0 %v618
      %v682 = vpop.f32.mrf.mxu0
      %v683 = vadd.f32 0.0, %v682
      %v684 = vpop.f32.mrf.mxu0
      %v685 = vadd.f32 0.0, %v684
      %686 = vmatmul.bf16.gmra.mxu0 %v621
      %v687 = vpop.f32.mrf.mxu0
      %v688 = vadd.f32 0.0, %v687
      %v689 = vpop.f32.mrf.mxu0
      %v690 = vadd.f32 0.0, %v689
      %691 = vmatmul.bf16.gmra.mxu0 %v624
      %v692 = vpop.f32.mrf.mxu0
      %v693 = vadd.f32 0.0, %v692
      %v694 = vpop.f32.mrf.mxu0
      %v695 = vadd.f32 0.0, %v694
      %696 = vmatmul.bf16.gmra.mxu0 %v627
      %v697 = vpop.f32.mrf.mxu0
      %v698 = vadd.f32 0.0, %v697
      %v699 = vpop.f32.mrf.mxu0
      %v700 = vadd.f32 0.0, %v699
      %701 = vmatmul.bf16.gmra.mxu0 %v630
      %v702 = vpop.f32.mrf.mxu0
      %v703 = vadd.f32 0.0, %v702
      %v704 = vpop.f32.mrf.mxu0
      %v705 = vadd.f32 0.0, %v704
      %706 = vmatmul.bf16.gmra.mxu0 %v633
      %v707 = vpop.f32.mrf.mxu0
      %v708 = vadd.f32 0.0, %v707
      %v709 = vpop.f32.mrf.mxu0
      %v710 = vadd.f32 0.0, %v709
      %711 = vmatmul.bf16.gmra.mxu0 %v636
      %v712 = vpop.f32.mrf.mxu0
      %v713 = vadd.f32 0.0, %v712
      %v714 = vpop.f32.mrf.mxu0
      %v715 = vadd.f32 0.0, %v714
      %716 = vmatmul.bf16.gmra.mxu0 %v639
      %v717 = vpop.f32.mrf.mxu0
      %v718 = vadd.f32 0.0, %v717
      %v719 = vpop.f32.mrf.mxu0
      %v720 = vadd.f32 0.0, %v719
      %721 = vmatmul.bf16.gmra.mxu0 %v642
      %v722 = vpop.f32.mrf.mxu0
      %v723 = vadd.f32 0.0, %v722
      %v724 = vpop.f32.mrf.mxu0
      %v725 = vadd.f32 0.0, %v724
      %726 = vmatmul.bf16.gmra.mxu0 %v645
      %v727 = vpop.f32.mrf.mxu0
      %v728 = vadd.f32 0.0, %v727
      %v729 = vpop.f32.mrf.mxu0
      %v730 = vadd.f32 0.0, %v729
      %731 = vmatmul.bf16.gmra.mxu0 %v648
      %v732 = vpop.f32.mrf.mxu0
      %v733 = vadd.f32 0.0, %v732
      %v734 = vpop.f32.mrf.mxu0
      %v735 = vadd.f32 0.0, %v734
      %736 = vmatmul.bf16.gmra.mxu0 %v651
      %v737 = vpop.f32.mrf.mxu0
      %v738 = vadd.f32 0.0, %v737
      %v739 = vpop.f32.mrf.mxu0
      %v740 = vadd.f32 0.0, %v739
      %741 = vdwg.mxu0
      %v744 = vunpack.c.l.b16 %v457
      %v745 = vunpack.c.l.b16 %v458
      %v746 = vpack.c.b16 %v745, %v744
      %v748 = vsel %vm604, %v440, 0
      %v750 = vsel %vm604, %v441, 0
      %v752 = vsel %vm604, %v442, 0
      %v754 = vsel %vm604, %v443, 0
      %v756 = vsel %vm604, %v444, 0
      %v758 = vsel %vm604, %v445, 0
      %v760 = vsel %vm604, %v446, 0
      %v762 = vsel %vm604, %v447, 0
      %v764 = vsel %vm604, %v448, 0
      %v766 = vsel %vm604, %v449, 0
      %v768 = vsel %vm604, %v450, 0
      %v770 = vsel %vm604, %v451, 0
      %v772 = vsel %vm604, %v452, 0
      %v774 = vsel %vm604, %v453, 0
      %v776 = vsel %vm604, %v454, 0
      %v778 = vsel %vm604, %v455, 0
      %780 = vmatpush.bf16.msra.mxu0 0
      %781 = vmatpush.bf16.msra.mxu0 0
      %782 = vmatpush.bf16.msra.mxu0 0
      %783 = vmatpush.bf16.msra.mxu0 0
      %784 = vmatpush.bf16.msra.mxu0 0
      %785 = vmatpush.bf16.msra.mxu0 0
      %786 = vmatpush.bf16.msra.mxu0 0
      %787 = vmatpush.bf16.msra.mxu0 %v746
      %788 = vmatmul.bf16.gmra.mxu0 %v748
      %v789 = vpop.f32.mrf.mxu0
      %v790 = vadd.f32 %v663, %v789
      %v791 = vpop.f32.mrf.mxu0
      %v792 = vadd.f32 %v665, %v791
      %793 = vmatmul.bf16.gmra.mxu0 %v750
      %v794 = vpop.f32.mrf.mxu0
      %v795 = vadd.f32 %v668, %v794
      %v796 = vpop.f32.mrf.mxu0
      %v797 = vadd.f32 %v670, %v796
      %798 = vmatmul.bf16.gmra.mxu0 %v752
      %v799 = vpop.f32.mrf.mxu0
      %v800 = vadd.f32 %v673, %v799
      %v801 = vpop.f32.mrf.mxu0
      %v802 = vadd.f32 %v675, %v801
      %803 = vmatmul.bf16.gmra.mxu0 %v754
      %v804 = vpop.f32.mrf.mxu0
      %v805 = vadd.f32 %v678, %v804
      %v806 = vpop.f32.mrf.mxu0
      %v807 = vadd.f32 %v680, %v806
      %808 = vmatmul.bf16.gmra.mxu0 %v756
      %v809 = vpop.f32.mrf.mxu0
      %v810 = vadd.f32 %v683, %v809
      %v811 = vpop.f32.mrf.mxu0
      %v812 = vadd.f32 %v685, %v811
      %813 = vmatmul.bf16.gmra.mxu0 %v758
      %v814 = vpop.f32.mrf.mxu0
      %v815 = vadd.f32 %v688, %v814
      %v816 = vpop.f32.mrf.mxu0
      %v817 = vadd.f32 %v690, %v816
      %818 = vmatmul.bf16.gmra.mxu0 %v760
      %v819 = vpop.f32.mrf.mxu0
      %v820 = vadd.f32 %v693, %v819
      %v821 = vpop.f32.mrf.mxu0
      %v822 = vadd.f32 %v695, %v821
      %823 = vmatmul.bf16.gmra.mxu0 %v762
      %v824 = vpop.f32.mrf.mxu0
      %v825 = vadd.f32 %v698, %v824
      %v826 = vpop.f32.mrf.mxu0
      %v827 = vadd.f32 %v700, %v826
      %828 = vmatmul.bf16.gmra.mxu0 %v764
      %v829 = vpop.f32.mrf.mxu0
      %v830 = vadd.f32 %v703, %v829
      %v831 = vpop.f32.mrf.mxu0
      %v832 = vadd.f32 %v705, %v831
      %833 = vmatmul.bf16.gmra.mxu0 %v766
      %v834 = vpop.f32.mrf.mxu0
      %v835 = vadd.f32 %v708, %v834
      %v836 = vpop.f32.mrf.mxu0
      %v837 = vadd.f32 %v710, %v836
      %838 = vmatmul.bf16.gmra.mxu0 %v768
      %v839 = vpop.f32.mrf.mxu0
      %v840 = vadd.f32 %v713, %v839
      %v841 = vpop.f32.mrf.mxu0
      %v842 = vadd.f32 %v715, %v841
      %843 = vmatmul.bf16.gmra.mxu0 %v770
      %v844 = vpop.f32.mrf.mxu0
      %v845 = vadd.f32 %v718, %v844
      %v846 = vpop.f32.mrf.mxu0
      %v847 = vadd.f32 %v720, %v846
      %848 = vmatmul.bf16.gmra.mxu0 %v772
      %v849 = vpop.f32.mrf.mxu0
      %v850 = vadd.f32 %v723, %v849
      %v851 = vpop.f32.mrf.mxu0
      %v852 = vadd.f32 %v725, %v851
      %853 = vmatmul.bf16.gmra.mxu0 %v774
      %v854 = vpop.f32.mrf.mxu0
      %v855 = vadd.f32 %v728, %v854
      %v856 = vpop.f32.mrf.mxu0
      %v857 = vadd.f32 %v730, %v856
      %858 = vmatmul.bf16.gmra.mxu0 %v776
      %v859 = vpop.f32.mrf.mxu0
      %v860 = vadd.f32 %v733, %v859
      %v861 = vpop.f32.mrf.mxu0
      %v862 = vadd.f32 %v735, %v861
      %863 = vmatmul.bf16.gmra.mxu0 %v778
      %v864 = vpop.f32.mrf.mxu0
      %v865 = vadd.f32 %v738, %v864
      %v866 = vpop.f32.mrf.mxu0
      %v867 = vadd.f32 %v740, %v866
      %868 = vdwg.mxu0
      %v871 = vunpack.c.l.b16 %v461
      %v872 = vunpack.c.l.b16 %v462
      %v873 = vpack.c.b16 %v872, %v871
      %v876 = vsel %vm604, %v456, 0
      %878 = vmatpush.bf16.msra.mxu0 0
      %879 = vmatpush.bf16.msra.mxu0 0
      %880 = vmatpush.bf16.msra.mxu0 0
      %881 = vmatpush.bf16.msra.mxu0 0
      %882 = vmatpush.bf16.msra.mxu0 0
      %883 = vmatpush.bf16.msra.mxu0 0
      %884 = vmatpush.bf16.msra.mxu0 0
      %885 = vmatpush.bf16.msra.mxu0 %v873
      %886 = vmatmul.bf16.gmra.mxu0 %v750
      %v887 = vpop.f32.mrf.mxu0
      %v888 = vadd.f32 0.0, %v887
      %v889 = vpop.f32.mrf.mxu0
      %v890 = vadd.f32 0.0, %v889
      %891 = vmatmul.bf16.gmra.mxu0 %v752
      %v892 = vpop.f32.mrf.mxu0
      %v893 = vadd.f32 0.0, %v892
      %v894 = vpop.f32.mrf.mxu0
      %v895 = vadd.f32 0.0, %v894
      %896 = vmatmul.bf16.gmra.mxu0 %v754
      %v897 = vpop.f32.mrf.mxu0
      %v898 = vadd.f32 0.0, %v897
      %v899 = vpop.f32.mrf.mxu0
      %v900 = vadd.f32 0.0, %v899
      %901 = vmatmul.bf16.gmra.mxu0 %v756
      %v902 = vpop.f32.mrf.mxu0
      %v903 = vadd.f32 0.0, %v902
      %v904 = vpop.f32.mrf.mxu0
      %v905 = vadd.f32 0.0, %v904
      %906 = vmatmul.bf16.gmra.mxu0 %v758
      %v907 = vpop.f32.mrf.mxu0
      %v908 = vadd.f32 0.0, %v907
      %v909 = vpop.f32.mrf.mxu0
      %v910 = vadd.f32 0.0, %v909
      %911 = vmatmul.bf16.gmra.mxu0 %v760
      %v912 = vpop.f32.mrf.mxu0
      %v913 = vadd.f32 0.0, %v912
      %v914 = vpop.f32.mrf.mxu0
      %v915 = vadd.f32 0.0, %v914
      %916 = vmatmul.bf16.gmra.mxu0 %v762
      %v917 = vpop.f32.mrf.mxu0
      %v918 = vadd.f32 0.0, %v917
      %v919 = vpop.f32.mrf.mxu0
      %v920 = vadd.f32 0.0, %v919
      %921 = vmatmul.bf16.gmra.mxu0 %v764
      %v922 = vpop.f32.mrf.mxu0
      %v923 = vadd.f32 0.0, %v922
      %v924 = vpop.f32.mrf.mxu0
      %v925 = vadd.f32 0.0, %v924
      %926 = vmatmul.bf16.gmra.mxu0 %v766
      %v927 = vpop.f32.mrf.mxu0
      %v928 = vadd.f32 0.0, %v927
      %v929 = vpop.f32.mrf.mxu0
      %v930 = vadd.f32 0.0, %v929
      %931 = vmatmul.bf16.gmra.mxu0 %v768
      %v932 = vpop.f32.mrf.mxu0
      %v933 = vadd.f32 0.0, %v932
      %v934 = vpop.f32.mrf.mxu0
      %v935 = vadd.f32 0.0, %v934
      %936 = vmatmul.bf16.gmra.mxu0 %v770
      %v937 = vpop.f32.mrf.mxu0
      %v938 = vadd.f32 0.0, %v937
      %v939 = vpop.f32.mrf.mxu0
      %v940 = vadd.f32 0.0, %v939
      %941 = vmatmul.bf16.gmra.mxu0 %v772
      %v942 = vpop.f32.mrf.mxu0
      %v943 = vadd.f32 0.0, %v942
      %v944 = vpop.f32.mrf.mxu0
      %v945 = vadd.f32 0.0, %v944
      %946 = vmatmul.bf16.gmra.mxu0 %v774
      %v947 = vpop.f32.mrf.mxu0
      %v948 = vadd.f32 0.0, %v947
      %v949 = vpop.f32.mrf.mxu0
      %v950 = vadd.f32 0.0, %v949
      %951 = vmatmul.bf16.gmra.mxu0 %v776
      %v952 = vpop.f32.mrf.mxu0
      %v953 = vadd.f32 0.0, %v952
      %v954 = vpop.f32.mrf.mxu0
      %v955 = vadd.f32 0.0, %v954
      %956 = vmatmul.bf16.gmra.mxu0 %v778
      %v957 = vpop.f32.mrf.mxu0
      %v958 = vadd.f32 0.0, %v957
      %v959 = vpop.f32.mrf.mxu0
      %v960 = vadd.f32 0.0, %v959
      %961 = vmatmul.bf16.gmra.mxu0 %v876
      %v962 = vpop.f32.mrf.mxu0
      %v963 = vadd.f32 0.0, %v962
      %v964 = vpop.f32.mrf.mxu0
      %v965 = vadd.f32 0.0, %v964
      %966 = vdwg.mxu0
      %v967 = vadd.f32 %v790, %v888
      %v968 = vadd.f32 %v792, %v890
      %v969 = vadd.f32 %v795, %v893
      %v970 = vadd.f32 %v797, %v895
      %v971 = vadd.f32 %v800, %v898
      %v972 = vadd.f32 %v802, %v900
      %v973 = vadd.f32 %v805, %v903
      %v974 = vadd.f32 %v807, %v905
      %v975 = vadd.f32 %v810, %v908
      %v976 = vadd.f32 %v812, %v910
      %v977 = vadd.f32 %v815, %v913
      %v978 = vadd.f32 %v817, %v915
      %v979 = vadd.f32 %v820, %v918
      %v980 = vadd.f32 %v822, %v920
      %v981 = vadd.f32 %v825, %v923
      %v982 = vadd.f32 %v827, %v925
      %v983 = vadd.f32 %v830, %v928
      %v984 = vadd.f32 %v832, %v930
      %v985 = vadd.f32 %v835, %v933
      %v986 = vadd.f32 %v837, %v935
      %v987 = vadd.f32 %v840, %v938
      %v988 = vadd.f32 %v842, %v940
      %v989 = vadd.f32 %v845, %v943
      %v990 = vadd.f32 %v847, %v945
      %v991 = vadd.f32 %v850, %v948
      %v992 = vadd.f32 %v852, %v950
      %v993 = vadd.f32 %v855, %v953
      %v994 = vadd.f32 %v857, %v955
      %v995 = vadd.f32 %v860, %v958
      %v996 = vadd.f32 %v862, %v960
      %v997 = vadd.f32 %v865, %v963
      %v998 = vadd.f32 %v867, %v965
      %v999 = vshrl.u32 %v456, 16
      %v1001 = vshll.u32 %v456, 16
      %v1003 = vrot.slane %v1001, 1
      %v1004 = vor.u32 %v999, %v1003
      %v1005 = vsel %vm465, %v1004, %v476
      %v1008 = vunpack.c.l.b16 %v463
      %v1009 = vunpack.c.l.b16 %v464
      %v1010 = vpack.c.b16 %v1009, %v1008
      %v1013 = vsel %vm604, %v1005, 0
      %1015 = vmatpush.bf16.msra.mxu0 0
      %1016 = vmatpush.bf16.msra.mxu0 0
      %1017 = vmatpush.bf16.msra.mxu0 0
      %1018 = vmatpush.bf16.msra.mxu0 0
      %1019 = vmatpush.bf16.msra.mxu0 0
      %1020 = vmatpush.bf16.msra.mxu0 0
      %1021 = vmatpush.bf16.msra.mxu0 0
      %1022 = vmatpush.bf16.msra.mxu0 %v1010
      %1023 = vmatmul.bf16.gmra.mxu0 %v609
      %v1024 = vpop.f32.mrf.mxu0
      %v1025 = vadd.f32 0.0, %v1024
      %v1026 = vpop.f32.mrf.mxu0
      %v1027 = vadd.f32 0.0, %v1026
      %1028 = vmatmul.bf16.gmra.mxu0 %v612
      %v1029 = vpop.f32.mrf.mxu0
      %v1030 = vadd.f32 0.0, %v1029
      %v1031 = vpop.f32.mrf.mxu0
      %v1032 = vadd.f32 0.0, %v1031
      %1033 = vmatmul.bf16.gmra.mxu0 %v615
      %v1034 = vpop.f32.mrf.mxu0
      %v1035 = vadd.f32 0.0, %v1034
      %v1036 = vpop.f32.mrf.mxu0
      %v1037 = vadd.f32 0.0, %v1036
      %1038 = vmatmul.bf16.gmra.mxu0 %v618
      %v1039 = vpop.f32.mrf.mxu0
      %v1040 = vadd.f32 0.0, %v1039
      %v1041 = vpop.f32.mrf.mxu0
      %v1042 = vadd.f32 0.0, %v1041
      %1043 = vmatmul.bf16.gmra.mxu0 %v621
      %v1044 = vpop.f32.mrf.mxu0
      %v1045 = vadd.f32 0.0, %v1044
      %v1046 = vpop.f32.mrf.mxu0
      %v1047 = vadd.f32 0.0, %v1046
      %1048 = vmatmul.bf16.gmra.mxu0 %v624
      %v1049 = vpop.f32.mrf.mxu0
      %v1050 = vadd.f32 0.0, %v1049
      %v1051 = vpop.f32.mrf.mxu0
      %v1052 = vadd.f32 0.0, %v1051
      %1053 = vmatmul.bf16.gmra.mxu0 %v627
      %v1054 = vpop.f32.mrf.mxu0
      %v1055 = vadd.f32 0.0, %v1054
      %v1056 = vpop.f32.mrf.mxu0
      %v1057 = vadd.f32 0.0, %v1056
      %1058 = vmatmul.bf16.gmra.mxu0 %v630
      %v1059 = vpop.f32.mrf.mxu0
      %v1060 = vadd.f32 0.0, %v1059
      %v1061 = vpop.f32.mrf.mxu0
      %v1062 = vadd.f32 0.0, %v1061
      %1063 = vmatmul.bf16.gmra.mxu0 %v633
      %v1064 = vpop.f32.mrf.mxu0
      %v1065 = vadd.f32 0.0, %v1064
      %v1066 = vpop.f32.mrf.mxu0
      %v1067 = vadd.f32 0.0, %v1066
      %1068 = vmatmul.bf16.gmra.mxu0 %v636
      %v1069 = vpop.f32.mrf.mxu0
      %v1070 = vadd.f32 0.0, %v1069
      %v1071 = vpop.f32.mrf.mxu0
      %v1072 = vadd.f32 0.0, %v1071
      %1073 = vmatmul.bf16.gmra.mxu0 %v639
      %v1074 = vpop.f32.mrf.mxu0
      %v1075 = vadd.f32 0.0, %v1074
      %v1076 = vpop.f32.mrf.mxu0
      %v1077 = vadd.f32 0.0, %v1076
      %1078 = vmatmul.bf16.gmra.mxu0 %v642
      %v1079 = vpop.f32.mrf.mxu0
      %v1080 = vadd.f32 0.0, %v1079
      %v1081 = vpop.f32.mrf.mxu0
      %v1082 = vadd.f32 0.0, %v1081
      %1083 = vmatmul.bf16.gmra.mxu0 %v645
      %v1084 = vpop.f32.mrf.mxu0
      %v1085 = vadd.f32 0.0, %v1084
      %v1086 = vpop.f32.mrf.mxu0
      %v1087 = vadd.f32 0.0, %v1086
      %1088 = vmatmul.bf16.gmra.mxu0 %v648
      %v1089 = vpop.f32.mrf.mxu0
      %v1090 = vadd.f32 0.0, %v1089
      %v1091 = vpop.f32.mrf.mxu0
      %v1092 = vadd.f32 0.0, %v1091
      %1093 = vmatmul.bf16.gmra.mxu0 %v651
      %v1094 = vpop.f32.mrf.mxu0
      %v1095 = vadd.f32 0.0, %v1094
      %v1096 = vpop.f32.mrf.mxu0
      %v1097 = vadd.f32 0.0, %v1096
      %1098 = vmatmul.bf16.gmra.mxu0 %v1013
      %v1099 = vpop.f32.mrf.mxu0
      %v1100 = vadd.f32 0.0, %v1099
      %v1101 = vpop.f32.mrf.mxu0
      %v1102 = vadd.f32 0.0, %v1101
      %1103 = vdwg.mxu0
      %v1104 = vadd.f32 %v967, %v1025
      %v1105 = vadd.f32 %v968, %v1027
      %v1106 = vadd.f32 %v969, %v1030
      %v1107 = vadd.f32 %v970, %v1032
      %v1108 = vadd.f32 %v971, %v1035
      %v1109 = vadd.f32 %v972, %v1037
      %v1110 = vadd.f32 %v973, %v1040
      %v1111 = vadd.f32 %v974, %v1042
      %v1112 = vadd.f32 %v975, %v1045
      %v1113 = vadd.f32 %v976, %v1047
      %v1114 = vadd.f32 %v977, %v1050
      %v1115 = vadd.f32 %v978, %v1052
      %v1116 = vadd.f32 %v979, %v1055
      %v1117 = vadd.f32 %v980, %v1057
      %v1118 = vadd.f32 %v981, %v1060
      %v1119 = vadd.f32 %v982, %v1062
      %v1120 = vadd.f32 %v983, %v1065
      %v1121 = vadd.f32 %v984, %v1067
      %v1122 = vadd.f32 %v985, %v1070
      %v1123 = vadd.f32 %v986, %v1072
      %v1124 = vadd.f32 %v987, %v1075
      %v1125 = vadd.f32 %v988, %v1077
      %v1126 = vadd.f32 %v989, %v1080
      %v1127 = vadd.f32 %v990, %v1082
      %v1128 = vadd.f32 %v991, %v1085
      %v1129 = vadd.f32 %v992, %v1087
      %v1130 = vadd.f32 %v993, %v1090
      %v1131 = vadd.f32 %v994, %v1092
      %v1132 = vadd.f32 %v995, %v1095
      %v1133 = vadd.f32 %v996, %v1097
      %v1134 = vadd.f32 %v997, %v1100
      %v1135 = vadd.f32 %v998, %v1102
      %v1136 = vld [vmem:[%s3] sm:$0x1]
      %v1138 = vperm.slane %v1136, 0
      %v1140 = vmul.f32 %v1104, %v1138
      %v1141 = vmul.f32 %v1105, %v1138
      %v1142 = vmul.f32 %v1106, %v1138
      %v1143 = vmul.f32 %v1107, %v1138
      %v1144 = vmul.f32 %v1108, %v1138
      %v1145 = vmul.f32 %v1109, %v1138
      %v1146 = vmul.f32 %v1110, %v1138
      %v1147 = vmul.f32 %v1111, %v1138
      %v1148 = vmul.f32 %v1112, %v1138
      %v1149 = vmul.f32 %v1113, %v1138
      %v1150 = vmul.f32 %v1114, %v1138
      %v1151 = vmul.f32 %v1115, %v1138
      %v1152 = vmul.f32 %v1116, %v1138
      %v1153 = vmul.f32 %v1117, %v1138
      %v1154 = vmul.f32 %v1118, %v1138
      %v1155 = vmul.f32 %v1119, %v1138
      %v1156 = vmul.f32 %v1120, %v1138
      %v1157 = vmul.f32 %v1121, %v1138
      %v1158 = vmul.f32 %v1122, %v1138
      %v1159 = vmul.f32 %v1123, %v1138
      %v1160 = vmul.f32 %v1124, %v1138
      %v1161 = vmul.f32 %v1125, %v1138
      %v1162 = vmul.f32 %v1126, %v1138
      %v1163 = vmul.f32 %v1127, %v1138
      %v1164 = vmul.f32 %v1128, %v1138
      %v1165 = vmul.f32 %v1129, %v1138
      %v1166 = vmul.f32 %v1130, %v1138
      %v1167 = vmul.f32 %v1131, %v1138
      %v1168 = vmul.f32 %v1132, %v1138
      %v1169 = vmul.f32 %v1133, %v1138
      %v1170 = vmul.f32 %v1134, %v1138
      %v1171 = vmul.f32 %v1135, %v1138
      %v1172 = vld [vmem:[%s4] sm:$0x1]
      %v1174 = vperm.slane %v1172, 0
      %v1176 = vadd.f32 %v1140, %v1174
      %v1177 = vadd.f32 %v1141, %v1174
      %v1178 = vadd.f32 %v1142, %v1174
      %v1179 = vadd.f32 %v1143, %v1174
      %v1180 = vadd.f32 %v1144, %v1174
      %v1181 = vadd.f32 %v1145, %v1174
      %v1182 = vadd.f32 %v1146, %v1174
      %v1183 = vadd.f32 %v1147, %v1174
      %v1184 = vadd.f32 %v1148, %v1174
      %v1185 = vadd.f32 %v1149, %v1174
      %v1186 = vadd.f32 %v1150, %v1174
      %v1187 = vadd.f32 %v1151, %v1174
      %v1188 = vadd.f32 %v1152, %v1174
      %v1189 = vadd.f32 %v1153, %v1174
      %v1190 = vadd.f32 %v1154, %v1174
      %v1191 = vadd.f32 %v1155, %v1174
      %v1192 = vadd.f32 %v1156, %v1174
      %v1193 = vadd.f32 %v1157, %v1174
      %v1194 = vadd.f32 %v1158, %v1174
      %v1195 = vadd.f32 %v1159, %v1174
      %v1196 = vadd.f32 %v1160, %v1174
      %v1197 = vadd.f32 %v1161, %v1174
      %v1198 = vadd.f32 %v1162, %v1174
      %v1199 = vadd.f32 %v1163, %v1174
      %v1200 = vadd.f32 %v1164, %v1174
      %v1201 = vadd.f32 %v1165, %v1174
      %v1202 = vadd.f32 %v1166, %v1174
      %v1203 = vadd.f32 %v1167, %v1174
      %v1204 = vadd.f32 %v1168, %v1174
      %v1205 = vadd.f32 %v1169, %v1174
      %v1206 = vadd.f32 %v1170, %v1174
      %v1207 = vadd.f32 %v1171, %v1174
      %v1208 = vmax.f32 %v1176, 0.0
      %v1209 = vmax.f32 %v1177, 0.0
      %v1210 = vmax.f32 %v1178, 0.0
      %v1211 = vmax.f32 %v1179, 0.0
      %v1212 = vmax.f32 %v1180, 0.0
      %v1213 = vmax.f32 %v1181, 0.0
      %v1214 = vmax.f32 %v1182, 0.0
      %v1215 = vmax.f32 %v1183, 0.0
      %v1216 = vmax.f32 %v1184, 0.0
      %v1217 = vmax.f32 %v1185, 0.0
      %v1218 = vmax.f32 %v1186, 0.0
      %v1219 = vmax.f32 %v1187, 0.0
      %v1220 = vmax.f32 %v1188, 0.0
      %v1221 = vmax.f32 %v1189, 0.0
      %v1222 = vmax.f32 %v1190, 0.0
      %v1223 = vmax.f32 %v1191, 0.0
      %v1224 = vmax.f32 %v1192, 0.0
      %v1225 = vmax.f32 %v1193, 0.0
      %v1226 = vmax.f32 %v1194, 0.0
      %v1227 = vmax.f32 %v1195, 0.0
      %v1228 = vmax.f32 %v1196, 0.0
      %v1229 = vmax.f32 %v1197, 0.0
      %v1230 = vmax.f32 %v1198, 0.0
      %v1231 = vmax.f32 %v1199, 0.0
      %v1232 = vmax.f32 %v1200, 0.0
      %v1233 = vmax.f32 %v1201, 0.0
      %v1234 = vmax.f32 %v1202, 0.0
      %v1235 = vmax.f32 %v1203, 0.0
      %v1236 = vmax.f32 %v1204, 0.0
      %v1237 = vmax.f32 %v1205, 0.0
      %v1238 = vmax.f32 %v1206, 0.0
      %v1239 = vmax.f32 %v1207, 0.0
      %v1240 = vpack.c.bf16 %v1208, %v1208
      %v1241 = vpack.c.bf16 %v1209, %v1209
      %v1242 = vpack.c.bf16 %v1210, %v1210
      %v1243 = vpack.c.bf16 %v1211, %v1211
      %v1244 = vpack.c.bf16 %v1212, %v1212
      %v1245 = vpack.c.bf16 %v1213, %v1213
      %v1246 = vpack.c.bf16 %v1214, %v1214
      %v1247 = vpack.c.bf16 %v1215, %v1215
      %v1248 = vpack.c.bf16 %v1216, %v1216
      %v1249 = vpack.c.bf16 %v1217, %v1217
      %v1250 = vpack.c.bf16 %v1218, %v1218
      %v1251 = vpack.c.bf16 %v1219, %v1219
      %v1252 = vpack.c.bf16 %v1220, %v1220
      %v1253 = vpack.c.bf16 %v1221, %v1221
      %v1254 = vpack.c.bf16 %v1222, %v1222
      %v1255 = vpack.c.bf16 %v1223, %v1223
      %v1256 = vpack.c.bf16 %v1224, %v1224
      %v1257 = vpack.c.bf16 %v1225, %v1225
      %v1258 = vpack.c.bf16 %v1226, %v1226
      %v1259 = vpack.c.bf16 %v1227, %v1227
      %v1260 = vpack.c.bf16 %v1228, %v1228
      %v1261 = vpack.c.bf16 %v1229, %v1229
      %v1262 = vpack.c.bf16 %v1230, %v1230
      %v1263 = vpack.c.bf16 %v1231, %v1231
      %v1264 = vpack.c.bf16 %v1232, %v1232
      %v1265 = vpack.c.bf16 %v1233, %v1233
      %v1266 = vpack.c.bf16 %v1234, %v1234
      %v1267 = vpack.c.bf16 %v1235, %v1235
      %v1268 = vpack.c.bf16 %v1236, %v1236
      %v1269 = vpack.c.bf16 %v1237, %v1237
      %v1270 = vpack.c.bf16 %v1238, %v1238
      %v1271 = vpack.c.bf16 %v1239, %v1239
      %vm1272 = vcmask 125952
      %1273 = vst.msk [vmem:[%s329] sm:$0xf] %vm1272, %v1240
      %1274 = vst.msk [vmem:[%s329 + $0x4] sm:$0xf] %vm1272, %v1241
      %1275 = vst.msk [vmem:[%s329 + $0x10] sm:$0xf] %vm1272, %v1242
      %1276 = vst.msk [vmem:[%s329 + $0x14] sm:$0xf] %vm1272, %v1243
      %1277 = vst.msk [vmem:[%s329 + $0x20] sm:$0xf] %vm1272, %v1244
      %1278 = vst.msk [vmem:[%s329 + $0x24] sm:$0xf] %vm1272, %v1245
      %1279 = vst.msk [vmem:[%s329 + $0x30] sm:$0xf] %vm1272, %v1246
      %1280 = vst.msk [vmem:[%s329 + $0x34] sm:$0xf] %vm1272, %v1247
      %1281 = vst.msk [vmem:[%s329 + $0x40] sm:$0xf] %vm1272, %v1248
      %1282 = vst.msk [vmem:[%s329 + $0x44] sm:$0xf] %vm1272, %v1249
      %1283 = vst.msk [vmem:[%s329 + $0x50] sm:$0xf] %vm1272, %v1250
      %1284 = vst.msk [vmem:[%s329 + $0x54] sm:$0xf] %vm1272, %v1251
      %1285 = vst.msk [vmem:[%s329 + $0x60] sm:$0xf] %vm1272, %v1252
      %1286 = vst.msk [vmem:[%s329 + $0x64] sm:$0xf] %vm1272, %v1253
      %1287 = vst.msk [vmem:[%s329 + $0x70] sm:$0xf] %vm1272, %v1254
      %1288 = vst.msk [vmem:[%s329 + $0x74] sm:$0xf] %vm1272, %v1255
      %1289 = vst.msk [vmem:[%s329 + $0x80] sm:$0xf] %vm1272, %v1256
      %1290 = vst.msk [vmem:[%s329 + $0x84] sm:$0xf] %vm1272, %v1257
      %1291 = vst.msk [vmem:[%s329 + $0x90] sm:$0xf] %vm1272, %v1258
      %1292 = vst.msk [vmem:[%s329 + $0x94] sm:$0xf] %vm1272, %v1259
      %1293 = vst.msk [vmem:[%s329 + $0xa0] sm:$0xf] %vm1272, %v1260
      %1294 = vst.msk [vmem:[%s329 + $0xa4] sm:$0xf] %vm1272, %v1261
      %1295 = vst.msk [vmem:[%s329 + $0xb0] sm:$0xf] %vm1272, %v1262
      %1296 = vst.msk [vmem:[%s329 + $0xb4] sm:$0xf] %vm1272, %v1263
      %1297 = vst.msk [vmem:[%s329 + $0xc0] sm:$0xf] %vm1272, %v1264
      %1298 = vst.msk [vmem:[%s329 + $0xc4] sm:$0xf] %vm1272, %v1265
      %1299 = vst.msk [vmem:[%s329 + $0xd0] sm:$0xf] %vm1272, %v1266
      %1300 = vst.msk [vmem:[%s329 + $0xd4] sm:$0xf] %vm1272, %v1267
      %1301 = vst.msk [vmem:[%s329 + $0xe0] sm:$0xf] %vm1272, %v1268
      %1302 = vst.msk [vmem:[%s329 + $0xe4] sm:$0xf] %vm1272, %v1269
      %1303 = vst.msk [vmem:[%s329 + $0xf0] sm:$0xf] %vm1272, %v1270
      %1304 = vst.msk [vmem:[%s329 + $0xf4] sm:$0xf] %vm1272, %v1271
      %1337 = vrot.lane.b32.xlu0 %v1240, 112
      %v1338 = vpop.permute.xlu0 %1337
      %1339 = vrot.lane.b32.xlu0 %v1241, 112
      %v1340 = vpop.permute.xlu0 %1339
      %1341 = vrot.lane.b32.xlu0 %v1242, 112
      %v1342 = vpop.permute.xlu0 %1341
      %1343 = vrot.lane.b32.xlu0 %v1243, 112
      %v1344 = vpop.permute.xlu0 %1343
      %1345 = vrot.lane.b32.xlu0 %v1244, 112
      %v1346 = vpop.permute.xlu0 %1345
      %1347 = vrot.lane.b32.xlu0 %v1245, 112
      %v1348 = vpop.permute.xlu0 %1347
      %1349 = vrot.lane.b32.xlu0 %v1246, 112
      %v1350 = vpop.permute.xlu0 %1349
      %1351 = vrot.lane.b32.xlu0 %v1247, 112
      %v1352 = vpop.permute.xlu0 %1351
      %1353 = vrot.lane.b32.xlu0 %v1248, 112
      %v1354 = vpop.permute.xlu0 %1353
      %1355 = vrot.lane.b32.xlu0 %v1249, 112
      %v1356 = vpop.permute.xlu0 %1355
      %1357 = vrot.lane.b32.xlu0 %v1250, 112
      %v1358 = vpop.permute.xlu0 %1357
      %1359 = vrot.lane.b32.xlu0 %v1251, 112
      %v1360 = vpop.permute.xlu0 %1359
      %1361 = vrot.lane.b32.xlu0 %v1252, 112
      %v1362 = vpop.permute.xlu0 %1361
      %1363 = vrot.lane.b32.xlu0 %v1253, 112
      %v1364 = vpop.permute.xlu0 %1363
      %1365 = vrot.lane.b32.xlu0 %v1254, 112
      %v1366 = vpop.permute.xlu0 %1365
      %1367 = vrot.lane.b32.xlu0 %v1255, 112
      %v1368 = vpop.permute.xlu0 %1367
      %1369 = vrot.lane.b32.xlu0 %v1256, 112
      %v1370 = vpop.permute.xlu0 %1369
      %1371 = vrot.lane.b32.xlu0 %v1257, 112
      %v1372 = vpop.permute.xlu0 %1371
      %1373 = vrot.lane.b32.xlu0 %v1258, 112
      %v1374 = vpop.permute.xlu0 %1373
      %1375 = vrot.lane.b32.xlu0 %v1259, 112
      %v1376 = vpop.permute.xlu0 %1375
      %1377 = vrot.lane.b32.xlu0 %v1260, 112
      %v1378 = vpop.permute.xlu0 %1377
      %1379 = vrot.lane.b32.xlu0 %v1261, 112
      %v1380 = vpop.permute.xlu0 %1379
      %1381 = vrot.lane.b32.xlu0 %v1262, 112
      %v1382 = vpop.permute.xlu0 %1381
      %1383 = vrot.lane.b32.xlu0 %v1263, 112
      %v1384 = vpop.permute.xlu0 %1383
      %1385 = vrot.lane.b32.xlu0 %v1264, 112
      %v1386 = vpop.permute.xlu0 %1385
      %1387 = vrot.lane.b32.xlu0 %v1265, 112
      %v1388 = vpop.permute.xlu0 %1387
      %1389 = vrot.lane.b32.xlu0 %v1266, 112
      %v1390 = vpop.permute.xlu0 %1389
      %1391 = vrot.lane.b32.xlu0 %v1267, 112
      %v1392 = vpop.permute.xlu0 %1391
      %1393 = vrot.lane.b32.xlu0 %v1268, 112
      %v1394 = vpop.permute.xlu0 %1393
      %1395 = vrot.lane.b32.xlu0 %v1269, 112
      %v1396 = vpop.permute.xlu0 %1395
      %1397 = vrot.lane.b32.xlu0 %v1270, 112
      %v1398 = vpop.permute.xlu0 %1397
      %1399 = vrot.lane.b32.xlu0 %v1271, 112
      %v1400 = vpop.permute.xlu0 %1399
      %s1433 = scalar_lea.vmem %s329, 8
      %1434 = vst.msk [vmem:[%s1433] sm:$0xf] %vm1272, %v1338
      %1435 = vst.msk [vmem:[%s1433 + $0x4] sm:$0xf] %vm1272, %v1340
      %1436 = vst.msk [vmem:[%s1433 + $0x10] sm:$0xf] %vm1272, %v1342
      %1437 = vst.msk [vmem:[%s1433 + $0x14] sm:$0xf] %vm1272, %v1344
      %1438 = vst.msk [vmem:[%s1433 + $0x20] sm:$0xf] %vm1272, %v1346
      %1439 = vst.msk [vmem:[%s1433 + $0x24] sm:$0xf] %vm1272, %v1348
      %1440 = vst.msk [vmem:[%s1433 + $0x30] sm:$0xf] %vm1272, %v1350
      %1441 = vst.msk [vmem:[%s1433 + $0x34] sm:$0xf] %vm1272, %v1352
      %1442 = vst.msk [vmem:[%s1433 + $0x40] sm:$0xf] %vm1272, %v1354
      %1443 = vst.msk [vmem:[%s1433 + $0x44] sm:$0xf] %vm1272, %v1356
      %1444 = vst.msk [vmem:[%s1433 + $0x50] sm:$0xf] %vm1272, %v1358
      %1445 = vst.msk [vmem:[%s1433 + $0x54] sm:$0xf] %vm1272, %v1360
      %1446 = vst.msk [vmem:[%s1433 + $0x60] sm:$0xf] %vm1272, %v1362
      %1447 = vst.msk [vmem:[%s1433 + $0x64] sm:$0xf] %vm1272, %v1364
      %1448 = vst.msk [vmem:[%s1433 + $0x70] sm:$0xf] %vm1272, %v1366
      %1449 = vst.msk [vmem:[%s1433 + $0x74] sm:$0xf] %vm1272, %v1368
      %1450 = vst.msk [vmem:[%s1433 + $0x80] sm:$0xf] %vm1272, %v1370
      %1451 = vst.msk [vmem:[%s1433 + $0x84] sm:$0xf] %vm1272, %v1372
      %1452 = vst.msk [vmem:[%s1433 + $0x90] sm:$0xf] %vm1272, %v1374
      %1453 = vst.msk [vmem:[%s1433 + $0x94] sm:$0xf] %vm1272, %v1376
      %1454 = vst.msk [vmem:[%s1433 + $0xa0] sm:$0xf] %vm1272, %v1378
      %1455 = vst.msk [vmem:[%s1433 + $0xa4] sm:$0xf] %vm1272, %v1380
      %1456 = vst.msk [vmem:[%s1433 + $0xb0] sm:$0xf] %vm1272, %v1382
      %1457 = vst.msk [vmem:[%s1433 + $0xb4] sm:$0xf] %vm1272, %v1384
      %1458 = vst.msk [vmem:[%s1433 + $0xc0] sm:$0xf] %vm1272, %v1386
      %1459 = vst.msk [vmem:[%s1433 + $0xc4] sm:$0xf] %vm1272, %v1388
      %1460 = vst.msk [vmem:[%s1433 + $0xd0] sm:$0xf] %vm1272, %v1390
      %1461 = vst.msk [vmem:[%s1433 + $0xd4] sm:$0xf] %vm1272, %v1392
      %1462 = vst.msk [vmem:[%s1433 + $0xe0] sm:$0xf] %vm1272, %v1394
      %1463 = vst.msk [vmem:[%s1433 + $0xe4] sm:$0xf] %vm1272, %v1396
      %1464 = vst.msk [vmem:[%s1433 + $0xf0] sm:$0xf] %vm1272, %v1398
      %1465 = vst.msk [vmem:[%s1433 + $0xf4] sm:$0xf] %vm1272, %v1400
      %s1466 = smul.u32 16, %s21
      %p1467 = scmp.lt.s32.totalorder %s20, 1
      %s1468 = scalar_select %p1467, %s20, 1
      %p1469 = scmp.lt.s32.totalorder %s1466, 15
      %s1470 = scalar_select %p1469, %s1466, 15
      %s1471 = smul.addr %s1470, 4
      %s1472 = smul.addr %s1468, 64
      %s1473 = sadd.s32 %s1471, %s1472
      %s1474 = smul.addr %s1473, 4
      %s1475 = scalar_lea.vmem %s5, %s1474
      // Predicated region
      $region41: #{unet_decoder_forward.5} parent=39 // pred_check
        %p1476 = pneg %p175
      $region42: #{unet_decoder_forward.5} parent=39 // pred_check_branch
        %1478 = sbr.rel (%p1476) target = $region44
      $region43: #{unet_decoder_forward.5} parent=39 // pred_region
        %s1479 = smul.u32 16, %s21
      $region44: #{unet_decoder_forward.5} parent=39 // pred_fallthru
        _
    $region40: #{unet_decoder_forward.5} parent=5 // pred_fallthru
      _
    %p1480 = scmp.le.s32.totalorder 2, %s11
    // Predicated region
    $region45: #{unet_decoder_forward.5} parent=5 // pred_check
      %p1481 = pneg %p1480
    $region46: #{unet_decoder_forward.5} parent=5 // pred_check_branch
      %1483 = sbr.rel (%p1481) target = $region48
    $region47: #{unet_decoder_forward.5} parent=5 // pred_region
      %s1484 = ssub.s32 %s11, 2
      // Predicated region
      $region49: #{unet_decoder_forward.5} parent=47 // pred_check
        %p1485 = pneg %p181
      $region50: #{unet_decoder_forward.5} parent=47 // pred_check_branch
        %1487 = sbr.rel (%p1485) target = $region52
      $region51: #{unet_decoder_forward.5} parent=47 // pred_region
        %s1488 = smul.u32 16, %s23
        %p1489 = scmp.lt.s32.totalorder %s22, 1
        %s1490 = scalar_select %p1489, %s22, 1
        %p1491 = scmp.lt.s32.totalorder %s1488, 15
        %s1492 = scalar_select %p1491, %s1488, 15
        %s1493 = smul.addr %s1492, 4
        %s1494 = smul.addr %s1490, 64
        %s1495 = sadd.s32 %s1493, %s1494
        %s1496 = smul.addr %s1495, 4
        %s1497 = scalar_lea.vmem %s5, %s1496
      $region52: #{unet_decoder_forward.5} parent=47 // pred_fallthru
        _
    $region48: #{unet_decoder_forward.5} parent=5 // pred_fallthru
      _
  $region6: #{unet_decoder_forward.5} parent=0 // loop_footer
    %s15 = sadd.s32 1, %s11
  $region7: #{unet_decoder_forward.5} parent=0 // loop_footer_branch
    %10 = sbr.rel target = $region3
  $region8: #{unet_decoder_forward.5} parent=0 // loop_exit
    _

// kernel: tile.43
$region0: #{tile.43}
  #allocation0 [shape = 's32[1]{0}', space=sflag, size = 0x4, scoped, tag = 'scoped memory for tile.43']
  %s0 = inlined_call_operand.vmem [shape: f32[4], index: 0, kind: input, shape index: {}]
  %s1 = inlined_call_operand.vmem [shape: f32[4,4], index: 1, kind: output, shape index: {}]
  // Predicated region
  $region2: #{tile.43} parent=0 // pred_check
    _
  $region3: #{tile.43} parent=0 // pred_check_branch
    %3 = sbr.rel (0) target = $region5
  $region4: #{tile.43} parent=0 // pred_region
    _
  $region5: #{tile.43} parent=0 // pred_fallthru
    _
  %v4 = vld [vmem:[%s0] ss:$0 sm:$0xff]
  %5 = vst [vmem:[%s1] sm:$0xf] %v4

// kernel: tile.44
$region0: #{tile.44}
  %s0 = inlined_call_operand.vmem [shape: f32[4,4], index: 0, kind: input, shape index: {}]
  %s1 = inlined_call_operand.vmem [shape: f32[1,16], index: 1, kind: output, shape index: {}]
  $region1: #{tile.44} parent=0
    #allocation0 [shape = 'u8[4096]{0}', space=vmem, size = 0x1000, scoped, tag = 'scoped mem for output reshape']
    #allocation1 [shape = 'u8[4096]{0}', space=vmem, size = 0x1000, scoped, tag = 'scoped mem for input reshape']
    %s3 = ssub.s32 16, 1
    %v4 = vld [vmem:[%s0] sm:%s3]
    %5 = vst [vmem:[#allocation1] sm:%s3] %v4
    %v6 = vld [vmem:[#allocation1] sm:$0x1]
    %vm7 = vcmask 31744
    %8 = vst.msk [vmem:[#allocation0] sm:$0x1] %vm7, %v6
    %s9 = scalar_lea.vmem [#allocation1], 3
    %v10 = vld [vmem:[%s9] sm:$0x1]
    %11 = vrot.lane.b32.xlu0 %v10, 12
    %v12 = vpop.permute.xlu0 %11
    %vm13 = vcmask 130144
    %14 = vst.msk [vmem:[#allocation0] sm:$0x1] %vm13, %v12
    %s15 = scalar_lea.vmem [#allocation1], 2
    %v16 = vld [vmem:[%s15] sm:$0x1]
    %17 = vrot.lane.b32.xlu0 %v16, 8
    %v18 = vpop.permute.xlu0 %17
    %vm19 = vcmask 97344
    %20 = vst.msk [vmem:[#allocation0] sm:$0x1] %vm19, %v18
    %s21 = scalar_lea.vmem [#allocation1], 1
    %v22 = vld [vmem:[%s21] sm:$0x1]
    %23 = vrot.lane.b32.xlu0 %v22, 4
    %v24 = vpop.permute.xlu0 %23
    %vm25 = vcmask 64544
    %26 = vst.msk [vmem:[#allocation0] sm:$0x1] %vm25, %v24
    %s28 = ssub.s32 2, 1
    %v29 = vld [vmem:[#allocation0] sm:%s28]
    %s31 = ssub.s32 2, 1
    %32 = vst [vmem:[%s1] sm:%s31] %v29

// kernel: unet_decoder_forward.6
$region0: #{unet_decoder_forward.6}
  #allocation0 [shape = 'u32[]', space=smem, size = 0x4, offset = 0x4, fixed_abs, tag = 'smem constant byte address 0x4 - core index']
  #allocation1 [shape = 'u32[72,128]{1,0:T(1,128)}', space=vmem, size = 0x9000, scoped, tag = 'internal scratch']
  %s0 = inlined_call_operand.vmem [shape: bf16[2,32,32,8], index: 0, kind: input, shape index: {}, may-alias: {0,1}]
  %s1 = inlined_call_operand.vmem [shape: bf16[2,32,32,8], index: 1, kind: input, shape index: {}, may-alias: {0,1}]
  %s2 = inlined_call_operand.vmem [shape: bf16[32,16], index: 2, kind: input, shape index: {}]
  %s3 = inlined_call_operand.vmem [shape: f32[2,1,2,16], index: 3, kind: output, shape index: {}]
  %s4 = sld [smem:[#allocation0]]
  $region45: #{unet_decoder_forward.6} parent=0
    _
  %s6 = ssub.s32 1, %s4
  %s7 = scalar_select 0, %s6, %s4
  loop: start=0, step=1, limit=4
  $region2: #{unet_decoder_forward.6} parent=0 // loop_pre_header
    _
  $region3: #{unet_decoder_forward.6} parent=0 // loop_header
    %s9 = sphi 0, %s13
    %p10 = scmp.ge.s32.totalorder %s9, 4
    %s16 = sphi 0, %s28
    %s17 = sphi 0, %s24
    %s18 = sphi 0, %s16
    %s19 = sphi 0, %s17
    %s20 = sphi 0, %s18
    %s21 = sphi 0, %s19
    %s33 = sphi 0, %s35
    %s36 = sphi 0, %s33
    %s37 = sphi 0, %s36
    %s53 = sphi 0, %s37
    %s69 = sphi 0, %s71
    %s72 = sphi 0, %s69
    %s73 = sphi 0, %s72
    %s89 = sphi 0, %s73
    %s93 = sphi 0, %s93
    %s95 = sphi 0, %s93
    %s96 = sphi 0, %s95
    %s110 = sphi 0, %s96
    %s118 = sphi 0, %s120
    %s121 = sphi 0, %s118
    %s122 = sphi 0, %s121
    %s138 = sphi 0, %s122
  $region4: #{unet_decoder_forward.6} parent=0 // loop_header_branch
    %12 = sbr.rel (%p10) target = $region8
  $region5: #{unet_decoder_forward.6} parent=0 // loop_body
    %s14 = ssub.s32 %s9, 1
    %s15 = ssub.s32 %s9, 2
    %s22 = sadd.s32 1, %s17
    %p23 = scmp.ge.s32.totalorder %s22, 1
    %s24 = scalar_select %p23, 0, %s22
    %s25 = sadd.s32 1, %s16
    %s26 = scalar_select %p23, %s25, %s16
    %p27 = scmp.ge.s32.totalorder %s26, 2
    %s28 = scalar_select %p27, 0, %s26
    %s29 = ssub.s32 %s16, %s28
    %s30 = ssub.s32 %s17, %s24
    %s31 = sor.u32 %s29, %s30
    %p32 = scmp.eq.s32.totalorder %s31, 0
    %s34 = sadd.s32 %s33, 1
    %s35 = scalar_select %p32, %s33, %s34
    %p38 = pneg %p32
    %p39 = scmp.eq.s32.totalorder %s9, 1
    %p40 = por %p38, %p39
    %p41 = scmp.ne.s32.totalorder %s33, %s36
    %p42 = scmp.eq.s32.totalorder %s9, 0
    %p43 = por %p41, %p42
    %p44 = scmp.ne.s32.totalorder %s33, %s36
    %p45 = scmp.eq.s32.totalorder %s14, 1
    %p46 = por %p44, %p45
    %p47 = scmp.ne.s32.totalorder %s36, %s37
    %p48 = scmp.eq.s32.totalorder %s14, 0
    %p49 = por %p47, %p48
    %p50 = scmp.ne.s32.totalorder %s36, %s37
    %p51 = scmp.eq.s32.totalorder %s15, 1
    %p52 = por %p50, %p51
    %p54 = scmp.ne.s32.totalorder %s37, %s53
    %p55 = scmp.eq.s32.totalorder %s15, 0
    %p56 = por %p54, %p55
    %s57 = sadd.s32 %s17, 1
    %s58 = smul.u32 %s57, 32
    %p59 = scmp.lt.s32.totalorder %s58, 31
    %s60 = scalar_select %p59, %s58, 31
    %s61 = sadd.s32 %s24, 1
    %s62 = smul.u32 %s61, 32
    %p63 = scmp.lt.s32.totalorder %s62, 31
    %s64 = scalar_select %p63, %s62, 31
    %s65 = ssub.s32 %s16, %s28
    %s66 = ssub.s32 %s60, %s64
    %s67 = sor.u32 %s65, %s66
    %p68 = scmp.eq.s32.totalorder %s67, 0
    %s70 = sadd.s32 %s69, 1
    %s71 = scalar_select %p68, %s69, %s70
    %p74 = pneg %p68
    %p75 = scmp.eq.s32.totalorder %s9, 1
    %p76 = por %p74, %p75
    %p77 = scmp.ne.s32.totalorder %s69, %s72
    %p78 = scmp.eq.s32.totalorder %s9, 0
    %p79 = por %p77, %p78
    %p80 = scmp.ne.s32.totalorder %s69, %s72
    %p81 = scmp.eq.s32.totalorder %s14, 1
    %p82 = por %p80, %p81
    %p83 = scmp.ne.s32.totalorder %s72, %s73
    %p84 = scmp.eq.s32.totalorder %s14, 0
    %p85 = por %p83, %p84
    %p86 = scmp.ne.s32.totalorder %s72, %s73
    %p87 = scmp.eq.s32.totalorder %s15, 1
    %p88 = por %p86, %p87
    %p90 = scmp.ne.s32.totalorder %s73, %s89
    %p91 = scmp.eq.s32.totalorder %s15, 0
    %p92 = por %p90, %p91
    %s94 = sadd.s32 %s93, 1
    %p97 = scmp.eq.s32.totalorder %s9, 1
    %p98 = scmp.ne.s32.totalorder %s93, %s95
    %p99 = scmp.eq.s32.totalorder %s9, 0
    %p100 = por %p98, %p99
    %p101 = scmp.ne.s32.totalorder %s93, %s95
    %p102 = scmp.eq.s32.totalorder %s14, 1
    %p103 = por %p101, %p102
    %p104 = scmp.ne.s32.totalorder %s95, %s96
    %p105 = scmp.eq.s32.totalorder %s14, 0
    %p106 = por %p104, %p105
    %p107 = scmp.ne.s32.totalorder %s95, %s96
    %p108 = scmp.eq.s32.totalorder %s15, 1
    %p109 = por %p107, %p108
    %p111 = scmp.ne.s32.totalorder %s96, %s110
    %p112 = scmp.eq.s32.totalorder %s15, 0
    %p113 = por %p111, %p112
    %s114 = ssub.s32 %s16, %s28
    %s115 = ssub.s32 %s17, %s24
    %s116 = sor.u32 %s114, %s115
    %p117 = scmp.eq.s32.totalorder %s116, 0
    %s119 = sadd.s32 %s118, 1
    %s120 = scalar_select %p117, %s118, %s119
    %p123 = pneg %p117
    %p124 = scmp.eq.s32.totalorder %s9, 1
    %p125 = por %p123, %p124
    %p126 = scmp.ne.s32.totalorder %s118, %s121
    %p127 = scmp.eq.s32.totalorder %s9, 0
    %p128 = por %p126, %p127
    %p129 = scmp.ne.s32.totalorder %s118, %s121
    %p130 = scmp.eq.s32.totalorder %s14, 1
    %p131 = por %p129, %p130
    %p132 = scmp.ne.s32.totalorder %s121, %s122
    %p133 = scmp.eq.s32.totalorder %s14, 0
    %p134 = por %p132, %p133
    %p135 = scmp.ne.s32.totalorder %s121, %s122
    %p136 = scmp.eq.s32.totalorder %s15, 1
    %p137 = por %p135, %p136
    %p139 = scmp.ne.s32.totalorder %s122, %s138
    %p140 = scmp.eq.s32.totalorder %s15, 0
    %p141 = por %p139, %p140
    %p142 = scmp.le.s32.totalorder 1, %s9
    %p143 = scmp.lt.s32.totalorder %s9, 3
    %p144 = pnand %p142, %p143
    %p145 = pneg %p144
    // Predicated region
    $region9: #{unet_decoder_forward.6} parent=5 // pred_check
      _
    $region10: #{unet_decoder_forward.6} parent=5 // pred_check_branch
      %147 = sbr.rel (%p144) target = $region12
    $region11: #{unet_decoder_forward.6} parent=5 // pred_region
      %s148 = ssub.s32 %s9, 1
      // Predicated region
      $region13: #{unet_decoder_forward.6} parent=11 // pred_check
        %p149 = pneg %p106
      $region14: #{unet_decoder_forward.6} parent=11 // pred_check_branch
        %151 = sbr.rel (%p149) target = $region16
      $region15: #{unet_decoder_forward.6} parent=11 // pred_region
        _
      $region16: #{unet_decoder_forward.6} parent=11 // pred_fallthru
        _
    $region12: #{unet_decoder_forward.6} parent=5 // pred_fallthru
      _
    %p152 = scmp.lt.s32.totalorder %s9, 2
    // Predicated region
    $region17: #{unet_decoder_forward.6} parent=5 // pred_check
      %p153 = pneg %p152
    $region18: #{unet_decoder_forward.6} parent=5 // pred_check_branch
      %155 = sbr.rel (%p153) target = $region20
    $region19: #{unet_decoder_forward.6} parent=5 // pred_region
      // Predicated region
      $region21: #{unet_decoder_forward.6} parent=19 // pred_check
        %p156 = pneg %p43
      $region22: #{unet_decoder_forward.6} parent=19 // pred_check_branch
        %158 = sbr.rel (%p156) target = $region24
      $region23: #{unet_decoder_forward.6} parent=19 // pred_region
        %s159 = smul.u32 32, %s17
        %p160 = scmp.lt.s32.totalorder %s16, 1
        %s161 = scalar_select %p160, %s16, 1
        %p162 = scmp.lt.s32.totalorder %s159, 31
        %s163 = scalar_select %p162, %s159, 31
        %s164 = smul.addr %s163, 4
        %s165 = smul.addr %s161, 128
        %s166 = sadd.s32 %s164, %s165
        %s167 = smul.addr %s166, 4
        %s168 = scalar_lea.vmem %s0, %s167
        %s169 = smul.u32 32, %s17
      $region24: #{unet_decoder_forward.6} parent=19 // pred_fallthru
        _
      // Predicated region
      $region25: #{unet_decoder_forward.6} parent=19 // pred_check
        %p170 = pneg %p79
      $region26: #{unet_decoder_forward.6} parent=19 // pred_check_branch
        %172 = sbr.rel (%p170) target = $region28
      $region27: #{unet_decoder_forward.6} parent=19 // pred_region
        %s173 = sadd.s32 %s17, 1
        %s174 = smul.u32 %s173, 32
        %p175 = scmp.lt.s32.totalorder %s174, 31
        %s176 = scalar_select %p175, %s174, 31
        %p177 = scmp.lt.s32.totalorder %s16, 1
        %s178 = scalar_select %p177, %s16, 1
        %p179 = scmp.lt.s32.totalorder %s176, 31
        %s180 = scalar_select %p179, %s176, 31
        %s181 = smul.addr %s180, 4
        %s182 = smul.addr %s178, 128
        %s183 = sadd.s32 %s181, %s182
        %s184 = smul.addr %s183, 4
        %s185 = scalar_lea.vmem %s1, %s184
        %s186 = sadd.s32 %s17, 1
        %s187 = smul.u32 %s186, 32
        %p188 = scmp.lt.s32.totalorder %s187, 31
        %s189 = scalar_select %p188, %s187, 31
      $region28: #{unet_decoder_forward.6} parent=19 // pred_fallthru
        _
    $region20: #{unet_decoder_forward.6} parent=5 // pred_fallthru
      _
    %p190 = scmp.le.s32.totalorder 1, %s9
    %p191 = scmp.lt.s32.totalorder %s9, 3
    %p192 = pnand %p190, %p191
    %p193 = pneg %p192
    // Predicated region
    $region29: #{unet_decoder_forward.6} parent=5 // pred_check
      _
    $region30: #{unet_decoder_forward.6} parent=5 // pred_check_branch
      %195 = sbr.rel (%p192) target = $region32
    $region31: #{unet_decoder_forward.6} parent=5 // pred_region
      %s196 = ssub.s32 %s9, 1
      %s197 = smul.u32 32, %s19
      %p198 = scmp.lt.s32.totalorder %s18, 1
      %s199 = scalar_select %p198, %s18, 1
      %p200 = scmp.lt.s32.totalorder %s197, 31
      %s201 = scalar_select %p200, %s197, 31
      %s202 = smul.addr %s201, 4
      %s203 = smul.addr %s199, 128
      %s204 = sadd.s32 %s202, %s203
      %s205 = smul.addr %s204, 4
      %s206 = scalar_lea.vmem %s0, %s205
      %p207 = pneg %p49
      %p208 = pneg %p46
      %s209 = sadd.s32 %s19, 1
      %s210 = smul.u32 %s209, 32
      %p211 = scmp.lt.s32.totalorder %s210, 31
      %s212 = scalar_select %p211, %s210, 31
      %p213 = scmp.lt.s32.totalorder %s18, 1
      %s214 = scalar_select %p213, %s18, 1
      %p215 = scmp.lt.s32.totalorder %s212, 31
      %s216 = scalar_select %p215, %s212, 31
      %s217 = smul.addr %s216, 4
      %s218 = smul.addr %s214, 128
      %s219 = sadd.s32 %s217, %s218
      %s220 = smul.addr %s219, 4
      %s221 = scalar_lea.vmem %s1, %s220
      %p222 = pneg %p85
      %p223 = pneg %p82
      %p224 = pneg %p106
      %p225 = pneg %p103
      %p226 = pneg %p134
      %p227 = pneg %p131
      %p228 = scmp.lt.s32.totalorder %s18, 1
      %s229 = scalar_select %p228, %s18, 1
      %p230 = scmp.lt.s32.totalorder %s19, 0
      %s231 = scalar_select %p230, %s19, 0
      %s232 = sadd.s32 %s231, %s229
      %s233 = smul.addr %s232, 2
      %s234 = scalar_lea.vmem %s3, %s233
      %s235 = smul.u32 32, %s19
      %p236 = scmp.lt.s32.totalorder %s18, 1
      %s237 = scalar_select %p236, %s18, 1
      %p238 = scmp.lt.s32.totalorder %s235, 31
      %s239 = scalar_select %p238, %s235, 31
      %s240 = smul.addr %s239, 4
      %s241 = smul.addr %s237, 128
      %s242 = sadd.s32 %s240, %s241
      %s243 = smul.addr %s242, 4
      %s244 = scalar_lea.vmem %s0, %s243
      %s245 = smul.u32 32, %s19
      %s246 = sadd.s32 %s19, 1
      %s247 = smul.u32 %s246, 32
      %p248 = scmp.lt.s32.totalorder %s247, 31
      %s249 = scalar_select %p248, %s247, 31
      %p250 = scmp.lt.s32.totalorder %s18, 1
      %s251 = scalar_select %p250, %s18, 1
      %p252 = scmp.lt.s32.totalorder %s249, 31
      %s253 = scalar_select %p252, %s249, 31
      %s254 = smul.addr %s253, 4
      %s255 = smul.addr %s251, 128
      %s256 = sadd.s32 %s254, %s255
      %s257 = smul.addr %s256, 4
      %s258 = scalar_lea.vmem %s1, %s257
      %s259 = sadd.s32 %s19, 1
      %s260 = smul.u32 %s259, 32
      %p261 = scmp.lt.s32.totalorder %s260, 31
      %s262 = scalar_select %p261, %s260, 31
      %p263 = scmp.lt.s32.totalorder %s18, 1
      %s264 = scalar_select %p263, %s18, 1
      %p265 = scmp.lt.s32.totalorder %s19, 0
      %s266 = scalar_select %p265, %s19, 0
      %s267 = sadd.s32 %s266, %s264
      %s268 = smul.addr %s267, 2
      %s269 = scalar_lea.vmem %s3, %s268
      %p271 = scmp.eq.s32.totalorder %s19, 0
      %v272 = vld [vmem:[%s244] sm:$0xf]
      %v273 = vld [vmem:[%s244 + $0x4] sm:$0xf]
      %v274 = vld [vmem:[%s244 + $0x8] sm:$0xf]
      %v275 = vld [vmem:[%s244 + $0xc] sm:$0xf]
      %v276 = vld [vmem:[%s244 + $0x10] sm:$0xf]
      %v277 = vld [vmem:[%s244 + $0x14] sm:$0xf]
      %v278 = vld [vmem:[%s244 + $0x18] sm:$0xf]
      %v279 = vld [vmem:[%s244 + $0x1c] sm:$0xf]
      %v280 = vld [vmem:[%s244 + $0x20] sm:$0xf]
      %v281 = vld [vmem:[%s244 + $0x24] sm:$0xf]
      %v282 = vld [vmem:[%s244 + $0x28] sm:$0xf]
      %v283 = vld [vmem:[%s244 + $0x2c] sm:$0xf]
      %v284 = vld [vmem:[%s244 + $0x30] sm:$0xf]
      %v285 = vld [vmem:[%s244 + $0x34] sm:$0xf]
      %v286 = vld [vmem:[%s244 + $0x38] sm:$0xf]
      %v287 = vld [vmem:[%s244 + $0x3c] sm:$0xf]
      %v288 = vld [vmem:[%s244 + $0x40] sm:$0xf]
      %v289 = vld [vmem:[%s244 + $0x44] sm:$0xf]
      %v290 = vld [vmem:[%s244 + $0x48] sm:$0xf]
      %v291 = vld [vmem:[%s244 + $0x4c] sm:$0xf]
      %v292 = vld [vmem:[%s244 + $0x50] sm:$0xf]
      %v293 = vld [vmem:[%s244 + $0x54] sm:$0xf]
      %v294 = vld [vmem:[%s244 + $0x58] sm:$0xf]
      %v295 = vld [vmem:[%s244 + $0x5c] sm:$0xf]
      %v296 = vld [vmem:[%s244 + $0x60] sm:$0xf]
      %v297 = vld [vmem:[%s244 + $0x64] sm:$0xf]
      %v298 = vld [vmem:[%s244 + $0x68] sm:$0xf]
      %v299 = vld [vmem:[%s244 + $0x6c] sm:$0xf]
      %v300 = vld [vmem:[%s244 + $0x70] sm:$0xf]
      %v301 = vld [vmem:[%s244 + $0x74] sm:$0xf]
      %v302 = vld [vmem:[%s244 + $0x78] sm:$0xf]
      %v303 = vld [vmem:[%s244 + $0x7c] sm:$0xf]
      %v304 = vld [vmem:[%s244 + $0x80] sm:$0xf]
      %v305 = vld [vmem:[%s244 + $0x84] sm:$0xf]
      %v306 = vld [vmem:[%s244 + $0x88] sm:$0xf]
      %v307 = vld [vmem:[%s244 + $0x8c] sm:$0xf]
      %v308 = vld [vmem:[%s244 + $0x90] sm:$0xf]
      %v309 = vld [vmem:[%s244 + $0x94] sm:$0xf]
      %v310 = vld [vmem:[%s244 + $0x98] sm:$0xf]
      %v311 = vld [vmem:[%s244 + $0x9c] sm:$0xf]
      %v312 = vld [vmem:[%s244 + $0xa0] sm:$0xf]
      %v313 = vld [vmem:[%s244 + $0xa4] sm:$0xf]
      %v314 = vld [vmem:[%s244 + $0xa8] sm:$0xf]
      %v315 = vld [vmem:[%s244 + $0xac] sm:$0xf]
      %v316 = vld [vmem:[%s244 + $0xb0] sm:$0xf]
      %v317 = vld [vmem:[%s244 + $0xb4] sm:$0xf]
      %v318 = vld [vmem:[%s244 + $0xb8] sm:$0xf]
      %v319 = vld [vmem:[%s244 + $0xbc] sm:$0xf]
      %v320 = vld [vmem:[%s244 + $0xc0] sm:$0xf]
      %v321 = vld [vmem:[%s244 + $0xc4] sm:$0xf]
      %v322 = vld [vmem:[%s244 + $0xc8] sm:$0xf]
      %v323 = vld [vmem:[%s244 + $0xcc] sm:$0xf]
      %v324 = vld [vmem:[%s244 + $0xd0] sm:$0xf]
      %v325 = vld [vmem:[%s244 + $0xd4] sm:$0xf]
      %v326 = vld [vmem:[%s244 + $0xd8] sm:$0xf]
      %v327 = vld [vmem:[%s244 + $0xdc] sm:$0xf]
      %v328 = vld [vmem:[%s244 + $0xe0] sm:$0xf]
      %v329 = vld [vmem:[%s244 + $0xe4] sm:$0xf]
      %v330 = vld [vmem:[%s244 + $0xe8] sm:$0xf]
      %v331 = vld [vmem:[%s244 + $0xec] sm:$0xf]
      %v332 = vld [vmem:[%s244 + $0xf0] sm:$0xf]
      %v333 = vld [vmem:[%s244 + $0xf4] sm:$0xf]
      %v334 = vld [vmem:[%s244 + $0xf8] sm:$0xf]
      %v335 = vld [vmem:[%s244 + $0xfc] sm:$0xf]
      %v336 = vld [vmem:[%s244 + $0x100] sm:$0xf]
      %v337 = vld [vmem:[%s244 + $0x104] sm:$0xf]
      %v338 = vld [vmem:[%s244 + $0x108] sm:$0xf]
      %v339 = vld [vmem:[%s244 + $0x10c] sm:$0xf]
      %v340 = vld [vmem:[%s244 + $0x110] sm:$0xf]
      %v341 = vld [vmem:[%s244 + $0x114] sm:$0xf]
      %v342 = vld [vmem:[%s244 + $0x118] sm:$0xf]
      %v343 = vld [vmem:[%s244 + $0x11c] sm:$0xf]
      %v344 = vld [vmem:[%s244 + $0x120] sm:$0xf]
      %v345 = vld [vmem:[%s244 + $0x124] sm:$0xf]
      %v346 = vld [vmem:[%s244 + $0x128] sm:$0xf]
      %v347 = vld [vmem:[%s244 + $0x12c] sm:$0xf]
      %v348 = vld [vmem:[%s244 + $0x130] sm:$0xf]
      %v349 = vld [vmem:[%s244 + $0x134] sm:$0xf]
      %v350 = vld [vmem:[%s244 + $0x138] sm:$0xf]
      %v351 = vld [vmem:[%s244 + $0x13c] sm:$0xf]
      %v352 = vld [vmem:[%s244 + $0x140] sm:$0xf]
      %v353 = vld [vmem:[%s244 + $0x144] sm:$0xf]
      %v354 = vld [vmem:[%s244 + $0x148] sm:$0xf]
      %v355 = vld [vmem:[%s244 + $0x14c] sm:$0xf]
      %v356 = vld [vmem:[%s244 + $0x150] sm:$0xf]
      %v357 = vld [vmem:[%s244 + $0x154] sm:$0xf]
      %v358 = vld [vmem:[%s244 + $0x158] sm:$0xf]
      %v359 = vld [vmem:[%s244 + $0x15c] sm:$0xf]
      %v360 = vld [vmem:[%s244 + $0x160] sm:$0xf]
      %v361 = vld [vmem:[%s244 + $0x164] sm:$0xf]
      %v362 = vld [vmem:[%s244 + $0x168] sm:$0xf]
      %v363 = vld [vmem:[%s244 + $0x16c] sm:$0xf]
      %v364 = vld [vmem:[%s244 + $0x170] sm:$0xf]
      %v365 = vld [vmem:[%s244 + $0x174] sm:$0xf]
      %v366 = vld [vmem:[%s244 + $0x178] sm:$0xf]
      %v367 = vld [vmem:[%s244 + $0x17c] sm:$0xf]
      %v368 = vld [vmem:[%s244 + $0x180] sm:$0xf]
      %v369 = vld [vmem:[%s244 + $0x184] sm:$0xf]
      %v370 = vld [vmem:[%s244 + $0x188] sm:$0xf]
      %v371 = vld [vmem:[%s244 + $0x18c] sm:$0xf]
      %v372 = vld [vmem:[%s244 + $0x190] sm:$0xf]
      %v373 = vld [vmem:[%s244 + $0x194] sm:$0xf]
      %v374 = vld [vmem:[%s244 + $0x198] sm:$0xf]
      %v375 = vld [vmem:[%s244 + $0x19c] sm:$0xf]
      %v376 = vld [vmem:[%s244 + $0x1a0] sm:$0xf]
      %v377 = vld [vmem:[%s244 + $0x1a4] sm:$0xf]
      %v378 = vld [vmem:[%s244 + $0x1a8] sm:$0xf]
      %v379 = vld [vmem:[%s244 + $0x1ac] sm:$0xf]
      %v380 = vld [vmem:[%s244 + $0x1b0] sm:$0xf]
      %v381 = vld [vmem:[%s244 + $0x1b4] sm:$0xf]
      %v382 = vld [vmem:[%s244 + $0x1b8] sm:$0xf]
      %v383 = vld [vmem:[%s244 + $0x1bc] sm:$0xf]
      %v384 = vld [vmem:[%s244 + $0x1c0] sm:$0xf]
      %v385 = vld [vmem:[%s244 + $0x1c4] sm:$0xf]
      %v386 = vld [vmem:[%s244 + $0x1c8] sm:$0xf]
      %v387 = vld [vmem:[%s244 + $0x1cc] sm:$0xf]
      %v388 = vld [vmem:[%s244 + $0x1d0] sm:$0xf]
      %v389 = vld [vmem:[%s244 + $0x1d4] sm:$0xf]
      %v390 = vld [vmem:[%s244 + $0x1d8] sm:$0xf]
      %v391 = vld [vmem:[%s244 + $0x1dc] sm:$0xf]
      %v392 = vld [vmem:[%s244 + $0x1e0] sm:$0xf]
      %v393 = vld [vmem:[%s244 + $0x1e4] sm:$0xf]
      %v394 = vld [vmem:[%s244 + $0x1e8] sm:$0xf]
      %v395 = vld [vmem:[%s244 + $0x1ec] sm:$0xf]
      %v396 = vld [vmem:[%s244 + $0x1f0] sm:$0xf]
      %v397 = vld [vmem:[%s244 + $0x1f4] sm:$0xf]
      %v398 = vld [vmem:[%s244 + $0x1f8] sm:$0xf]
      %v399 = vld [vmem:[%s244 + $0x1fc] sm:$0xf]
      %v400 = vld [vmem:[%s258] sm:$0xf]
      %v401 = vld [vmem:[%s258 + $0x4] sm:$0xf]
      %v402 = vld [vmem:[%s258 + $0x8] sm:$0xf]
      %v403 = vld [vmem:[%s258 + $0xc] sm:$0xf]
      %s404 = scalar_select %p271, 1, 0
      %v405 = vstv %s404
      %vm406 = vcmp.eq.s32.totalorder %v405, 1
      %v407 = vsel %vm406, 0, %v400
      %v408 = vsel %vm406, 0, %v401
      %v409 = vsel %vm406, 0, %v402
      %v410 = vsel %vm406, 0, %v403
      %v543 = vunpack.c.l.b16 %v272
      %v544 = vunpack.c.l.b16 %v273
      %v545 = vunpack.c.l.b16 %v274
      %v546 = vunpack.c.l.b16 %v275
      %v547 = vunpack.c.l.b16 %v276
      %v548 = vunpack.c.l.b16 %v277
      %v549 = vunpack.c.l.b16 %v278
      %v550 = vunpack.c.l.b16 %v279
      %v551 = vunpack.c.l.b16 %v280
      %v552 = vunpack.c.l.b16 %v281
      %v553 = vunpack.c.l.b16 %v282
      %v554 = vunpack.c.l.b16 %v283
      %v555 = vunpack.c.l.b16 %v284
      %v556 = vunpack.c.l.b16 %v285
      %v557 = vunpack.c.l.b16 %v286
      %v558 = vunpack.c.l.b16 %v287
      %v559 = vunpack.c.l.b16 %v288
      %v560 = vunpack.c.l.b16 %v289
      %v561 = vunpack.c.l.b16 %v290
      %v562 = vunpack.c.l.b16 %v291
      %v563 = vunpack.c.l.b16 %v292
      %v564 = vunpack.c.l.b16 %v293
      %v565 = vunpack.c.l.b16 %v294
      %v566 = vunpack.c.l.b16 %v295
      %v567 = vunpack.c.l.b16 %v296
      %v568 = vunpack.c.l.b16 %v297
      %v569 = vunpack.c.l.b16 %v298
      %v570 = vunpack.c.l.b16 %v299
      %v571 = vunpack.c.l.b16 %v300
      %v572 = vunpack.c.l.b16 %v301
      %v573 = vunpack.c.l.b16 %v302
      %v574 = vunpack.c.l.b16 %v303
      %v575 = vunpack.c.l.b16 %v304
      %v576 = vunpack.c.l.b16 %v305
      %v577 = vunpack.c.l.b16 %v306
      %v578 = vunpack.c.l.b16 %v307
      %v579 = vunpack.c.l.b16 %v308
      %v580 = vunpack.c.l.b16 %v309
      %v581 = vunpack.c.l.b16 %v310
      %v582 = vunpack.c.l.b16 %v311
      %v583 = vunpack.c.l.b16 %v312
      %v584 = vunpack.c.l.b16 %v313
      %v585 = vunpack.c.l.b16 %v314
      %v586 = vunpack.c.l.b16 %v315
      %v587 = vunpack.c.l.b16 %v316
      %v588 = vunpack.c.l.b16 %v317
      %v589 = vunpack.c.l.b16 %v318
      %v590 = vunpack.c.l.b16 %v319
      %v591 = vunpack.c.l.b16 %v320
      %v592 = vunpack.c.l.b16 %v321
      %v593 = vunpack.c.l.b16 %v322
      %v594 = vunpack.c.l.b16 %v323
      %v595 = vunpack.c.l.b16 %v324
      %v596 = vunpack.c.l.b16 %v325
      %v597 = vunpack.c.l.b16 %v326
      %v598 = vunpack.c.l.b16 %v327
      %v599 = vunpack.c.l.b16 %v328
      %v600 = vunpack.c.l.b16 %v329
      %v601 = vunpack.c.l.b16 %v330
      %v602 = vunpack.c.l.b16 %v331
      %v603 = vunpack.c.l.b16 %v332
      %v604 = vunpack.c.l.b16 %v333
      %v605 = vunpack.c.l.b16 %v334
      %v606 = vunpack.c.l.b16 %v335
      %v607 = vunpack.c.l.b16 %v336
      %v608 = vunpack.c.l.b16 %v337
      %v609 = vunpack.c.l.b16 %v338
      %v610 = vunpack.c.l.b16 %v339
      %v611 = vunpack.c.l.b16 %v340
      %v612 = vunpack.c.l.b16 %v341
      %v613 = vunpack.c.l.b16 %v342
      %v614 = vunpack.c.l.b16 %v343
      %v615 = vunpack.c.l.b16 %v344
      %v616 = vunpack.c.l.b16 %v345
      %v617 = vunpack.c.l.b16 %v346
      %v618 = vunpack.c.l.b16 %v347
      %v619 = vunpack.c.l.b16 %v348
      %v620 = vunpack.c.l.b16 %v349
      %v621 = vunpack.c.l.b16 %v350
      %v622 = vunpack.c.l.b16 %v351
      %v623 = vunpack.c.l.b16 %v352
      %v624 = vunpack.c.l.b16 %v353
      %v625 = vunpack.c.l.b16 %v354
      %v626 = vunpack.c.l.b16 %v355
      %v627 = vunpack.c.l.b16 %v356
      %v628 = vunpack.c.l.b16 %v357
      %v629 = vunpack.c.l.b16 %v358
      %v630 = vunpack.c.l.b16 %v359
      %v631 = vunpack.c.l.b16 %v360
      %v632 = vunpack.c.l.b16 %v361
      %v633 = vunpack.c.l.b16 %v362
      %v634 = vunpack.c.l.b16 %v363
      %v635 = vunpack.c.l.b16 %v364
      %v636 = vunpack.c.l.b16 %v365
      %v637 = vunpack.c.l.b16 %v366
      %v638 = vunpack.c.l.b16 %v367
      %v639 = vunpack.c.l.b16 %v368
      %v640 = vunpack.c.l.b16 %v369
      %v641 = vunpack.c.l.b16 %v370
      %v642 = vunpack.c.l.b16 %v371
      %v643 = vunpack.c.l.b16 %v372
      %v644 = vunpack.c.l.b16 %v373
      %v645 = vunpack.c.l.b16 %v374
      %v646 = vunpack.c.l.b16 %v375
      %v647 = vunpack.c.l.b16 %v376
      %v648 = vunpack.c.l.b16 %v377
      %v649 = vunpack.c.l.b16 %v378
      %v650 = vunpack.c.l.b16 %v379
      %v651 = vunpack.c.l.b16 %v380
      %v652 = vunpack.c.l.b16 %v381
      %v653 = vunpack.c.l.b16 %v382
      %v654 = vunpack.c.l.b16 %v383
      %v655 = vunpack.c.l.b16 %v384
      %v656 = vunpack.c.l.b16 %v385
      %v657 = vunpack.c.l.b16 %v386
      %v658 = vunpack.c.l.b16 %v387
      %v659 = vunpack.c.l.b16 %v388
      %v660 = vunpack.c.l.b16 %v389
      %v661 = vunpack.c.l.b16 %v390
      %v662 = vunpack.c.l.b16 %v391
      %v663 = vunpack.c.l.b16 %v392
      %v664 = vunpack.c.l.b16 %v393
      %v665 = vunpack.c.l.b16 %v394
      %v666 = vunpack.c.l.b16 %v395
      %v667 = vunpack.c.l.b16 %v396
      %v668 = vunpack.c.l.b16 %v397
      %v669 = vunpack.c.l.b16 %v398
      %v670 = vunpack.c.l.b16 %v399
      %v671 = vunpack.c.l.b16 %v407
      %v672 = vunpack.c.l.b16 %v408
      %v673 = vunpack.c.l.b16 %v409
      %v674 = vunpack.c.l.b16 %v410
      %v675 = vpack.c.b16 %v544, %v543
      %v676 = vpack.c.b16 %v546, %v545
      %v677 = vpack.c.b16 %v548, %v547
      %v678 = vpack.c.b16 %v550, %v549
      %v679 = vpack.c.b16 %v552, %v551
      %v680 = vpack.c.b16 %v554, %v553
      %v681 = vpack.c.b16 %v556, %v555
      %v682 = vpack.c.b16 %v558, %v557
      %v683 = vpack.c.b16 %v560, %v559
      %v684 = vpack.c.b16 %v562, %v561
      %v685 = vpack.c.b16 %v564, %v563
      %v686 = vpack.c.b16 %v566, %v565
      %v687 = vpack.c.b16 %v568, %v567
      %v688 = vpack.c.b16 %v570, %v569
      %v689 = vpack.c.b16 %v572, %v571
      %v690 = vpack.c.b16 %v574, %v573
      %v691 = vpack.c.b16 %v576, %v575
      %v692 = vpack.c.b16 %v578, %v577
      %v693 = vpack.c.b16 %v580, %v579
      %v694 = vpack.c.b16 %v582, %v581
      %v695 = vpack.c.b16 %v584, %v583
      %v696 = vpack.c.b16 %v586, %v585
      %v697 = vpack.c.b16 %v588, %v587
      %v698 = vpack.c.b16 %v590, %v589
      %v699 = vpack.c.b16 %v592, %v591
      %v700 = vpack.c.b16 %v594, %v593
      %v701 = vpack.c.b16 %v596, %v595
      %v702 = vpack.c.b16 %v598, %v597
      %v703 = vpack.c.b16 %v600, %v599
      %v704 = vpack.c.b16 %v602, %v601
      %v705 = vpack.c.b16 %v604, %v603
      %v706 = vpack.c.b16 %v606, %v605
      %v707 = vpack.c.b16 %v608, %v607
      %v708 = vpack.c.b16 %v610, %v609
      %v709 = vpack.c.b16 %v612, %v611
      %v710 = vpack.c.b16 %v614, %v613
      %v711 = vpack.c.b16 %v616, %v615
      %v712 = vpack.c.b16 %v618, %v617
      %v713 = vpack.c.b16 %v620, %v619
      %v714 = vpack.c.b16 %v622, %v621
      %v715 = vpack.c.b16 %v624, %v623
      %v716 = vpack.c.b16 %v626, %v625
      %v717 = vpack.c.b16 %v628, %v627
      %v718 = vpack.c.b16 %v630, %v629
      %v719 = vpack.c.b16 %v632, %v631
      %v720 = vpack.c.b16 %v634, %v633
      %v721 = vpack.c.b16 %v636, %v635
      %v722 = vpack.c.b16 %v638, %v637
      %v723 = vpack.c.b16 %v640, %v639
      %v724 = vpack.c.b16 %v642, %v641
      %v725 = vpack.c.b16 %v644, %v643
      %v726 = vpack.c.b16 %v646, %v645
      %v727 = vpack.c.b16 %v648, %v647
      %v728 = vpack.c.b16 %v650, %v649
      %v729 = vpack.c.b16 %v652, %v651
      %v730 = vpack.c.b16 %v654, %v653
      %v731 = vpack.c.b16 %v656, %v655
      %v732 = vpack.c.b16 %v658, %v657
      %v733 = vpack.c.b16 %v660, %v659
      %v734 = vpack.c.b16 %v662, %v661
      %v735 = vpack.c.b16 %v664, %v663
      %v736 = vpack.c.b16 %v666, %v665
      %v737 = vpack.c.b16 %v668, %v667
      %v738 = vpack.c.b16 %v670, %v669
      %v739 = vpack.c.b16 %v672, %v671
      %v740 = vpack.c.b16 %v674, %v673
      %v741 = vld [vmem:[%s2] sm:$0xf]
      %v742 = vld [vmem:[%s2 + $0x4] sm:$0xf]
      %v743 = vld [vmem:[%s2 + $0x8] sm:$0xf]
      %v744 = vld [vmem:[%s2 + $0xc] sm:$0xf]
      %vm745 = vsmask.f32 7424
      %v747 = vshrl.u32 %v675, 16
      %v749 = vshll.u32 %v675, 16
      %v751 = vrot.slane %v749, 1
      %v752 = vor.u32 %v747, %v751
      %v754 = vshll.u32 %v676, 16
      %v756 = vrot.slane %v754, 1
      %v757 = vsel %vm745, %v752, %v756
      %v758 = vshrl.u32 %v676, 16
      %v760 = vor.u32 %v758, %v756
      %v762 = vshll.u32 0, 16
      %v764 = vrot.slane %v762, 1
      %v765 = vsel %vm745, %v760, %v764
      %v767 = vshrl.u32 %v677, 16
      %v769 = vshll.u32 %v677, 16
      %v771 = vrot.slane %v769, 1
      %v772 = vor.u32 %v767, %v771
      %v774 = vshll.u32 %v678, 16
      %v776 = vrot.slane %v774, 1
      %v777 = vsel %vm745, %v772, %v776
      %v778 = vshrl.u32 %v678, 16
      %v780 = vor.u32 %v778, %v776
      %v781 = vsel %vm745, %v780, %v764
      %v783 = vshrl.u32 %v679, 16
      %v785 = vshll.u32 %v679, 16
      %v787 = vrot.slane %v785, 1
      %v788 = vor.u32 %v783, %v787
      %v790 = vshll.u32 %v680, 16
      %v792 = vrot.slane %v790, 1
      %v793 = vsel %vm745, %v788, %v792
      %v794 = vshrl.u32 %v680, 16
      %v796 = vor.u32 %v794, %v792
      %v797 = vsel %vm745, %v796, %v764
      %v799 = vshrl.u32 %v681, 16
      %v801 = vshll.u32 %v681, 16
      %v803 = vrot.slane %v801, 1
      %v804 = vor.u32 %v799, %v803
      %v806 = vshll.u32 %v682, 16
      %v808 = vrot.slane %v806, 1
      %v809 = vsel %vm745, %v804, %v808
      %v810 = vshrl.u32 %v682, 16
      %v812 = vor.u32 %v810, %v808
      %v813 = vsel %vm745, %v812, %v764
      %v815 = vshrl.u32 %v683, 16
      %v817 = vshll.u32 %v683, 16
      %v819 = vrot.slane %v817, 1
      %v820 = vor.u32 %v815, %v819
      %v822 = vshll.u32 %v684, 16
      %v824 = vrot.slane %v822, 1
      %v825 = vsel %vm745, %v820, %v824
      %v826 = vshrl.u32 %v684, 16
      %v828 = vor.u32 %v826, %v824
      %v829 = vsel %vm745, %v828, %v764
      %v831 = vshrl.u32 %v685, 16
      %v833 = vshll.u32 %v685, 16
      %v835 = vrot.slane %v833, 1
      %v836 = vor.u32 %v831, %v835
      %v838 = vshll.u32 %v686, 16
      %v840 = vrot.slane %v838, 1
      %v841 = vsel %vm745, %v836, %v840
      %v842 = vshrl.u32 %v686, 16
      %v844 = vor.u32 %v842, %v840
      %v845 = vsel %vm745, %v844, %v764
      %v847 = vshrl.u32 %v687, 16
      %v849 = vshll.u32 %v687, 16
      %v851 = vrot.slane %v849, 1
      %v852 = vor.u32 %v847, %v851
      %v854 = vshll.u32 %v688, 16
      %v856 = vrot.slane %v854, 1
      %v857 = vsel %vm745, %v852, %v856
      %v858 = vshrl.u32 %v688, 16
      %v860 = vor.u32 %v858, %v856
      %v861 = vsel %vm745, %v860, %v764
      %v863 = vshrl.u32 %v689, 16
      %v865 = vshll.u32 %v689, 16
      %v867 = vrot.slane %v865, 1
      %v868 = vor.u32 %v863, %v867
      %v870 = vshll.u32 %v690, 16
      %v872 = vrot.slane %v870, 1
      %v873 = vsel %vm745, %v868, %v872
      %v874 = vshrl.u32 %v690, 16
      %v876 = vor.u32 %v874, %v872
      %v877 = vsel %vm745, %v876, %v764
      %v879 = vshrl.u32 %v691, 16
      %v881 = vshll.u32 %v691, 16
      %v883 = vrot.slane %v881, 1
      %v884 = vor.u32 %v879, %v883
      %v886 = vshll.u32 %v692, 16
      %v888 = vrot.slane %v886, 1
      %v889 = vsel %vm745, %v884, %v888
      %v890 = vshrl.u32 %v692, 16
      %v892 = vor.u32 %v890, %v888
      %v893 = vsel %vm745, %v892, %v764
      %v895 = vshrl.u32 %v693, 16
      %v897 = vshll.u32 %v693, 16
      %v899 = vrot.slane %v897, 1
      %v900 = vor.u32 %v895, %v899
      %v902 = vshll.u32 %v694, 16
      %v904 = vrot.slane %v902, 1
      %v905 = vsel %vm745, %v900, %v904
      %v906 = vshrl.u32 %v694, 16
      %v908 = vor.u32 %v906, %v904
      %v909 = vsel %vm745, %v908, %v764
      %v911 = vshrl.u32 %v695, 16
      %v913 = vshll.u32 %v695, 16
      %v915 = vrot.slane %v913, 1
      %v916 = vor.u32 %v911, %v915
      %v918 = vshll.u32 %v696, 16
      %v920 = vrot.slane %v918, 1
      %v921 = vsel %vm745, %v916, %v920
      %v922 = vshrl.u32 %v696, 16
      %v924 = vor.u32 %v922, %v920
      %v925 = vsel %vm745, %v924, %v764
      %v927 = vshrl.u32 %v697, 16
      %v929 = vshll.u32 %v697, 16
      %v931 = vrot.slane %v929, 1
      %v932 = vor.u32 %v927, %v931
      %v934 = vshll.u32 %v698, 16
      %v936 = vrot.slane %v934, 1
      %v937 = vsel %vm745, %v932, %v936
      %v938 = vshrl.u32 %v698, 16
      %v940 = vor.u32 %v938, %v936
      %v941 = vsel %vm745, %v940, %v764
      %v943 = vshrl.u32 %v699, 16
      %v945 = vshll.u32 %v699, 16
      %v947 = vrot.slane %v945, 1
      %v948 = vor.u32 %v943, %v947
      %v950 = vshll.u32 %v700, 16
      %v952 = vrot.slane %v950, 1
      %v953 = vsel %vm745, %v948, %v952
      %v954 = vshrl.u32 %v700, 16
      %v956 = vor.u32 %v954, %v952
      %v957 = vsel %vm745, %v956, %v764
      %v959 = vshrl.u32 %v701, 16
      %v961 = vshll.u32 %v701, 16
      %v963 = vrot.slane %v961, 1
      %v964 = vor.u32 %v959, %v963
      %v966 = vshll.u32 %v702, 16
      %v968 = vrot.slane %v966, 1
      %v969 = vsel %vm745, %v964, %v968
      %v970 = vshrl.u32 %v702, 16
      %v972 = vor.u32 %v970, %v968
      %v973 = vsel %vm745, %v972, %v764
      %v975 = vshrl.u32 %v703, 16
      %v977 = vshll.u32 %v703, 16
      %v979 = vrot.slane %v977, 1
      %v980 = vor.u32 %v975, %v979
      %v982 = vshll.u32 %v704, 16
      %v984 = vrot.slane %v982, 1
      %v985 = vsel %vm745, %v980, %v984
      %v986 = vshrl.u32 %v704, 16
      %v988 = vor.u32 %v986, %v984
      %v989 = vsel %vm745, %v988, %v764
      %v991 = vshrl.u32 %v705, 16
      %v993 = vshll.u32 %v705, 16
      %v995 = vrot.slane %v993, 1
      %v996 = vor.u32 %v991, %v995
      %v998 = vshll.u32 %v706, 16
      %v1000 = vrot.slane %v998, 1
      %v1001 = vsel %vm745, %v996, %v1000
      %v1002 = vshrl.u32 %v706, 16
      %v1004 = vor.u32 %v1002, %v1000
      %v1005 = vsel %vm745, %v1004, %v764
      %v1007 = vshrl.u32 %v707, 16
      %v1009 = vshll.u32 %v707, 16
      %v1011 = vrot.slane %v1009, 1
      %v1012 = vor.u32 %v1007, %v1011
      %v1014 = vshll.u32 %v708, 16
      %v1016 = vrot.slane %v1014, 1
      %v1017 = vsel %vm745, %v1012, %v1016
      %v1018 = vshrl.u32 %v708, 16
      %v1020 = vor.u32 %v1018, %v1016
      %v1021 = vsel %vm745, %v1020, %v764
      %v1023 = vshrl.u32 %v709, 16
      %v1025 = vshll.u32 %v709, 16
      %v1027 = vrot.slane %v1025, 1
      %v1028 = vor.u32 %v1023, %v1027
      %v1030 = vshll.u32 %v710, 16
      %v1032 = vrot.slane %v1030, 1
      %v1033 = vsel %vm745, %v1028, %v1032
      %v1034 = vshrl.u32 %v710, 16
      %v1036 = vor.u32 %v1034, %v1032
      %v1037 = vsel %vm745, %v1036, %v764
      %v1039 = vshrl.u32 %v711, 16
      %v1041 = vshll.u32 %v711, 16
      %v1043 = vrot.slane %v1041, 1
      %v1044 = vor.u32 %v1039, %v1043
      %v1046 = vshll.u32 %v712, 16
      %v1048 = vrot.slane %v1046, 1
      %v1049 = vsel %vm745, %v1044, %v1048
      %v1050 = vshrl.u32 %v712, 16
      %v1052 = vor.u32 %v1050, %v1048
      %v1053 = vsel %vm745, %v1052, %v764
      %v1055 = vshrl.u32 %v713, 16
      %v1057 = vshll.u32 %v713, 16
      %v1059 = vrot.slane %v1057, 1
      %v1060 = vor.u32 %v1055, %v1059
      %v1062 = vshll.u32 %v714, 16
      %v1064 = vrot.slane %v1062, 1
      %v1065 = vsel %vm745, %v1060, %v1064
      %v1066 = vshrl.u32 %v714, 16
      %v1068 = vor.u32 %v1066, %v1064
      %v1069 = vsel %vm745, %v1068, %v764
      %v1071 = vshrl.u32 %v715, 16
      %v1073 = vshll.u32 %v715, 16
      %v1075 = vrot.slane %v1073, 1
      %v1076 = vor.u32 %v1071, %v1075
      %v1078 = vshll.u32 %v716, 16
      %v1080 = vrot.slane %v1078, 1
      %v1081 = vsel %vm745, %v1076, %v1080
      %v1082 = vshrl.u32 %v716, 16
      %v1084 = vor.u32 %v1082, %v1080
      %v1085 = vsel %vm745, %v1084, %v764
      %v1087 = vshrl.u32 %v717, 16
      %v1089 = vshll.u32 %v717, 16
      %v1091 = vrot.slane %v1089, 1
      %v1092 = vor.u32 %v1087, %v1091
      %v1094 = vshll.u32 %v718, 16
      %v1096 = vrot.slane %v1094, 1
      %v1097 = vsel %vm745, %v1092, %v1096
      %v1098 = vshrl.u32 %v718, 16
      %v1100 = vor.u32 %v1098, %v1096
      %v1101 = vsel %vm745, %v1100, %v764
      %v1103 = vshrl.u32 %v719, 16
      %v1105 = vshll.u32 %v719, 16
      %v1107 = vrot.slane %v1105, 1
      %v1108 = vor.u32 %v1103, %v1107
      %v1110 = vshll.u32 %v720, 16
      %v1112 = vrot.slane %v1110, 1
      %v1113 = vsel %vm745, %v1108, %v1112
      %v1114 = vshrl.u32 %v720, 16
      %v1116 = vor.u32 %v1114, %v1112
      %v1117 = vsel %vm745, %v1116, %v764
      %v1119 = vshrl.u32 %v721, 16
      %v1121 = vshll.u32 %v721, 16
      %v1123 = vrot.slane %v1121, 1
      %v1124 = vor.u32 %v1119, %v1123
      %v1126 = vshll.u32 %v722, 16
      %v1128 = vrot.slane %v1126, 1
      %v1129 = vsel %vm745, %v1124, %v1128
      %v1130 = vshrl.u32 %v722, 16
      %v1132 = vor.u32 %v1130, %v1128
      %v1133 = vsel %vm745, %v1132, %v764
      %v1135 = vshrl.u32 %v723, 16
      %v1137 = vshll.u32 %v723, 16
      %v1139 = vrot.slane %v1137, 1
      %v1140 = vor.u32 %v1135, %v1139
      %v1142 = vshll.u32 %v724, 16
      %v1144 = vrot.slane %v1142, 1
      %v1145 = vsel %vm745, %v1140, %v1144
      %v1146 = vshrl.u32 %v724, 16
      %v1148 = vor.u32 %v1146, %v1144
      %v1149 = vsel %vm745, %v1148, %v764
      %v1151 = vshrl.u32 %v725, 16
      %v1153 = vshll.u32 %v725, 16
      %v1155 = vrot.slane %v1153, 1
      %v1156 = vor.u32 %v1151, %v1155
      %v1158 = vshll.u32 %v726, 16
      %v1160 = vrot.slane %v1158, 1
      %v1161 = vsel %vm745, %v1156, %v1160
      %v1162 = vshrl.u32 %v726, 16
      %v1164 = vor.u32 %v1162, %v1160
      %v1165 = vsel %vm745, %v1164, %v764
      %v1167 = vshrl.u32 %v727, 16
      %v1169 = vshll.u32 %v727, 16
      %v1171 = vrot.slane %v1169, 1
      %v1172 = vor.u32 %v1167, %v1171
      %v1174 = vshll.u32 %v728, 16
      %v1176 = vrot.slane %v1174, 1
      %v1177 = vsel %vm745, %v1172, %v1176
      %v1178 = vshrl.u32 %v728, 16
      %v1180 = vor.u32 %v1178, %v1176
      %v1181 = vsel %vm745, %v1180, %v764
      %v1183 = vshrl.u32 %v729, 16
      %v1185 = vshll.u32 %v729, 16
      %v1187 = vrot.slane %v1185, 1
      %v1188 = vor.u32 %v1183, %v1187
      %v1190 = vshll.u32 %v730, 16
      %v1192 = vrot.slane %v1190, 1
      %v1193 = vsel %vm745, %v1188, %v1192
      %v1194 = vshrl.u32 %v730, 16
      %v1196 = vor.u32 %v1194, %v1192
      %v1197 = vsel %vm745, %v1196, %v764
      %v1199 = vshrl.u32 %v731, 16
      %v1201 = vshll.u32 %v731, 16
      %v1203 = vrot.slane %v1201, 1
      %v1204 = vor.u32 %v1199, %v1203
      %v1206 = vshll.u32 %v732, 16
      %v1208 = vrot.slane %v1206, 1
      %v1209 = vsel %vm745, %v1204, %v1208
      %v1210 = vshrl.u32 %v732, 16
      %v1212 = vor.u32 %v1210, %v1208
      %v1213 = vsel %vm745, %v1212, %v764
      %v1215 = vshrl.u32 %v733, 16
      %v1217 = vshll.u32 %v733, 16
      %v1219 = vrot.slane %v1217, 1
      %v1220 = vor.u32 %v1215, %v1219
      %v1222 = vshll.u32 %v734, 16
      %v1224 = vrot.slane %v1222, 1
      %v1225 = vsel %vm745, %v1220, %v1224
      %v1226 = vshrl.u32 %v734, 16
      %v1228 = vor.u32 %v1226, %v1224
      %v1229 = vsel %vm745, %v1228, %v764
      %v1231 = vshrl.u32 %v735, 16
      %v1233 = vshll.u32 %v735, 16
      %v1235 = vrot.slane %v1233, 1
      %v1236 = vor.u32 %v1231, %v1235
      %v1238 = vshll.u32 %v736, 16
      %v1240 = vrot.slane %v1238, 1
      %v1241 = vsel %vm745, %v1236, %v1240
      %v1242 = vshrl.u32 %v736, 16
      %v1244 = vor.u32 %v1242, %v1240
      %v1245 = vsel %vm745, %v1244, %v764
      %v1247 = vshrl.u32 %v737, 16
      %v1249 = vshll.u32 %v737, 16
      %v1251 = vrot.slane %v1249, 1
      %v1252 = vor.u32 %v1247, %v1251
      %v1254 = vshll.u32 %v738, 16
      %v1256 = vrot.slane %v1254, 1
      %v1257 = vsel %vm745, %v1252, %v1256
      %v1258 = vshrl.u32 %v738, 16
      %v1260 = vor.u32 %v1258, %v1256
      %v1261 = vsel %vm745, %v1260, %v764
      %vm1262 = vcmask 64512
      %v1264 = vsel %vm1262, %v757, 0
      %v1267 = vsel %vm1262, %v765, 0
      %v1270 = vsel %vm1262, %v777, 0
      %v1273 = vsel %vm1262, %v781, 0
      %v1276 = vsel %vm1262, %v793, 0
      %v1279 = vsel %vm1262, %v797, 0
      %v1282 = vsel %vm1262, %v809, 0
      %v1285 = vsel %vm1262, %v813, 0
      %v1288 = vsel %vm1262, %v825, 0
      %v1291 = vsel %vm1262, %v829, 0
      %v1294 = vsel %vm1262, %v841, 0
      %v1297 = vsel %vm1262, %v845, 0
      %v1300 = vsel %vm1262, %v857, 0
      %v1303 = vsel %vm1262, %v861, 0
      %v1306 = vsel %vm1262, %v873, 0
      %v1309 = vsel %vm1262, %v877, 0
      %v1312 = vsel %vm1262, %v889, 0
      %v1315 = vsel %vm1262, %v893, 0
      %v1318 = vsel %vm1262, %v905, 0
      %v1321 = vsel %vm1262, %v909, 0
      %v1324 = vsel %vm1262, %v921, 0
      %v1327 = vsel %vm1262, %v925, 0
      %v1330 = vsel %vm1262, %v937, 0
      %v1333 = vsel %vm1262, %v941, 0
      %v1336 = vsel %vm1262, %v953, 0
      %v1339 = vsel %vm1262, %v957, 0
      %v1342 = vsel %vm1262, %v969, 0
      %v1345 = vsel %vm1262, %v973, 0
      %v1348 = vsel %vm1262, %v985, 0
      %v1351 = vsel %vm1262, %v989, 0
      %v1354 = vsel %vm1262, %v1001, 0
      %v1357 = vsel %vm1262, %v1005, 0
      %v1360 = vsel %vm1262, %v1017, 0
      %v1363 = vsel %vm1262, %v1021, 0
      %v1366 = vsel %vm1262, %v1033, 0
      %v1369 = vsel %vm1262, %v1037, 0
      %v1372 = vsel %vm1262, %v1049, 0
      %v1375 = vsel %vm1262, %v1053, 0
      %v1378 = vsel %vm1262, %v1065, 0
      %v1381 = vsel %vm1262, %v1069, 0
      %v1384 = vsel %vm1262, %v1081, 0
      %v1387 = vsel %vm1262, %v1085, 0
      %v1390 = vsel %vm1262, %v1097, 0
      %v1393 = vsel %vm1262, %v1101, 0
      %v1396 = vsel %vm1262, %v1113, 0
      %v1399 = vsel %vm1262, %v1117, 0
      %v1402 = vsel %vm1262, %v1129, 0
      %v1405 = vsel %vm1262, %v1133, 0
      %v1408 = vsel %vm1262, %v1145, 0
      %v1411 = vsel %vm1262, %v1149, 0
      %v1414 = vsel %vm1262, %v1161, 0
      %v1417 = vsel %vm1262, %v1165, 0
      %v1420 = vsel %vm1262, %v1177, 0
      %v1423 = vsel %vm1262, %v1181, 0
      %v1426 = vsel %vm1262, %v1193, 0
      %v1429 = vsel %vm1262, %v1197, 0
      %v1432 = vsel %vm1262, %v1209, 0
      %v1435 = vsel %vm1262, %v1213, 0
      %v1438 = vsel %vm1262, %v1225, 0
      %v1441 = vsel %vm1262, %v1229, 0
      %v1444 = vsel %vm1262, %v1241, 0
      %v1447 = vsel %vm1262, %v1245, 0
      %v1450 = vsel %vm1262, %v1257, 0
      %v1453 = vsel %vm1262, %v1261, 0
      %vm1455 = vcmask 1043456
      %v1457 = vsel %vm1455, %v742, 0
      %1459 = vmatpush.bf16.msra.mxu0 0
      %1460 = vmatpush.bf16.msra.mxu0 0
      %1461 = vmatpush.bf16.msra.mxu0 0
      %1462 = vmatpush.bf16.msra.mxu0 0
      %1463 = vmatpush.bf16.msra.mxu0 0
      %1464 = vmatpush.bf16.msra.mxu0 0
      %1465 = vmatpush.bf16.msra.mxu0 0
      %1466 = vmatpush.bf16.msra.mxu0 %v1457
      %1467 = vmatmul.bf16.gmra.mxu0 %v1264
      %v1468 = vpop.f32.mrf.mxu0
      %v1469 = vadd.f32 0.0, %v1468
      %v1470 = vpop.f32.mrf.mxu0
      %v1471 = vadd.f32 0.0, %v1470
      %1472 = vmatmul.bf16.gmra.mxu0 %v1267
      %v1473 = vpop.f32.mrf.mxu0
      %v1474 = vadd.f32 0.0, %v1473
      %v1475 = vpop.f32.mrf.mxu0
      %v1476 = vadd.f32 0.0, %v1475
      %1477 = vmatmul.bf16.gmra.mxu0 %v1270
      %v1478 = vpop.f32.mrf.mxu0
      %v1479 = vadd.f32 0.0, %v1478
      %v1480 = vpop.f32.mrf.mxu0
      %v1481 = vadd.f32 0.0, %v1480
      %1482 = vmatmul.bf16.gmra.mxu0 %v1273
      %v1483 = vpop.f32.mrf.mxu0
      %v1484 = vadd.f32 0.0, %v1483
      %v1485 = vpop.f32.mrf.mxu0
      %v1486 = vadd.f32 0.0, %v1485
      %1487 = vmatmul.bf16.gmra.mxu0 %v1276
      %v1488 = vpop.f32.mrf.mxu0
      %v1489 = vadd.f32 0.0, %v1488
      %v1490 = vpop.f32.mrf.mxu0
      %v1491 = vadd.f32 0.0, %v1490
      %1492 = vmatmul.bf16.gmra.mxu0 %v1279
      %v1493 = vpop.f32.mrf.mxu0
      %v1494 = vadd.f32 0.0, %v1493
      %v1495 = vpop.f32.mrf.mxu0
      %v1496 = vadd.f32 0.0, %v1495
      %1497 = vmatmul.bf16.gmra.mxu0 %v1282
      %v1498 = vpop.f32.mrf.mxu0
      %v1499 = vadd.f32 0.0, %v1498
      %v1500 = vpop.f32.mrf.mxu0
      %v1501 = vadd.f32 0.0, %v1500
      %1502 = vmatmul.bf16.gmra.mxu0 %v1285
      %v1503 = vpop.f32.mrf.mxu0
      %v1504 = vadd.f32 0.0, %v1503
      %v1505 = vpop.f32.mrf.mxu0
      %v1506 = vadd.f32 0.0, %v1505
      %1507 = vmatmul.bf16.gmra.mxu0 %v1288
      %v1508 = vpop.f32.mrf.mxu0
      %v1509 = vadd.f32 0.0, %v1508
      %v1510 = vpop.f32.mrf.mxu0
      %v1511 = vadd.f32 0.0, %v1510
      %1512 = vmatmul.bf16.gmra.mxu0 %v1291
      %v1513 = vpop.f32.mrf.mxu0
      %v1514 = vadd.f32 0.0, %v1513
      %v1515 = vpop.f32.mrf.mxu0
      %v1516 = vadd.f32 0.0, %v1515
      %1517 = vmatmul.bf16.gmra.mxu0 %v1294
      %v1518 = vpop.f32.mrf.mxu0
      %v1519 = vadd.f32 0.0, %v1518
      %v1520 = vpop.f32.mrf.mxu0
      %v1521 = vadd.f32 0.0, %v1520
      %1522 = vmatmul.bf16.gmra.mxu0 %v1297
      %v1523 = vpop.f32.mrf.mxu0
      %v1524 = vadd.f32 0.0, %v1523
      %v1525 = vpop.f32.mrf.mxu0
      %v1526 = vadd.f32 0.0, %v1525
      %1527 = vmatmul.bf16.gmra.mxu0 %v1300
      %v1528 = vpop.f32.mrf.mxu0
      %v1529 = vadd.f32 0.0, %v1528
      %v1530 = vpop.f32.mrf.mxu0
      %v1531 = vadd.f32 0.0, %v1530
      %1532 = vmatmul.bf16.gmra.mxu0 %v1303
      %v1533 = vpop.f32.mrf.mxu0
      %v1534 = vadd.f32 0.0, %v1533
      %v1535 = vpop.f32.mrf.mxu0
      %v1536 = vadd.f32 0.0, %v1535
      %1537 = vmatmul.bf16.gmra.mxu0 %v1306
      %v1538 = vpop.f32.mrf.mxu0
      %v1539 = vadd.f32 0.0, %v1538
      %v1540 = vpop.f32.mrf.mxu0
      %v1541 = vadd.f32 0.0, %v1540
      %1542 = vmatmul.bf16.gmra.mxu0 %v1309
      %v1543 = vpop.f32.mrf.mxu0
      %v1544 = vadd.f32 0.0, %v1543
      %v1545 = vpop.f32.mrf.mxu0
      %v1546 = vadd.f32 0.0, %v1545
      %1547 = vmatmul.bf16.gmra.mxu0 %v1312
      %v1548 = vpop.f32.mrf.mxu0
      %v1549 = vadd.f32 0.0, %v1548
      %v1550 = vpop.f32.mrf.mxu0
      %v1551 = vadd.f32 0.0, %v1550
      %1552 = vmatmul.bf16.gmra.mxu0 %v1315
      %v1553 = vpop.f32.mrf.mxu0
      %v1554 = vadd.f32 0.0, %v1553
      %v1555 = vpop.f32.mrf.mxu0
      %v1556 = vadd.f32 0.0, %v1555
      %1557 = vmatmul.bf16.gmra.mxu0 %v1318
      %v1558 = vpop.f32.mrf.mxu0
      %v1559 = vadd.f32 0.0, %v1558
      %v1560 = vpop.f32.mrf.mxu0
      %v1561 = vadd.f32 0.0, %v1560
      %1562 = vmatmul.bf16.gmra.mxu0 %v1321
      %v1563 = vpop.f32.mrf.mxu0
      %v1564 = vadd.f32 0.0, %v1563
      %v1565 = vpop.f32.mrf.mxu0
      %v1566 = vadd.f32 0.0, %v1565
      %1567 = vmatmul.bf16.gmra.mxu0 %v1324
      %v1568 = vpop.f32.mrf.mxu0
      %v1569 = vadd.f32 0.0, %v1568
      %v1570 = vpop.f32.mrf.mxu0
      %v1571 = vadd.f32 0.0, %v1570
      %1572 = vmatmul.bf16.gmra.mxu0 %v1327
      %v1573 = vpop.f32.mrf.mxu0
      %v1574 = vadd.f32 0.0, %v1573
      %v1575 = vpop.f32.mrf.mxu0
      %v1576 = vadd.f32 0.0, %v1575
      %1577 = vmatmul.bf16.gmra.mxu0 %v1330
      %v1578 = vpop.f32.mrf.mxu0
      %v1579 = vadd.f32 0.0, %v1578
      %v1580 = vpop.f32.mrf.mxu0
      %v1581 = vadd.f32 0.0, %v1580
      %1582 = vmatmul.bf16.gmra.mxu0 %v1333
      %v1583 = vpop.f32.mrf.mxu0
      %v1584 = vadd.f32 0.0, %v1583
      %v1585 = vpop.f32.mrf.mxu0
      %v1586 = vadd.f32 0.0, %v1585
      %1587 = vmatmul.bf16.gmra.mxu0 %v1336
      %v1588 = vpop.f32.mrf.mxu0
      %v1589 = vadd.f32 0.0, %v1588
      %v1590 = vpop.f32.mrf.mxu0
      %v1591 = vadd.f32 0.0, %v1590
      %1592 = vmatmul.bf16.gmra.mxu0 %v1339
      %v1593 = vpop.f32.mrf.mxu0
      %v1594 = vadd.f32 0.0, %v1593
      %v1595 = vpop.f32.mrf.mxu0
      %v1596 = vadd.f32 0.0, %v1595
      %1597 = vmatmul.bf16.gmra.mxu0 %v1342
      %v1598 = vpop.f32.mrf.mxu0
      %v1599 = vadd.f32 0.0, %v1598
      %v1600 = vpop.f32.mrf.mxu0
      %v1601 = vadd.f32 0.0, %v1600
      %1602 = vmatmul.bf16.gmra.mxu0 %v1345
      %v1603 = vpop.f32.mrf.mxu0
      %v1604 = vadd.f32 0.0, %v1603
      %v1605 = vpop.f32.mrf.mxu0
      %v1606 = vadd.f32 0.0, %v1605
      %1607 = vmatmul.bf16.gmra.mxu0 %v1348
      %v1608 = vpop.f32.mrf.mxu0
      %v1609 = vadd.f32 0.0, %v1608
      %v1610 = vpop.f32.mrf.mxu0
      %v1611 = vadd.f32 0.0, %v1610
      %1612 = vmatmul.bf16.gmra.mxu0 %v1351
      %v1613 = vpop.f32.mrf.mxu0
      %v1614 = vadd.f32 0.0, %v1613
      %v1615 = vpop.f32.mrf.mxu0
      %v1616 = vadd.f32 0.0, %v1615
      %1617 = vmatmul.bf16.gmra.mxu0 %v1354
      %v1618 = vpop.f32.mrf.mxu0
      %v1619 = vadd.f32 0.0, %v1618
      %v1620 = vpop.f32.mrf.mxu0
      %v1621 = vadd.f32 0.0, %v1620
      %1622 = vmatmul.bf16.gmra.mxu0 %v1357
      %v1623 = vpop.f32.mrf.mxu0
      %v1624 = vadd.f32 0.0, %v1623
      %v1625 = vpop.f32.mrf.mxu0
      %v1626 = vadd.f32 0.0, %v1625
      %1627 = vmatmul.bf16.gmra.mxu0 %v1360
      %v1628 = vpop.f32.mrf.mxu0
      %v1629 = vadd.f32 0.0, %v1628
      %v1630 = vpop.f32.mrf.mxu0
      %v1631 = vadd.f32 0.0, %v1630
      %1632 = vmatmul.bf16.gmra.mxu0 %v1363
      %v1633 = vpop.f32.mrf.mxu0
      %v1634 = vadd.f32 0.0, %v1633
      %v1635 = vpop.f32.mrf.mxu0
      %v1636 = vadd.f32 0.0, %v1635
      %1637 = vmatmul.bf16.gmra.mxu0 %v1366
      %v1638 = vpop.f32.mrf.mxu0
      %v1639 = vadd.f32 0.0, %v1638
      %v1640 = vpop.f32.mrf.mxu0
      %v1641 = vadd.f32 0.0, %v1640
      %1642 = vmatmul.bf16.gmra.mxu0 %v1369
      %v1643 = vpop.f32.mrf.mxu0
      %v1644 = vadd.f32 0.0, %v1643
      %v1645 = vpop.f32.mrf.mxu0
      %v1646 = vadd.f32 0.0, %v1645
      %1647 = vmatmul.bf16.gmra.mxu0 %v1372
      %v1648 = vpop.f32.mrf.mxu0
      %v1649 = vadd.f32 0.0, %v1648
      %v1650 = vpop.f32.mrf.mxu0
      %v1651 = vadd.f32 0.0, %v1650
      %1652 = vmatmul.bf16.gmra.mxu0 %v1375
      %v1653 = vpop.f32.mrf.mxu0
      %v1654 = vadd.f32 0.0, %v1653
      %v1655 = vpop.f32.mrf.mxu0
      %v1656 = vadd.f32 0.0, %v1655
      %1657 = vmatmul.bf16.gmra.mxu0 %v1378
      %v1658 = vpop.f32.mrf.mxu0
      %v1659 = vadd.f32 0.0, %v1658
      %v1660 = vpop.f32.mrf.mxu0
      %v1661 = vadd.f32 0.0, %v1660
      %1662 = vmatmul.bf16.gmra.mxu0 %v1381
      %v1663 = vpop.f32.mrf.mxu0
      %v1664 = vadd.f32 0.0, %v1663
      %v1665 = vpop.f32.mrf.mxu0
      %v1666 = vadd.f32 0.0, %v1665
      %1667 = vmatmul.bf16.gmra.mxu0 %v1384
      %v1668 = vpop.f32.mrf.mxu0
      %v1669 = vadd.f32 0.0, %v1668
      %v1670 = vpop.f32.mrf.mxu0
      %v1671 = vadd.f32 0.0, %v1670
      %1672 = vmatmul.bf16.gmra.mxu0 %v1387
      %v1673 = vpop.f32.mrf.mxu0
      %v1674 = vadd.f32 0.0, %v1673
      %v1675 = vpop.f32.mrf.mxu0
      %v1676 = vadd.f32 0.0, %v1675
      %1677 = vmatmul.bf16.gmra.mxu0 %v1390
      %v1678 = vpop.f32.mrf.mxu0
      %v1679 = vadd.f32 0.0, %v1678
      %v1680 = vpop.f32.mrf.mxu0
      %v1681 = vadd.f32 0.0, %v1680
      %1682 = vmatmul.bf16.gmra.mxu0 %v1393
      %v1683 = vpop.f32.mrf.mxu0
      %v1684 = vadd.f32 0.0, %v1683
      %v1685 = vpop.f32.mrf.mxu0
      %v1686 = vadd.f32 0.0, %v1685
      %1687 = vmatmul.bf16.gmra.mxu0 %v1396
      %v1688 = vpop.f32.mrf.mxu0
      %v1689 = vadd.f32 0.0, %v1688
      %v1690 = vpop.f32.mrf.mxu0
      %v1691 = vadd.f32 0.0, %v1690
      %1692 = vmatmul.bf16.gmra.mxu0 %v1399
      %v1693 = vpop.f32.mrf.mxu0
      %v1694 = vadd.f32 0.0, %v1693
      %v1695 = vpop.f32.mrf.mxu0
      %v1696 = vadd.f32 0.0, %v1695
      %1697 = vmatmul.bf16.gmra.mxu0 %v1402
      %v1698 = vpop.f32.mrf.mxu0
      %v1699 = vadd.f32 0.0, %v1698
      %v1700 = vpop.f32.mrf.mxu0
      %v1701 = vadd.f32 0.0, %v1700
      %1702 = vmatmul.bf16.gmra.mxu0 %v1405
      %v1703 = vpop.f32.mrf.mxu0
      %v1704 = vadd.f32 0.0, %v1703
      %v1705 = vpop.f32.mrf.mxu0
      %v1706 = vadd.f32 0.0, %v1705
      %1707 = vmatmul.bf16.gmra.mxu0 %v1408
      %v1708 = vpop.f32.mrf.mxu0
      %v1709 = vadd.f32 0.0, %v1708
      %v1710 = vpop.f32.mrf.mxu0
      %v1711 = vadd.f32 0.0, %v1710
      %1712 = vmatmul.bf16.gmra.mxu0 %v1411
      %v1713 = vpop.f32.mrf.mxu0
      %v1714 = vadd.f32 0.0, %v1713
      %v1715 = vpop.f32.mrf.mxu0
      %v1716 = vadd.f32 0.0, %v1715
      %1717 = vmatmul.bf16.gmra.mxu0 %v1414
      %v1718 = vpop.f32.mrf.mxu0
      %v1719 = vadd.f32 0.0, %v1718
      %v1720 = vpop.f32.mrf.mxu0
      %v1721 = vadd.f32 0.0, %v1720
      %1722 = vmatmul.bf16.gmra.mxu0 %v1417
      %v1723 = vpop.f32.mrf.mxu0
      %v1724 = vadd.f32 0.0, %v1723
      %v1725 = vpop.f32.mrf.mxu0
      %v1726 = vadd.f32 0.0, %v1725
      %1727 = vmatmul.bf16.gmra.mxu0 %v1420
      %v1728 = vpop.f32.mrf.mxu0
      %v1729 = vadd.f32 0.0, %v1728
      %v1730 = vpop.f32.mrf.mxu0
      %v1731 = vadd.f32 0.0, %v1730
      %1732 = vmatmul.bf16.gmra.mxu0 %v1423
      %v1733 = vpop.f32.mrf.mxu0
      %v1734 = vadd.f32 0.0, %v1733
      %v1735 = vpop.f32.mrf.mxu0
      %v1736 = vadd.f32 0.0, %v1735
      %1737 = vmatmul.bf16.gmra.mxu0 %v1426
      %v1738 = vpop.f32.mrf.mxu0
      %v1739 = vadd.f32 0.0, %v1738
      %v1740 = vpop.f32.mrf.mxu0
      %v1741 = vadd.f32 0.0, %v1740
      %1742 = vmatmul.bf16.gmra.mxu0 %v1429
      %v1743 = vpop.f32.mrf.mxu0
      %v1744 = vadd.f32 0.0, %v1743
      %v1745 = vpop.f32.mrf.mxu0
      %v1746 = vadd.f32 0.0, %v1745
      %1747 = vmatmul.bf16.gmra.mxu0 %v1432
      %v1748 = vpop.f32.mrf.mxu0
      %v1749 = vadd.f32 0.0, %v1748
      %v1750 = vpop.f32.mrf.mxu0
      %v1751 = vadd.f32 0.0, %v1750
      %1752 = vmatmul.bf16.gmra.mxu0 %v1435
      %v1753 = vpop.f32.mrf.mxu0
      %v1754 = vadd.f32 0.0, %v1753
      %v1755 = vpop.f32.mrf.mxu0
      %v1756 = vadd.f32 0.0, %v1755
      %1757 = vmatmul.bf16.gmra.mxu0 %v1438
      %v1758 = vpop.f32.mrf.mxu0
      %v1759 = vadd.f32 0.0, %v1758
      %v1760 = vpop.f32.mrf.mxu0
      %v1761 = vadd.f32 0.0, %v1760
      %1762 = vmatmul.bf16.gmra.mxu0 %v1441
      %v1763 = vpop.f32.mrf.mxu0
      %v1764 = vadd.f32 0.0, %v1763
      %v1765 = vpop.f32.mrf.mxu0
      %v1766 = vadd.f32 0.0, %v1765
      %1767 = vmatmul.bf16.gmra.mxu0 %v1444
      %v1768 = vpop.f32.mrf.mxu0
      %v1769 = vadd.f32 0.0, %v1768
      %v1770 = vpop.f32.mrf.mxu0
      %v1771 = vadd.f32 0.0, %v1770
      %1772 = vmatmul.bf16.gmra.mxu0 %v1447
      %v1773 = vpop.f32.mrf.mxu0
      %v1774 = vadd.f32 0.0, %v1773
      %v1775 = vpop.f32.mrf.mxu0
      %v1776 = vadd.f32 0.0, %v1775
      %1777 = vmatmul.bf16.gmra.mxu0 %v1450
      %v1778 = vpop.f32.mrf.mxu0
      %v1779 = vadd.f32 0.0, %v1778
      %v1780 = vpop.f32.mrf.mxu0
      %v1781 = vadd.f32 0.0, %v1780
      %1782 = vmatmul.bf16.gmra.mxu0 %v1453
      %v1783 = vpop.f32.mrf.mxu0
      %v1784 = vadd.f32 0.0, %v1783
      %v1785 = vpop.f32.mrf.mxu0
      %v1786 = vadd.f32 0.0, %v1785
      %1787 = vdwg.mxu0
      %v1788 = vsel %vm1262, %v675, 0
      %v1790 = vsel %vm1262, %v676, 0
      %v1792 = vsel %vm1262, %v677, 0
      %v1794 = vsel %vm1262, %v678, 0
      %v1796 = vsel %vm1262, %v679, 0
      %v1798 = vsel %vm1262, %v680, 0
      %v1800 = vsel %vm1262, %v681, 0
      %v1802 = vsel %vm1262, %v682, 0
      %v1804 = vsel %vm1262, %v683, 0
      %v1806 = vsel %vm1262, %v684, 0
      %v1808 = vsel %vm1262, %v685, 0
      %v1810 = vsel %vm1262, %v686, 0
      %v1812 = vsel %vm1262, %v687, 0
      %v1814 = vsel %vm1262, %v688, 0
      %v1816 = vsel %vm1262, %v689, 0
      %v1818 = vsel %vm1262, %v690, 0
      %v1820 = vsel %vm1262, %v691, 0
      %v1822 = vsel %vm1262, %v692, 0
      %v1824 = vsel %vm1262, %v693, 0
      %v1826 = vsel %vm1262, %v694, 0
      %v1828 = vsel %vm1262, %v695, 0
      %v1830 = vsel %vm1262, %v696, 0
      %v1832 = vsel %vm1262, %v697, 0
      %v1834 = vsel %vm1262, %v698, 0
      %v1836 = vsel %vm1262, %v699, 0
      %v1838 = vsel %vm1262, %v700, 0
      %v1840 = vsel %vm1262, %v701, 0
      %v1842 = vsel %vm1262, %v702, 0
      %v1844 = vsel %vm1262, %v703, 0
      %v1846 = vsel %vm1262, %v704, 0
      %v1848 = vsel %vm1262, %v705, 0
      %v1850 = vsel %vm1262, %v706, 0
      %v1852 = vsel %vm1262, %v707, 0
      %v1854 = vsel %vm1262, %v708, 0
      %v1856 = vsel %vm1262, %v709, 0
      %v1858 = vsel %vm1262, %v710, 0
      %v1860 = vsel %vm1262, %v711, 0
      %v1862 = vsel %vm1262, %v712, 0
      %v1864 = vsel %vm1262, %v713, 0
      %v1866 = vsel %vm1262, %v714, 0
      %v1868 = vsel %vm1262, %v715, 0
      %v1870 = vsel %vm1262, %v716, 0
      %v1872 = vsel %vm1262, %v717, 0
      %v1874 = vsel %vm1262, %v718, 0
      %v1876 = vsel %vm1262, %v719, 0
      %v1878 = vsel %vm1262, %v720, 0
      %v1880 = vsel %vm1262, %v721, 0
      %v1882 = vsel %vm1262, %v722, 0
      %v1884 = vsel %vm1262, %v723, 0
      %v1886 = vsel %vm1262, %v724, 0
      %v1888 = vsel %vm1262, %v725, 0
      %v1890 = vsel %vm1262, %v726, 0
      %v1892 = vsel %vm1262, %v727, 0
      %v1894 = vsel %vm1262, %v728, 0
      %v1896 = vsel %vm1262, %v729, 0
      %v1898 = vsel %vm1262, %v730, 0
      %v1900 = vsel %vm1262, %v731, 0
      %v1902 = vsel %vm1262, %v732, 0
      %v1904 = vsel %vm1262, %v733, 0
      %v1906 = vsel %vm1262, %v734, 0
      %v1908 = vsel %vm1262, %v735, 0
      %v1910 = vsel %vm1262, %v736, 0
      %v1912 = vsel %vm1262, %v737, 0
      %v1914 = vsel %vm1262, %v738, 0
      %v1917 = vsel %vm1455, %v741, 0
      %1919 = vmatpush.bf16.msra.mxu0 0
      %1920 = vmatpush.bf16.msra.mxu0 0
      %1921 = vmatpush.bf16.msra.mxu0 0
      %1922 = vmatpush.bf16.msra.mxu0 0
      %1923 = vmatpush.bf16.msra.mxu0 0
      %1924 = vmatpush.bf16.msra.mxu0 0
      %1925 = vmatpush.bf16.msra.mxu0 0
      %1926 = vmatpush.bf16.msra.mxu0 %v1917
      %1927 = vmatmul.bf16.gmra.mxu0 %v1788
      %v1928 = vpop.f32.mrf.mxu0
      %v1929 = vadd.f32 %v1469, %v1928
      %v1930 = vpop.f32.mrf.mxu0
      %v1931 = vadd.f32 %v1471, %v1930
      %1932 = vmatmul.bf16.gmra.mxu0 %v1790
      %v1933 = vpop.f32.mrf.mxu0
      %v1934 = vadd.f32 %v1474, %v1933
      %v1935 = vpop.f32.mrf.mxu0
      %v1936 = vadd.f32 %v1476, %v1935
      %1937 = vmatmul.bf16.gmra.mxu0 %v1792
      %v1938 = vpop.f32.mrf.mxu0
      %v1939 = vadd.f32 %v1479, %v1938
      %v1940 = vpop.f32.mrf.mxu0
      %v1941 = vadd.f32 %v1481, %v1940
      %1942 = vmatmul.bf16.gmra.mxu0 %v1794
      %v1943 = vpop.f32.mrf.mxu0
      %v1944 = vadd.f32 %v1484, %v1943
      %v1945 = vpop.f32.mrf.mxu0
      %v1946 = vadd.f32 %v1486, %v1945
      %1947 = vmatmul.bf16.gmra.mxu0 %v1796
      %v1948 = vpop.f32.mrf.mxu0
      %v1949 = vadd.f32 %v1489, %v1948
      %v1950 = vpop.f32.mrf.mxu0
      %v1951 = vadd.f32 %v1491, %v1950
      %1952 = vmatmul.bf16.gmra.mxu0 %v1798
      %v1953 = vpop.f32.mrf.mxu0
      %v1954 = vadd.f32 %v1494, %v1953
      %v1955 = vpop.f32.mrf.mxu0
      %v1956 = vadd.f32 %v1496, %v1955
      %1957 = vmatmul.bf16.gmra.mxu0 %v1800
      %v1958 = vpop.f32.mrf.mxu0
      %v1959 = vadd.f32 %v1499, %v1958
      %v1960 = vpop.f32.mrf.mxu0
      %v1961 = vadd.f32 %v1501, %v1960
      %1962 = vmatmul.bf16.gmra.mxu0 %v1802
      %v1963 = vpop.f32.mrf.mxu0
      %v1964 = vadd.f32 %v1504, %v1963
      %v1965 = vpop.f32.mrf.mxu0
      %v1966 = vadd.f32 %v1506, %v1965
      %1967 = vmatmul.bf16.gmra.mxu0 %v1804
      %v1968 = vpop.f32.mrf.mxu0
      %v1969 = vadd.f32 %v1509, %v1968
      %v1970 = vpop.f32.mrf.mxu0
      %v1971 = vadd.f32 %v1511, %v1970
      %1972 = vmatmul.bf16.gmra.mxu0 %v1806
      %v1973 = vpop.f32.mrf.mxu0
      %v1974 = vadd.f32 %v1514, %v1973
      %v1975 = vpop.f32.mrf.mxu0
      %v1976 = vadd.f32 %v1516, %v1975
      %1977 = vmatmul.bf16.gmra.mxu0 %v1808
      %v1978 = vpop.f32.mrf.mxu0
      %v1979 = vadd.f32 %v1519, %v1978
      %v1980 = vpop.f32.mrf.mxu0
      %v1981 = vadd.f32 %v1521, %v1980
      %1982 = vmatmul.bf16.gmra.mxu0 %v1810
      %v1983 = vpop.f32.mrf.mxu0
      %v1984 = vadd.f32 %v1524, %v1983
      %v1985 = vpop.f32.mrf.mxu0
      %v1986 = vadd.f32 %v1526, %v1985
      %1987 = vmatmul.bf16.gmra.mxu0 %v1812
      %v1988 = vpop.f32.mrf.mxu0
      %v1989 = vadd.f32 %v1529, %v1988
      %v1990 = vpop.f32.mrf.mxu0
      %v1991 = vadd.f32 %v1531, %v1990
      %1992 = vmatmul.bf16.gmra.mxu0 %v1814
      %v1993 = vpop.f32.mrf.mxu0
      %v1994 = vadd.f32 %v1534, %v1993
      %v1995 = vpop.f32.mrf.mxu0
      %v1996 = vadd.f32 %v1536, %v1995
      %1997 = vmatmul.bf16.gmra.mxu0 %v1816
      %v1998 = vpop.f32.mrf.mxu0
      %v1999 = vadd.f32 %v1539, %v1998
      %v2000 = vpop.f32.mrf.mxu0
      %v2001 = vadd.f32 %v1541, %v2000
      %2002 = vmatmul.bf16.gmra.mxu0 %v1818
      %v2003 = vpop.f32.mrf.mxu0
      %v2004 = vadd.f32 %v1544, %v2003
      %v2005 = vpop.f32.mrf.mxu0
      %v2006 = vadd.f32 %v1546, %v2005
      %2007 = vmatmul.bf16.gmra.mxu0 %v1820
      %v2008 = vpop.f32.mrf.mxu0
      %v2009 = vadd.f32 %v1549, %v2008
      %v2010 = vpop.f32.mrf.mxu0
      %v2011 = vadd.f32 %v1551, %v2010
      %2012 = vmatmul.bf16.gmra.mxu0 %v1822
      %v2013 = vpop.f32.mrf.mxu0
      %v2014 = vadd.f32 %v1554, %v2013
      %v2015 = vpop.f32.mrf.mxu0
      %v2016 = vadd.f32 %v1556, %v2015
      %2017 = vmatmul.bf16.gmra.mxu0 %v1824
      %v2018 = vpop.f32.mrf.mxu0
      %v2019 = vadd.f32 %v1559, %v2018
      %v2020 = vpop.f32.mrf.mxu0
      %v2021 = vadd.f32 %v1561, %v2020
      %2022 = vmatmul.bf16.gmra.mxu0 %v1826
      %v2023 = vpop.f32.mrf.mxu0
      %v2024 = vadd.f32 %v1564, %v2023
      %v2025 = vpop.f32.mrf.mxu0
      %v2026 = vadd.f32 %v1566, %v2025
      %2027 = vmatmul.bf16.gmra.mxu0 %v1828
      %v2028 = vpop.f32.mrf.mxu0
      %v2029 = vadd.f32 %v1569, %v2028
      %v2030 = vpop.f32.mrf.mxu0
      %v2031 = vadd.f32 %v1571, %v2030
      %2032 = vmatmul.bf16.gmra.mxu0 %v1830
      %v2033 = vpop.f32.mrf.mxu0
      %v2034 = vadd.f32 %v1574, %v2033
      %v2035 = vpop.f32.mrf.mxu0
      %v2036 = vadd.f32 %v1576, %v2035
      %2037 = vmatmul.bf16.gmra.mxu0 %v1832
      %v2038 = vpop.f32.mrf.mxu0
      %v2039 = vadd.f32 %v1579, %v2038
      %v2040 = vpop.f32.mrf.mxu0
      %v2041 = vadd.f32 %v1581, %v2040
      %2042 = vmatmul.bf16.gmra.mxu0 %v1834
      %v2043 = vpop.f32.mrf.mxu0
      %v2044 = vadd.f32 %v1584, %v2043
      %v2045 = vpop.f32.mrf.mxu0
      %v2046 = vadd.f32 %v1586, %v2045
      %2047 = vmatmul.bf16.gmra.mxu0 %v1836
      %v2048 = vpop.f32.mrf.mxu0
      %v2049 = vadd.f32 %v1589, %v2048
      %v2050 = vpop.f32.mrf.mxu0
      %v2051 = vadd.f32 %v1591, %v2050
      %2052 = vmatmul.bf16.gmra.mxu0 %v1838
      %v2053 = vpop.f32.mrf.mxu0
      %v2054 = vadd.f32 %v1594, %v2053
      %v2055 = vpop.f32.mrf.mxu0
      %v2056 = vadd.f32 %v1596, %v2055
      %2057 = vmatmul.bf16.gmra.mxu0 %v1840
      %v2058 = vpop.f32.mrf.mxu0
      %v2059 = vadd.f32 %v1599, %v2058
      %v2060 = vpop.f32.mrf.mxu0
      %v2061 = vadd.f32 %v1601, %v2060
      %2062 = vmatmul.bf16.gmra.mxu0 %v1842
      %v2063 = vpop.f32.mrf.mxu0
      %v2064 = vadd.f32 %v1604, %v2063
      %v2065 = vpop.f32.mrf.mxu0
      %v2066 = vadd.f32 %v1606, %v2065
      %2067 = vmatmul.bf16.gmra.mxu0 %v1844
      %v2068 = vpop.f32.mrf.mxu0
      %v2069 = vadd.f32 %v1609, %v2068
      %v2070 = vpop.f32.mrf.mxu0
      %v2071 = vadd.f32 %v1611, %v2070
      %2072 = vmatmul.bf16.gmra.mxu0 %v1846
      %v2073 = vpop.f32.mrf.mxu0
      %v2074 = vadd.f32 %v1614, %v2073
      %v2075 = vpop.f32.mrf.mxu0
      %v2076 = vadd.f32 %v1616, %v2075
      %2077 = vmatmul.bf16.gmra.mxu0 %v1848
      %v2078 = vpop.f32.mrf.mxu0
      %v2079 = vadd.f32 %v1619, %v2078
      %v2080 = vpop.f32.mrf.mxu0
      %v2081 = vadd.f32 %v1621, %v2080
      %2082 = vmatmul.bf16.gmra.mxu0 %v1850
      %v2083 = vpop.f32.mrf.mxu0
      %v2084 = vadd.f32 %v1624, %v2083
      %v2085 = vpop.f32.mrf.mxu0
      %v2086 = vadd.f32 %v1626, %v2085
      %2087 = vmatmul.bf16.gmra.mxu0 %v1852
      %v2088 = vpop.f32.mrf.mxu0
      %v2089 = vadd.f32 %v1629, %v2088
      %v2090 = vpop.f32.mrf.mxu0
      %v2091 = vadd.f32 %v1631, %v2090
      %2092 = vmatmul.bf16.gmra.mxu0 %v1854
      %v2093 = vpop.f32.mrf.mxu0
      %v2094 = vadd.f32 %v1634, %v2093
      %v2095 = vpop.f32.mrf.mxu0
      %v2096 = vadd.f32 %v1636, %v2095
      %2097 = vmatmul.bf16.gmra.mxu0 %v1856
      %v2098 = vpop.f32.mrf.mxu0
      %v2099 = vadd.f32 %v1639, %v2098
      %v2100 = vpop.f32.mrf.mxu0
      %v2101 = vadd.f32 %v1641, %v2100
      %2102 = vmatmul.bf16.gmra.mxu0 %v1858
      %v2103 = vpop.f32.mrf.mxu0
      %v2104 = vadd.f32 %v1644, %v2103
      %v2105 = vpop.f32.mrf.mxu0
      %v2106 = vadd.f32 %v1646, %v2105
      %2107 = vmatmul.bf16.gmra.mxu0 %v1860
      %v2108 = vpop.f32.mrf.mxu0
      %v2109 = vadd.f32 %v1649, %v2108
      %v2110 = vpop.f32.mrf.mxu0
      %v2111 = vadd.f32 %v1651, %v2110
      %2112 = vmatmul.bf16.gmra.mxu0 %v1862
      %v2113 = vpop.f32.mrf.mxu0
      %v2114 = vadd.f32 %v1654, %v2113
      %v2115 = vpop.f32.mrf.mxu0
      %v2116 = vadd.f32 %v1656, %v2115
      %2117 = vmatmul.bf16.gmra.mxu0 %v1864
      %v2118 = vpop.f32.mrf.mxu0
      %v2119 = vadd.f32 %v1659, %v2118
      %v2120 = vpop.f32.mrf.mxu0
      %v2121 = vadd.f32 %v1661, %v2120
      %2122 = vmatmul.bf16.gmra.mxu0 %v1866
      %v2123 = vpop.f32.mrf.mxu0
      %v2124 = vadd.f32 %v1664, %v2123
      %v2125 = vpop.f32.mrf.mxu0
      %v2126 = vadd.f32 %v1666, %v2125
      %2127 = vmatmul.bf16.gmra.mxu0 %v1868
      %v2128 = vpop.f32.mrf.mxu0
      %v2129 = vadd.f32 %v1669, %v2128
      %v2130 = vpop.f32.mrf.mxu0
      %v2131 = vadd.f32 %v1671, %v2130
      %2132 = vmatmul.bf16.gmra.mxu0 %v1870
      %v2133 = vpop.f32.mrf.mxu0
      %v2134 = vadd.f32 %v1674, %v2133
      %v2135 = vpop.f32.mrf.mxu0
      %v2136 = vadd.f32 %v1676, %v2135
      %2137 = vmatmul.bf16.gmra.mxu0 %v1872
      %v2138 = vpop.f32.mrf.mxu0
      %v2139 = vadd.f32 %v1679, %v2138
      %v2140 = vpop.f32.mrf.mxu0
      %v2141 = vadd.f32 %v1681, %v2140
      %2142 = vmatmul.bf16.gmra.mxu0 %v1874
      %v2143 = vpop.f32.mrf.mxu0
      %v2144 = vadd.f32 %v1684, %v2143
      %v2145 = vpop.f32.mrf.mxu0
      %v2146 = vadd.f32 %v1686, %v2145
      %2147 = vmatmul.bf16.gmra.mxu0 %v1876
      %v2148 = vpop.f32.mrf.mxu0
      %v2149 = vadd.f32 %v1689, %v2148
      %v2150 = vpop.f32.mrf.mxu0
      %v2151 = vadd.f32 %v1691, %v2150
      %2152 = vmatmul.bf16.gmra.mxu0 %v1878
      %v2153 = vpop.f32.mrf.mxu0
      %v2154 = vadd.f32 %v1694, %v2153
      %v2155 = vpop.f32.mrf.mxu0
      %v2156 = vadd.f32 %v1696, %v2155
      %2157 = vmatmul.bf16.gmra.mxu0 %v1880
      %v2158 = vpop.f32.mrf.mxu0
      %v2159 = vadd.f32 %v1699, %v2158
      %v2160 = vpop.f32.mrf.mxu0
      %v2161 = vadd.f32 %v1701, %v2160
      %2162 = vmatmul.bf16.gmra.mxu0 %v1882
      %v2163 = vpop.f32.mrf.mxu0
      %v2164 = vadd.f32 %v1704, %v2163
      %v2165 = vpop.f32.mrf.mxu0
      %v2166 = vadd.f32 %v1706, %v2165
      %2167 = vmatmul.bf16.gmra.mxu0 %v1884
      %v2168 = vpop.f32.mrf.mxu0
      %v2169 = vadd.f32 %v1709, %v2168
      %v2170 = vpop.f32.mrf.mxu0
      %v2171 = vadd.f32 %v1711, %v2170
      %2172 = vmatmul.bf16.gmra.mxu0 %v1886
      %v2173 = vpop.f32.mrf.mxu0
      %v2174 = vadd.f32 %v1714, %v2173
      %v2175 = vpop.f32.mrf.mxu0
      %v2176 = vadd.f32 %v1716, %v2175
      %2177 = vmatmul.bf16.gmra.mxu0 %v1888
      %v2178 = vpop.f32.mrf.mxu0
      %v2179 = vadd.f32 %v1719, %v2178
      %v2180 = vpop.f32.mrf.mxu0
      %v2181 = vadd.f32 %v1721, %v2180
      %2182 = vmatmul.bf16.gmra.mxu0 %v1890
      %v2183 = vpop.f32.mrf.mxu0
      %v2184 = vadd.f32 %v1724, %v2183
      %v2185 = vpop.f32.mrf.mxu0
      %v2186 = vadd.f32 %v1726, %v2185
      %2187 = vmatmul.bf16.gmra.mxu0 %v1892
      %v2188 = vpop.f32.mrf.mxu0
      %v2189 = vadd.f32 %v1729, %v2188
      %v2190 = vpop.f32.mrf.mxu0
      %v2191 = vadd.f32 %v1731, %v2190
      %2192 = vmatmul.bf16.gmra.mxu0 %v1894
      %v2193 = vpop.f32.mrf.mxu0
      %v2194 = vadd.f32 %v1734, %v2193
      %v2195 = vpop.f32.mrf.mxu0
      %v2196 = vadd.f32 %v1736, %v2195
      %2197 = vmatmul.bf16.gmra.mxu0 %v1896
      %v2198 = vpop.f32.mrf.mxu0
      %v2199 = vadd.f32 %v1739, %v2198
      %v2200 = vpop.f32.mrf.mxu0
      %v2201 = vadd.f32 %v1741, %v2200
      %2202 = vmatmul.bf16.gmra.mxu0 %v1898
      %v2203 = vpop.f32.mrf.mxu0
      %v2204 = vadd.f32 %v1744, %v2203
      %v2205 = vpop.f32.mrf.mxu0
      %v2206 = vadd.f32 %v1746, %v2205
      %2207 = vmatmul.bf16.gmra.mxu0 %v1900
      %v2208 = vpop.f32.mrf.mxu0
      %v2209 = vadd.f32 %v1749, %v2208
      %v2210 = vpop.f32.mrf.mxu0
      %v2211 = vadd.f32 %v1751, %v2210
      %2212 = vmatmul.bf16.gmra.mxu0 %v1902
      %v2213 = vpop.f32.mrf.mxu0
      %v2214 = vadd.f32 %v1754, %v2213
      %v2215 = vpop.f32.mrf.mxu0
      %v2216 = vadd.f32 %v1756, %v2215
      %2217 = vmatmul.bf16.gmra.mxu0 %v1904
      %v2218 = vpop.f32.mrf.mxu0
      %v2219 = vadd.f32 %v1759, %v2218
      %v2220 = vpop.f32.mrf.mxu0
      %v2221 = vadd.f32 %v1761, %v2220
      %2222 = vmatmul.bf16.gmra.mxu0 %v1906
      %v2223 = vpop.f32.mrf.mxu0
      %v2224 = vadd.f32 %v1764, %v2223
      %v2225 = vpop.f32.mrf.mxu0
      %v2226 = vadd.f32 %v1766, %v2225
      %2227 = vmatmul.bf16.gmra.mxu0 %v1908
      %v2228 = vpop.f32.mrf.mxu0
      %v2229 = vadd.f32 %v1769, %v2228
      %v2230 = vpop.f32.mrf.mxu0
      %v2231 = vadd.f32 %v1771, %v2230
      %2232 = vmatmul.bf16.gmra.mxu0 %v1910
      %v2233 = vpop.f32.mrf.mxu0
      %v2234 = vadd.f32 %v1774, %v2233
      %v2235 = vpop.f32.mrf.mxu0
      %v2236 = vadd.f32 %v1776, %v2235
      %2237 = vmatmul.bf16.gmra.mxu0 %v1912
      %v2238 = vpop.f32.mrf.mxu0
      %v2239 = vadd.f32 %v1779, %v2238
      %v2240 = vpop.f32.mrf.mxu0
      %v2241 = vadd.f32 %v1781, %v2240
      %2242 = vmatmul.bf16.gmra.mxu0 %v1914
      %v2243 = vpop.f32.mrf.mxu0
      %v2244 = vadd.f32 %v1784, %v2243
      %v2245 = vpop.f32.mrf.mxu0
      %v2246 = vadd.f32 %v1786, %v2245
      %2247 = vdwg.mxu0
      %v2249 = vsel %vm1262, %v739, 0
      %v2252 = vsel %vm1262, %v740, 0
      %v2255 = vsel %vm1455, %v743, 0
      %2257 = vmatpush.bf16.msra.mxu0 0
      %2258 = vmatpush.bf16.msra.mxu0 0
      %2259 = vmatpush.bf16.msra.mxu0 0
      %2260 = vmatpush.bf16.msra.mxu0 0
      %2261 = vmatpush.bf16.msra.mxu0 0
      %2262 = vmatpush.bf16.msra.mxu0 0
      %2263 = vmatpush.bf16.msra.mxu0 0
      %2264 = vmatpush.bf16.msra.mxu0 %v2255
      %2265 = vmatmul.bf16.gmra.mxu0 %v1792
      %v2266 = vpop.f32.mrf.mxu0
      %v2267 = vadd.f32 0.0, %v2266
      %v2268 = vpop.f32.mrf.mxu0
      %v2269 = vadd.f32 0.0, %v2268
      %2270 = vmatmul.bf16.gmra.mxu0 %v1794
      %v2271 = vpop.f32.mrf.mxu0
      %v2272 = vadd.f32 0.0, %v2271
      %v2273 = vpop.f32.mrf.mxu0
      %v2274 = vadd.f32 0.0, %v2273
      %2275 = vmatmul.bf16.gmra.mxu0 %v1796
      %v2276 = vpop.f32.mrf.mxu0
      %v2277 = vadd.f32 0.0, %v2276
      %v2278 = vpop.f32.mrf.mxu0
      %v2279 = vadd.f32 0.0, %v2278
      %2280 = vmatmul.bf16.gmra.mxu0 %v1798
      %v2281 = vpop.f32.mrf.mxu0
      %v2282 = vadd.f32 0.0, %v2281
      %v2283 = vpop.f32.mrf.mxu0
      %v2284 = vadd.f32 0.0, %v2283
      %2285 = vmatmul.bf16.gmra.mxu0 %v1800
      %v2286 = vpop.f32.mrf.mxu0
      %v2287 = vadd.f32 0.0, %v2286
      %v2288 = vpop.f32.mrf.mxu0
      %v2289 = vadd.f32 0.0, %v2288
      %2290 = vmatmul.bf16.gmra.mxu0 %v1802
      %v2291 = vpop.f32.mrf.mxu0
      %v2292 = vadd.f32 0.0, %v2291
      %v2293 = vpop.f32.mrf.mxu0
      %v2294 = vadd.f32 0.0, %v2293
      %2295 = vmatmul.bf16.gmra.mxu0 %v1804
      %v2296 = vpop.f32.mrf.mxu0
      %v2297 = vadd.f32 0.0, %v2296
      %v2298 = vpop.f32.mrf.mxu0
      %v2299 = vadd.f32 0.0, %v2298
      %2300 = vmatmul.bf16.gmra.mxu0 %v1806
      %v2301 = vpop.f32.mrf.mxu0
      %v2302 = vadd.f32 0.0, %v2301
      %v2303 = vpop.f32.mrf.mxu0
      %v2304 = vadd.f32 0.0, %v2303
      %2305 = vmatmul.bf16.gmra.mxu0 %v1808
      %v2306 = vpop.f32.mrf.mxu0
      %v2307 = vadd.f32 0.0, %v2306
      %v2308 = vpop.f32.mrf.mxu0
      %v2309 = vadd.f32 0.0, %v2308
      %2310 = vmatmul.bf16.gmra.mxu0 %v1810
      %v2311 = vpop.f32.mrf.mxu0
      %v2312 = vadd.f32 0.0, %v2311
      %v2313 = vpop.f32.mrf.mxu0
      %v2314 = vadd.f32 0.0, %v2313
      %2315 = vmatmul.bf16.gmra.mxu0 %v1812
      %v2316 = vpop.f32.mrf.mxu0
      %v2317 = vadd.f32 0.0, %v2316
      %v2318 = vpop.f32.mrf.mxu0
      %v2319 = vadd.f32 0.0, %v2318
      %2320 = vmatmul.bf16.gmra.mxu0 %v1814
      %v2321 = vpop.f32.mrf.mxu0
      %v2322 = vadd.f32 0.0, %v2321
      %v2323 = vpop.f32.mrf.mxu0
      %v2324 = vadd.f32 0.0, %v2323
      %2325 = vmatmul.bf16.gmra.mxu0 %v1816
      %v2326 = vpop.f32.mrf.mxu0
      %v2327 = vadd.f32 0.0, %v2326
      %v2328 = vpop.f32.mrf.mxu0
      %v2329 = vadd.f32 0.0, %v2328
      %2330 = vmatmul.bf16.gmra.mxu0 %v1818
      %v2331 = vpop.f32.mrf.mxu0
      %v2332 = vadd.f32 0.0, %v2331
      %v2333 = vpop.f32.mrf.mxu0
      %v2334 = vadd.f32 0.0, %v2333
      %2335 = vmatmul.bf16.gmra.mxu0 %v1820
      %v2336 = vpop.f32.mrf.mxu0
      %v2337 = vadd.f32 0.0, %v2336
      %v2338 = vpop.f32.mrf.mxu0
      %v2339 = vadd.f32 0.0, %v2338
      %2340 = vmatmul.bf16.gmra.mxu0 %v1822
      %v2341 = vpop.f32.mrf.mxu0
      %v2342 = vadd.f32 0.0, %v2341
      %v2343 = vpop.f32.mrf.mxu0
      %v2344 = vadd.f32 0.0, %v2343
      %2345 = vmatmul.bf16.gmra.mxu0 %v1824
      %v2346 = vpop.f32.mrf.mxu0
      %v2347 = vadd.f32 0.0, %v2346
      %v2348 = vpop.f32.mrf.mxu0
      %v2349 = vadd.f32 0.0, %v2348
      %2350 = vmatmul.bf16.gmra.mxu0 %v1826
      %v2351 = vpop.f32.mrf.mxu0
      %v2352 = vadd.f32 0.0, %v2351
      %v2353 = vpop.f32.mrf.mxu0
      %v2354 = vadd.f32 0.0, %v2353
      %2355 = vmatmul.bf16.gmra.mxu0 %v1828
      %v2356 = vpop.f32.mrf.mxu0
      %v2357 = vadd.f32 0.0, %v2356
      %v2358 = vpop.f32.mrf.mxu0
      %v2359 = vadd.f32 0.0, %v2358
      %2360 = vmatmul.bf16.gmra.mxu0 %v1830
      %v2361 = vpop.f32.mrf.mxu0
      %v2362 = vadd.f32 0.0, %v2361
      %v2363 = vpop.f32.mrf.mxu0
      %v2364 = vadd.f32 0.0, %v2363
      %2365 = vmatmul.bf16.gmra.mxu0 %v1832
      %v2366 = vpop.f32.mrf.mxu0
      %v2367 = vadd.f32 0.0, %v2366
      %v2368 = vpop.f32.mrf.mxu0
      %v2369 = vadd.f32 0.0, %v2368
      %2370 = vmatmul.bf16.gmra.mxu0 %v1834
      %v2371 = vpop.f32.mrf.mxu0
      %v2372 = vadd.f32 0.0, %v2371
      %v2373 = vpop.f32.mrf.mxu0
      %v2374 = vadd.f32 0.0, %v2373
      %2375 = vmatmul.bf16.gmra.mxu0 %v1836
      %v2376 = vpop.f32.mrf.mxu0
      %v2377 = vadd.f32 0.0, %v2376
      %v2378 = vpop.f32.mrf.mxu0
      %v2379 = vadd.f32 0.0, %v2378
      %2380 = vmatmul.bf16.gmra.mxu0 %v1838
      %v2381 = vpop.f32.mrf.mxu0
      %v2382 = vadd.f32 0.0, %v2381
      %v2383 = vpop.f32.mrf.mxu0
      %v2384 = vadd.f32 0.0, %v2383
      %2385 = vmatmul.bf16.gmra.mxu0 %v1840
      %v2386 = vpop.f32.mrf.mxu0
      %v2387 = vadd.f32 0.0, %v2386
      %v2388 = vpop.f32.mrf.mxu0
      %v2389 = vadd.f32 0.0, %v2388
      %2390 = vmatmul.bf16.gmra.mxu0 %v1842
      %v2391 = vpop.f32.mrf.mxu0
      %v2392 = vadd.f32 0.0, %v2391
      %v2393 = vpop.f32.mrf.mxu0
      %v2394 = vadd.f32 0.0, %v2393
      %2395 = vmatmul.bf16.gmra.mxu0 %v1844
      %v2396 = vpop.f32.mrf.mxu0
      %v2397 = vadd.f32 0.0, %v2396
      %v2398 = vpop.f32.mrf.mxu0
      %v2399 = vadd.f32 0.0, %v2398
      %2400 = vmatmul.bf16.gmra.mxu0 %v1846
      %v2401 = vpop.f32.mrf.mxu0
      %v2402 = vadd.f32 0.0, %v2401
      %v2403 = vpop.f32.mrf.mxu0
      %v2404 = vadd.f32 0.0, %v2403
      %2405 = vmatmul.bf16.gmra.mxu0 %v1848
      %v2406 = vpop.f32.mrf.mxu0
      %v2407 = vadd.f32 0.0, %v2406
      %v2408 = vpop.f32.mrf.mxu0
      %v2409 = vadd.f32 0.0, %v2408
      %2410 = vmatmul.bf16.gmra.mxu0 %v1850
      %v2411 = vpop.f32.mrf.mxu0
      %v2412 = vadd.f32 0.0, %v2411
      %v2413 = vpop.f32.mrf.mxu0
      %v2414 = vadd.f32 0.0, %v2413
      %2415 = vmatmul.bf16.gmra.mxu0 %v1852
      %v2416 = vpop.f32.mrf.mxu0
      %v2417 = vadd.f32 0.0, %v2416
      %v2418 = vpop.f32.mrf.mxu0
      %v2419 = vadd.f32 0.0, %v2418
      %2420 = vmatmul.bf16.gmra.mxu0 %v1854
      %v2421 = vpop.f32.mrf.mxu0
      %v2422 = vadd.f32 0.0, %v2421
      %v2423 = vpop.f32.mrf.mxu0
      %v2424 = vadd.f32 0.0, %v2423
      %2425 = vmatmul.bf16.gmra.mxu0 %v1856
      %v2426 = vpop.f32.mrf.mxu0
      %v2427 = vadd.f32 0.0, %v2426
      %v2428 = vpop.f32.mrf.mxu0
      %v2429 = vadd.f32 0.0, %v2428
      %2430 = vmatmul.bf16.gmra.mxu0 %v1858
      %v2431 = vpop.f32.mrf.mxu0
      %v2432 = vadd.f32 0.0, %v2431
      %v2433 = vpop.f32.mrf.mxu0
      %v2434 = vadd.f32 0.0, %v2433
      %2435 = vmatmul.bf16.gmra.mxu0 %v1860
      %v2436 = vpop.f32.mrf.mxu0
      %v2437 = vadd.f32 0.0, %v2436
      %v2438 = vpop.f32.mrf.mxu0
      %v2439 = vadd.f32 0.0, %v2438
      %2440 = vmatmul.bf16.gmra.mxu0 %v1862
      %v2441 = vpop.f32.mrf.mxu0
      %v2442 = vadd.f32 0.0, %v2441
      %v2443 = vpop.f32.mrf.mxu0
      %v2444 = vadd.f32 0.0, %v2443
      %2445 = vmatmul.bf16.gmra.mxu0 %v1864
      %v2446 = vpop.f32.mrf.mxu0
      %v2447 = vadd.f32 0.0, %v2446
      %v2448 = vpop.f32.mrf.mxu0
      %v2449 = vadd.f32 0.0, %v2448
      %2450 = vmatmul.bf16.gmra.mxu0 %v1866
      %v2451 = vpop.f32.mrf.mxu0
      %v2452 = vadd.f32 0.0, %v2451
      %v2453 = vpop.f32.mrf.mxu0
      %v2454 = vadd.f32 0.0, %v2453
      %2455 = vmatmul.bf16.gmra.mxu0 %v1868
      %v2456 = vpop.f32.mrf.mxu0
      %v2457 = vadd.f32 0.0, %v2456
      %v2458 = vpop.f32.mrf.mxu0
      %v2459 = vadd.f32 0.0, %v2458
      %2460 = vmatmul.bf16.gmra.mxu0 %v1870
      %v2461 = vpop.f32.mrf.mxu0
      %v2462 = vadd.f32 0.0, %v2461
      %v2463 = vpop.f32.mrf.mxu0
      %v2464 = vadd.f32 0.0, %v2463
      %2465 = vmatmul.bf16.gmra.mxu0 %v1872
      %v2466 = vpop.f32.mrf.mxu0
      %v2467 = vadd.f32 0.0, %v2466
      %v2468 = vpop.f32.mrf.mxu0
      %v2469 = vadd.f32 0.0, %v2468
      %2470 = vmatmul.bf16.gmra.mxu0 %v1874
      %v2471 = vpop.f32.mrf.mxu0
      %v2472 = vadd.f32 0.0, %v2471
      %v2473 = vpop.f32.mrf.mxu0
      %v2474 = vadd.f32 0.0, %v2473
      %2475 = vmatmul.bf16.gmra.mxu0 %v1876
      %v2476 = vpop.f32.mrf.mxu0
      %v2477 = vadd.f32 0.0, %v2476
      %v2478 = vpop.f32.mrf.mxu0
      %v2479 = vadd.f32 0.0, %v2478
      %2480 = vmatmul.bf16.gmra.mxu0 %v1878
      %v2481 = vpop.f32.mrf.mxu0
      %v2482 = vadd.f32 0.0, %v2481
      %v2483 = vpop.f32.mrf.mxu0
      %v2484 = vadd.f32 0.0, %v2483
      %2485 = vmatmul.bf16.gmra.mxu0 %v1880
      %v2486 = vpop.f32.mrf.mxu0
      %v2487 = vadd.f32 0.0, %v2486
      %v2488 = vpop.f32.mrf.mxu0
      %v2489 = vadd.f32 0.0, %v2488
      %2490 = vmatmul.bf16.gmra.mxu0 %v1882
      %v2491 = vpop.f32.mrf.mxu0
      %v2492 = vadd.f32 0.0, %v2491
      %v2493 = vpop.f32.mrf.mxu0
      %v2494 = vadd.f32 0.0, %v2493
      %2495 = vmatmul.bf16.gmra.mxu0 %v1884
      %v2496 = vpop.f32.mrf.mxu0
      %v2497 = vadd.f32 0.0, %v2496
      %v2498 = vpop.f32.mrf.mxu0
      %v2499 = vadd.f32 0.0, %v2498
      %2500 = vmatmul.bf16.gmra.mxu0 %v1886
      %v2501 = vpop.f32.mrf.mxu0
      %v2502 = vadd.f32 0.0, %v2501
      %v2503 = vpop.f32.mrf.mxu0
      %v2504 = vadd.f32 0.0, %v2503
      %2505 = vmatmul.bf16.gmra.mxu0 %v1888
      %v2506 = vpop.f32.mrf.mxu0
      %v2507 = vadd.f32 0.0, %v2506
      %v2508 = vpop.f32.mrf.mxu0
      %v2509 = vadd.f32 0.0, %v2508
      %2510 = vmatmul.bf16.gmra.mxu0 %v1890
      %v2511 = vpop.f32.mrf.mxu0
      %v2512 = vadd.f32 0.0, %v2511
      %v2513 = vpop.f32.mrf.mxu0
      %v2514 = vadd.f32 0.0, %v2513
      %2515 = vmatmul.bf16.gmra.mxu0 %v1892
      %v2516 = vpop.f32.mrf.mxu0
      %v2517 = vadd.f32 0.0, %v2516
      %v2518 = vpop.f32.mrf.mxu0
      %v2519 = vadd.f32 0.0, %v2518
      %2520 = vmatmul.bf16.gmra.mxu0 %v1894
      %v2521 = vpop.f32.mrf.mxu0
      %v2522 = vadd.f32 0.0, %v2521
      %v2523 = vpop.f32.mrf.mxu0
      %v2524 = vadd.f32 0.0, %v2523
      %2525 = vmatmul.bf16.gmra.mxu0 %v1896
      %v2526 = vpop.f32.mrf.mxu0
      %v2527 = vadd.f32 0.0, %v2526
      %v2528 = vpop.f32.mrf.mxu0
      %v2529 = vadd.f32 0.0, %v2528
      %2530 = vmatmul.bf16.gmra.mxu0 %v1898
      %v2531 = vpop.f32.mrf.mxu0
      %v2532 = vadd.f32 0.0, %v2531
      %v2533 = vpop.f32.mrf.mxu0
      %v2534 = vadd.f32 0.0, %v2533
      %2535 = vmatmul.bf16.gmra.mxu0 %v1900
      %v2536 = vpop.f32.mrf.mxu0
      %v2537 = vadd.f32 0.0, %v2536
      %v2538 = vpop.f32.mrf.mxu0
      %v2539 = vadd.f32 0.0, %v2538
      %2540 = vmatmul.bf16.gmra.mxu0 %v1902
      %v2541 = vpop.f32.mrf.mxu0
      %v2542 = vadd.f32 0.0, %v2541
      %v2543 = vpop.f32.mrf.mxu0
      %v2544 = vadd.f32 0.0, %v2543
      %2545 = vmatmul.bf16.gmra.mxu0 %v1904
      %v2546 = vpop.f32.mrf.mxu0
      %v2547 = vadd.f32 0.0, %v2546
      %v2548 = vpop.f32.mrf.mxu0
      %v2549 = vadd.f32 0.0, %v2548
      %2550 = vmatmul.bf16.gmra.mxu0 %v1906
      %v2551 = vpop.f32.mrf.mxu0
      %v2552 = vadd.f32 0.0, %v2551
      %v2553 = vpop.f32.mrf.mxu0
      %v2554 = vadd.f32 0.0, %v2553
      %2555 = vmatmul.bf16.gmra.mxu0 %v1908
      %v2556 = vpop.f32.mrf.mxu0
      %v2557 = vadd.f32 0.0, %v2556
      %v2558 = vpop.f32.mrf.mxu0
      %v2559 = vadd.f32 0.0, %v2558
      %2560 = vmatmul.bf16.gmra.mxu0 %v1910
      %v2561 = vpop.f32.mrf.mxu0
      %v2562 = vadd.f32 0.0, %v2561
      %v2563 = vpop.f32.mrf.mxu0
      %v2564 = vadd.f32 0.0, %v2563
      %2565 = vmatmul.bf16.gmra.mxu0 %v1912
      %v2566 = vpop.f32.mrf.mxu0
      %v2567 = vadd.f32 0.0, %v2566
      %v2568 = vpop.f32.mrf.mxu0
      %v2569 = vadd.f32 0.0, %v2568
      %2570 = vmatmul.bf16.gmra.mxu0 %v1914
      %v2571 = vpop.f32.mrf.mxu0
      %v2572 = vadd.f32 0.0, %v2571
      %v2573 = vpop.f32.mrf.mxu0
      %v2574 = vadd.f32 0.0, %v2573
      %2575 = vmatmul.bf16.gmra.mxu0 %v2249
      %v2576 = vpop.f32.mrf.mxu0
      %v2577 = vadd.f32 0.0, %v2576
      %v2578 = vpop.f32.mrf.mxu0
      %v2579 = vadd.f32 0.0, %v2578
      %2580 = vmatmul.bf16.gmra.mxu0 %v2252
      %v2581 = vpop.f32.mrf.mxu0
      %v2582 = vadd.f32 0.0, %v2581
      %v2583 = vpop.f32.mrf.mxu0
      %v2584 = vadd.f32 0.0, %v2583
      %2585 = vdwg.mxu0
      %v2586 = vadd.f32 %v1929, %v2267
      %v2587 = vadd.f32 %v1931, %v2269
      %v2588 = vadd.f32 %v1934, %v2272
      %v2589 = vadd.f32 %v1936, %v2274
      %v2590 = vadd.f32 %v1939, %v2277
      %v2591 = vadd.f32 %v1941, %v2279
      %v2592 = vadd.f32 %v1944, %v2282
      %v2593 = vadd.f32 %v1946, %v2284
      %v2594 = vadd.f32 %v1949, %v2287
      %v2595 = vadd.f32 %v1951, %v2289
      %v2596 = vadd.f32 %v1954, %v2292
      %v2597 = vadd.f32 %v1956, %v2294
      %v2598 = vadd.f32 %v1959, %v2297
      %v2599 = vadd.f32 %v1961, %v2299
      %v2600 = vadd.f32 %v1964, %v2302
      %v2601 = vadd.f32 %v1966, %v2304
      %v2602 = vadd.f32 %v1969, %v2307
      %v2603 = vadd.f32 %v1971, %v2309
      %v2604 = vadd.f32 %v1974, %v2312
      %v2605 = vadd.f32 %v1976, %v2314
      %v2606 = vadd.f32 %v1979, %v2317
      %v2607 = vadd.f32 %v1981, %v2319
      %v2608 = vadd.f32 %v1984, %v2322
      %v2609 = vadd.f32 %v1986, %v2324
      %v2610 = vadd.f32 %v1989, %v2327
      %v2611 = vadd.f32 %v1991, %v2329
      %v2612 = vadd.f32 %v1994, %v2332
      %v2613 = vadd.f32 %v1996, %v2334
      %v2614 = vadd.f32 %v1999, %v2337
      %v2615 = vadd.f32 %v2001, %v2339
      %v2616 = vadd.f32 %v2004, %v2342
      %v2617 = vadd.f32 %v2006, %v2344
      %v2618 = vadd.f32 %v2009, %v2347
      %v2619 = vadd.f32 %v2011, %v2349
      %v2620 = vadd.f32 %v2014, %v2352
      %v2621 = vadd.f32 %v2016, %v2354
      %v2622 = vadd.f32 %v2019, %v2357
      %v2623 = vadd.f32 %v2021, %v2359
      %v2624 = vadd.f32 %v2024, %v2362
      %v2625 = vadd.f32 %v2026, %v2364
      %v2626 = vadd.f32 %v2029, %v2367
      %v2627 = vadd.f32 %v2031, %v2369
      %v2628 = vadd.f32 %v2034, %v2372
      %v2629 = vadd.f32 %v2036, %v2374
      %v2630 = vadd.f32 %v2039, %v2377
      %v2631 = vadd.f32 %v2041, %v2379
      %v2632 = vadd.f32 %v2044, %v2382
      %v2633 = vadd.f32 %v2046, %v2384
      %v2634 = vadd.f32 %v2049, %v2387
      %v2635 = vadd.f32 %v2051, %v2389
      %v2636 = vadd.f32 %v2054, %v2392
      %v2637 = vadd.f32 %v2056, %v2394
      %v2638 = vadd.f32 %v2059, %v2397
      %v2639 = vadd.f32 %v2061, %v2399
      %v2640 = vadd.f32 %v2064, %v2402
      %v2641 = vadd.f32 %v2066, %v2404
      %v2642 = vadd.f32 %v2069, %v2407
      %v2643 = vadd.f32 %v2071, %v2409
      %v2644 = vadd.f32 %v2074, %v2412
      %v2645 = vadd.f32 %v2076, %v2414
      %v2646 = vadd.f32 %v2079, %v2417
      %v2647 = vadd.f32 %v2081, %v2419
      %v2648 = vadd.f32 %v2084, %v2422
      %v2649 = vadd.f32 %v2086, %v2424
      %v2650 = vadd.f32 %v2089, %v2427
      %v2651 = vadd.f32 %v2091, %v2429
      %v2652 = vadd.f32 %v2094, %v2432
      %v2653 = vadd.f32 %v2096, %v2434
      %v2654 = vadd.f32 %v2099, %v2437
      %v2655 = vadd.f32 %v2101, %v2439
      %v2656 = vadd.f32 %v2104, %v2442
      %v2657 = vadd.f32 %v2106, %v2444
      %v2658 = vadd.f32 %v2109, %v2447
      %v2659 = vadd.f32 %v2111, %v2449
      %v2660 = vadd.f32 %v2114, %v2452
      %v2661 = vadd.f32 %v2116, %v2454
      %v2662 = vadd.f32 %v2119, %v2457
      %v2663 = vadd.f32 %v2121, %v2459
      %v2664 = vadd.f32 %v2124, %v2462
      %v2665 = vadd.f32 %v2126, %v2464
      %v2666 = vadd.f32 %v2129, %v2467
      %v2667 = vadd.f32 %v2131, %v2469
      %v2668 = vadd.f32 %v2134, %v2472
      %v2669 = vadd.f32 %v2136, %v2474
      %v2670 = vadd.f32 %v2139, %v2477
      %v2671 = vadd.f32 %v2141, %v2479
      %v2672 = vadd.f32 %v2144, %v2482
      %v2673 = vadd.f32 %v2146, %v2484
      %v2674 = vadd.f32 %v2149, %v2487
      %v2675 = vadd.f32 %v2151, %v2489
      %v2676 = vadd.f32 %v2154, %v2492
      %v2677 = vadd.f32 %v2156, %v2494
      %v2678 = vadd.f32 %v2159, %v2497
      %v2679 = vadd.f32 %v2161, %v2499
      %v2680 = vadd.f32 %v2164, %v2502
      %v2681 = vadd.f32 %v2166, %v2504
      %v2682 = vadd.f32 %v2169, %v2507
      %v2683 = vadd.f32 %v2171, %v2509
      %v2684 = vadd.f32 %v2174, %v2512
      %v2685 = vadd.f32 %v2176, %v2514
      %v2686 = vadd.f32 %v2179, %v2517
      %v2687 = vadd.f32 %v2181, %v2519
      %v2688 = vadd.f32 %v2184, %v2522
      %v2689 = vadd.f32 %v2186, %v2524
      %v2690 = vadd.f32 %v2189, %v2527
      %v2691 = vadd.f32 %v2191, %v2529
      %v2692 = vadd.f32 %v2194, %v2532
      %v2693 = vadd.f32 %v2196, %v2534
      %v2694 = vadd.f32 %v2199, %v2537
      %v2695 = vadd.f32 %v2201, %v2539
      %v2696 = vadd.f32 %v2204, %v2542
      %v2697 = vadd.f32 %v2206, %v2544
      %v2698 = vadd.f32 %v2209, %v2547
      %v2699 = vadd.f32 %v2211, %v2549
      %v2700 = vadd.f32 %v2214, %v2552
      %v2701 = vadd.f32 %v2216, %v2554
      %v2702 = vadd.f32 %v2219, %v2557
      %v2703 = vadd.f32 %v2221, %v2559
      %v2704 = vadd.f32 %v2224, %v2562
      %v2705 = vadd.f32 %v2226, %v2564
      %v2706 = vadd.f32 %v2229, %v2567
      %v2707 = vadd.f32 %v2231, %v2569
      %v2708 = vadd.f32 %v2234, %v2572
      %v2709 = vadd.f32 %v2236, %v2574
      %v2710 = vadd.f32 %v2239, %v2577
      %v2711 = vadd.f32 %v2241, %v2579
      %v2712 = vadd.f32 %v2244, %v2582
      %v2713 = vadd.f32 %v2246, %v2584
      %v2714 = vshrl.u32 %v739, 16
      %v2716 = vshll.u32 %v739, 16
      %v2718 = vrot.slane %v2716, 1
      %v2719 = vor.u32 %v2714, %v2718
      %v2720 = vshll.u32 %v740, 16
      %v2722 = vrot.slane %v2720, 1
      %v2723 = vsel %vm745, %v2719, %v2722
      %v2724 = vshrl.u32 %v740, 16
      %v2726 = vor.u32 %v2724, %v2722
      %v2727 = vsel %vm745, %v2726, %v764
      %v2729 = vsel %vm1262, %v2723, 0
      %v2732 = vsel %vm1262, %v2727, 0
      %v2735 = vsel %vm1455, %v744, 0
      %2737 = vmatpush.bf16.msra.mxu0 0
      %2738 = vmatpush.bf16.msra.mxu0 0
      %2739 = vmatpush.bf16.msra.mxu0 0
      %2740 = vmatpush.bf16.msra.mxu0 0
      %2741 = vmatpush.bf16.msra.mxu0 0
      %2742 = vmatpush.bf16.msra.mxu0 0
      %2743 = vmatpush.bf16.msra.mxu0 0
      %2744 = vmatpush.bf16.msra.mxu0 %v2735
      %2745 = vmatmul.bf16.gmra.mxu0 %v1270
      %v2746 = vpop.f32.mrf.mxu0
      %v2747 = vadd.f32 0.0, %v2746
      %v2748 = vpop.f32.mrf.mxu0
      %v2749 = vadd.f32 0.0, %v2748
      %2750 = vmatmul.bf16.gmra.mxu0 %v1273
      %v2751 = vpop.f32.mrf.mxu0
      %v2752 = vadd.f32 0.0, %v2751
      %v2753 = vpop.f32.mrf.mxu0
      %v2754 = vadd.f32 0.0, %v2753
      %2755 = vmatmul.bf16.gmra.mxu0 %v1276
      %v2756 = vpop.f32.mrf.mxu0
      %v2757 = vadd.f32 0.0, %v2756
      %v2758 = vpop.f32.mrf.mxu0
      %v2759 = vadd.f32 0.0, %v2758
      %2760 = vmatmul.bf16.gmra.mxu0 %v1279
      %v2761 = vpop.f32.mrf.mxu0
      %v2762 = vadd.f32 0.0, %v2761
      %v2763 = vpop.f32.mrf.mxu0
      %v2764 = vadd.f32 0.0, %v2763
      %2765 = vmatmul.bf16.gmra.mxu0 %v1282
      %v2766 = vpop.f32.mrf.mxu0
      %v2767 = vadd.f32 0.0, %v2766
      %v2768 = vpop.f32.mrf.mxu0
      %v2769 = vadd.f32 0.0, %v2768
      %2770 = vmatmul.bf16.gmra.mxu0 %v1285
      %v2771 = vpop.f32.mrf.mxu0
      %v2772 = vadd.f32 0.0, %v2771
      %v2773 = vpop.f32.mrf.mxu0
      %v2774 = vadd.f32 0.0, %v2773
      %2775 = vmatmul.bf16.gmra.mxu0 %v1288
      %v2776 = vpop.f32.mrf.mxu0
      %v2777 = vadd.f32 0.0, %v2776
      %v2778 = vpop.f32.mrf.mxu0
      %v2779 = vadd.f32 0.0, %v2778
      %2780 = vmatmul.bf16.gmra.mxu0 %v1291
      %v2781 = vpop.f32.mrf.mxu0
      %v2782 = vadd.f32 0.0, %v2781
      %v2783 = vpop.f32.mrf.mxu0
      %v2784 = vadd.f32 0.0, %v2783
      %2785 = vmatmul.bf16.gmra.mxu0 %v1294
      %v2786 = vpop.f32.mrf.mxu0
      %v2787 = vadd.f32 0.0, %v2786
      %v2788 = vpop.f32.mrf.mxu0
      %v2789 = vadd.f32 0.0, %v2788
      %2790 = vmatmul.bf16.gmra.mxu0 %v1297
      %v2791 = vpop.f32.mrf.mxu0
      %v2792 = vadd.f32 0.0, %v2791
      %v2793 = vpop.f32.mrf.mxu0
      %v2794 = vadd.f32 0.0, %v2793
      %2795 = vmatmul.bf16.gmra.mxu0 %v1300
      %v2796 = vpop.f32.mrf.mxu0
      %v2797 = vadd.f32 0.0, %v2796
      %v2798 = vpop.f32.mrf.mxu0
      %v2799 = vadd.f32 0.0, %v2798
      %2800 = vmatmul.bf16.gmra.mxu0 %v1303
      %v2801 = vpop.f32.mrf.mxu0
      %v2802 = vadd.f32 0.0, %v2801
      %v2803 = vpop.f32.mrf.mxu0
      %v2804 = vadd.f32 0.0, %v2803
      %2805 = vmatmul.bf16.gmra.mxu0 %v1306
      %v2806 = vpop.f32.mrf.mxu0
      %v2807 = vadd.f32 0.0, %v2806
      %v2808 = vpop.f32.mrf.mxu0
      %v2809 = vadd.f32 0.0, %v2808
      %2810 = vmatmul.bf16.gmra.mxu0 %v1309
      %v2811 = vpop.f32.mrf.mxu0
      %v2812 = vadd.f32 0.0, %v2811
      %v2813 = vpop.f32.mrf.mxu0
      %v2814 = vadd.f32 0.0, %v2813
      %2815 = vmatmul.bf16.gmra.mxu0 %v1312
      %v2816 = vpop.f32.mrf.mxu0
      %v2817 = vadd.f32 0.0, %v2816
      %v2818 = vpop.f32.mrf.mxu0
      %v2819 = vadd.f32 0.0, %v2818
      %2820 = vmatmul.bf16.gmra.mxu0 %v1315
      %v2821 = vpop.f32.mrf.mxu0
      %v2822 = vadd.f32 0.0, %v2821
      %v2823 = vpop.f32.mrf.mxu0
      %v2824 = vadd.f32 0.0, %v2823
      %2825 = vmatmul.bf16.gmra.mxu0 %v1318
      %v2826 = vpop.f32.mrf.mxu0
      %v2827 = vadd.f32 0.0, %v2826
      %v2828 = vpop.f32.mrf.mxu0
      %v2829 = vadd.f32 0.0, %v2828
      %2830 = vmatmul.bf16.gmra.mxu0 %v1321
      %v2831 = vpop.f32.mrf.mxu0
      %v2832 = vadd.f32 0.0, %v2831
      %v2833 = vpop.f32.mrf.mxu0
      %v2834 = vadd.f32 0.0, %v2833
      %2835 = vmatmul.bf16.gmra.mxu0 %v1324
      %v2836 = vpop.f32.mrf.mxu0
      %v2837 = vadd.f32 0.0, %v2836
      %v2838 = vpop.f32.mrf.mxu0
      %v2839 = vadd.f32 0.0, %v2838
      %2840 = vmatmul.bf16.gmra.mxu0 %v1327
      %v2841 = vpop.f32.mrf.mxu0
      %v2842 = vadd.f32 0.0, %v2841
      %v2843 = vpop.f32.mrf.mxu0
      %v2844 = vadd.f32 0.0, %v2843
      %2845 = vmatmul.bf16.gmra.mxu0 %v1330
      %v2846 = vpop.f32.mrf.mxu0
      %v2847 = vadd.f32 0.0, %v2846
      %v2848 = vpop.f32.mrf.mxu0
      %v2849 = vadd.f32 0.0, %v2848
      %2850 = vmatmul.bf16.gmra.mxu0 %v1333
      %v2851 = vpop.f32.mrf.mxu0
      %v2852 = vadd.f32 0.0, %v2851
      %v2853 = vpop.f32.mrf.mxu0
      %v2854 = vadd.f32 0.0, %v2853
      %2855 = vmatmul.bf16.gmra.mxu0 %v1336
      %v2856 = vpop.f32.mrf.mxu0
      %v2857 = vadd.f32 0.0, %v2856
      %v2858 = vpop.f32.mrf.mxu0
      %v2859 = vadd.f32 0.0, %v2858
      %2860 = vmatmul.bf16.gmra.mxu0 %v1339
      %v2861 = vpop.f32.mrf.mxu0
      %v2862 = vadd.f32 0.0, %v2861
      %v2863 = vpop.f32.mrf.mxu0
      %v2864 = vadd.f32 0.0, %v2863
      %2865 = vmatmul.bf16.gmra.mxu0 %v1342
      %v2866 = vpop.f32.mrf.mxu0
      %v2867 = vadd.f32 0.0, %v2866
      %v2868 = vpop.f32.mrf.mxu0
      %v2869 = vadd.f32 0.0, %v2868
      %2870 = vmatmul.bf16.gmra.mxu0 %v1345
      %v2871 = vpop.f32.mrf.mxu0
      %v2872 = vadd.f32 0.0, %v2871
      %v2873 = vpop.f32.mrf.mxu0
      %v2874 = vadd.f32 0.0, %v2873
      %2875 = vmatmul.bf16.gmra.mxu0 %v1348
      %v2876 = vpop.f32.mrf.mxu0
      %v2877 = vadd.f32 0.0, %v2876
      %v2878 = vpop.f32.mrf.mxu0
      %v2879 = vadd.f32 0.0, %v2878
      %2880 = vmatmul.bf16.gmra.mxu0 %v1351
      %v2881 = vpop.f32.mrf.mxu0
      %v2882 = vadd.f32 0.0, %v2881
      %v2883 = vpop.f32.mrf.mxu0
      %v2884 = vadd.f32 0.0, %v2883
      %2885 = vmatmul.bf16.gmra.mxu0 %v1354
      %v2886 = vpop.f32.mrf.mxu0
      %v2887 = vadd.f32 0.0, %v2886
      %v2888 = vpop.f32.mrf.mxu0
      %v2889 = vadd.f32 0.0, %v2888
      %2890 = vmatmul.bf16.gmra.mxu0 %v1357
      %v2891 = vpop.f32.mrf.mxu0
      %v2892 = vadd.f32 0.0, %v2891
      %v2893 = vpop.f32.mrf.mxu0
      %v2894 = vadd.f32 0.0, %v2893
      %2895 = vmatmul.bf16.gmra.mxu0 %v1360
      %v2896 = vpop.f32.mrf.mxu0
      %v2897 = vadd.f32 0.0, %v2896
      %v2898 = vpop.f32.mrf.mxu0
      %v2899 = vadd.f32 0.0, %v2898
      %2900 = vmatmul.bf16.gmra.mxu0 %v1363
      %v2901 = vpop.f32.mrf.mxu0
      %v2902 = vadd.f32 0.0, %v2901
      %v2903 = vpop.f32.mrf.mxu0
      %v2904 = vadd.f32 0.0, %v2903
      %2905 = vmatmul.bf16.gmra.mxu0 %v1366
      %v2906 = vpop.f32.mrf.mxu0
      %v2907 = vadd.f32 0.0, %v2906
      %v2908 = vpop.f32.mrf.mxu0
      %v2909 = vadd.f32 0.0, %v2908
      %2910 = vmatmul.bf16.gmra.mxu0 %v1369
      %v2911 = vpop.f32.mrf.mxu0
      %v2912 = vadd.f32 0.0, %v2911
      %v2913 = vpop.f32.mrf.mxu0
      %v2914 = vadd.f32 0.0, %v2913
      %2915 = vmatmul.bf16.gmra.mxu0 %v1372
      %v2916 = vpop.f32.mrf.mxu0
      %v2917 = vadd.f32 0.0, %v2916
      %v2918 = vpop.f32.mrf.mxu0
      %v2919 = vadd.f32 0.0, %v2918
      %2920 = vmatmul.bf16.gmra.mxu0 %v1375
      %v2921 = vpop.f32.mrf.mxu0
      %v2922 = vadd.f32 0.0, %v2921
      %v2923 = vpop.f32.mrf.mxu0
      %v2924 = vadd.f32 0.0, %v2923
      %2925 = vmatmul.bf16.gmra.mxu0 %v1378
      %v2926 = vpop.f32.mrf.mxu0
      %v2927 = vadd.f32 0.0, %v2926
      %v2928 = vpop.f32.mrf.mxu0
      %v2929 = vadd.f32 0.0, %v2928
      %2930 = vmatmul.bf16.gmra.mxu0 %v1381
      %v2931 = vpop.f32.mrf.mxu0
      %v2932 = vadd.f32 0.0, %v2931
      %v2933 = vpop.f32.mrf.mxu0
      %v2934 = vadd.f32 0.0, %v2933
      %2935 = vmatmul.bf16.gmra.mxu0 %v1384
      %v2936 = vpop.f32.mrf.mxu0
      %v2937 = vadd.f32 0.0, %v2936
      %v2938 = vpop.f32.mrf.mxu0
      %v2939 = vadd.f32 0.0, %v2938
      %2940 = vmatmul.bf16.gmra.mxu0 %v1387
      %v2941 = vpop.f32.mrf.mxu0
      %v2942 = vadd.f32 0.0, %v2941
      %v2943 = vpop.f32.mrf.mxu0
      %v2944 = vadd.f32 0.0, %v2943
      %2945 = vmatmul.bf16.gmra.mxu0 %v1390
      %v2946 = vpop.f32.mrf.mxu0
      %v2947 = vadd.f32 0.0, %v2946
      %v2948 = vpop.f32.mrf.mxu0
      %v2949 = vadd.f32 0.0, %v2948
      %2950 = vmatmul.bf16.gmra.mxu0 %v1393
      %v2951 = vpop.f32.mrf.mxu0
      %v2952 = vadd.f32 0.0, %v2951
      %v2953 = vpop.f32.mrf.mxu0
      %v2954 = vadd.f32 0.0, %v2953
      %2955 = vmatmul.bf16.gmra.mxu0 %v1396
      %v2956 = vpop.f32.mrf.mxu0
      %v2957 = vadd.f32 0.0, %v2956
      %v2958 = vpop.f32.mrf.mxu0
      %v2959 = vadd.f32 0.0, %v2958
      %2960 = vmatmul.bf16.gmra.mxu0 %v1399
      %v2961 = vpop.f32.mrf.mxu0
      %v2962 = vadd.f32 0.0, %v2961
      %v2963 = vpop.f32.mrf.mxu0
      %v2964 = vadd.f32 0.0, %v2963
      %2965 = vmatmul.bf16.gmra.mxu0 %v1402
      %v2966 = vpop.f32.mrf.mxu0
      %v2967 = vadd.f32 0.0, %v2966
      %v2968 = vpop.f32.mrf.mxu0
      %v2969 = vadd.f32 0.0, %v2968
      %2970 = vmatmul.bf16.gmra.mxu0 %v1405
      %v2971 = vpop.f32.mrf.mxu0
      %v2972 = vadd.f32 0.0, %v2971
      %v2973 = vpop.f32.mrf.mxu0
      %v2974 = vadd.f32 0.0, %v2973
      %2975 = vmatmul.bf16.gmra.mxu0 %v1408
      %v2976 = vpop.f32.mrf.mxu0
      %v2977 = vadd.f32 0.0, %v2976
      %v2978 = vpop.f32.mrf.mxu0
      %v2979 = vadd.f32 0.0, %v2978
      %2980 = vmatmul.bf16.gmra.mxu0 %v1411
      %v2981 = vpop.f32.mrf.mxu0
      %v2982 = vadd.f32 0.0, %v2981
      %v2983 = vpop.f32.mrf.mxu0
      %v2984 = vadd.f32 0.0, %v2983
      %2985 = vmatmul.bf16.gmra.mxu0 %v1414
      %v2986 = vpop.f32.mrf.mxu0
      %v2987 = vadd.f32 0.0, %v2986
      %v2988 = vpop.f32.mrf.mxu0
      %v2989 = vadd.f32 0.0, %v2988
      %2990 = vmatmul.bf16.gmra.mxu0 %v1417
      %v2991 = vpop.f32.mrf.mxu0
      %v2992 = vadd.f32 0.0, %v2991
      %v2993 = vpop.f32.mrf.mxu0
      %v2994 = vadd.f32 0.0, %v2993
      %2995 = vmatmul.bf16.gmra.mxu0 %v1420
      %v2996 = vpop.f32.mrf.mxu0
      %v2997 = vadd.f32 0.0, %v2996
      %v2998 = vpop.f32.mrf.mxu0
      %v2999 = vadd.f32 0.0, %v2998
      %3000 = vmatmul.bf16.gmra.mxu0 %v1423
      %v3001 = vpop.f32.mrf.mxu0
      %v3002 = vadd.f32 0.0, %v3001
      %v3003 = vpop.f32.mrf.mxu0
      %v3004 = vadd.f32 0.0, %v3003
      %3005 = vmatmul.bf16.gmra.mxu0 %v1426
      %v3006 = vpop.f32.mrf.mxu0
      %v3007 = vadd.f32 0.0, %v3006
      %v3008 = vpop.f32.mrf.mxu0
      %v3009 = vadd.f32 0.0, %v3008
      %3010 = vmatmul.bf16.gmra.mxu0 %v1429
      %v3011 = vpop.f32.mrf.mxu0
      %v3012 = vadd.f32 0.0, %v3011
      %v3013 = vpop.f32.mrf.mxu0
      %v3014 = vadd.f32 0.0, %v3013
      %3015 = vmatmul.bf16.gmra.mxu0 %v1432
      %v3016 = vpop.f32.mrf.mxu0
      %v3017 = vadd.f32 0.0, %v3016
      %v3018 = vpop.f32.mrf.mxu0
      %v3019 = vadd.f32 0.0, %v3018
      %3020 = vmatmul.bf16.gmra.mxu0 %v1435
      %v3021 = vpop.f32.mrf.mxu0
      %v3022 = vadd.f32 0.0, %v3021
      %v3023 = vpop.f32.mrf.mxu0
      %v3024 = vadd.f32 0.0, %v3023
      %3025 = vmatmul.bf16.gmra.mxu0 %v1438
      %v3026 = vpop.f32.mrf.mxu0
      %v3027 = vadd.f32 0.0, %v3026
      %v3028 = vpop.f32.mrf.mxu0
      %v3029 = vadd.f32 0.0, %v3028
      %3030 = vmatmul.bf16.gmra.mxu0 %v1441
      %v3031 = vpop.f32.mrf.mxu0
      %v3032 = vadd.f32 0.0, %v3031
      %v3033 = vpop.f32.mrf.mxu0
      %v3034 = vadd.f32 0.0, %v3033
      %3035 = vmatmul.bf16.gmra.mxu0 %v1444
      %v3036 = vpop.f32.mrf.mxu0
      %v3037 = vadd.f32 0.0, %v3036
      %v3038 = vpop.f32.mrf.mxu0
      %v3039 = vadd.f32 0.0, %v3038
      %3040 = vmatmul.bf16.gmra.mxu0 %v1447
      %v3041 = vpop.f32.mrf.mxu0
      %v3042 = vadd.f32 0.0, %v3041
      %v3043 = vpop.f32.mrf.mxu0
      %v3044 = vadd.f32 0.0, %v3043
      %3045 = vmatmul.bf16.gmra.mxu0 %v1450
      %v3046 = vpop.f32.mrf.mxu0
      %v3047 = vadd.f32 0.0, %v3046
      %v3048 = vpop.f32.mrf.mxu0
      %v3049 = vadd.f32 0.0, %v3048
      %3050 = vmatmul.bf16.gmra.mxu0 %v1453
      %v3051 = vpop.f32.mrf.mxu0
      %v3052 = vadd.f32 0.0, %v3051
      %v3053 = vpop.f32.mrf.mxu0
      %v3054 = vadd.f32 0.0, %v3053
      %3055 = vmatmul.bf16.gmra.mxu0 %v2729
      %v3056 = vpop.f32.mrf.mxu0
      %v3057 = vadd.f32 0.0, %v3056
      %v3058 = vpop.f32.mrf.mxu0
      %v3059 = vadd.f32 0.0, %v3058
      %3060 = vmatmul.bf16.gmra.mxu0 %v2732
      %v3061 = vpop.f32.mrf.mxu0
      %v3062 = vadd.f32 0.0, %v3061
      %v3063 = vpop.f32.mrf.mxu0
      %v3064 = vadd.f32 0.0, %v3063
      %3065 = vdwg.mxu0
      %v3066 = vadd.f32 %v2586, %v2747
      %v3067 = vadd.f32 %v2587, %v2749
      %v3068 = vadd.f32 %v2588, %v2752
      %v3069 = vadd.f32 %v2589, %v2754
      %v3070 = vadd.f32 %v2590, %v2757
      %v3071 = vadd.f32 %v2591, %v2759
      %v3072 = vadd.f32 %v2592, %v2762
      %v3073 = vadd.f32 %v2593, %v2764
      %v3074 = vadd.f32 %v2594, %v2767
      %v3075 = vadd.f32 %v2595, %v2769
      %v3076 = vadd.f32 %v2596, %v2772
      %v3077 = vadd.f32 %v2597, %v2774
      %v3078 = vadd.f32 %v2598, %v2777
      %v3079 = vadd.f32 %v2599, %v2779
      %v3080 = vadd.f32 %v2600, %v2782
      %v3081 = vadd.f32 %v2601, %v2784
      %v3082 = vadd.f32 %v2602, %v2787
      %v3083 = vadd.f32 %v2603, %v2789
      %v3084 = vadd.f32 %v2604, %v2792
      %v3085 = vadd.f32 %v2605, %v2794
      %v3086 = vadd.f32 %v2606, %v2797
      %v3087 = vadd.f32 %v2607, %v2799
      %v3088 = vadd.f32 %v2608, %v2802
      %v3089 = vadd.f32 %v2609, %v2804
      %v3090 = vadd.f32 %v2610, %v2807
      %v3091 = vadd.f32 %v2611, %v2809
      %v3092 = vadd.f32 %v2612, %v2812
      %v3093 = vadd.f32 %v2613, %v2814
      %v3094 = vadd.f32 %v2614, %v2817
      %v3095 = vadd.f32 %v2615, %v2819
      %v3096 = vadd.f32 %v2616, %v2822
      %v3097 = vadd.f32 %v2617, %v2824
      %v3098 = vadd.f32 %v2618, %v2827
      %v3099 = vadd.f32 %v2619, %v2829
      %v3100 = vadd.f32 %v2620, %v2832
      %v3101 = vadd.f32 %v2621, %v2834
      %v3102 = vadd.f32 %v2622, %v2837
      %v3103 = vadd.f32 %v2623, %v2839
      %v3104 = vadd.f32 %v2624, %v2842
      %v3105 = vadd.f32 %v2625, %v2844
      %v3106 = vadd.f32 %v2626, %v2847
      %v3107 = vadd.f32 %v2627, %v2849
      %v3108 = vadd.f32 %v2628, %v2852
      %v3109 = vadd.f32 %v2629, %v2854
      %v3110 = vadd.f32 %v2630, %v2857
      %v3111 = vadd.f32 %v2631, %v2859
      %v3112 = vadd.f32 %v2632, %v2862
      %v3113 = vadd.f32 %v2633, %v2864
      %v3114 = vadd.f32 %v2634, %v2867
      %v3115 = vadd.f32 %v2635, %v2869
      %v3116 = vadd.f32 %v2636, %v2872
      %v3117 = vadd.f32 %v2637, %v2874
      %v3118 = vadd.f32 %v2638, %v2877
      %v3119 = vadd.f32 %v2639, %v2879
      %v3120 = vadd.f32 %v2640, %v2882
      %v3121 = vadd.f32 %v2641, %v2884
      %v3122 = vadd.f32 %v2642, %v2887
      %v3123 = vadd.f32 %v2643, %v2889
      %v3124 = vadd.f32 %v2644, %v2892
      %v3125 = vadd.f32 %v2645, %v2894
      %v3126 = vadd.f32 %v2646, %v2897
      %v3127 = vadd.f32 %v2647, %v2899
      %v3128 = vadd.f32 %v2648, %v2902
      %v3129 = vadd.f32 %v2649, %v2904
      %v3130 = vadd.f32 %v2650, %v2907
      %v3131 = vadd.f32 %v2651, %v2909
      %v3132 = vadd.f32 %v2652, %v2912
      %v3133 = vadd.f32 %v2653, %v2914
      %v3134 = vadd.f32 %v2654, %v2917
      %v3135 = vadd.f32 %v2655, %v2919
      %v3136 = vadd.f32 %v2656, %v2922
      %v3137 = vadd.f32 %v2657, %v2924
      %v3138 = vadd.f32 %v2658, %v2927
      %v3139 = vadd.f32 %v2659, %v2929
      %v3140 = vadd.f32 %v2660, %v2932
      %v3141 = vadd.f32 %v2661, %v2934
      %v3142 = vadd.f32 %v2662, %v2937
      %v3143 = vadd.f32 %v2663, %v2939
      %v3144 = vadd.f32 %v2664, %v2942
      %v3145 = vadd.f32 %v2665, %v2944
      %v3146 = vadd.f32 %v2666, %v2947
      %v3147 = vadd.f32 %v2667, %v2949
      %v3148 = vadd.f32 %v2668, %v2952
      %v3149 = vadd.f32 %v2669, %v2954
      %v3150 = vadd.f32 %v2670, %v2957
      %v3151 = vadd.f32 %v2671, %v2959
      %v3152 = vadd.f32 %v2672, %v2962
      %v3153 = vadd.f32 %v2673, %v2964
      %v3154 = vadd.f32 %v2674, %v2967
      %v3155 = vadd.f32 %v2675, %v2969
      %v3156 = vadd.f32 %v2676, %v2972
      %v3157 = vadd.f32 %v2677, %v2974
      %v3158 = vadd.f32 %v2678, %v2977
      %v3159 = vadd.f32 %v2679, %v2979
      %v3160 = vadd.f32 %v2680, %v2982
      %v3161 = vadd.f32 %v2681, %v2984
      %v3162 = vadd.f32 %v2682, %v2987
      %v3163 = vadd.f32 %v2683, %v2989
      %v3164 = vadd.f32 %v2684, %v2992
      %v3165 = vadd.f32 %v2685, %v2994
      %v3166 = vadd.f32 %v2686, %v2997
      %v3167 = vadd.f32 %v2687, %v2999
      %v3168 = vadd.f32 %v2688, %v3002
      %v3169 = vadd.f32 %v2689, %v3004
      %v3170 = vadd.f32 %v2690, %v3007
      %v3171 = vadd.f32 %v2691, %v3009
      %v3172 = vadd.f32 %v2692, %v3012
      %v3173 = vadd.f32 %v2693, %v3014
      %v3174 = vadd.f32 %v2694, %v3017
      %v3175 = vadd.f32 %v2695, %v3019
      %v3176 = vadd.f32 %v2696, %v3022
      %v3177 = vadd.f32 %v2697, %v3024
      %v3178 = vadd.f32 %v2698, %v3027
      %v3179 = vadd.f32 %v2699, %v3029
      %v3180 = vadd.f32 %v2700, %v3032
      %v3181 = vadd.f32 %v2701, %v3034
      %v3182 = vadd.f32 %v2702, %v3037
      %v3183 = vadd.f32 %v2703, %v3039
      %v3184 = vadd.f32 %v2704, %v3042
      %v3185 = vadd.f32 %v2705, %v3044
      %v3186 = vadd.f32 %v2706, %v3047
      %v3187 = vadd.f32 %v2707, %v3049
      %v3188 = vadd.f32 %v2708, %v3052
      %v3189 = vadd.f32 %v2709, %v3054
      %v3190 = vadd.f32 %v2710, %v3057
      %v3191 = vadd.f32 %v2711, %v3059
      %v3192 = vadd.f32 %v2712, %v3062
      %v3193 = vadd.f32 %v2713, %v3064
      %vm3194 = vcmask 130048
      %v3195 = vsel %vm3194, %v3066, 0.0
      %v3196 = vsel %vm3194, %v3067, 0.0
      %v3197 = vadd.f32 %v3195, %v3196
      %v3198 = vsel %vm3194, %v3068, 0.0
      %v3199 = vadd.f32 %v3197, %v3198
      %v3200 = vsel %vm3194, %v3069, 0.0
      %v3201 = vadd.f32 %v3199, %v3200
      %v3202 = vsel %vm3194, %v3070, 0.0
      %v3203 = vadd.f32 %v3201, %v3202
      %v3204 = vsel %vm3194, %v3071, 0.0
      %v3205 = vadd.f32 %v3203, %v3204
      %v3206 = vsel %vm3194, %v3072, 0.0
      %v3207 = vadd.f32 %v3205, %v3206
      %v3208 = vsel %vm3194, %v3073, 0.0
      %v3209 = vadd.f32 %v3207, %v3208
      %v3210 = vsel %vm3194, %v3074, 0.0
      %v3211 = vadd.f32 %v3209, %v3210
      %v3212 = vsel %vm3194, %v3075, 0.0
      %v3213 = vadd.f32 %v3211, %v3212
      %v3214 = vsel %vm3194, %v3076, 0.0
      %v3215 = vadd.f32 %v3213, %v3214
      %v3216 = vsel %vm3194, %v3077, 0.0
      %v3217 = vadd.f32 %v3215, %v3216
      %v3218 = vsel %vm3194, %v3078, 0.0
      %v3219 = vadd.f32 %v3217, %v3218
      %v3220 = vsel %vm3194, %v3079, 0.0
      %v3221 = vadd.f32 %v3219, %v3220
      %v3222 = vsel %vm3194, %v3080, 0.0
      %v3223 = vadd.f32 %v3221, %v3222
      %v3224 = vsel %vm3194, %v3081, 0.0
      %v3225 = vadd.f32 %v3223, %v3224
      %v3226 = vsel %vm3194, %v3082, 0.0
      %v3227 = vadd.f32 %v3225, %v3226
      %v3228 = vsel %vm3194, %v3083, 0.0
      %v3229 = vadd.f32 %v3227, %v3228
      %v3230 = vsel %vm3194, %v3084, 0.0
      %v3231 = vadd.f32 %v3229, %v3230
      %v3232 = vsel %vm3194, %v3085, 0.0
      %v3233 = vadd.f32 %v3231, %v3232
      %v3234 = vsel %vm3194, %v3086, 0.0
      %v3235 = vadd.f32 %v3233, %v3234
      %v3236 = vsel %vm3194, %v3087, 0.0
      %v3237 = vadd.f32 %v3235, %v3236
      %v3238 = vsel %vm3194, %v3088, 0.0
      %v3239 = vadd.f32 %v3237, %v3238
      %v3240 = vsel %vm3194, %v3089, 0.0
      %v3241 = vadd.f32 %v3239, %v3240
      %v3242 = vsel %vm3194, %v3090, 0.0
      %v3243 = vadd.f32 %v3241, %v3242
      %v3244 = vsel %vm3194, %v3091, 0.0
      %v3245 = vadd.f32 %v3243, %v3244
      %v3246 = vsel %vm3194, %v3092, 0.0
      %v3247 = vadd.f32 %v3245, %v3246
      %v3248 = vsel %vm3194, %v3093, 0.0
      %v3249 = vadd.f32 %v3247, %v3248
      %v3250 = vsel %vm3194, %v3094, 0.0
      %v3251 = vadd.f32 %v3249, %v3250
      %v3252 = vsel %vm3194, %v3095, 0.0
      %v3253 = vadd.f32 %v3251, %v3252
      %v3254 = vsel %vm3194, %v3096, 0.0
      %v3255 = vadd.f32 %v3253, %v3254
      %v3256 = vsel %vm3194, %v3097, 0.0
      %v3257 = vadd.f32 %v3255, %v3256
      %v3258 = vsel %vm3194, %v3098, 0.0
      %v3259 = vadd.f32 %v3257, %v3258
      %v3260 = vsel %vm3194, %v3099, 0.0
      %v3261 = vadd.f32 %v3259, %v3260
      %v3262 = vsel %vm3194, %v3100, 0.0
      %v3263 = vadd.f32 %v3261, %v3262
      %v3264 = vsel %vm3194, %v3101, 0.0
      %v3265 = vadd.f32 %v3263, %v3264
      %v3266 = vsel %vm3194, %v3102, 0.0
      %v3267 = vadd.f32 %v3265, %v3266
      %v3268 = vsel %vm3194, %v3103, 0.0
      %v3269 = vadd.f32 %v3267, %v3268
      %v3270 = vsel %vm3194, %v3104, 0.0
      %v3271 = vadd.f32 %v3269, %v3270
      %v3272 = vsel %vm3194, %v3105, 0.0
      %v3273 = vadd.f32 %v3271, %v3272
      %v3274 = vsel %vm3194, %v3106, 0.0
      %v3275 = vadd.f32 %v3273, %v3274
      %v3276 = vsel %vm3194, %v3107, 0.0
      %v3277 = vadd.f32 %v3275, %v3276
      %v3278 = vsel %vm3194, %v3108, 0.0
      %v3279 = vadd.f32 %v3277, %v3278
      %v3280 = vsel %vm3194, %v3109, 0.0
      %v3281 = vadd.f32 %v3279, %v3280
      %v3282 = vsel %vm3194, %v3110, 0.0
      %v3283 = vadd.f32 %v3281, %v3282
      %v3284 = vsel %vm3194, %v3111, 0.0
      %v3285 = vadd.f32 %v3283, %v3284
      %v3286 = vsel %vm3194, %v3112, 0.0
      %v3287 = vadd.f32 %v3285, %v3286
      %v3288 = vsel %vm3194, %v3113, 0.0
      %v3289 = vadd.f32 %v3287, %v3288
      %v3290 = vsel %vm3194, %v3114, 0.0
      %v3291 = vadd.f32 %v3289, %v3290
      %v3292 = vsel %vm3194, %v3115, 0.0
      %v3293 = vadd.f32 %v3291, %v3292
      %v3294 = vsel %vm3194, %v3116, 0.0
      %v3295 = vadd.f32 %v3293, %v3294
      %v3296 = vsel %vm3194, %v3117, 0.0
      %v3297 = vadd.f32 %v3295, %v3296
      %v3298 = vsel %vm3194, %v3118, 0.0
      %v3299 = vadd.f32 %v3297, %v3298
      %v3300 = vsel %vm3194, %v3119, 0.0
      %v3301 = vadd.f32 %v3299, %v3300
      %v3302 = vsel %vm3194, %v3120, 0.0
      %v3303 = vadd.f32 %v3301, %v3302
      %v3304 = vsel %vm3194, %v3121, 0.0
      %v3305 = vadd.f32 %v3303, %v3304
      %v3306 = vsel %vm3194, %v3122, 0.0
      %v3307 = vadd.f32 %v3305, %v3306
      %v3308 = vsel %vm3194, %v3123, 0.0
      %v3309 = vadd.f32 %v3307, %v3308
      %v3310 = vsel %vm3194, %v3124, 0.0
      %v3311 = vadd.f32 %v3309, %v3310
      %v3312 = vsel %vm3194, %v3125, 0.0
      %v3313 = vadd.f32 %v3311, %v3312
      %v3314 = vsel %vm3194, %v3126, 0.0
      %v3315 = vadd.f32 %v3313, %v3314
      %v3316 = vsel %vm3194, %v3127, 0.0
      %v3317 = vadd.f32 %v3315, %v3316
      %v3318 = vsel %vm3194, %v3128, 0.0
      %v3319 = vadd.f32 %v3317, %v3318
      %v3320 = vsel %vm3194, %v3129, 0.0
      %v3321 = vadd.f32 %v3319, %v3320
      %v3322 = vsel %vm3194, %v3130, 0.0
      %v3323 = vadd.f32 %v3321, %v3322
      %v3324 = vsel %vm3194, %v3131, 0.0
      %v3325 = vadd.f32 %v3323, %v3324
      %v3326 = vsel %vm3194, %v3132, 0.0
      %v3327 = vadd.f32 %v3325, %v3326
      %v3328 = vsel %vm3194, %v3133, 0.0
      %v3329 = vadd.f32 %v3327, %v3328
      %v3330 = vsel %vm3194, %v3134, 0.0
      %v3331 = vadd.f32 %v3329, %v3330
      %v3332 = vsel %vm3194, %v3135, 0.0
      %v3333 = vadd.f32 %v3331, %v3332
      %v3334 = vsel %vm3194, %v3136, 0.0
      %v3335 = vadd.f32 %v3333, %v3334
      %v3336 = vsel %vm3194, %v3137, 0.0
      %v3337 = vadd.f32 %v3335, %v3336
      %v3338 = vsel %vm3194, %v3138, 0.0
      %v3339 = vadd.f32 %v3337, %v3338
      %v3340 = vsel %vm3194, %v3139, 0.0
      %v3341 = vadd.f32 %v3339, %v3340
      %v3342 = vsel %vm3194, %v3140, 0.0
      %v3343 = vadd.f32 %v3341, %v3342
      %v3344 = vsel %vm3194, %v3141, 0.0
      %v3345 = vadd.f32 %v3343, %v3344
      %v3346 = vsel %vm3194, %v3142, 0.0
      %v3347 = vadd.f32 %v3345, %v3346
      %v3348 = vsel %vm3194, %v3143, 0.0
      %v3349 = vadd.f32 %v3347, %v3348
      %v3350 = vsel %vm3194, %v3144, 0.0
      %v3351 = vadd.f32 %v3349, %v3350
      %v3352 = vsel %vm3194, %v3145, 0.0
      %v3353 = vadd.f32 %v3351, %v3352
      %v3354 = vsel %vm3194, %v3146, 0.0
      %v3355 = vadd.f32 %v3353, %v3354
      %v3356 = vsel %vm3194, %v3147, 0.0
      %v3357 = vadd.f32 %v3355, %v3356
      %v3358 = vsel %vm3194, %v3148, 0.0
      %v3359 = vadd.f32 %v3357, %v3358
      %v3360 = vsel %vm3194, %v3149, 0.0
      %v3361 = vadd.f32 %v3359, %v3360
      %v3362 = vsel %vm3194, %v3150, 0.0
      %v3363 = vadd.f32 %v3361, %v3362
      %v3364 = vsel %vm3194, %v3151, 0.0
      %v3365 = vadd.f32 %v3363, %v3364
      %v3366 = vsel %vm3194, %v3152, 0.0
      %v3367 = vadd.f32 %v3365, %v3366
      %v3368 = vsel %vm3194, %v3153, 0.0
      %v3369 = vadd.f32 %v3367, %v3368
      %v3370 = vsel %vm3194, %v3154, 0.0
      %v3371 = vadd.f32 %v3369, %v3370
      %v3372 = vsel %vm3194, %v3155, 0.0
      %v3373 = vadd.f32 %v3371, %v3372
      %v3374 = vsel %vm3194, %v3156, 0.0
      %v3375 = vadd.f32 %v3373, %v3374
      %v3376 = vsel %vm3194, %v3157, 0.0
      %v3377 = vadd.f32 %v3375, %v3376
      %v3378 = vsel %vm3194, %v3158, 0.0
      %v3379 = vadd.f32 %v3377, %v3378
      %v3380 = vsel %vm3194, %v3159, 0.0
      %v3381 = vadd.f32 %v3379, %v3380
      %v3382 = vsel %vm3194, %v3160, 0.0
      %v3383 = vadd.f32 %v3381, %v3382
      %v3384 = vsel %vm3194, %v3161, 0.0
      %v3385 = vadd.f32 %v3383, %v3384
      %v3386 = vsel %vm3194, %v3162, 0.0
      %v3387 = vadd.f32 %v3385, %v3386
      %v3388 = vsel %vm3194, %v3163, 0.0
      %v3389 = vadd.f32 %v3387, %v3388
      %v3390 = vsel %vm3194, %v3164, 0.0
      %v3391 = vadd.f32 %v3389, %v3390
      %v3392 = vsel %vm3194, %v3165, 0.0
      %v3393 = vadd.f32 %v3391, %v3392
      %v3394 = vsel %vm3194, %v3166, 0.0
      %v3395 = vadd.f32 %v3393, %v3394
      %v3396 = vsel %vm3194, %v3167, 0.0
      %v3397 = vadd.f32 %v3395, %v3396
      %v3398 = vsel %vm3194, %v3168, 0.0
      %v3399 = vadd.f32 %v3397, %v3398
      %v3400 = vsel %vm3194, %v3169, 0.0
      %v3401 = vadd.f32 %v3399, %v3400
      %v3402 = vsel %vm3194, %v3170, 0.0
      %v3403 = vadd.f32 %v3401, %v3402
      %v3404 = vsel %vm3194, %v3171, 0.0
      %v3405 = vadd.f32 %v3403, %v3404
      %v3406 = vsel %vm3194, %v3172, 0.0
      %v3407 = vadd.f32 %v3405, %v3406
      %v3408 = vsel %vm3194, %v3173, 0.0
      %v3409 = vadd.f32 %v3407, %v3408
      %v3410 = vsel %vm3194, %v3174, 0.0
      %v3411 = vadd.f32 %v3409, %v3410
      %v3412 = vsel %vm3194, %v3175, 0.0
      %v3413 = vadd.f32 %v3411, %v3412
      %v3414 = vsel %vm3194, %v3176, 0.0
      %v3415 = vadd.f32 %v3413, %v3414
      %v3416 = vsel %vm3194, %v3177, 0.0
      %v3417 = vadd.f32 %v3415, %v3416
      %v3418 = vsel %vm3194, %v3178, 0.0
      %v3419 = vadd.f32 %v3417, %v3418
      %v3420 = vsel %vm3194, %v3179, 0.0
      %v3421 = vadd.f32 %v3419, %v3420
      %v3422 = vsel %vm3194, %v3180, 0.0
      %v3423 = vadd.f32 %v3421, %v3422
      %v3424 = vsel %vm3194, %v3181, 0.0
      %v3425 = vadd.f32 %v3423, %v3424
      %v3426 = vsel %vm3194, %v3182, 0.0
      %v3427 = vadd.f32 %v3425, %v3426
      %v3428 = vsel %vm3194, %v3183, 0.0
      %v3429 = vadd.f32 %v3427, %v3428
      %v3430 = vsel %vm3194, %v3184, 0.0
      %v3431 = vadd.f32 %v3429, %v3430
      %v3432 = vsel %vm3194, %v3185, 0.0
      %v3433 = vadd.f32 %v3431, %v3432
      %v3434 = vsel %vm3194, %v3186, 0.0
      %v3435 = vadd.f32 %v3433, %v3434
      %v3436 = vsel %vm3194, %v3187, 0.0
      %v3437 = vadd.f32 %v3435, %v3436
      %v3438 = vsel %vm3194, %v3188, 0.0
      %v3439 = vadd.f32 %v3437, %v3438
      %v3440 = vsel %vm3194, %v3189, 0.0
      %v3441 = vadd.f32 %v3439, %v3440
      %v3442 = vsel %vm3194, %v3190, 0.0
      %v3443 = vadd.f32 %v3441, %v3442
      %v3444 = vsel %vm3194, %v3191, 0.0
      %v3445 = vadd.f32 %v3443, %v3444
      %v3446 = vsel %vm3194, %v3192, 0.0
      %v3447 = vadd.f32 %v3445, %v3446
      %v3448 = vsel %vm3194, %v3193, 0.0
      %v3449 = vadd.f32 %v3447, %v3448
      %v3450 = vrot.slane %v3449, 4
      %v3451 = vadd.f32 %v3449, %v3450
      %v3452 = vrot.slane %v3451, 2
      %v3453 = vadd.f32 %v3451, %v3452
      %v3454 = vrot.slane %v3453, 1
      %v3455 = vadd.f32 %v3453, %v3454
      %v3456 = vrcp.pop 1024.0
      %v3457 = vmul.f32 1024.0, %v3456
      %v3458 = vsub.f32 1.0, %v3457
      %v3459 = vmul.f32 %v3456, %v3458
      %v3460 = vadd.f32 %v3456, %v3459
      %vm3461 = vweird.f32 %v3456
      %v3462 = vsel %vm3461, %v3456, %v3460
      %v3463 = vmul.f32 %v3455, %v3462
      %v3464 = vsub.f32 %v3066, %v3463
      %v3465 = vsub.f32 %v3067, %v3463
      %v3466 = vsub.f32 %v3068, %v3463
      %v3467 = vsub.f32 %v3069, %v3463
      %v3468 = vsub.f32 %v3070, %v3463
      %v3469 = vsub.f32 %v3071, %v3463
      %v3470 = vsub.f32 %v3072, %v3463
      %v3471 = vsub.f32 %v3073, %v3463
      %v3472 = vsub.f32 %v3074, %v3463
      %v3473 = vsub.f32 %v3075, %v3463
      %v3474 = vsub.f32 %v3076, %v3463
      %v3475 = vsub.f32 %v3077, %v3463
      %v3476 = vsub.f32 %v3078, %v3463
      %v3477 = vsub.f32 %v3079, %v3463
      %v3478 = vsub.f32 %v3080, %v3463
      %v3479 = vsub.f32 %v3081, %v3463
      %v3480 = vsub.f32 %v3082, %v3463
      %v3481 = vsub.f32 %v3083, %v3463
      %v3482 = vsub.f32 %v3084, %v3463
      %v3483 = vsub.f32 %v3085, %v3463
      %v3484 = vsub.f32 %v3086, %v3463
      %v3485 = vsub.f32 %v3087, %v3463
      %v3486 = vsub.f32 %v3088, %v3463
      %v3487 = vsub.f32 %v3089, %v3463
      %v3488 = vsub.f32 %v3090, %v3463
      %v3489 = vsub.f32 %v3091, %v3463
      %v3490 = vsub.f32 %v3092, %v3463
      %v3491 = vsub.f32 %v3093, %v3463
      %v3492 = vsub.f32 %v3094, %v3463
      %v3493 = vsub.f32 %v3095, %v3463
      %v3494 = vsub.f32 %v3096, %v3463
      %v3495 = vsub.f32 %v3097, %v3463
      %v3496 = vsub.f32 %v3098, %v3463
      %v3497 = vsub.f32 %v3099, %v3463
      %v3498 = vsub.f32 %v3100, %v3463
      %v3499 = vsub.f32 %v3101, %v3463
      %v3500 = vsub.f32 %v3102, %v3463
      %v3501 = vsub.f32 %v3103, %v3463
      %v3502 = vsub.f32 %v3104, %v3463
      %v3503 = vsub.f32 %v3105, %v3463
      %v3504 = vsub.f32 %v3106, %v3463
      %v3505 = vsub.f32 %v3107, %v3463
      %v3506 = vsub.f32 %v3108, %v3463
      %v3507 = vsub.f32 %v3109, %v3463
      %v3508 = vsub.f32 %v3110, %v3463
      %v3509 = vsub.f32 %v3111, %v3463
      %v3510 = vsub.f32 %v3112, %v3463
      %v3511 = vsub.f32 %v3113, %v3463
      %v3512 = vsub.f32 %v3114, %v3463
      %v3513 = vsub.f32 %v3115, %v3463
      %v3514 = vsub.f32 %v3116, %v3463
      %v3515 = vsub.f32 %v3117, %v3463
      %v3516 = vsub.f32 %v3118, %v3463
      %v3517 = vsub.f32 %v3119, %v3463
      %v3518 = vsub.f32 %v3120, %v3463
      %v3519 = vsub.f32 %v3121, %v3463
      %v3520 = vsub.f32 %v3122, %v3463
      %v3521 = vsub.f32 %v3123, %v3463
      %v3522 = vsub.f32 %v3124, %v3463
      %v3523 = vsub.f32 %v3125, %v3463
      %v3524 = vsub.f32 %v3126, %v3463
      %v3525 = vsub.f32 %v3127, %v3463
      %v3526 = vsub.f32 %v3128, %v3463
      %v3527 = vsub.f32 %v3129, %v3463
      %v3528 = vsub.f32 %v3130, %v3463
      %v3529 = vsub.f32 %v3131, %v3463
      %v3530 = vsub.f32 %v3132, %v3463
      %v3531 = vsub.f32 %v3133, %v3463
      %v3532 = vsub.f32 %v3134, %v3463
      %v3533 = vsub.f32 %v3135, %v3463
      %v3534 = vsub.f32 %v3136, %v3463
      %v3535 = vsub.f32 %v3137, %v3463
      %v3536 = vsub.f32 %v3138, %v3463
      %v3537 = vsub.f32 %v3139, %v3463
      %v3538 = vsub.f32 %v3140, %v3463
      %v3539 = vsub.f32 %v3141, %v3463
      %v3540 = vsub.f32 %v3142, %v3463
      %v3541 = vsub.f32 %v3143, %v3463
      %v3542 = vsub.f32 %v3144, %v3463
      %v3543 = vsub.f32 %v3145, %v3463
      %v3544 = vsub.f32 %v3146, %v3463
      %v3545 = vsub.f32 %v3147, %v3463
      %v3546 = vsub.f32 %v3148, %v3463
      %v3547 = vsub.f32 %v3149, %v3463
      %v3548 = vsub.f32 %v3150, %v3463
      %v3549 = vsub.f32 %v3151, %v3463
      %v3550 = vsub.f32 %v3152, %v3463
      %v3551 = vsub.f32 %v3153, %v3463
      %v3552 = vsub.f32 %v3154, %v3463
      %v3553 = vsub.f32 %v3155, %v3463
      %v3554 = vsub.f32 %v3156, %v3463
      %v3555 = vsub.f32 %v3157, %v3463
      %v3556 = vsub.f32 %v3158, %v3463
      %v3557 = vsub.f32 %v3159, %v3463
      %v3558 = vsub.f32 %v3160, %v3463
      %v3559 = vsub.f32 %v3161, %v3463
      %v3560 = vsub.f32 %v3162, %v3463
      %v3561 = vsub.f32 %v3163, %v3463
      %v3562 = vsub.f32 %v3164, %v3463
      %v3563 = vsub.f32 %v3165, %v3463
      %v3564 = vsub.f32 %v3166, %v3463
      %v3565 = vsub.f32 %v3167, %v3463
      %v3566 = vsub.f32 %v3168, %v3463
      %v3567 = vsub.f32 %v3169, %v3463
      %v3568 = vsub.f32 %v3170, %v3463
      %v3569 = vsub.f32 %v3171, %v3463
      %v3570 = vsub.f32 %v3172, %v3463
      %v3571 = vsub.f32 %v3173, %v3463
      %v3572 = vsub.f32 %v3174, %v3463
      %v3573 = vsub.f32 %v3175, %v3463
      %v3574 = vsub.f32 %v3176, %v3463
      %v3575 = vsub.f32 %v3177, %v3463
      %v3576 = vsub.f32 %v3178, %v3463
      %v3577 = vsub.f32 %v3179, %v3463
      %v3578 = vsub.f32 %v3180, %v3463
      %v3579 = vsub.f32 %v3181, %v3463
      %v3580 = vsub.f32 %v3182, %v3463
      %v3581 = vsub.f32 %v3183, %v3463
      %v3582 = vsub.f32 %v3184, %v3463
      %v3583 = vsub.f32 %v3185, %v3463
      %v3584 = vsub.f32 %v3186, %v3463
      %v3585 = vsub.f32 %v3187, %v3463
      %v3586 = vsub.f32 %v3188, %v3463
      %v3587 = vsub.f32 %v3189, %v3463
      %v3588 = vsub.f32 %v3190, %v3463
      %v3589 = vsub.f32 %v3191, %v3463
      %v3590 = vsub.f32 %v3192, %v3463
      %v3591 = vsub.f32 %v3193, %v3463
      %v3592 = vmul.f32 %v3464, %v3464
      %v3593 = vmul.f32 %v3465, %v3465
      %v3594 = vmul.f32 %v3466, %v3466
      %v3595 = vmul.f32 %v3467, %v3467
      %v3596 = vmul.f32 %v3468, %v3468
      %v3597 = vmul.f32 %v3469, %v3469
      %v3598 = vmul.f32 %v3470, %v3470
      %v3599 = vmul.f32 %v3471, %v3471
      %v3600 = vmul.f32 %v3472, %v3472
      %v3601 = vmul.f32 %v3473, %v3473
      %v3602 = vmul.f32 %v3474, %v3474
      %v3603 = vmul.f32 %v3475, %v3475
      %v3604 = vmul.f32 %v3476, %v3476
      %v3605 = vmul.f32 %v3477, %v3477
      %v3606 = vmul.f32 %v3478, %v3478
      %v3607 = vmul.f32 %v3479, %v3479
      %v3608 = vmul.f32 %v3480, %v3480
      %v3609 = vmul.f32 %v3481, %v3481
      %v3610 = vmul.f32 %v3482, %v3482
      %v3611 = vmul.f32 %v3483, %v3483
      %v3612 = vmul.f32 %v3484, %v3484
      %v3613 = vmul.f32 %v3485, %v3485
      %v3614 = vmul.f32 %v3486, %v3486
      %v3615 = vmul.f32 %v3487, %v3487
      %v3616 = vmul.f32 %v3488, %v3488
      %v3617 = vmul.f32 %v3489, %v3489
      %v3618 = vmul.f32 %v3490, %v3490
      %v3619 = vmul.f32 %v3491, %v3491
      %v3620 = vmul.f32 %v3492, %v3492
      %v3621 = vmul.f32 %v3493, %v3493
      %v3622 = vmul.f32 %v3494, %v3494
      %v3623 = vmul.f32 %v3495, %v3495
      %v3624 = vmul.f32 %v3496, %v3496
      %v3625 = vmul.f32 %v3497, %v3497
      %v3626 = vmul.f32 %v3498, %v3498
      %v3627 = vmul.f32 %v3499, %v3499
      %v3628 = vmul.f32 %v3500, %v3500
      %v3629 = vmul.f32 %v3501, %v3501
      %v3630 = vmul.f32 %v3502, %v3502
      %v3631 = vmul.f32 %v3503, %v3503
      %v3632 = vmul.f32 %v3504, %v3504
      %v3633 = vmul.f32 %v3505, %v3505
      %v3634 = vmul.f32 %v3506, %v3506
      %v3635 = vmul.f32 %v3507, %v3507
      %v3636 = vmul.f32 %v3508, %v3508
      %v3637 = vmul.f32 %v3509, %v3509
      %v3638 = vmul.f32 %v3510, %v3510
      %v3639 = vmul.f32 %v3511, %v3511
      %v3640 = vmul.f32 %v3512, %v3512
      %v3641 = vmul.f32 %v3513, %v3513
      %v3642 = vmul.f32 %v3514, %v3514
      %v3643 = vmul.f32 %v3515, %v3515
      %v3644 = vmul.f32 %v3516, %v3516
      %v3645 = vmul.f32 %v3517, %v3517
      %v3646 = vmul.f32 %v3518, %v3518
      %v3647 = vmul.f32 %v3519, %v3519
      %v3648 = vmul.f32 %v3520, %v3520
      %v3649 = vmul.f32 %v3521, %v3521
      %v3650 = vmul.f32 %v3522, %v3522
      %v3651 = vmul.f32 %v3523, %v3523
      %v3652 = vmul.f32 %v3524, %v3524
      %v3653 = vmul.f32 %v3525, %v3525
      %v3654 = vmul.f32 %v3526, %v3526
      %v3655 = vmul.f32 %v3527, %v3527
      %v3656 = vmul.f32 %v3528, %v3528
      %v3657 = vmul.f32 %v3529, %v3529
      %v3658 = vmul.f32 %v3530, %v3530
      %v3659 = vmul.f32 %v3531, %v3531
      %v3660 = vmul.f32 %v3532, %v3532
      %v3661 = vmul.f32 %v3533, %v3533
      %v3662 = vmul.f32 %v3534, %v3534
      %v3663 = vmul.f32 %v3535, %v3535
      %v3664 = vmul.f32 %v3536, %v3536
      %v3665 = vmul.f32 %v3537, %v3537
      %v3666 = vmul.f32 %v3538, %v3538
      %v3667 = vmul.f32 %v3539, %v3539
      %v3668 = vmul.f32 %v3540, %v3540
      %v3669 = vmul.f32 %v3541, %v3541
      %v3670 = vmul.f32 %v3542, %v3542
      %v3671 = vmul.f32 %v3543, %v3543
      %v3672 = vmul.f32 %v3544, %v3544
      %v3673 = vmul.f32 %v3545, %v3545
      %v3674 = vmul.f32 %v3546, %v3546
      %v3675 = vmul.f32 %v3547, %v3547
      %v3676 = vmul.f32 %v3548, %v3548
      %v3677 = vmul.f32 %v3549, %v3549
      %v3678 = vmul.f32 %v3550, %v3550
      %v3679 = vmul.f32 %v3551, %v3551
      %v3680 = vmul.f32 %v3552, %v3552
      %v3681 = vmul.f32 %v3553, %v3553
      %v3682 = vmul.f32 %v3554, %v3554
      %v3683 = vmul.f32 %v3555, %v3555
      %v3684 = vmul.f32 %v3556, %v3556
      %v3685 = vmul.f32 %v3557, %v3557
      %v3686 = vmul.f32 %v3558, %v3558
      %v3687 = vmul.f32 %v3559, %v3559
      %v3688 = vmul.f32 %v3560, %v3560
      %v3689 = vmul.f32 %v3561, %v3561
      %v3690 = vmul.f32 %v3562, %v3562
      %v3691 = vmul.f32 %v3563, %v3563
      %v3692 = vmul.f32 %v3564, %v3564
      %v3693 = vmul.f32 %v3565, %v3565
      %v3694 = vmul.f32 %v3566, %v3566
      %v3695 = vmul.f32 %v3567, %v3567
      %v3696 = vmul.f32 %v3568, %v3568
      %v3697 = vmul.f32 %v3569, %v3569
      %v3698 = vmul.f32 %v3570, %v3570
      %v3699 = vmul.f32 %v3571, %v3571
      %v3700 = vmul.f32 %v3572, %v3572
      %v3701 = vmul.f32 %v3573, %v3573
      %v3702 = vmul.f32 %v3574, %v3574
      %v3703 = vmul.f32 %v3575, %v3575
      %v3704 = vmul.f32 %v3576, %v3576
      %v3705 = vmul.f32 %v3577, %v3577
      %v3706 = vmul.f32 %v3578, %v3578
      %v3707 = vmul.f32 %v3579, %v3579
      %v3708 = vmul.f32 %v3580, %v3580
      %v3709 = vmul.f32 %v3581, %v3581
      %v3710 = vmul.f32 %v3582, %v3582
      %v3711 = vmul.f32 %v3583, %v3583
      %v3712 = vmul.f32 %v3584, %v3584
      %v3713 = vmul.f32 %v3585, %v3585
      %v3714 = vmul.f32 %v3586, %v3586
      %v3715 = vmul.f32 %v3587, %v3587
      %v3716 = vmul.f32 %v3588, %v3588
      %v3717 = vmul.f32 %v3589, %v3589
      %v3718 = vmul.f32 %v3590, %v3590
      %v3719 = vmul.f32 %v3591, %v3591
      %v3720 = vsel %vm3194, %v3592, 0.0
      %v3721 = vsel %vm3194, %v3593, 0.0
      %v3722 = vadd.f32 %v3720, %v3721
      %v3723 = vsel %vm3194, %v3594, 0.0
      %v3724 = vadd.f32 %v3722, %v3723
      %v3725 = vsel %vm3194, %v3595, 0.0
      %v3726 = vadd.f32 %v3724, %v3725
      %v3727 = vsel %vm3194, %v3596, 0.0
      %v3728 = vadd.f32 %v3726, %v3727
      %v3729 = vsel %vm3194, %v3597, 0.0
      %v3730 = vadd.f32 %v3728, %v3729
      %v3731 = vsel %vm3194, %v3598, 0.0
      %v3732 = vadd.f32 %v3730, %v3731
      %v3733 = vsel %vm3194, %v3599, 0.0
      %v3734 = vadd.f32 %v3732, %v3733
      %v3735 = vsel %vm3194, %v3600, 0.0
      %v3736 = vadd.f32 %v3734, %v3735
      %v3737 = vsel %vm3194, %v3601, 0.0
      %v3738 = vadd.f32 %v3736, %v3737
      %v3739 = vsel %vm3194, %v3602, 0.0
      %v3740 = vadd.f32 %v3738, %v3739
      %v3741 = vsel %vm3194, %v3603, 0.0
      %v3742 = vadd.f32 %v3740, %v3741
      %v3743 = vsel %vm3194, %v3604, 0.0
      %v3744 = vadd.f32 %v3742, %v3743
      %v3745 = vsel %vm3194, %v3605, 0.0
      %v3746 = vadd.f32 %v3744, %v3745
      %v3747 = vsel %vm3194, %v3606, 0.0
      %v3748 = vadd.f32 %v3746, %v3747
      %v3749 = vsel %vm3194, %v3607, 0.0
      %v3750 = vadd.f32 %v3748, %v3749
      %v3751 = vsel %vm3194, %v3608, 0.0
      %v3752 = vadd.f32 %v3750, %v3751
      %v3753 = vsel %vm3194, %v3609, 0.0
      %v3754 = vadd.f32 %v3752, %v3753
      %v3755 = vsel %vm3194, %v3610, 0.0
      %v3756 = vadd.f32 %v3754, %v3755
      %v3757 = vsel %vm3194, %v3611, 0.0
      %v3758 = vadd.f32 %v3756, %v3757
      %v3759 = vsel %vm3194, %v3612, 0.0
      %v3760 = vadd.f32 %v3758, %v3759
      %v3761 = vsel %vm3194, %v3613, 0.0
      %v3762 = vadd.f32 %v3760, %v3761
      %v3763 = vsel %vm3194, %v3614, 0.0
      %v3764 = vadd.f32 %v3762, %v3763
      %v3765 = vsel %vm3194, %v3615, 0.0
      %v3766 = vadd.f32 %v3764, %v3765
      %v3767 = vsel %vm3194, %v3616, 0.0
      %v3768 = vadd.f32 %v3766, %v3767
      %v3769 = vsel %vm3194, %v3617, 0.0
      %v3770 = vadd.f32 %v3768, %v3769
      %v3771 = vsel %vm3194, %v3618, 0.0
      %v3772 = vadd.f32 %v3770, %v3771
      %v3773 = vsel %vm3194, %v3619, 0.0
      %v3774 = vadd.f32 %v3772, %v3773
      %v3775 = vsel %vm3194, %v3620, 0.0
      %v3776 = vadd.f32 %v3774, %v3775
      %v3777 = vsel %vm3194, %v3621, 0.0
      %v3778 = vadd.f32 %v3776, %v3777
      %v3779 = vsel %vm3194, %v3622, 0.0
      %v3780 = vadd.f32 %v3778, %v3779
      %v3781 = vsel %vm3194, %v3623, 0.0
      %v3782 = vadd.f32 %v3780, %v3781
      %v3783 = vsel %vm3194, %v3624, 0.0
      %v3784 = vadd.f32 %v3782, %v3783
      %v3785 = vsel %vm3194, %v3625, 0.0
      %v3786 = vadd.f32 %v3784, %v3785
      %v3787 = vsel %vm3194, %v3626, 0.0
      %v3788 = vadd.f32 %v3786, %v3787
      %v3789 = vsel %vm3194, %v3627, 0.0
      %v3790 = vadd.f32 %v3788, %v3789
      %v3791 = vsel %vm3194, %v3628, 0.0
      %v3792 = vadd.f32 %v3790, %v3791
      %v3793 = vsel %vm3194, %v3629, 0.0
      %v3794 = vadd.f32 %v3792, %v3793
      %v3795 = vsel %vm3194, %v3630, 0.0
      %v3796 = vadd.f32 %v3794, %v3795
      %v3797 = vsel %vm3194, %v3631, 0.0
      %v3798 = vadd.f32 %v3796, %v3797
      %v3799 = vsel %vm3194, %v3632, 0.0
      %v3800 = vadd.f32 %v3798, %v3799
      %v3801 = vsel %vm3194, %v3633, 0.0
      %v3802 = vadd.f32 %v3800, %v3801
      %v3803 = vsel %vm3194, %v3634, 0.0
      %v3804 = vadd.f32 %v3802, %v3803
      %v3805 = vsel %vm3194, %v3635, 0.0
      %v3806 = vadd.f32 %v3804, %v3805
      %v3807 = vsel %vm3194, %v3636, 0.0
      %v3808 = vadd.f32 %v3806, %v3807
      %v3809 = vsel %vm3194, %v3637, 0.0
      %v3810 = vadd.f32 %v3808, %v3809
      %v3811 = vsel %vm3194, %v3638, 0.0
      %v3812 = vadd.f32 %v3810, %v3811
      %v3813 = vsel %vm3194, %v3639, 0.0
      %v3814 = vadd.f32 %v3812, %v3813
      %v3815 = vsel %vm3194, %v3640, 0.0
      %v3816 = vadd.f32 %v3814, %v3815
      %v3817 = vsel %vm3194, %v3641, 0.0
      %v3818 = vadd.f32 %v3816, %v3817
      %v3819 = vsel %vm3194, %v3642, 0.0
      %v3820 = vadd.f32 %v3818, %v3819
      %v3821 = vsel %vm3194, %v3643, 0.0
      %v3822 = vadd.f32 %v3820, %v3821
      %v3823 = vsel %vm3194, %v3644, 0.0
      %v3824 = vadd.f32 %v3822, %v3823
      %v3825 = vsel %vm3194, %v3645, 0.0
      %v3826 = vadd.f32 %v3824, %v3825
      %v3827 = vsel %vm3194, %v3646, 0.0
      %v3828 = vadd.f32 %v3826, %v3827
      %v3829 = vsel %vm3194, %v3647, 0.0
      %v3830 = vadd.f32 %v3828, %v3829
      %v3831 = vsel %vm3194, %v3648, 0.0
      %v3832 = vadd.f32 %v3830, %v3831
      %v3833 = vsel %vm3194, %v3649, 0.0
      %v3834 = vadd.f32 %v3832, %v3833
      %v3835 = vsel %vm3194, %v3650, 0.0
      %v3836 = vadd.f32 %v3834, %v3835
      %v3837 = vsel %vm3194, %v3651, 0.0
      %v3838 = vadd.f32 %v3836, %v3837
      %v3839 = vsel %vm3194, %v3652, 0.0
      %v3840 = vadd.f32 %v3838, %v3839
      %v3841 = vsel %vm3194, %v3653, 0.0
      %v3842 = vadd.f32 %v3840, %v3841
      %v3843 = vsel %vm3194, %v3654, 0.0
      %v3844 = vadd.f32 %v3842, %v3843
      %v3845 = vsel %vm3194, %v3655, 0.0
      %v3846 = vadd.f32 %v3844, %v3845
      %v3847 = vsel %vm3194, %v3656, 0.0
      %v3848 = vadd.f32 %v3846, %v3847
      %v3849 = vsel %vm3194, %v3657, 0.0
      %v3850 = vadd.f32 %v3848, %v3849
      %v3851 = vsel %vm3194, %v3658, 0.0
      %v3852 = vadd.f32 %v3850, %v3851
      %v3853 = vsel %vm3194, %v3659, 0.0
      %v3854 = vadd.f32 %v3852, %v3853
      %v3855 = vsel %vm3194, %v3660, 0.0
      %v3856 = vadd.f32 %v3854, %v3855
      %v3857 = vsel %vm3194, %v3661, 0.0
      %v3858 = vadd.f32 %v3856, %v3857
      %v3859 = vsel %vm3194, %v3662, 0.0
      %v3860 = vadd.f32 %v3858, %v3859
      %v3861 = vsel %vm3194, %v3663, 0.0
      %v3862 = vadd.f32 %v3860, %v3861
      %v3863 = vsel %vm3194, %v3664, 0.0
      %v3864 = vadd.f32 %v3862, %v3863
      %v3865 = vsel %vm3194, %v3665, 0.0
      %v3866 = vadd.f32 %v3864, %v3865
      %v3867 = vsel %vm3194, %v3666, 0.0
      %v3868 = vadd.f32 %v3866, %v3867
      %v3869 = vsel %vm3194, %v3667, 0.0
      %v3870 = vadd.f32 %v3868, %v3869
      %v3871 = vsel %vm3194, %v3668, 0.0
      %v3872 = vadd.f32 %v3870, %v3871
      %v3873 = vsel %vm3194, %v3669, 0.0
      %v3874 = vadd.f32 %v3872, %v3873
      %v3875 = vsel %vm3194, %v3670, 0.0
      %v3876 = vadd.f32 %v3874, %v3875
      %v3877 = vsel %vm3194, %v3671, 0.0
      %v3878 = vadd.f32 %v3876, %v3877
      %v3879 = vsel %vm3194, %v3672, 0.0
      %v3880 = vadd.f32 %v3878, %v3879
      %v3881 = vsel %vm3194, %v3673, 0.0
      %v3882 = vadd.f32 %v3880, %v3881
      %v3883 = vsel %vm3194, %v3674, 0.0
      %v3884 = vadd.f32 %v3882, %v3883
      %v3885 = vsel %vm3194, %v3675, 0.0
      %v3886 = vadd.f32 %v3884, %v3885
      %v3887 = vsel %vm3194, %v3676, 0.0
      %v3888 = vadd.f32 %v3886, %v3887
      %v3889 = vsel %vm3194, %v3677, 0.0
      %v3890 = vadd.f32 %v3888, %v3889
      %v3891 = vsel %vm3194, %v3678, 0.0
      %v3892 = vadd.f32 %v3890, %v3891
      %v3893 = vsel %vm3194, %v3679, 0.0
      %v3894 = vadd.f32 %v3892, %v3893
      %v3895 = vsel %vm3194, %v3680, 0.0
      %v3896 = vadd.f32 %v3894, %v3895
      %v3897 = vsel %vm3194, %v3681, 0.0
      %v3898 = vadd.f32 %v3896, %v3897
      %v3899 = vsel %vm3194, %v3682, 0.0
      %v3900 = vadd.f32 %v3898, %v3899
      %v3901 = vsel %vm3194, %v3683, 0.0
      %v3902 = vadd.f32 %v3900, %v3901
      %v3903 = vsel %vm3194, %v3684, 0.0
      %v3904 = vadd.f32 %v3902, %v3903
      %v3905 = vsel %vm3194, %v3685, 0.0
      %v3906 = vadd.f32 %v3904, %v3905
      %v3907 = vsel %vm3194, %v3686, 0.0
      %v3908 = vadd.f32 %v3906, %v3907
      %v3909 = vsel %vm3194, %v3687, 0.0
      %v3910 = vadd.f32 %v3908, %v3909
      %v3911 = vsel %vm3194, %v3688, 0.0
      %v3912 = vadd.f32 %v3910, %v3911
      %v3913 = vsel %vm3194, %v3689, 0.0
      %v3914 = vadd.f32 %v3912, %v3913
      %v3915 = vsel %vm3194, %v3690, 0.0
      %v3916 = vadd.f32 %v3914, %v3915
      %v3917 = vsel %vm3194, %v3691, 0.0
      %v3918 = vadd.f32 %v3916, %v3917
      %v3919 = vsel %vm3194, %v3692, 0.0
      %v3920 = vadd.f32 %v3918, %v3919
      %v3921 = vsel %vm3194, %v3693, 0.0
      %v3922 = vadd.f32 %v3920, %v3921
      %v3923 = vsel %vm3194, %v3694, 0.0
      %v3924 = vadd.f32 %v3922, %v3923
      %v3925 = vsel %vm3194, %v3695, 0.0
      %v3926 = vadd.f32 %v3924, %v3925
      %v3927 = vsel %vm3194, %v3696, 0.0
      %v3928 = vadd.f32 %v3926, %v3927
      %v3929 = vsel %vm3194, %v3697, 0.0
      %v3930 = vadd.f32 %v3928, %v3929
      %v3931 = vsel %vm3194, %v3698, 0.0
      %v3932 = vadd.f32 %v3930, %v3931
      %v3933 = vsel %vm3194, %v3699, 0.0
      %v3934 = vadd.f32 %v3932, %v3933
      %v3935 = vsel %vm3194, %v3700, 0.0
      %v3936 = vadd.f32 %v3934, %v3935
      %v3937 = vsel %vm3194, %v3701, 0.0
      %v3938 = vadd.f32 %v3936, %v3937
      %v3939 = vsel %vm3194, %v3702, 0.0
      %v3940 = vadd.f32 %v3938, %v3939
      %v3941 = vsel %vm3194, %v3703, 0.0
      %v3942 = vadd.f32 %v3940, %v3941
      %v3943 = vsel %vm3194, %v3704, 0.0
      %v3944 = vadd.f32 %v3942, %v3943
      %v3945 = vsel %vm3194, %v3705, 0.0
      %v3946 = vadd.f32 %v3944, %v3945
      %v3947 = vsel %vm3194, %v3706, 0.0
      %v3948 = vadd.f32 %v3946, %v3947
      %v3949 = vsel %vm3194, %v3707, 0.0
      %v3950 = vadd.f32 %v3948, %v3949
      %v3951 = vsel %vm3194, %v3708, 0.0
      %v3952 = vadd.f32 %v3950, %v3951
      %v3953 = vsel %vm3194, %v3709, 0.0
      %v3954 = vadd.f32 %v3952, %v3953
      %v3955 = vsel %vm3194, %v3710, 0.0
      %v3956 = vadd.f32 %v3954, %v3955
      %v3957 = vsel %vm3194, %v3711, 0.0
      %v3958 = vadd.f32 %v3956, %v3957
      %v3959 = vsel %vm3194, %v3712, 0.0
      %v3960 = vadd.f32 %v3958, %v3959
      %v3961 = vsel %vm3194, %v3713, 0.0
      %v3962 = vadd.f32 %v3960, %v3961
      %v3963 = vsel %vm3194, %v3714, 0.0
      %v3964 = vadd.f32 %v3962, %v3963
      %v3965 = vsel %vm3194, %v3715, 0.0
      %v3966 = vadd.f32 %v3964, %v3965
      %v3967 = vsel %vm3194, %v3716, 0.0
      %v3968 = vadd.f32 %v3966, %v3967
      %v3969 = vsel %vm3194, %v3717, 0.0
      %v3970 = vadd.f32 %v3968, %v3969
      %v3971 = vsel %vm3194, %v3718, 0.0
      %v3972 = vadd.f32 %v3970, %v3971
      %v3973 = vsel %vm3194, %v3719, 0.0
      %v3974 = vadd.f32 %v3972, %v3973
      %v3975 = vrot.slane %v3974, 4
      %v3976 = vadd.f32 %v3974, %v3975
      %v3977 = vrot.slane %v3976, 2
      %v3978 = vadd.f32 %v3976, %v3977
      %v3979 = vrot.slane %v3978, 1
      %v3980 = vadd.f32 %v3978, %v3979
      %vm3981 = vcmask 122880
      %3982 = vst.msk [vmem:[%s269] sm:$0x1] %vm3981, %v3463
      %3983 = vst.msk [vmem:[%s269 + $0x1] sm:$0x1] %vm3981, %v3980
      %p3984 = scmp.lt.s32.totalorder %s18, 1
      %s3985 = scalar_select %p3984, %s18, 1
      %p3986 = scmp.lt.s32.totalorder %s19, 0
      %s3987 = scalar_select %p3986, %s19, 0
      %s3988 = sadd.s32 %s3987, %s3985
      %s3989 = smul.addr %s3988, 2
      %s3990 = scalar_lea.vmem %s3, %s3989
      // Predicated region
      $region33: #{unet_decoder_forward.6} parent=31 // pred_check
        %p3991 = pneg %p131
      $region34: #{unet_decoder_forward.6} parent=31 // pred_check_branch
        %3993 = sbr.rel (%p3991) target = $region36
      $region35: #{unet_decoder_forward.6} parent=31 // pred_region
        _
      $region36: #{unet_decoder_forward.6} parent=31 // pred_fallthru
        _
    $region32: #{unet_decoder_forward.6} parent=5 // pred_fallthru
      _
    %p3994 = scmp.le.s32.totalorder 2, %s9
    // Predicated region
    $region37: #{unet_decoder_forward.6} parent=5 // pred_check
      %p3995 = pneg %p3994
    $region38: #{unet_decoder_forward.6} parent=5 // pred_check_branch
      %3997 = sbr.rel (%p3995) target = $region40
    $region39: #{unet_decoder_forward.6} parent=5 // pred_region
      %s3998 = ssub.s32 %s9, 2
      // Predicated region
      $region41: #{unet_decoder_forward.6} parent=39 // pred_check
        %p3999 = pneg %p137
      $region42: #{unet_decoder_forward.6} parent=39 // pred_check_branch
        %4001 = sbr.rel (%p3999) target = $region44
      $region43: #{unet_decoder_forward.6} parent=39 // pred_region
        %p4002 = scmp.lt.s32.totalorder %s20, 1
        %s4003 = scalar_select %p4002, %s20, 1
        %p4004 = scmp.lt.s32.totalorder %s21, 0
        %s4005 = scalar_select %p4004, %s21, 0
        %s4006 = sadd.s32 %s4005, %s4003
        %s4007 = smul.addr %s4006, 2
        %s4008 = scalar_lea.vmem %s3, %s4007
      $region44: #{unet_decoder_forward.6} parent=39 // pred_fallthru
        _
    $region40: #{unet_decoder_forward.6} parent=5 // pred_fallthru
      _
  $region6: #{unet_decoder_forward.6} parent=0 // loop_footer
    %s13 = sadd.s32 1, %s9
  $region7: #{unet_decoder_forward.6} parent=0 // loop_footer_branch
    %8 = sbr.rel target = $region3
  $region8: #{unet_decoder_forward.6} parent=0 // loop_exit
    _

// kernel: unet_decoder_forward.7
$region0: #{unet_decoder_forward.7}
  #allocation0 [shape = 'u32[]', space=smem, size = 0x4, offset = 0x4, fixed_abs, tag = 'smem constant byte address 0x4 - core index']
  #allocation1 [shape = 'u32[72,128]{1,0:T(1,128)}', space=vmem, size = 0x9000, scoped, tag = 'internal scratch']
  %s0 = inlined_call_operand.vmem [shape: bf16[2,32,32,8], index: 0, kind: input, shape index: {}, may-alias: {0,1}]
  %s1 = inlined_call_operand.vmem [shape: bf16[2,32,32,8], index: 1, kind: input, shape index: {}, may-alias: {0,1}]
  %s2 = inlined_call_operand.vmem [shape: bf16[32,16], index: 2, kind: input, shape index: {}]
  %s3 = inlined_call_operand.vmem [shape: f32[1,16], index: 3, kind: input, shape index: {}]
  %s4 = inlined_call_operand.vmem [shape: f32[1,16], index: 4, kind: input, shape index: {}]
  %s5 = inlined_call_operand.vmem [shape: bf16[16,12], index: 5, kind: input, shape index: {}]
  %s6 = inlined_call_operand.vmem [shape: f32[1,12], index: 6, kind: input, shape index: {}]
  %s7 = inlined_call_operand.vmem [shape: f32[2,32,2,32,6], index: 7, kind: output, shape index: {}]
  %s8 = sld [smem:[#allocation0]]
  $region61: #{unet_decoder_forward.7} parent=0
    _
  %s10 = ssub.s32 1, %s8
  %s11 = scalar_select 0, %s10, %s8
  loop: start=0, step=1, limit=4
  $region2: #{unet_decoder_forward.7} parent=0 // loop_pre_header
    _
  $region3: #{unet_decoder_forward.7} parent=0 // loop_header
    %s13 = sphi 0, %s17
    %p14 = scmp.ge.s32.totalorder %s13, 4
    %s20 = sphi 0, %s32
    %s21 = sphi 0, %s28
    %s22 = sphi 0, %s20
    %s23 = sphi 0, %s21
    %s24 = sphi 0, %s22
    %s25 = sphi 0, %s23
    %s37 = sphi 0, %s39
    %s40 = sphi 0, %s37
    %s41 = sphi 0, %s40
    %s57 = sphi 0, %s41
    %s73 = sphi 0, %s75
    %s76 = sphi 0, %s73
    %s77 = sphi 0, %s76
    %s93 = sphi 0, %s77
    %s97 = sphi 0, %s97
    %s99 = sphi 0, %s97
    %s100 = sphi 0, %s99
    %s114 = sphi 0, %s100
    %s118 = sphi 0, %s118
    %s120 = sphi 0, %s118
    %s121 = sphi 0, %s120
    %s135 = sphi 0, %s121
    %s139 = sphi 0, %s139
    %s141 = sphi 0, %s139
    %s142 = sphi 0, %s141
    %s156 = sphi 0, %s142
    %s160 = sphi 0, %s160
    %s162 = sphi 0, %s160
    %s163 = sphi 0, %s162
    %s177 = sphi 0, %s163
    %s181 = sphi 0, %s181
    %s183 = sphi 0, %s181
    %s184 = sphi 0, %s183
    %s198 = sphi 0, %s184
    %s206 = sphi 0, %s208
    %s209 = sphi 0, %s206
    %s210 = sphi 0, %s209
    %s226 = sphi 0, %s210
  $region4: #{unet_decoder_forward.7} parent=0 // loop_header_branch
    %16 = sbr.rel (%p14) target = $region8
  $region5: #{unet_decoder_forward.7} parent=0 // loop_body
    %s18 = ssub.s32 %s13, 1
    %s19 = ssub.s32 %s13, 2
    %s26 = sadd.s32 1, %s21
    %p27 = scmp.ge.s32.totalorder %s26, 1
    %s28 = scalar_select %p27, 0, %s26
    %s29 = sadd.s32 1, %s20
    %s30 = scalar_select %p27, %s29, %s20
    %p31 = scmp.ge.s32.totalorder %s30, 2
    %s32 = scalar_select %p31, 0, %s30
    %s33 = ssub.s32 %s20, %s32
    %s34 = ssub.s32 %s21, %s28
    %s35 = sor.u32 %s33, %s34
    %p36 = scmp.eq.s32.totalorder %s35, 0
    %s38 = sadd.s32 %s37, 1
    %s39 = scalar_select %p36, %s37, %s38
    %p42 = pneg %p36
    %p43 = scmp.eq.s32.totalorder %s13, 1
    %p44 = por %p42, %p43
    %p45 = scmp.ne.s32.totalorder %s37, %s40
    %p46 = scmp.eq.s32.totalorder %s13, 0
    %p47 = por %p45, %p46
    %p48 = scmp.ne.s32.totalorder %s37, %s40
    %p49 = scmp.eq.s32.totalorder %s18, 1
    %p50 = por %p48, %p49
    %p51 = scmp.ne.s32.totalorder %s40, %s41
    %p52 = scmp.eq.s32.totalorder %s18, 0
    %p53 = por %p51, %p52
    %p54 = scmp.ne.s32.totalorder %s40, %s41
    %p55 = scmp.eq.s32.totalorder %s19, 1
    %p56 = por %p54, %p55
    %p58 = scmp.ne.s32.totalorder %s41, %s57
    %p59 = scmp.eq.s32.totalorder %s19, 0
    %p60 = por %p58, %p59
    %s61 = sadd.s32 %s21, 1
    %s62 = smul.u32 %s61, 32
    %p63 = scmp.lt.s32.totalorder %s62, 31
    %s64 = scalar_select %p63, %s62, 31
    %s65 = sadd.s32 %s28, 1
    %s66 = smul.u32 %s65, 32
    %p67 = scmp.lt.s32.totalorder %s66, 31
    %s68 = scalar_select %p67, %s66, 31
    %s69 = ssub.s32 %s20, %s32
    %s70 = ssub.s32 %s64, %s68
    %s71 = sor.u32 %s69, %s70
    %p72 = scmp.eq.s32.totalorder %s71, 0
    %s74 = sadd.s32 %s73, 1
    %s75 = scalar_select %p72, %s73, %s74
    %p78 = pneg %p72
    %p79 = scmp.eq.s32.totalorder %s13, 1
    %p80 = por %p78, %p79
    %p81 = scmp.ne.s32.totalorder %s73, %s76
    %p82 = scmp.eq.s32.totalorder %s13, 0
    %p83 = por %p81, %p82
    %p84 = scmp.ne.s32.totalorder %s73, %s76
    %p85 = scmp.eq.s32.totalorder %s18, 1
    %p86 = por %p84, %p85
    %p87 = scmp.ne.s32.totalorder %s76, %s77
    %p88 = scmp.eq.s32.totalorder %s18, 0
    %p89 = por %p87, %p88
    %p90 = scmp.ne.s32.totalorder %s76, %s77
    %p91 = scmp.eq.s32.totalorder %s19, 1
    %p92 = por %p90, %p91
    %p94 = scmp.ne.s32.totalorder %s77, %s93
    %p95 = scmp.eq.s32.totalorder %s19, 0
    %p96 = por %p94, %p95
    %s98 = sadd.s32 %s97, 1
    %p101 = scmp.eq.s32.totalorder %s13, 1
    %p102 = scmp.ne.s32.totalorder %s97, %s99
    %p103 = scmp.eq.s32.totalorder %s13, 0
    %p104 = por %p102, %p103
    %p105 = scmp.ne.s32.totalorder %s97, %s99
    %p106 = scmp.eq.s32.totalorder %s18, 1
    %p107 = por %p105, %p106
    %p108 = scmp.ne.s32.totalorder %s99, %s100
    %p109 = scmp.eq.s32.totalorder %s18, 0
    %p110 = por %p108, %p109
    %p111 = scmp.ne.s32.totalorder %s99, %s100
    %p112 = scmp.eq.s32.totalorder %s19, 1
    %p113 = por %p111, %p112
    %p115 = scmp.ne.s32.totalorder %s100, %s114
    %p116 = scmp.eq.s32.totalorder %s19, 0
    %p117 = por %p115, %p116
    %s119 = sadd.s32 %s118, 1
    %p122 = scmp.eq.s32.totalorder %s13, 1
    %p123 = scmp.ne.s32.totalorder %s118, %s120
    %p124 = scmp.eq.s32.totalorder %s13, 0
    %p125 = por %p123, %p124
    %p126 = scmp.ne.s32.totalorder %s118, %s120
    %p127 = scmp.eq.s32.totalorder %s18, 1
    %p128 = por %p126, %p127
    %p129 = scmp.ne.s32.totalorder %s120, %s121
    %p130 = scmp.eq.s32.totalorder %s18, 0
    %p131 = por %p129, %p130
    %p132 = scmp.ne.s32.totalorder %s120, %s121
    %p133 = scmp.eq.s32.totalorder %s19, 1
    %p134 = por %p132, %p133
    %p136 = scmp.ne.s32.totalorder %s121, %s135
    %p137 = scmp.eq.s32.totalorder %s19, 0
    %p138 = por %p136, %p137
    %s140 = sadd.s32 %s139, 1
    %p143 = scmp.eq.s32.totalorder %s13, 1
    %p144 = scmp.ne.s32.totalorder %s139, %s141
    %p145 = scmp.eq.s32.totalorder %s13, 0
    %p146 = por %p144, %p145
    %p147 = scmp.ne.s32.totalorder %s139, %s141
    %p148 = scmp.eq.s32.totalorder %s18, 1
    %p149 = por %p147, %p148
    %p150 = scmp.ne.s32.totalorder %s141, %s142
    %p151 = scmp.eq.s32.totalorder %s18, 0
    %p152 = por %p150, %p151
    %p153 = scmp.ne.s32.totalorder %s141, %s142
    %p154 = scmp.eq.s32.totalorder %s19, 1
    %p155 = por %p153, %p154
    %p157 = scmp.ne.s32.totalorder %s142, %s156
    %p158 = scmp.eq.s32.totalorder %s19, 0
    %p159 = por %p157, %p158
    %s161 = sadd.s32 %s160, 1
    %p164 = scmp.eq.s32.totalorder %s13, 1
    %p165 = scmp.ne.s32.totalorder %s160, %s162
    %p166 = scmp.eq.s32.totalorder %s13, 0
    %p167 = por %p165, %p166
    %p168 = scmp.ne.s32.totalorder %s160, %s162
    %p169 = scmp.eq.s32.totalorder %s18, 1
    %p170 = por %p168, %p169
    %p171 = scmp.ne.s32.totalorder %s162, %s163
    %p172 = scmp.eq.s32.totalorder %s18, 0
    %p173 = por %p171, %p172
    %p174 = scmp.ne.s32.totalorder %s162, %s163
    %p175 = scmp.eq.s32.totalorder %s19, 1
    %p176 = por %p174, %p175
    %p178 = scmp.ne.s32.totalorder %s163, %s177
    %p179 = scmp.eq.s32.totalorder %s19, 0
    %p180 = por %p178, %p179
    %s182 = sadd.s32 %s181, 1
    %p185 = scmp.eq.s32.totalorder %s13, 1
    %p186 = scmp.ne.s32.totalorder %s181, %s183
    %p187 = scmp.eq.s32.totalorder %s13, 0
    %p188 = por %p186, %p187
    %p189 = scmp.ne.s32.totalorder %s181, %s183
    %p190 = scmp.eq.s32.totalorder %s18, 1
    %p191 = por %p189, %p190
    %p192 = scmp.ne.s32.totalorder %s183, %s184
    %p193 = scmp.eq.s32.totalorder %s18, 0
    %p194 = por %p192, %p193
    %p195 = scmp.ne.s32.totalorder %s183, %s184
    %p196 = scmp.eq.s32.totalorder %s19, 1
    %p197 = por %p195, %p196
    %p199 = scmp.ne.s32.totalorder %s184, %s198
    %p200 = scmp.eq.s32.totalorder %s19, 0
    %p201 = por %p199, %p200
    %s202 = ssub.s32 %s20, %s32
    %s203 = ssub.s32 %s21, %s28
    %s204 = sor.u32 %s202, %s203
    %p205 = scmp.eq.s32.totalorder %s204, 0
    %s207 = sadd.s32 %s206, 1
    %s208 = scalar_select %p205, %s206, %s207
    %p211 = pneg %p205
    %p212 = scmp.eq.s32.totalorder %s13, 1
    %p213 = por %p211, %p212
    %p214 = scmp.ne.s32.totalorder %s206, %s209
    %p215 = scmp.eq.s32.totalorder %s13, 0
    %p216 = por %p214, %p215
    %p217 = scmp.ne.s32.totalorder %s206, %s209
    %p218 = scmp.eq.s32.totalorder %s18, 1
    %p219 = por %p217, %p218
    %p220 = scmp.ne.s32.totalorder %s209, %s210
    %p221 = scmp.eq.s32.totalorder %s18, 0
    %p222 = por %p220, %p221
    %p223 = scmp.ne.s32.totalorder %s209, %s210
    %p224 = scmp.eq.s32.totalorder %s19, 1
    %p225 = por %p223, %p224
    %p227 = scmp.ne.s32.totalorder %s210, %s226
    %p228 = scmp.eq.s32.totalorder %s19, 0
    %p229 = por %p227, %p228
    %p230 = scmp.le.s32.totalorder 1, %s13
    %p231 = scmp.lt.s32.totalorder %s13, 3
    %p232 = pnand %p230, %p231
    %p233 = pneg %p232
    // Predicated region
    $region9: #{unet_decoder_forward.7} parent=5 // pred_check
      _
    $region10: #{unet_decoder_forward.7} parent=5 // pred_check_branch
      %235 = sbr.rel (%p232) target = $region12
    $region11: #{unet_decoder_forward.7} parent=5 // pred_region
      %s236 = ssub.s32 %s13, 1
      // Predicated region
      $region13: #{unet_decoder_forward.7} parent=11 // pred_check
        %p237 = pneg %p110
      $region14: #{unet_decoder_forward.7} parent=11 // pred_check_branch
        %239 = sbr.rel (%p237) target = $region16
      $region15: #{unet_decoder_forward.7} parent=11 // pred_region
        _
      $region16: #{unet_decoder_forward.7} parent=11 // pred_fallthru
        _
      // Predicated region
      $region17: #{unet_decoder_forward.7} parent=11 // pred_check
        %p240 = pneg %p131
      $region18: #{unet_decoder_forward.7} parent=11 // pred_check_branch
        %242 = sbr.rel (%p240) target = $region20
      $region19: #{unet_decoder_forward.7} parent=11 // pred_region
        _
      $region20: #{unet_decoder_forward.7} parent=11 // pred_fallthru
        _
      // Predicated region
      $region21: #{unet_decoder_forward.7} parent=11 // pred_check
        %p243 = pneg %p152
      $region22: #{unet_decoder_forward.7} parent=11 // pred_check_branch
        %245 = sbr.rel (%p243) target = $region24
      $region23: #{unet_decoder_forward.7} parent=11 // pred_region
        _
      $region24: #{unet_decoder_forward.7} parent=11 // pred_fallthru
        _
      // Predicated region
      $region25: #{unet_decoder_forward.7} parent=11 // pred_check
        %p246 = pneg %p173
      $region26: #{unet_decoder_forward.7} parent=11 // pred_check_branch
        %248 = sbr.rel (%p246) target = $region28
      $region27: #{unet_decoder_forward.7} parent=11 // pred_region
        _
      $region28: #{unet_decoder_forward.7} parent=11 // pred_fallthru
        _
      // Predicated region
      $region29: #{unet_decoder_forward.7} parent=11 // pred_check
        %p249 = pneg %p194
      $region30: #{unet_decoder_forward.7} parent=11 // pred_check_branch
        %251 = sbr.rel (%p249) target = $region32
      $region31: #{unet_decoder_forward.7} parent=11 // pred_region
        _
      $region32: #{unet_decoder_forward.7} parent=11 // pred_fallthru
        _
    $region12: #{unet_decoder_forward.7} parent=5 // pred_fallthru
      _
    %p252 = scmp.lt.s32.totalorder %s13, 2
    // Predicated region
    $region33: #{unet_decoder_forward.7} parent=5 // pred_check
      %p253 = pneg %p252
    $region34: #{unet_decoder_forward.7} parent=5 // pred_check_branch
      %255 = sbr.rel (%p253) target = $region36
    $region35: #{unet_decoder_forward.7} parent=5 // pred_region
      // Predicated region
      $region37: #{unet_decoder_forward.7} parent=35 // pred_check
        %p256 = pneg %p47
      $region38: #{unet_decoder_forward.7} parent=35 // pred_check_branch
        %258 = sbr.rel (%p256) target = $region40
      $region39: #{unet_decoder_forward.7} parent=35 // pred_region
        %s259 = smul.u32 32, %s21
        %p260 = scmp.lt.s32.totalorder %s20, 1
        %s261 = scalar_select %p260, %s20, 1
        %p262 = scmp.lt.s32.totalorder %s259, 31
        %s263 = scalar_select %p262, %s259, 31
        %s264 = smul.addr %s263, 4
        %s265 = smul.addr %s261, 128
        %s266 = sadd.s32 %s264, %s265
        %s267 = smul.addr %s266, 4
        %s268 = scalar_lea.vmem %s0, %s267
        %s269 = smul.u32 32, %s21
      $region40: #{unet_decoder_forward.7} parent=35 // pred_fallthru
        _
      // Predicated region
      $region41: #{unet_decoder_forward.7} parent=35 // pred_check
        %p270 = pneg %p83
      $region42: #{unet_decoder_forward.7} parent=35 // pred_check_branch
        %272 = sbr.rel (%p270) target = $region44
      $region43: #{unet_decoder_forward.7} parent=35 // pred_region
        %s273 = sadd.s32 %s21, 1
        %s274 = smul.u32 %s273, 32
        %p275 = scmp.lt.s32.totalorder %s274, 31
        %s276 = scalar_select %p275, %s274, 31
        %p277 = scmp.lt.s32.totalorder %s20, 1
        %s278 = scalar_select %p277, %s20, 1
        %p279 = scmp.lt.s32.totalorder %s276, 31
        %s280 = scalar_select %p279, %s276, 31
        %s281 = smul.addr %s280, 4
        %s282 = smul.addr %s278, 128
        %s283 = sadd.s32 %s281, %s282
        %s284 = smul.addr %s283, 4
        %s285 = scalar_lea.vmem %s1, %s284
        %s286 = sadd.s32 %s21, 1
        %s287 = smul.u32 %s286, 32
        %p288 = scmp.lt.s32.totalorder %s287, 31
        %s289 = scalar_select %p288, %s287, 31
      $region44: #{unet_decoder_forward.7} parent=35 // pred_fallthru
        _
    $region36: #{unet_decoder_forward.7} parent=5 // pred_fallthru
      _
    %p290 = scmp.le.s32.totalorder 1, %s13
    %p291 = scmp.lt.s32.totalorder %s13, 3
    %p292 = pnand %p290, %p291
    %p293 = pneg %p292
    // Predicated region
    $region45: #{unet_decoder_forward.7} parent=5 // pred_check
      _
    $region46: #{unet_decoder_forward.7} parent=5 // pred_check_branch
      %295 = sbr.rel (%p292) target = $region48
    $region47: #{unet_decoder_forward.7} parent=5 // pred_region
      %s296 = ssub.s32 %s13, 1
      %s297 = smul.u32 32, %s23
      %p298 = scmp.lt.s32.totalorder %s22, 1
      %s299 = scalar_select %p298, %s22, 1
      %p300 = scmp.lt.s32.totalorder %s297, 31
      %s301 = scalar_select %p300, %s297, 31
      %s302 = smul.addr %s301, 4
      %s303 = smul.addr %s299, 128
      %s304 = sadd.s32 %s302, %s303
      %s305 = smul.addr %s304, 4
      %s306 = scalar_lea.vmem %s0, %s305
      %p307 = pneg %p53
      %p308 = pneg %p50
      %s309 = sadd.s32 %s23, 1
      %s310 = smul.u32 %s309, 32
      %p311 = scmp.lt.s32.totalorder %s310, 31
      %s312 = scalar_select %p311, %s310, 31
      %p313 = scmp.lt.s32.totalorder %s22, 1
      %s314 = scalar_select %p313, %s22, 1
      %p315 = scmp.lt.s32.totalorder %s312, 31
      %s316 = scalar_select %p315, %s312, 31
      %s317 = smul.addr %s316, 4
      %s318 = smul.addr %s314, 128
      %s319 = sadd.s32 %s317, %s318
      %s320 = smul.addr %s319, 4
      %s321 = scalar_lea.vmem %s1, %s320
      %p322 = pneg %p89
      %p323 = pneg %p86
      %p324 = pneg %p110
      %p325 = pneg %p107
      %p326 = pneg %p131
      %p327 = pneg %p128
      %p328 = pneg %p152
      %p329 = pneg %p149
      %p330 = pneg %p173
      %p331 = pneg %p170
      %p332 = pneg %p194
      %p333 = pneg %p191
      %p334 = pneg %p222
      %p335 = pneg %p219
      %s336 = smul.u32 32, %s23
      %p337 = scmp.lt.s32.totalorder %s22, 1
      %s338 = scalar_select %p337, %s22, 1
      %p339 = scmp.lt.s32.totalorder %s336, 31
      %s340 = scalar_select %p339, %s336, 31
      %s341 = smul.addr %s340, 8
      %s342 = smul.addr %s338, 256
      %s343 = sadd.s32 %s341, %s342
      %s344 = smul.addr %s343, 8
      %s345 = scalar_lea.vmem %s7, %s344
      %s346 = smul.u32 32, %s23
      %p347 = scmp.lt.s32.totalorder %s22, 1
      %s348 = scalar_select %p347, %s22, 1
      %p349 = scmp.lt.s32.totalorder %s346, 31
      %s350 = scalar_select %p349, %s346, 31
      %s351 = smul.addr %s350, 4
      %s352 = smul.addr %s348, 128
      %s353 = sadd.s32 %s351, %s352
      %s354 = smul.addr %s353, 4
      %s355 = scalar_lea.vmem %s0, %s354
      %s356 = smul.u32 32, %s23
      %s357 = sadd.s32 %s23, 1
      %s358 = smul.u32 %s357, 32
      %p359 = scmp.lt.s32.totalorder %s358, 31
      %s360 = scalar_select %p359, %s358, 31
      %p361 = scmp.lt.s32.totalorder %s22, 1
      %s362 = scalar_select %p361, %s22, 1
      %p363 = scmp.lt.s32.totalorder %s360, 31
      %s364 = scalar_select %p363, %s360, 31
      %s365 = smul.addr %s364, 4
      %s366 = smul.addr %s362, 128
      %s367 = sadd.s32 %s365, %s366
      %s368 = smul.addr %s367, 4
      %s369 = scalar_lea.vmem %s1, %s368
      %s370 = sadd.s32 %s23, 1
      %s371 = smul.u32 %s370, 32
      %p372 = scmp.lt.s32.totalorder %s371, 31
      %s373 = scalar_select %p372, %s371, 31
      %s374 = smul.u32 32, %s23
      %p375 = scmp.lt.s32.totalorder %s22, 1
      %s376 = scalar_select %p375, %s22, 1
      %p377 = scmp.lt.s32.totalorder %s374, 31
      %s378 = scalar_select %p377, %s374, 31
      %s379 = smul.addr %s378, 8
      %s380 = smul.addr %s376, 256
      %s381 = sadd.s32 %s379, %s380
      %s382 = smul.addr %s381, 8
      %s383 = scalar_lea.vmem %s7, %s382
      %s384 = smul.u32 32, %s23
      %p386 = scmp.eq.s32.totalorder %s23, 0
      %v387 = vld [vmem:[%s355] sm:$0xf]
      %v388 = vld [vmem:[%s355 + $0x4] sm:$0xf]
      %v389 = vld [vmem:[%s355 + $0x8] sm:$0xf]
      %v390 = vld [vmem:[%s355 + $0xc] sm:$0xf]
      %v391 = vld [vmem:[%s355 + $0x10] sm:$0xf]
      %v392 = vld [vmem:[%s355 + $0x14] sm:$0xf]
      %v393 = vld [vmem:[%s355 + $0x18] sm:$0xf]
      %v394 = vld [vmem:[%s355 + $0x1c] sm:$0xf]
      %v395 = vld [vmem:[%s355 + $0x20] sm:$0xf]
      %v396 = vld [vmem:[%s355 + $0x24] sm:$0xf]
      %v397 = vld [vmem:[%s355 + $0x28] sm:$0xf]
      %v398 = vld [vmem:[%s355 + $0x2c] sm:$0xf]
      %v399 = vld [vmem:[%s355 + $0x30] sm:$0xf]
      %v400 = vld [vmem:[%s355 + $0x34] sm:$0xf]
      %v401 = vld [vmem:[%s355 + $0x38] sm:$0xf]
      %v402 = vld [vmem:[%s355 + $0x3c] sm:$0xf]
      %v403 = vld [vmem:[%s355 + $0x40] sm:$0xf]
      %v404 = vld [vmem:[%s355 + $0x44] sm:$0xf]
      %v405 = vld [vmem:[%s355 + $0x48] sm:$0xf]
      %v406 = vld [vmem:[%s355 + $0x4c] sm:$0xf]
      %v407 = vld [vmem:[%s355 + $0x50] sm:$0xf]
      %v408 = vld [vmem:[%s355 + $0x54] sm:$0xf]
      %v409 = vld [vmem:[%s355 + $0x58] sm:$0xf]
      %v410 = vld [vmem:[%s355 + $0x5c] sm:$0xf]
      %v411 = vld [vmem:[%s355 + $0x60] sm:$0xf]
      %v412 = vld [vmem:[%s355 + $0x64] sm:$0xf]
      %v413 = vld [vmem:[%s355 + $0x68] sm:$0xf]
      %v414 = vld [vmem:[%s355 + $0x6c] sm:$0xf]
      %v415 = vld [vmem:[%s355 + $0x70] sm:$0xf]
      %v416 = vld [vmem:[%s355 + $0x74] sm:$0xf]
      %v417 = vld [vmem:[%s355 + $0x78] sm:$0xf]
      %v418 = vld [vmem:[%s355 + $0x7c] sm:$0xf]
      %v419 = vld [vmem:[%s355 + $0x80] sm:$0xf]
      %v420 = vld [vmem:[%s355 + $0x84] sm:$0xf]
      %v421 = vld [vmem:[%s355 + $0x88] sm:$0xf]
      %v422 = vld [vmem:[%s355 + $0x8c] sm:$0xf]
      %v423 = vld [vmem:[%s355 + $0x90] sm:$0xf]
      %v424 = vld [vmem:[%s355 + $0x94] sm:$0xf]
      %v425 = vld [vmem:[%s355 + $0x98] sm:$0xf]
      %v426 = vld [vmem:[%s355 + $0x9c] sm:$0xf]
      %v427 = vld [vmem:[%s355 + $0xa0] sm:$0xf]
      %v428 = vld [vmem:[%s355 + $0xa4] sm:$0xf]
      %v429 = vld [vmem:[%s355 + $0xa8] sm:$0xf]
      %v430 = vld [vmem:[%s355 + $0xac] sm:$0xf]
      %v431 = vld [vmem:[%s355 + $0xb0] sm:$0xf]
      %v432 = vld [vmem:[%s355 + $0xb4] sm:$0xf]
      %v433 = vld [vmem:[%s355 + $0xb8] sm:$0xf]
      %v434 = vld [vmem:[%s355 + $0xbc] sm:$0xf]
      %v435 = vld [vmem:[%s355 + $0xc0] sm:$0xf]
      %v436 = vld [vmem:[%s355 + $0xc4] sm:$0xf]
      %v437 = vld [vmem:[%s355 + $0xc8] sm:$0xf]
      %v438 = vld [vmem:[%s355 + $0xcc] sm:$0xf]
      %v439 = vld [vmem:[%s355 + $0xd0] sm:$0xf]
      %v440 = vld [vmem:[%s355 + $0xd4] sm:$0xf]
      %v441 = vld [vmem:[%s355 + $0xd8] sm:$0xf]
      %v442 = vld [vmem:[%s355 + $0xdc] sm:$0xf]
      %v443 = vld [vmem:[%s355 + $0xe0] sm:$0xf]
      %v444 = vld [vmem:[%s355 + $0xe4] sm:$0xf]
      %v445 = vld [vmem:[%s355 + $0xe8] sm:$0xf]
      %v446 = vld [vmem:[%s355 + $0xec] sm:$0xf]
      %v447 = vld [vmem:[%s355 + $0xf0] sm:$0xf]
      %v448 = vld [vmem:[%s355 + $0xf4] sm:$0xf]
      %v449 = vld [vmem:[%s355 + $0xf8] sm:$0xf]
      %v450 = vld [vmem:[%s355 + $0xfc] sm:$0xf]
      %v451 = vld [vmem:[%s355 + $0x100] sm:$0xf]
      %v452 = vld [vmem:[%s355 + $0x104] sm:$0xf]
      %v453 = vld [vmem:[%s355 + $0x108] sm:$0xf]
      %v454 = vld [vmem:[%s355 + $0x10c] sm:$0xf]
      %v455 = vld [vmem:[%s355 + $0x110] sm:$0xf]
      %v456 = vld [vmem:[%s355 + $0x114] sm:$0xf]
      %v457 = vld [vmem:[%s355 + $0x118] sm:$0xf]
      %v458 = vld [vmem:[%s355 + $0x11c] sm:$0xf]
      %v459 = vld [vmem:[%s355 + $0x120] sm:$0xf]
      %v460 = vld [vmem:[%s355 + $0x124] sm:$0xf]
      %v461 = vld [vmem:[%s355 + $0x128] sm:$0xf]
      %v462 = vld [vmem:[%s355 + $0x12c] sm:$0xf]
      %v463 = vld [vmem:[%s355 + $0x130] sm:$0xf]
      %v464 = vld [vmem:[%s355 + $0x134] sm:$0xf]
      %v465 = vld [vmem:[%s355 + $0x138] sm:$0xf]
      %v466 = vld [vmem:[%s355 + $0x13c] sm:$0xf]
      %v467 = vld [vmem:[%s355 + $0x140] sm:$0xf]
      %v468 = vld [vmem:[%s355 + $0x144] sm:$0xf]
      %v469 = vld [vmem:[%s355 + $0x148] sm:$0xf]
      %v470 = vld [vmem:[%s355 + $0x14c] sm:$0xf]
      %v471 = vld [vmem:[%s355 + $0x150] sm:$0xf]
      %v472 = vld [vmem:[%s355 + $0x154] sm:$0xf]
      %v473 = vld [vmem:[%s355 + $0x158] sm:$0xf]
      %v474 = vld [vmem:[%s355 + $0x15c] sm:$0xf]
      %v475 = vld [vmem:[%s355 + $0x160] sm:$0xf]
      %v476 = vld [vmem:[%s355 + $0x164] sm:$0xf]
      %v477 = vld [vmem:[%s355 + $0x168] sm:$0xf]
      %v478 = vld [vmem:[%s355 + $0x16c] sm:$0xf]
      %v479 = vld [vmem:[%s355 + $0x170] sm:$0xf]
      %v480 = vld [vmem:[%s355 + $0x174] sm:$0xf]
      %v481 = vld [vmem:[%s355 + $0x178] sm:$0xf]
      %v482 = vld [vmem:[%s355 + $0x17c] sm:$0xf]
      %v483 = vld [vmem:[%s355 + $0x180] sm:$0xf]
      %v484 = vld [vmem:[%s355 + $0x184] sm:$0xf]
      %v485 = vld [vmem:[%s355 + $0x188] sm:$0xf]
      %v486 = vld [vmem:[%s355 + $0x18c] sm:$0xf]
      %v487 = vld [vmem:[%s355 + $0x190] sm:$0xf]
      %v488 = vld [vmem:[%s355 + $0x194] sm:$0xf]
      %v489 = vld [vmem:[%s355 + $0x198] sm:$0xf]
      %v490 = vld [vmem:[%s355 + $0x19c] sm:$0xf]
      %v491 = vld [vmem:[%s355 + $0x1a0] sm:$0xf]
      %v492 = vld [vmem:[%s355 + $0x1a4] sm:$0xf]
      %v493 = vld [vmem:[%s355 + $0x1a8] sm:$0xf]
      %v494 = vld [vmem:[%s355 + $0x1ac] sm:$0xf]
      %v495 = vld [vmem:[%s355 + $0x1b0] sm:$0xf]
      %v496 = vld [vmem:[%s355 + $0x1b4] sm:$0xf]
      %v497 = vld [vmem:[%s355 + $0x1b8] sm:$0xf]
      %v498 = vld [vmem:[%s355 + $0x1bc] sm:$0xf]
      %v499 = vld [vmem:[%s355 + $0x1c0] sm:$0xf]
      %v500 = vld [vmem:[%s355 + $0x1c4] sm:$0xf]
      %v501 = vld [vmem:[%s355 + $0x1c8] sm:$0xf]
      %v502 = vld [vmem:[%s355 + $0x1cc] sm:$0xf]
      %v503 = vld [vmem:[%s355 + $0x1d0] sm:$0xf]
      %v504 = vld [vmem:[%s355 + $0x1d4] sm:$0xf]
      %v505 = vld [vmem:[%s355 + $0x1d8] sm:$0xf]
      %v506 = vld [vmem:[%s355 + $0x1dc] sm:$0xf]
      %v507 = vld [vmem:[%s355 + $0x1e0] sm:$0xf]
      %v508 = vld [vmem:[%s355 + $0x1e4] sm:$0xf]
      %v509 = vld [vmem:[%s355 + $0x1e8] sm:$0xf]
      %v510 = vld [vmem:[%s355 + $0x1ec] sm:$0xf]
      %v511 = vld [vmem:[%s355 + $0x1f0] sm:$0xf]
      %v512 = vld [vmem:[%s355 + $0x1f4] sm:$0xf]
      %v513 = vld [vmem:[%s355 + $0x1f8] sm:$0xf]
      %v514 = vld [vmem:[%s355 + $0x1fc] sm:$0xf]
      %v515 = vld [vmem:[%s369] sm:$0xf]
      %v516 = vld [vmem:[%s369 + $0x4] sm:$0xf]
      %v517 = vld [vmem:[%s369 + $0x8] sm:$0xf]
      %v518 = vld [vmem:[%s369 + $0xc] sm:$0xf]
      %s519 = scalar_select %p386, 1, 0
      %v520 = vstv %s519
      %vm521 = vcmp.eq.s32.totalorder %v520, 1
      %v522 = vsel %vm521, 0, %v515
      %v523 = vsel %vm521, 0, %v516
      %v524 = vsel %vm521, 0, %v517
      %v525 = vsel %vm521, 0, %v518
      %v658 = vunpack.c.l.b16 %v387
      %v659 = vunpack.c.l.b16 %v388
      %v660 = vunpack.c.l.b16 %v389
      %v661 = vunpack.c.l.b16 %v390
      %v662 = vunpack.c.l.b16 %v391
      %v663 = vunpack.c.l.b16 %v392
      %v664 = vunpack.c.l.b16 %v393
      %v665 = vunpack.c.l.b16 %v394
      %v666 = vunpack.c.l.b16 %v395
      %v667 = vunpack.c.l.b16 %v396
      %v668 = vunpack.c.l.b16 %v397
      %v669 = vunpack.c.l.b16 %v398
      %v670 = vunpack.c.l.b16 %v399
      %v671 = vunpack.c.l.b16 %v400
      %v672 = vunpack.c.l.b16 %v401
      %v673 = vunpack.c.l.b16 %v402
      %v674 = vunpack.c.l.b16 %v403
      %v675 = vunpack.c.l.b16 %v404
      %v676 = vunpack.c.l.b16 %v405
      %v677 = vunpack.c.l.b16 %v406
      %v678 = vunpack.c.l.b16 %v407
      %v679 = vunpack.c.l.b16 %v408
      %v680 = vunpack.c.l.b16 %v409
      %v681 = vunpack.c.l.b16 %v410
      %v682 = vunpack.c.l.b16 %v411
      %v683 = vunpack.c.l.b16 %v412
      %v684 = vunpack.c.l.b16 %v413
      %v685 = vunpack.c.l.b16 %v414
      %v686 = vunpack.c.l.b16 %v415
      %v687 = vunpack.c.l.b16 %v416
      %v688 = vunpack.c.l.b16 %v417
      %v689 = vunpack.c.l.b16 %v418
      %v690 = vunpack.c.l.b16 %v419
      %v691 = vunpack.c.l.b16 %v420
      %v692 = vunpack.c.l.b16 %v421
      %v693 = vunpack.c.l.b16 %v422
      %v694 = vunpack.c.l.b16 %v423
      %v695 = vunpack.c.l.b16 %v424
      %v696 = vunpack.c.l.b16 %v425
      %v697 = vunpack.c.l.b16 %v426
      %v698 = vunpack.c.l.b16 %v427
      %v699 = vunpack.c.l.b16 %v428
      %v700 = vunpack.c.l.b16 %v429
      %v701 = vunpack.c.l.b16 %v430
      %v702 = vunpack.c.l.b16 %v431
      %v703 = vunpack.c.l.b16 %v432
      %v704 = vunpack.c.l.b16 %v433
      %v705 = vunpack.c.l.b16 %v434
      %v706 = vunpack.c.l.b16 %v435
      %v707 = vunpack.c.l.b16 %v436
      %v708 = vunpack.c.l.b16 %v437
      %v709 = vunpack.c.l.b16 %v438
      %v710 = vunpack.c.l.b16 %v439
      %v711 = vunpack.c.l.b16 %v440
      %v712 = vunpack.c.l.b16 %v441
      %v713 = vunpack.c.l.b16 %v442
      %v714 = vunpack.c.l.b16 %v443
      %v715 = vunpack.c.l.b16 %v444
      %v716 = vunpack.c.l.b16 %v445
      %v717 = vunpack.c.l.b16 %v446
      %v718 = vunpack.c.l.b16 %v447
      %v719 = vunpack.c.l.b16 %v448
      %v720 = vunpack.c.l.b16 %v449
      %v721 = vunpack.c.l.b16 %v450
      %v722 = vunpack.c.l.b16 %v451
      %v723 = vunpack.c.l.b16 %v452
      %v724 = vunpack.c.l.b16 %v453
      %v725 = vunpack.c.l.b16 %v454
      %v726 = vunpack.c.l.b16 %v455
      %v727 = vunpack.c.l.b16 %v456
      %v728 = vunpack.c.l.b16 %v457
      %v729 = vunpack.c.l.b16 %v458
      %v730 = vunpack.c.l.b16 %v459
      %v731 = vunpack.c.l.b16 %v460
      %v732 = vunpack.c.l.b16 %v461
      %v733 = vunpack.c.l.b16 %v462
      %v734 = vunpack.c.l.b16 %v463
      %v735 = vunpack.c.l.b16 %v464
      %v736 = vunpack.c.l.b16 %v465
      %v737 = vunpack.c.l.b16 %v466
      %v738 = vunpack.c.l.b16 %v467
      %v739 = vunpack.c.l.b16 %v468
      %v740 = vunpack.c.l.b16 %v469
      %v741 = vunpack.c.l.b16 %v470
      %v742 = vunpack.c.l.b16 %v471
      %v743 = vunpack.c.l.b16 %v472
      %v744 = vunpack.c.l.b16 %v473
      %v745 = vunpack.c.l.b16 %v474
      %v746 = vunpack.c.l.b16 %v475
      %v747 = vunpack.c.l.b16 %v476
      %v748 = vunpack.c.l.b16 %v477
      %v749 = vunpack.c.l.b16 %v478
      %v750 = vunpack.c.l.b16 %v479
      %v751 = vunpack.c.l.b16 %v480
      %v752 = vunpack.c.l.b16 %v481
      %v753 = vunpack.c.l.b16 %v482
      %v754 = vunpack.c.l.b16 %v483
      %v755 = vunpack.c.l.b16 %v484
      %v756 = vunpack.c.l.b16 %v485
      %v757 = vunpack.c.l.b16 %v486
      %v758 = vunpack.c.l.b16 %v487
      %v759 = vunpack.c.l.b16 %v488
      %v760 = vunpack.c.l.b16 %v489
      %v761 = vunpack.c.l.b16 %v490
      %v762 = vunpack.c.l.b16 %v491
      %v763 = vunpack.c.l.b16 %v492
      %v764 = vunpack.c.l.b16 %v493
      %v765 = vunpack.c.l.b16 %v494
      %v766 = vunpack.c.l.b16 %v495
      %v767 = vunpack.c.l.b16 %v496
      %v768 = vunpack.c.l.b16 %v497
      %v769 = vunpack.c.l.b16 %v498
      %v770 = vunpack.c.l.b16 %v499
      %v771 = vunpack.c.l.b16 %v500
      %v772 = vunpack.c.l.b16 %v501
      %v773 = vunpack.c.l.b16 %v502
      %v774 = vunpack.c.l.b16 %v503
      %v775 = vunpack.c.l.b16 %v504
      %v776 = vunpack.c.l.b16 %v505
      %v777 = vunpack.c.l.b16 %v506
      %v778 = vunpack.c.l.b16 %v507
      %v779 = vunpack.c.l.b16 %v508
      %v780 = vunpack.c.l.b16 %v509
      %v781 = vunpack.c.l.b16 %v510
      %v782 = vunpack.c.l.b16 %v511
      %v783 = vunpack.c.l.b16 %v512
      %v784 = vunpack.c.l.b16 %v513
      %v785 = vunpack.c.l.b16 %v514
      %v786 = vunpack.c.l.b16 %v522
      %v787 = vunpack.c.l.b16 %v523
      %v788 = vunpack.c.l.b16 %v524
      %v789 = vunpack.c.l.b16 %v525
      %v790 = vpack.c.b16 %v659, %v658
      %v791 = vpack.c.b16 %v661, %v660
      %v792 = vpack.c.b16 %v663, %v662
      %v793 = vpack.c.b16 %v665, %v664
      %v794 = vpack.c.b16 %v667, %v666
      %v795 = vpack.c.b16 %v669, %v668
      %v796 = vpack.c.b16 %v671, %v670
      %v797 = vpack.c.b16 %v673, %v672
      %v798 = vpack.c.b16 %v675, %v674
      %v799 = vpack.c.b16 %v677, %v676
      %v800 = vpack.c.b16 %v679, %v678
      %v801 = vpack.c.b16 %v681, %v680
      %v802 = vpack.c.b16 %v683, %v682
      %v803 = vpack.c.b16 %v685, %v684
      %v804 = vpack.c.b16 %v687, %v686
      %v805 = vpack.c.b16 %v689, %v688
      %v806 = vpack.c.b16 %v691, %v690
      %v807 = vpack.c.b16 %v693, %v692
      %v808 = vpack.c.b16 %v695, %v694
      %v809 = vpack.c.b16 %v697, %v696
      %v810 = vpack.c.b16 %v699, %v698
      %v811 = vpack.c.b16 %v701, %v700
      %v812 = vpack.c.b16 %v703, %v702
      %v813 = vpack.c.b16 %v705, %v704
      %v814 = vpack.c.b16 %v707, %v706
      %v815 = vpack.c.b16 %v709, %v708
      %v816 = vpack.c.b16 %v711, %v710
      %v817 = vpack.c.b16 %v713, %v712
      %v818 = vpack.c.b16 %v715, %v714
      %v819 = vpack.c.b16 %v717, %v716
      %v820 = vpack.c.b16 %v719, %v718
      %v821 = vpack.c.b16 %v721, %v720
      %v822 = vpack.c.b16 %v723, %v722
      %v823 = vpack.c.b16 %v725, %v724
      %v824 = vpack.c.b16 %v727, %v726
      %v825 = vpack.c.b16 %v729, %v728
      %v826 = vpack.c.b16 %v731, %v730
      %v827 = vpack.c.b16 %v733, %v732
      %v828 = vpack.c.b16 %v735, %v734
      %v829 = vpack.c.b16 %v737, %v736
      %v830 = vpack.c.b16 %v739, %v738
      %v831 = vpack.c.b16 %v741, %v740
      %v832 = vpack.c.b16 %v743, %v742
      %v833 = vpack.c.b16 %v745, %v744
      %v834 = vpack.c.b16 %v747, %v746
      %v835 = vpack.c.b16 %v749, %v748
      %v836 = vpack.c.b16 %v751, %v750
      %v837 = vpack.c.b16 %v753, %v752
      %v838 = vpack.c.b16 %v755, %v754
      %v839 = vpack.c.b16 %v757, %v756
      %v840 = vpack.c.b16 %v759, %v758
      %v841 = vpack.c.b16 %v761, %v760
      %v842 = vpack.c.b16 %v763, %v762
      %v843 = vpack.c.b16 %v765, %v764
      %v844 = vpack.c.b16 %v767, %v766
      %v845 = vpack.c.b16 %v769, %v768
      %v846 = vpack.c.b16 %v771, %v770
      %v847 = vpack.c.b16 %v773, %v772
      %v848 = vpack.c.b16 %v775, %v774
      %v849 = vpack.c.b16 %v777, %v776
      %v850 = vpack.c.b16 %v779, %v778
      %v851 = vpack.c.b16 %v781, %v780
      %v852 = vpack.c.b16 %v783, %v782
      %v853 = vpack.c.b16 %v785, %v784
      %v854 = vpack.c.b16 %v787, %v786
      %v855 = vpack.c.b16 %v789, %v788
      %v856 = vld [vmem:[%s2] sm:$0xf]
      %v857 = vld [vmem:[%s2 + $0x4] sm:$0xf]
      %v858 = vld [vmem:[%s2 + $0x8] sm:$0xf]
      %v859 = vld [vmem:[%s2 + $0xc] sm:$0xf]
      %vm860 = vsmask.f32 7424
      %v862 = vshrl.u32 %v790, 16
      %v864 = vshll.u32 %v790, 16
      %v866 = vrot.slane %v864, 1
      %v867 = vor.u32 %v862, %v866
      %v869 = vshll.u32 %v791, 16
      %v871 = vrot.slane %v869, 1
      %v872 = vsel %vm860, %v867, %v871
      %v873 = vshrl.u32 %v791, 16
      %v875 = vor.u32 %v873, %v871
      %v877 = vshll.u32 0, 16
      %v879 = vrot.slane %v877, 1
      %v880 = vsel %vm860, %v875, %v879
      %v882 = vshrl.u32 %v792, 16
      %v884 = vshll.u32 %v792, 16
      %v886 = vrot.slane %v884, 1
      %v887 = vor.u32 %v882, %v886
      %v889 = vshll.u32 %v793, 16
      %v891 = vrot.slane %v889, 1
      %v892 = vsel %vm860, %v887, %v891
      %v893 = vshrl.u32 %v793, 16
      %v895 = vor.u32 %v893, %v891
      %v896 = vsel %vm860, %v895, %v879
      %v898 = vshrl.u32 %v794, 16
      %v900 = vshll.u32 %v794, 16
      %v902 = vrot.slane %v900, 1
      %v903 = vor.u32 %v898, %v902
      %v905 = vshll.u32 %v795, 16
      %v907 = vrot.slane %v905, 1
      %v908 = vsel %vm860, %v903, %v907
      %v909 = vshrl.u32 %v795, 16
      %v911 = vor.u32 %v909, %v907
      %v912 = vsel %vm860, %v911, %v879
      %v914 = vshrl.u32 %v796, 16
      %v916 = vshll.u32 %v796, 16
      %v918 = vrot.slane %v916, 1
      %v919 = vor.u32 %v914, %v918
      %v921 = vshll.u32 %v797, 16
      %v923 = vrot.slane %v921, 1
      %v924 = vsel %vm860, %v919, %v923
      %v925 = vshrl.u32 %v797, 16
      %v927 = vor.u32 %v925, %v923
      %v928 = vsel %vm860, %v927, %v879
      %v930 = vshrl.u32 %v798, 16
      %v932 = vshll.u32 %v798, 16
      %v934 = vrot.slane %v932, 1
      %v935 = vor.u32 %v930, %v934
      %v937 = vshll.u32 %v799, 16
      %v939 = vrot.slane %v937, 1
      %v940 = vsel %vm860, %v935, %v939
      %v941 = vshrl.u32 %v799, 16
      %v943 = vor.u32 %v941, %v939
      %v944 = vsel %vm860, %v943, %v879
      %v946 = vshrl.u32 %v800, 16
      %v948 = vshll.u32 %v800, 16
      %v950 = vrot.slane %v948, 1
      %v951 = vor.u32 %v946, %v950
      %v953 = vshll.u32 %v801, 16
      %v955 = vrot.slane %v953, 1
      %v956 = vsel %vm860, %v951, %v955
      %v957 = vshrl.u32 %v801, 16
      %v959 = vor.u32 %v957, %v955
      %v960 = vsel %vm860, %v959, %v879
      %v962 = vshrl.u32 %v802, 16
      %v964 = vshll.u32 %v802, 16
      %v966 = vrot.slane %v964, 1
      %v967 = vor.u32 %v962, %v966
      %v969 = vshll.u32 %v803, 16
      %v971 = vrot.slane %v969, 1
      %v972 = vsel %vm860, %v967, %v971
      %v973 = vshrl.u32 %v803, 16
      %v975 = vor.u32 %v973, %v971
      %v976 = vsel %vm860, %v975, %v879
      %v978 = vshrl.u32 %v804, 16
      %v980 = vshll.u32 %v804, 16
      %v982 = vrot.slane %v980, 1
      %v983 = vor.u32 %v978, %v982
      %v985 = vshll.u32 %v805, 16
      %v987 = vrot.slane %v985, 1
      %v988 = vsel %vm860, %v983, %v987
      %v989 = vshrl.u32 %v805, 16
      %v991 = vor.u32 %v989, %v987
      %v992 = vsel %vm860, %v991, %v879
      %v994 = vshrl.u32 %v806, 16
      %v996 = vshll.u32 %v806, 16
      %v998 = vrot.slane %v996, 1
      %v999 = vor.u32 %v994, %v998
      %v1001 = vshll.u32 %v807, 16
      %v1003 = vrot.slane %v1001, 1
      %v1004 = vsel %vm860, %v999, %v1003
      %v1005 = vshrl.u32 %v807, 16
      %v1007 = vor.u32 %v1005, %v1003
      %v1008 = vsel %vm860, %v1007, %v879
      %v1010 = vshrl.u32 %v808, 16
      %v1012 = vshll.u32 %v808, 16
      %v1014 = vrot.slane %v1012, 1
      %v1015 = vor.u32 %v1010, %v1014
      %v1017 = vshll.u32 %v809, 16
      %v1019 = vrot.slane %v1017, 1
      %v1020 = vsel %vm860, %v1015, %v1019
      %v1021 = vshrl.u32 %v809, 16
      %v1023 = vor.u32 %v1021, %v1019
      %v1024 = vsel %vm860, %v1023, %v879
      %v1026 = vshrl.u32 %v810, 16
      %v1028 = vshll.u32 %v810, 16
      %v1030 = vrot.slane %v1028, 1
      %v1031 = vor.u32 %v1026, %v1030
      %v1033 = vshll.u32 %v811, 16
      %v1035 = vrot.slane %v1033, 1
      %v1036 = vsel %vm860, %v1031, %v1035
      %v1037 = vshrl.u32 %v811, 16
      %v1039 = vor.u32 %v1037, %v1035
      %v1040 = vsel %vm860, %v1039, %v879
      %v1042 = vshrl.u32 %v812, 16
      %v1044 = vshll.u32 %v812, 16
      %v1046 = vrot.slane %v1044, 1
      %v1047 = vor.u32 %v1042, %v1046
      %v1049 = vshll.u32 %v813, 16
      %v1051 = vrot.slane %v1049, 1
      %v1052 = vsel %vm860, %v1047, %v1051
      %v1053 = vshrl.u32 %v813, 16
      %v1055 = vor.u32 %v1053, %v1051
      %v1056 = vsel %vm860, %v1055, %v879
      %v1058 = vshrl.u32 %v814, 16
      %v1060 = vshll.u32 %v814, 16
      %v1062 = vrot.slane %v1060, 1
      %v1063 = vor.u32 %v1058, %v1062
      %v1065 = vshll.u32 %v815, 16
      %v1067 = vrot.slane %v1065, 1
      %v1068 = vsel %vm860, %v1063, %v1067
      %v1069 = vshrl.u32 %v815, 16
      %v1071 = vor.u32 %v1069, %v1067
      %v1072 = vsel %vm860, %v1071, %v879
      %v1074 = vshrl.u32 %v816, 16
      %v1076 = vshll.u32 %v816, 16
      %v1078 = vrot.slane %v1076, 1
      %v1079 = vor.u32 %v1074, %v1078
      %v1081 = vshll.u32 %v817, 16
      %v1083 = vrot.slane %v1081, 1
      %v1084 = vsel %vm860, %v1079, %v1083
      %v1085 = vshrl.u32 %v817, 16
      %v1087 = vor.u32 %v1085, %v1083
      %v1088 = vsel %vm860, %v1087, %v879
      %v1090 = vshrl.u32 %v818, 16
      %v1092 = vshll.u32 %v818, 16
      %v1094 = vrot.slane %v1092, 1
      %v1095 = vor.u32 %v1090, %v1094
      %v1097 = vshll.u32 %v819, 16
      %v1099 = vrot.slane %v1097, 1
      %v1100 = vsel %vm860, %v1095, %v1099
      %v1101 = vshrl.u32 %v819, 16
      %v1103 = vor.u32 %v1101, %v1099
      %v1104 = vsel %vm860, %v1103, %v879
      %v1106 = vshrl.u32 %v820, 16
      %v1108 = vshll.u32 %v820, 16
      %v1110 = vrot.slane %v1108, 1
      %v1111 = vor.u32 %v1106, %v1110
      %v1113 = vshll.u32 %v821, 16
      %v1115 = vrot.slane %v1113, 1
      %v1116 = vsel %vm860, %v1111, %v1115
      %v1117 = vshrl.u32 %v821, 16
      %v1119 = vor.u32 %v1117, %v1115
      %v1120 = vsel %vm860, %v1119, %v879
      %v1122 = vshrl.u32 %v822, 16
      %v1124 = vshll.u32 %v822, 16
      %v1126 = vrot.slane %v1124, 1
      %v1127 = vor.u32 %v1122, %v1126
      %v1129 = vshll.u32 %v823, 16
      %v1131 = vrot.slane %v1129, 1
      %v1132 = vsel %vm860, %v1127, %v1131
      %v1133 = vshrl.u32 %v823, 16
      %v1135 = vor.u32 %v1133, %v1131
      %v1136 = vsel %vm860, %v1135, %v879
      %v1138 = vshrl.u32 %v824, 16
      %v1140 = vshll.u32 %v824, 16
      %v1142 = vrot.slane %v1140, 1
      %v1143 = vor.u32 %v1138, %v1142
      %v1145 = vshll.u32 %v825, 16
      %v1147 = vrot.slane %v1145, 1
      %v1148 = vsel %vm860, %v1143, %v1147
      %v1149 = vshrl.u32 %v825, 16
      %v1151 = vor.u32 %v1149, %v1147
      %v1152 = vsel %vm860, %v1151, %v879
      %v1154 = vshrl.u32 %v826, 16
      %v1156 = vshll.u32 %v826, 16
      %v1158 = vrot.slane %v1156, 1
      %v1159 = vor.u32 %v1154, %v1158
      %v1161 = vshll.u32 %v827, 16
      %v1163 = vrot.slane %v1161, 1
      %v1164 = vsel %vm860, %v1159, %v1163
      %v1165 = vshrl.u32 %v827, 16
      %v1167 = vor.u32 %v1165, %v1163
      %v1168 = vsel %vm860, %v1167, %v879
      %v1170 = vshrl.u32 %v828, 16
      %v1172 = vshll.u32 %v828, 16
      %v1174 = vrot.slane %v1172, 1
      %v1175 = vor.u32 %v1170, %v1174
      %v1177 = vshll.u32 %v829, 16
      %v1179 = vrot.slane %v1177, 1
      %v1180 = vsel %vm860, %v1175, %v1179
      %v1181 = vshrl.u32 %v829, 16
      %v1183 = vor.u32 %v1181, %v1179
      %v1184 = vsel %vm860, %v1183, %v879
      %v1186 = vshrl.u32 %v830, 16
      %v1188 = vshll.u32 %v830, 16
      %v1190 = vrot.slane %v1188, 1
      %v1191 = vor.u32 %v1186, %v1190
      %v1193 = vshll.u32 %v831, 16
      %v1195 = vrot.slane %v1193, 1
      %v1196 = vsel %vm860, %v1191, %v1195
      %v1197 = vshrl.u32 %v831, 16
      %v1199 = vor.u32 %v1197, %v1195
      %v1200 = vsel %vm860, %v1199, %v879
      %v1202 = vshrl.u32 %v832, 16
      %v1204 = vshll.u32 %v832, 16
      %v1206 = vrot.slane %v1204, 1
      %v1207 = vor.u32 %v1202, %v1206
      %v1209 = vshll.u32 %v833, 16
      %v1211 = vrot.slane %v1209, 1
      %v1212 = vsel %vm860, %v1207, %v1211
      %v1213 = vshrl.u32 %v833, 16
      %v1215 = vor.u32 %v1213, %v1211
      %v1216 = vsel %vm860, %v1215, %v879
      %v1218 = vshrl.u32 %v834, 16
      %v1220 = vshll.u32 %v834, 16
      %v1222 = vrot.slane %v1220, 1
      %v1223 = vor.u32 %v1218, %v1222
      %v1225 = vshll.u32 %v835, 16
      %v1227 = vrot.slane %v1225, 1
      %v1228 = vsel %vm860, %v1223, %v1227
      %v1229 = vshrl.u32 %v835, 16
      %v1231 = vor.u32 %v1229, %v1227
      %v1232 = vsel %vm860, %v1231, %v879
      %v1234 = vshrl.u32 %v836, 16
      %v1236 = vshll.u32 %v836, 16
      %v1238 = vrot.slane %v1236, 1
      %v1239 = vor.u32 %v1234, %v1238
      %v1241 = vshll.u32 %v837, 16
      %v1243 = vrot.slane %v1241, 1
      %v1244 = vsel %vm860, %v1239, %v1243
      %v1245 = vshrl.u32 %v837, 16
      %v1247 = vor.u32 %v1245, %v1243
      %v1248 = vsel %vm860, %v1247, %v879
      %v1250 = vshrl.u32 %v838, 16
      %v1252 = vshll.u32 %v838, 16
      %v1254 = vrot.slane %v1252, 1
      %v1255 = vor.u32 %v1250, %v1254
      %v1257 = vshll.u32 %v839, 16
      %v1259 = vrot.slane %v1257, 1
      %v1260 = vsel %vm860, %v1255, %v1259
      %v1261 = vshrl.u32 %v839, 16
      %v1263 = vor.u32 %v1261, %v1259
      %v1264 = vsel %vm860, %v1263, %v879
      %v1266 = vshrl.u32 %v840, 16
      %v1268 = vshll.u32 %v840, 16
      %v1270 = vrot.slane %v1268, 1
      %v1271 = vor.u32 %v1266, %v1270
      %v1273 = vshll.u32 %v841, 16
      %v1275 = vrot.slane %v1273, 1
      %v1276 = vsel %vm860, %v1271, %v1275
      %v1277 = vshrl.u32 %v841, 16
      %v1279 = vor.u32 %v1277, %v1275
      %v1280 = vsel %vm860, %v1279, %v879
      %v1282 = vshrl.u32 %v842, 16
      %v1284 = vshll.u32 %v842, 16
      %v1286 = vrot.slane %v1284, 1
      %v1287 = vor.u32 %v1282, %v1286
      %v1289 = vshll.u32 %v843, 16
      %v1291 = vrot.slane %v1289, 1
      %v1292 = vsel %vm860, %v1287, %v1291
      %v1293 = vshrl.u32 %v843, 16
      %v1295 = vor.u32 %v1293, %v1291
      %v1296 = vsel %vm860, %v1295, %v879
      %v1298 = vshrl.u32 %v844, 16
      %v1300 = vshll.u32 %v844, 16
      %v1302 = vrot.slane %v1300, 1
      %v1303 = vor.u32 %v1298, %v1302
      %v1305 = vshll.u32 %v845, 16
      %v1307 = vrot.slane %v1305, 1
      %v1308 = vsel %vm860, %v1303, %v1307
      %v1309 = vshrl.u32 %v845, 16
      %v1311 = vor.u32 %v1309, %v1307
      %v1312 = vsel %vm860, %v1311, %v879
      %v1314 = vshrl.u32 %v846, 16
      %v1316 = vshll.u32 %v846, 16
      %v1318 = vrot.slane %v1316, 1
      %v1319 = vor.u32 %v1314, %v1318
      %v1321 = vshll.u32 %v847, 16
      %v1323 = vrot.slane %v1321, 1
      %v1324 = vsel %vm860, %v1319, %v1323
      %v1325 = vshrl.u32 %v847, 16
      %v1327 = vor.u32 %v1325, %v1323
      %v1328 = vsel %vm860, %v1327, %v879
      %v1330 = vshrl.u32 %v848, 16
      %v1332 = vshll.u32 %v848, 16
      %v1334 = vrot.slane %v1332, 1
      %v1335 = vor.u32 %v1330, %v1334
      %v1337 = vshll.u32 %v849, 16
      %v1339 = vrot.slane %v1337, 1
      %v1340 = vsel %vm860, %v1335, %v1339
      %v1341 = vshrl.u32 %v849, 16
      %v1343 = vor.u32 %v1341, %v1339
      %v1344 = vsel %vm860, %v1343, %v879
      %v1346 = vshrl.u32 %v850, 16
      %v1348 = vshll.u32 %v850, 16
      %v1350 = vrot.slane %v1348, 1
      %v1351 = vor.u32 %v1346, %v1350
      %v1353 = vshll.u32 %v851, 16
      %v1355 = vrot.slane %v1353, 1
      %v1356 = vsel %vm860, %v1351, %v1355
      %v1357 = vshrl.u32 %v851, 16
      %v1359 = vor.u32 %v1357, %v1355
      %v1360 = vsel %vm860, %v1359, %v879
      %v1362 = vshrl.u32 %v852, 16
      %v1364 = vshll.u32 %v852, 16
      %v1366 = vrot.slane %v1364, 1
      %v1367 = vor.u32 %v1362, %v1366
      %v1369 = vshll.u32 %v853, 16
      %v1371 = vrot.slane %v1369, 1
      %v1372 = vsel %vm860, %v1367, %v1371
      %v1373 = vshrl.u32 %v853, 16
      %v1375 = vor.u32 %v1373, %v1371
      %v1376 = vsel %vm860, %v1375, %v879
      %vm1377 = vcmask 64512
      %v1379 = vsel %vm1377, %v872, 0
      %v1382 = vsel %vm1377, %v880, 0
      %v1385 = vsel %vm1377, %v892, 0
      %v1388 = vsel %vm1377, %v896, 0
      %v1391 = vsel %vm1377, %v908, 0
      %v1394 = vsel %vm1377, %v912, 0
      %v1397 = vsel %vm1377, %v924, 0
      %v1400 = vsel %vm1377, %v928, 0
      %v1403 = vsel %vm1377, %v940, 0
      %v1406 = vsel %vm1377, %v944, 0
      %v1409 = vsel %vm1377, %v956, 0
      %v1412 = vsel %vm1377, %v960, 0
      %v1415 = vsel %vm1377, %v972, 0
      %v1418 = vsel %vm1377, %v976, 0
      %v1421 = vsel %vm1377, %v988, 0
      %v1424 = vsel %vm1377, %v992, 0
      %v1427 = vsel %vm1377, %v1004, 0
      %v1430 = vsel %vm1377, %v1008, 0
      %v1433 = vsel %vm1377, %v1020, 0
      %v1436 = vsel %vm1377, %v1024, 0
      %v1439 = vsel %vm1377, %v1036, 0
      %v1442 = vsel %vm1377, %v1040, 0
      %v1445 = vsel %vm1377, %v1052, 0
      %v1448 = vsel %vm1377, %v1056, 0
      %v1451 = vsel %vm1377, %v1068, 0
      %v1454 = vsel %vm1377, %v1072, 0
      %v1457 = vsel %vm1377, %v1084, 0
      %v1460 = vsel %vm1377, %v1088, 0
      %v1463 = vsel %vm1377, %v1100, 0
      %v1466 = vsel %vm1377, %v1104, 0
      %v1469 = vsel %vm1377, %v1116, 0
      %v1472 = vsel %vm1377, %v1120, 0
      %v1475 = vsel %vm1377, %v1132, 0
      %v1478 = vsel %vm1377, %v1136, 0
      %v1481 = vsel %vm1377, %v1148, 0
      %v1484 = vsel %vm1377, %v1152, 0
      %v1487 = vsel %vm1377, %v1164, 0
      %v1490 = vsel %vm1377, %v1168, 0
      %v1493 = vsel %vm1377, %v1180, 0
      %v1496 = vsel %vm1377, %v1184, 0
      %v1499 = vsel %vm1377, %v1196, 0
      %v1502 = vsel %vm1377, %v1200, 0
      %v1505 = vsel %vm1377, %v1212, 0
      %v1508 = vsel %vm1377, %v1216, 0
      %v1511 = vsel %vm1377, %v1228, 0
      %v1514 = vsel %vm1377, %v1232, 0
      %v1517 = vsel %vm1377, %v1244, 0
      %v1520 = vsel %vm1377, %v1248, 0
      %v1523 = vsel %vm1377, %v1260, 0
      %v1526 = vsel %vm1377, %v1264, 0
      %v1529 = vsel %vm1377, %v1276, 0
      %v1532 = vsel %vm1377, %v1280, 0
      %v1535 = vsel %vm1377, %v1292, 0
      %v1538 = vsel %vm1377, %v1296, 0
      %v1541 = vsel %vm1377, %v1308, 0
      %v1544 = vsel %vm1377, %v1312, 0
      %v1547 = vsel %vm1377, %v1324, 0
      %v1550 = vsel %vm1377, %v1328, 0
      %v1553 = vsel %vm1377, %v1340, 0
      %v1556 = vsel %vm1377, %v1344, 0
      %v1559 = vsel %vm1377, %v1356, 0
      %v1562 = vsel %vm1377, %v1360, 0
      %v1565 = vsel %vm1377, %v1372, 0
      %v1568 = vsel %vm1377, %v1376, 0
      %vm1570 = vcmask 1043456
      %v1572 = vsel %vm1570, %v857, 0
      %1574 = vmatpush.bf16.msra.mxu0 0
      %1575 = vmatpush.bf16.msra.mxu0 0
      %1576 = vmatpush.bf16.msra.mxu0 0
      %1577 = vmatpush.bf16.msra.mxu0 0
      %1578 = vmatpush.bf16.msra.mxu0 0
      %1579 = vmatpush.bf16.msra.mxu0 0
      %1580 = vmatpush.bf16.msra.mxu0 0
      %1581 = vmatpush.bf16.msra.mxu0 %v1572
      %1582 = vmatmul.bf16.gmra.mxu0 %v1379
      %v1583 = vpop.f32.mrf.mxu0
      %v1584 = vadd.f32 0.0, %v1583
      %v1585 = vpop.f32.mrf.mxu0
      %v1586 = vadd.f32 0.0, %v1585
      %1587 = vmatmul.bf16.gmra.mxu0 %v1382
      %v1588 = vpop.f32.mrf.mxu0
      %v1589 = vadd.f32 0.0, %v1588
      %v1590 = vpop.f32.mrf.mxu0
      %v1591 = vadd.f32 0.0, %v1590
      %1592 = vmatmul.bf16.gmra.mxu0 %v1385
      %v1593 = vpop.f32.mrf.mxu0
      %v1594 = vadd.f32 0.0, %v1593
      %v1595 = vpop.f32.mrf.mxu0
      %v1596 = vadd.f32 0.0, %v1595
      %1597 = vmatmul.bf16.gmra.mxu0 %v1388
      %v1598 = vpop.f32.mrf.mxu0
      %v1599 = vadd.f32 0.0, %v1598
      %v1600 = vpop.f32.mrf.mxu0
      %v1601 = vadd.f32 0.0, %v1600
      %1602 = vmatmul.bf16.gmra.mxu0 %v1391
      %v1603 = vpop.f32.mrf.mxu0
      %v1604 = vadd.f32 0.0, %v1603
      %v1605 = vpop.f32.mrf.mxu0
      %v1606 = vadd.f32 0.0, %v1605
      %1607 = vmatmul.bf16.gmra.mxu0 %v1394
      %v1608 = vpop.f32.mrf.mxu0
      %v1609 = vadd.f32 0.0, %v1608
      %v1610 = vpop.f32.mrf.mxu0
      %v1611 = vadd.f32 0.0, %v1610
      %1612 = vmatmul.bf16.gmra.mxu0 %v1397
      %v1613 = vpop.f32.mrf.mxu0
      %v1614 = vadd.f32 0.0, %v1613
      %v1615 = vpop.f32.mrf.mxu0
      %v1616 = vadd.f32 0.0, %v1615
      %1617 = vmatmul.bf16.gmra.mxu0 %v1400
      %v1618 = vpop.f32.mrf.mxu0
      %v1619 = vadd.f32 0.0, %v1618
      %v1620 = vpop.f32.mrf.mxu0
      %v1621 = vadd.f32 0.0, %v1620
      %1622 = vmatmul.bf16.gmra.mxu0 %v1403
      %v1623 = vpop.f32.mrf.mxu0
      %v1624 = vadd.f32 0.0, %v1623
      %v1625 = vpop.f32.mrf.mxu0
      %v1626 = vadd.f32 0.0, %v1625
      %1627 = vmatmul.bf16.gmra.mxu0 %v1406
      %v1628 = vpop.f32.mrf.mxu0
      %v1629 = vadd.f32 0.0, %v1628
      %v1630 = vpop.f32.mrf.mxu0
      %v1631 = vadd.f32 0.0, %v1630
      %1632 = vmatmul.bf16.gmra.mxu0 %v1409
      %v1633 = vpop.f32.mrf.mxu0
      %v1634 = vadd.f32 0.0, %v1633
      %v1635 = vpop.f32.mrf.mxu0
      %v1636 = vadd.f32 0.0, %v1635
      %1637 = vmatmul.bf16.gmra.mxu0 %v1412
      %v1638 = vpop.f32.mrf.mxu0
      %v1639 = vadd.f32 0.0, %v1638
      %v1640 = vpop.f32.mrf.mxu0
      %v1641 = vadd.f32 0.0, %v1640
      %1642 = vmatmul.bf16.gmra.mxu0 %v1415
      %v1643 = vpop.f32.mrf.mxu0
      %v1644 = vadd.f32 0.0, %v1643
      %v1645 = vpop.f32.mrf.mxu0
      %v1646 = vadd.f32 0.0, %v1645
      %1647 = vmatmul.bf16.gmra.mxu0 %v1418
      %v1648 = vpop.f32.mrf.mxu0
      %v1649 = vadd.f32 0.0, %v1648
      %v1650 = vpop.f32.mrf.mxu0
      %v1651 = vadd.f32 0.0, %v1650
      %1652 = vmatmul.bf16.gmra.mxu0 %v1421
      %v1653 = vpop.f32.mrf.mxu0
      %v1654 = vadd.f32 0.0, %v1653
      %v1655 = vpop.f32.mrf.mxu0
      %v1656 = vadd.f32 0.0, %v1655
      %1657 = vmatmul.bf16.gmra.mxu0 %v1424
      %v1658 = vpop.f32.mrf.mxu0
      %v1659 = vadd.f32 0.0, %v1658
      %v1660 = vpop.f32.mrf.mxu0
      %v1661 = vadd.f32 0.0, %v1660
      %1662 = vmatmul.bf16.gmra.mxu0 %v1427
      %v1663 = vpop.f32.mrf.mxu0
      %v1664 = vadd.f32 0.0, %v1663
      %v1665 = vpop.f32.mrf.mxu0
      %v1666 = vadd.f32 0.0, %v1665
      %1667 = vmatmul.bf16.gmra.mxu0 %v1430
      %v1668 = vpop.f32.mrf.mxu0
      %v1669 = vadd.f32 0.0, %v1668
      %v1670 = vpop.f32.mrf.mxu0
      %v1671 = vadd.f32 0.0, %v1670
      %1672 = vmatmul.bf16.gmra.mxu0 %v1433
      %v1673 = vpop.f32.mrf.mxu0
      %v1674 = vadd.f32 0.0, %v1673
      %v1675 = vpop.f32.mrf.mxu0
      %v1676 = vadd.f32 0.0, %v1675
      %1677 = vmatmul.bf16.gmra.mxu0 %v1436
      %v1678 = vpop.f32.mrf.mxu0
      %v1679 = vadd.f32 0.0, %v1678
      %v1680 = vpop.f32.mrf.mxu0
      %v1681 = vadd.f32 0.0, %v1680
      %1682 = vmatmul.bf16.gmra.mxu0 %v1439
      %v1683 = vpop.f32.mrf.mxu0
      %v1684 = vadd.f32 0.0, %v1683
      %v1685 = vpop.f32.mrf.mxu0
      %v1686 = vadd.f32 0.0, %v1685
      %1687 = vmatmul.bf16.gmra.mxu0 %v1442
      %v1688 = vpop.f32.mrf.mxu0
      %v1689 = vadd.f32 0.0, %v1688
      %v1690 = vpop.f32.mrf.mxu0
      %v1691 = vadd.f32 0.0, %v1690
      %1692 = vmatmul.bf16.gmra.mxu0 %v1445
      %v1693 = vpop.f32.mrf.mxu0
      %v1694 = vadd.f32 0.0, %v1693
      %v1695 = vpop.f32.mrf.mxu0
      %v1696 = vadd.f32 0.0, %v1695
      %1697 = vmatmul.bf16.gmra.mxu0 %v1448
      %v1698 = vpop.f32.mrf.mxu0
      %v1699 = vadd.f32 0.0, %v1698
      %v1700 = vpop.f32.mrf.mxu0
      %v1701 = vadd.f32 0.0, %v1700
      %1702 = vmatmul.bf16.gmra.mxu0 %v1451
      %v1703 = vpop.f32.mrf.mxu0
      %v1704 = vadd.f32 0.0, %v1703
      %v1705 = vpop.f32.mrf.mxu0
      %v1706 = vadd.f32 0.0, %v1705
      %1707 = vmatmul.bf16.gmra.mxu0 %v1454
      %v1708 = vpop.f32.mrf.mxu0
      %v1709 = vadd.f32 0.0, %v1708
      %v1710 = vpop.f32.mrf.mxu0
      %v1711 = vadd.f32 0.0, %v1710
      %1712 = vmatmul.bf16.gmra.mxu0 %v1457
      %v1713 = vpop.f32.mrf.mxu0
      %v1714 = vadd.f32 0.0, %v1713
      %v1715 = vpop.f32.mrf.mxu0
      %v1716 = vadd.f32 0.0, %v1715
      %1717 = vmatmul.bf16.gmra.mxu0 %v1460
      %v1718 = vpop.f32.mrf.mxu0
      %v1719 = vadd.f32 0.0, %v1718
      %v1720 = vpop.f32.mrf.mxu0
      %v1721 = vadd.f32 0.0, %v1720
      %1722 = vmatmul.bf16.gmra.mxu0 %v1463
      %v1723 = vpop.f32.mrf.mxu0
      %v1724 = vadd.f32 0.0, %v1723
      %v1725 = vpop.f32.mrf.mxu0
      %v1726 = vadd.f32 0.0, %v1725
      %1727 = vmatmul.bf16.gmra.mxu0 %v1466
      %v1728 = vpop.f32.mrf.mxu0
      %v1729 = vadd.f32 0.0, %v1728
      %v1730 = vpop.f32.mrf.mxu0
      %v1731 = vadd.f32 0.0, %v1730
      %1732 = vmatmul.bf16.gmra.mxu0 %v1469
      %v1733 = vpop.f32.mrf.mxu0
      %v1734 = vadd.f32 0.0, %v1733
      %v1735 = vpop.f32.mrf.mxu0
      %v1736 = vadd.f32 0.0, %v1735
      %1737 = vmatmul.bf16.gmra.mxu0 %v1472
      %v1738 = vpop.f32.mrf.mxu0
      %v1739 = vadd.f32 0.0, %v1738
      %v1740 = vpop.f32.mrf.mxu0
      %v1741 = vadd.f32 0.0, %v1740
      %1742 = vmatmul.bf16.gmra.mxu0 %v1475
      %v1743 = vpop.f32.mrf.mxu0
      %v1744 = vadd.f32 0.0, %v1743
      %v1745 = vpop.f32.mrf.mxu0
      %v1746 = vadd.f32 0.0, %v1745
      %1747 = vmatmul.bf16.gmra.mxu0 %v1478
      %v1748 = vpop.f32.mrf.mxu0
      %v1749 = vadd.f32 0.0, %v1748
      %v1750 = vpop.f32.mrf.mxu0
      %v1751 = vadd.f32 0.0, %v1750
      %1752 = vmatmul.bf16.gmra.mxu0 %v1481
      %v1753 = vpop.f32.mrf.mxu0
      %v1754 = vadd.f32 0.0, %v1753
      %v1755 = vpop.f32.mrf.mxu0
      %v1756 = vadd.f32 0.0, %v1755
      %1757 = vmatmul.bf16.gmra.mxu0 %v1484
      %v1758 = vpop.f32.mrf.mxu0
      %v1759 = vadd.f32 0.0, %v1758
      %v1760 = vpop.f32.mrf.mxu0
      %v1761 = vadd.f32 0.0, %v1760
      %1762 = vmatmul.bf16.gmra.mxu0 %v1487
      %v1763 = vpop.f32.mrf.mxu0
      %v1764 = vadd.f32 0.0, %v1763
      %v1765 = vpop.f32.mrf.mxu0
      %v1766 = vadd.f32 0.0, %v1765
      %1767 = vmatmul.bf16.gmra.mxu0 %v1490
      %v1768 = vpop.f32.mrf.mxu0
      %v1769 = vadd.f32 0.0, %v1768
      %v1770 = vpop.f32.mrf.mxu0
      %v1771 = vadd.f32 0.0, %v1770
      %1772 = vmatmul.bf16.gmra.mxu0 %v1493
      %v1773 = vpop.f32.mrf.mxu0
      %v1774 = vadd.f32 0.0, %v1773
      %v1775 = vpop.f32.mrf.mxu0
      %v1776 = vadd.f32 0.0, %v1775
      %1777 = vmatmul.bf16.gmra.mxu0 %v1496
      %v1778 = vpop.f32.mrf.mxu0
      %v1779 = vadd.f32 0.0, %v1778
      %v1780 = vpop.f32.mrf.mxu0
      %v1781 = vadd.f32 0.0, %v1780
      %1782 = vmatmul.bf16.gmra.mxu0 %v1499
      %v1783 = vpop.f32.mrf.mxu0
      %v1784 = vadd.f32 0.0, %v1783
      %v1785 = vpop.f32.mrf.mxu0
      %v1786 = vadd.f32 0.0, %v1785
      %1787 = vmatmul.bf16.gmra.mxu0 %v1502
      %v1788 = vpop.f32.mrf.mxu0
      %v1789 = vadd.f32 0.0, %v1788
      %v1790 = vpop.f32.mrf.mxu0
      %v1791 = vadd.f32 0.0, %v1790
      %1792 = vmatmul.bf16.gmra.mxu0 %v1505
      %v1793 = vpop.f32.mrf.mxu0
      %v1794 = vadd.f32 0.0, %v1793
      %v1795 = vpop.f32.mrf.mxu0
      %v1796 = vadd.f32 0.0, %v1795
      %1797 = vmatmul.bf16.gmra.mxu0 %v1508
      %v1798 = vpop.f32.mrf.mxu0
      %v1799 = vadd.f32 0.0, %v1798
      %v1800 = vpop.f32.mrf.mxu0
      %v1801 = vadd.f32 0.0, %v1800
      %1802 = vmatmul.bf16.gmra.mxu0 %v1511
      %v1803 = vpop.f32.mrf.mxu0
      %v1804 = vadd.f32 0.0, %v1803
      %v1805 = vpop.f32.mrf.mxu0
      %v1806 = vadd.f32 0.0, %v1805
      %1807 = vmatmul.bf16.gmra.mxu0 %v1514
      %v1808 = vpop.f32.mrf.mxu0
      %v1809 = vadd.f32 0.0, %v1808
      %v1810 = vpop.f32.mrf.mxu0
      %v1811 = vadd.f32 0.0, %v1810
      %1812 = vmatmul.bf16.gmra.mxu0 %v1517
      %v1813 = vpop.f32.mrf.mxu0
      %v1814 = vadd.f32 0.0, %v1813
      %v1815 = vpop.f32.mrf.mxu0
      %v1816 = vadd.f32 0.0, %v1815
      %1817 = vmatmul.bf16.gmra.mxu0 %v1520
      %v1818 = vpop.f32.mrf.mxu0
      %v1819 = vadd.f32 0.0, %v1818
      %v1820 = vpop.f32.mrf.mxu0
      %v1821 = vadd.f32 0.0, %v1820
      %1822 = vmatmul.bf16.gmra.mxu0 %v1523
      %v1823 = vpop.f32.mrf.mxu0
      %v1824 = vadd.f32 0.0, %v1823
      %v1825 = vpop.f32.mrf.mxu0
      %v1826 = vadd.f32 0.0, %v1825
      %1827 = vmatmul.bf16.gmra.mxu0 %v1526
      %v1828 = vpop.f32.mrf.mxu0
      %v1829 = vadd.f32 0.0, %v1828
      %v1830 = vpop.f32.mrf.mxu0
      %v1831 = vadd.f32 0.0, %v1830
      %1832 = vmatmul.bf16.gmra.mxu0 %v1529
      %v1833 = vpop.f32.mrf.mxu0
      %v1834 = vadd.f32 0.0, %v1833
      %v1835 = vpop.f32.mrf.mxu0
      %v1836 = vadd.f32 0.0, %v1835
      %1837 = vmatmul.bf16.gmra.mxu0 %v1532
      %v1838 = vpop.f32.mrf.mxu0
      %v1839 = vadd.f32 0.0, %v1838
      %v1840 = vpop.f32.mrf.mxu0
      %v1841 = vadd.f32 0.0, %v1840
      %1842 = vmatmul.bf16.gmra.mxu0 %v1535
      %v1843 = vpop.f32.mrf.mxu0
      %v1844 = vadd.f32 0.0, %v1843
      %v1845 = vpop.f32.mrf.mxu0
      %v1846 = vadd.f32 0.0, %v1845
      %1847 = vmatmul.bf16.gmra.mxu0 %v1538
      %v1848 = vpop.f32.mrf.mxu0
      %v1849 = vadd.f32 0.0, %v1848
      %v1850 = vpop.f32.mrf.mxu0
      %v1851 = vadd.f32 0.0, %v1850
      %1852 = vmatmul.bf16.gmra.mxu0 %v1541
      %v1853 = vpop.f32.mrf.mxu0
      %v1854 = vadd.f32 0.0, %v1853
      %v1855 = vpop.f32.mrf.mxu0
      %v1856 = vadd.f32 0.0, %v1855
      %1857 = vmatmul.bf16.gmra.mxu0 %v1544
      %v1858 = vpop.f32.mrf.mxu0
      %v1859 = vadd.f32 0.0, %v1858
      %v1860 = vpop.f32.mrf.mxu0
      %v1861 = vadd.f32 0.0, %v1860
      %1862 = vmatmul.bf16.gmra.mxu0 %v1547
      %v1863 = vpop.f32.mrf.mxu0
      %v1864 = vadd.f32 0.0, %v1863
      %v1865 = vpop.f32.mrf.mxu0
      %v1866 = vadd.f32 0.0, %v1865
      %1867 = vmatmul.bf16.gmra.mxu0 %v1550
      %v1868 = vpop.f32.mrf.mxu0
      %v1869 = vadd.f32 0.0, %v1868
      %v1870 = vpop.f32.mrf.mxu0
      %v1871 = vadd.f32 0.0, %v1870
      %1872 = vmatmul.bf16.gmra.mxu0 %v1553
      %v1873 = vpop.f32.mrf.mxu0
      %v1874 = vadd.f32 0.0, %v1873
      %v1875 = vpop.f32.mrf.mxu0
      %v1876 = vadd.f32 0.0, %v1875
      %1877 = vmatmul.bf16.gmra.mxu0 %v1556
      %v1878 = vpop.f32.mrf.mxu0
      %v1879 = vadd.f32 0.0, %v1878
      %v1880 = vpop.f32.mrf.mxu0
      %v1881 = vadd.f32 0.0, %v1880
      %1882 = vmatmul.bf16.gmra.mxu0 %v1559
      %v1883 = vpop.f32.mrf.mxu0
      %v1884 = vadd.f32 0.0, %v1883
      %v1885 = vpop.f32.mrf.mxu0
      %v1886 = vadd.f32 0.0, %v1885
      %1887 = vmatmul.bf16.gmra.mxu0 %v1562
      %v1888 = vpop.f32.mrf.mxu0
      %v1889 = vadd.f32 0.0, %v1888
      %v1890 = vpop.f32.mrf.mxu0
      %v1891 = vadd.f32 0.0, %v1890
      %1892 = vmatmul.bf16.gmra.mxu0 %v1565
      %v1893 = vpop.f32.mrf.mxu0
      %v1894 = vadd.f32 0.0, %v1893
      %v1895 = vpop.f32.mrf.mxu0
      %v1896 = vadd.f32 0.0, %v1895
      %1897 = vmatmul.bf16.gmra.mxu0 %v1568
      %v1898 = vpop.f32.mrf.mxu0
      %v1899 = vadd.f32 0.0, %v1898
      %v1900 = vpop.f32.mrf.mxu0
      %v1901 = vadd.f32 0.0, %v1900
      %1902 = vdwg.mxu0
      %v1903 = vsel %vm1377, %v790, 0
      %v1905 = vsel %vm1377, %v791, 0
      %v1907 = vsel %vm1377, %v792, 0
      %v1909 = vsel %vm1377, %v793, 0
      %v1911 = vsel %vm1377, %v794, 0
      %v1913 = vsel %vm1377, %v795, 0
      %v1915 = vsel %vm1377, %v796, 0
      %v1917 = vsel %vm1377, %v797, 0
      %v1919 = vsel %vm1377, %v798, 0
      %v1921 = vsel %vm1377, %v799, 0
      %v1923 = vsel %vm1377, %v800, 0
      %v1925 = vsel %vm1377, %v801, 0
      %v1927 = vsel %vm1377, %v802, 0
      %v1929 = vsel %vm1377, %v803, 0
      %v1931 = vsel %vm1377, %v804, 0
      %v1933 = vsel %vm1377, %v805, 0
      %v1935 = vsel %vm1377, %v806, 0
      %v1937 = vsel %vm1377, %v807, 0
      %v1939 = vsel %vm1377, %v808, 0
      %v1941 = vsel %vm1377, %v809, 0
      %v1943 = vsel %vm1377, %v810, 0
      %v1945 = vsel %vm1377, %v811, 0
      %v1947 = vsel %vm1377, %v812, 0
      %v1949 = vsel %vm1377, %v813, 0
      %v1951 = vsel %vm1377, %v814, 0
      %v1953 = vsel %vm1377, %v815, 0
      %v1955 = vsel %vm1377, %v816, 0
      %v1957 = vsel %vm1377, %v817, 0
      %v1959 = vsel %vm1377, %v818, 0
      %v1961 = vsel %vm1377, %v819, 0
      %v1963 = vsel %vm1377, %v820, 0
      %v1965 = vsel %vm1377, %v821, 0
      %v1967 = vsel %vm1377, %v822, 0
      %v1969 = vsel %vm1377, %v823, 0
      %v1971 = vsel %vm1377, %v824, 0
      %v1973 = vsel %vm1377, %v825, 0
      %v1975 = vsel %vm1377, %v826, 0
      %v1977 = vsel %vm1377, %v827, 0
      %v1979 = vsel %vm1377, %v828, 0
      %v1981 = vsel %vm1377, %v829, 0
      %v1983 = vsel %vm1377, %v830, 0
      %v1985 = vsel %vm1377, %v831, 0
      %v1987 = vsel %vm1377, %v832, 0
      %v1989 = vsel %vm1377, %v833, 0
      %v1991 = vsel %vm1377, %v834, 0
      %v1993 = vsel %vm1377, %v835, 0
      %v1995 = vsel %vm1377, %v836, 0
      %v1997 = vsel %vm1377, %v837, 0
      %v1999 = vsel %vm1377, %v838, 0
      %v2001 = vsel %vm1377, %v839, 0
      %v2003 = vsel %vm1377, %v840, 0
      %v2005 = vsel %vm1377, %v841, 0
      %v2007 = vsel %vm1377, %v842, 0
      %v2009 = vsel %vm1377, %v843, 0
      %v2011 = vsel %vm1377, %v844, 0
      %v2013 = vsel %vm1377, %v845, 0
      %v2015 = vsel %vm1377, %v846, 0
      %v2017 = vsel %vm1377, %v847, 0
      %v2019 = vsel %vm1377, %v848, 0
      %v2021 = vsel %vm1377, %v849, 0
      %v2023 = vsel %vm1377, %v850, 0
      %v2025 = vsel %vm1377, %v851, 0
      %v2027 = vsel %vm1377, %v852, 0
      %v2029 = vsel %vm1377, %v853, 0
      %v2032 = vsel %vm1570, %v856, 0
      %2034 = vmatpush.bf16.msra.mxu0 0
      %2035 = vmatpush.bf16.msra.mxu0 0
      %2036 = vmatpush.bf16.msra.mxu0 0
      %2037 = vmatpush.bf16.msra.mxu0 0
      %2038 = vmatpush.bf16.msra.mxu0 0
      %2039 = vmatpush.bf16.msra.mxu0 0
      %2040 = vmatpush.bf16.msra.mxu0 0
      %2041 = vmatpush.bf16.msra.mxu0 %v2032
      %2042 = vmatmul.bf16.gmra.mxu0 %v1903
      %v2043 = vpop.f32.mrf.mxu0
      %v2044 = vadd.f32 %v1584, %v2043
      %v2045 = vpop.f32.mrf.mxu0
      %v2046 = vadd.f32 %v1586, %v2045
      %2047 = vmatmul.bf16.gmra.mxu0 %v1905
      %v2048 = vpop.f32.mrf.mxu0
      %v2049 = vadd.f32 %v1589, %v2048
      %v2050 = vpop.f32.mrf.mxu0
      %v2051 = vadd.f32 %v1591, %v2050
      %2052 = vmatmul.bf16.gmra.mxu0 %v1907
      %v2053 = vpop.f32.mrf.mxu0
      %v2054 = vadd.f32 %v1594, %v2053
      %v2055 = vpop.f32.mrf.mxu0
      %v2056 = vadd.f32 %v1596, %v2055
      %2057 = vmatmul.bf16.gmra.mxu0 %v1909
      %v2058 = vpop.f32.mrf.mxu0
      %v2059 = vadd.f32 %v1599, %v2058
      %v2060 = vpop.f32.mrf.mxu0
      %v2061 = vadd.f32 %v1601, %v2060
      %2062 = vmatmul.bf16.gmra.mxu0 %v1911
      %v2063 = vpop.f32.mrf.mxu0
      %v2064 = vadd.f32 %v1604, %v2063
      %v2065 = vpop.f32.mrf.mxu0
      %v2066 = vadd.f32 %v1606, %v2065
      %2067 = vmatmul.bf16.gmra.mxu0 %v1913
      %v2068 = vpop.f32.mrf.mxu0
      %v2069 = vadd.f32 %v1609, %v2068
      %v2070 = vpop.f32.mrf.mxu0
      %v2071 = vadd.f32 %v1611, %v2070
      %2072 = vmatmul.bf16.gmra.mxu0 %v1915
      %v2073 = vpop.f32.mrf.mxu0
      %v2074 = vadd.f32 %v1614, %v2073
      %v2075 = vpop.f32.mrf.mxu0
      %v2076 = vadd.f32 %v1616, %v2075
      %2077 = vmatmul.bf16.gmra.mxu0 %v1917
      %v2078 = vpop.f32.mrf.mxu0
      %v2079 = vadd.f32 %v1619, %v2078
      %v2080 = vpop.f32.mrf.mxu0
      %v2081 = vadd.f32 %v1621, %v2080
      %2082 = vmatmul.bf16.gmra.mxu0 %v1919
      %v2083 = vpop.f32.mrf.mxu0
      %v2084 = vadd.f32 %v1624, %v2083
      %v2085 = vpop.f32.mrf.mxu0
      %v2086 = vadd.f32 %v1626, %v2085
      %2087 = vmatmul.bf16.gmra.mxu0 %v1921
      %v2088 = vpop.f32.mrf.mxu0
      %v2089 = vadd.f32 %v1629, %v2088
      %v2090 = vpop.f32.mrf.mxu0
      %v2091 = vadd.f32 %v1631, %v2090
      %2092 = vmatmul.bf16.gmra.mxu0 %v1923
      %v2093 = vpop.f32.mrf.mxu0
      %v2094 = vadd.f32 %v1634, %v2093
      %v2095 = vpop.f32.mrf.mxu0
      %v2096 = vadd.f32 %v1636, %v2095
      %2097 = vmatmul.bf16.gmra.mxu0 %v1925
      %v2098 = vpop.f32.mrf.mxu0
      %v2099 = vadd.f32 %v1639, %v2098
      %v2100 = vpop.f32.mrf.mxu0
      %v2101 = vadd.f32 %v1641, %v2100
      %2102 = vmatmul.bf16.gmra.mxu0 %v1927
      %v2103 = vpop.f32.mrf.mxu0
      %v2104 = vadd.f32 %v1644, %v2103
      %v2105 = vpop.f32.mrf.mxu0
      %v2106 = vadd.f32 %v1646, %v2105
      %2107 = vmatmul.bf16.gmra.mxu0 %v1929
      %v2108 = vpop.f32.mrf.mxu0
      %v2109 = vadd.f32 %v1649, %v2108
      %v2110 = vpop.f32.mrf.mxu0
      %v2111 = vadd.f32 %v1651, %v2110
      %2112 = vmatmul.bf16.gmra.mxu0 %v1931
      %v2113 = vpop.f32.mrf.mxu0
      %v2114 = vadd.f32 %v1654, %v2113
      %v2115 = vpop.f32.mrf.mxu0
      %v2116 = vadd.f32 %v1656, %v2115
      %2117 = vmatmul.bf16.gmra.mxu0 %v1933
      %v2118 = vpop.f32.mrf.mxu0
      %v2119 = vadd.f32 %v1659, %v2118
      %v2120 = vpop.f32.mrf.mxu0
      %v2121 = vadd.f32 %v1661, %v2120
      %2122 = vmatmul.bf16.gmra.mxu0 %v1935
      %v2123 = vpop.f32.mrf.mxu0
      %v2124 = vadd.f32 %v1664, %v2123
      %v2125 = vpop.f32.mrf.mxu0
      %v2126 = vadd.f32 %v1666, %v2125
      %2127 = vmatmul.bf16.gmra.mxu0 %v1937
      %v2128 = vpop.f32.mrf.mxu0
      %v2129 = vadd.f32 %v1669, %v2128
      %v2130 = vpop.f32.mrf.mxu0
      %v2131 = vadd.f32 %v1671, %v2130
      %2132 = vmatmul.bf16.gmra.mxu0 %v1939
      %v2133 = vpop.f32.mrf.mxu0
      %v2134 = vadd.f32 %v1674, %v2133
      %v2135 = vpop.f32.mrf.mxu0
      %v2136 = vadd.f32 %v1676, %v2135
      %2137 = vmatmul.bf16.gmra.mxu0 %v1941
      %v2138 = vpop.f32.mrf.mxu0
      %v2139 = vadd.f32 %v1679, %v2138
      %v2140 = vpop.f32.mrf.mxu0
      %v2141 = vadd.f32 %v1681, %v2140
      %2142 = vmatmul.bf16.gmra.mxu0 %v1943
      %v2143 = vpop.f32.mrf.mxu0
      %v2144 = vadd.f32 %v1684, %v2143
      %v2145 = vpop.f32.mrf.mxu0
      %v2146 = vadd.f32 %v1686, %v2145
      %2147 = vmatmul.bf16.gmra.mxu0 %v1945
      %v2148 = vpop.f32.mrf.mxu0
      %v2149 = vadd.f32 %v1689, %v2148
      %v2150 = vpop.f32.mrf.mxu0
      %v2151 = vadd.f32 %v1691, %v2150
      %2152 = vmatmul.bf16.gmra.mxu0 %v1947
      %v2153 = vpop.f32.mrf.mxu0
      %v2154 = vadd.f32 %v1694, %v2153
      %v2155 = vpop.f32.mrf.mxu0
      %v2156 = vadd.f32 %v1696, %v2155
      %2157 = vmatmul.bf16.gmra.mxu0 %v1949
      %v2158 = vpop.f32.mrf.mxu0
      %v2159 = vadd.f32 %v1699, %v2158
      %v2160 = vpop.f32.mrf.mxu0
      %v2161 = vadd.f32 %v1701, %v2160
      %2162 = vmatmul.bf16.gmra.mxu0 %v1951
      %v2163 = vpop.f32.mrf.mxu0
      %v2164 = vadd.f32 %v1704, %v2163
      %v2165 = vpop.f32.mrf.mxu0
      %v2166 = vadd.f32 %v1706, %v2165
      %2167 = vmatmul.bf16.gmra.mxu0 %v1953
      %v2168 = vpop.f32.mrf.mxu0
      %v2169 = vadd.f32 %v1709, %v2168
      %v2170 = vpop.f32.mrf.mxu0
      %v2171 = vadd.f32 %v1711, %v2170
      %2172 = vmatmul.bf16.gmra.mxu0 %v1955
      %v2173 = vpop.f32.mrf.mxu0
      %v2174 = vadd.f32 %v1714, %v2173
      %v2175 = vpop.f32.mrf.mxu0
      %v2176 = vadd.f32 %v1716, %v2175
      %2177 = vmatmul.bf16.gmra.mxu0 %v1957
      %v2178 = vpop.f32.mrf.mxu0
      %v2179 = vadd.f32 %v1719, %v2178
      %v2180 = vpop.f32.mrf.mxu0
      %v2181 = vadd.f32 %v1721, %v2180
      %2182 = vmatmul.bf16.gmra.mxu0 %v1959
      %v2183 = vpop.f32.mrf.mxu0
      %v2184 = vadd.f32 %v1724, %v2183
      %v2185 = vpop.f32.mrf.mxu0
      %v2186 = vadd.f32 %v1726, %v2185
      %2187 = vmatmul.bf16.gmra.mxu0 %v1961
      %v2188 = vpop.f32.mrf.mxu0
      %v2189 = vadd.f32 %v1729, %v2188
      %v2190 = vpop.f32.mrf.mxu0
      %v2191 = vadd.f32 %v1731, %v2190
      %2192 = vmatmul.bf16.gmra.mxu0 %v1963
      %v2193 = vpop.f32.mrf.mxu0
      %v2194 = vadd.f32 %v1734, %v2193
      %v2195 = vpop.f32.mrf.mxu0
      %v2196 = vadd.f32 %v1736, %v2195
      %2197 = vmatmul.bf16.gmra.mxu0 %v1965
      %v2198 = vpop.f32.mrf.mxu0
      %v2199 = vadd.f32 %v1739, %v2198
      %v2200 = vpop.f32.mrf.mxu0
      %v2201 = vadd.f32 %v1741, %v2200
      %2202 = vmatmul.bf16.gmra.mxu0 %v1967
      %v2203 = vpop.f32.mrf.mxu0
      %v2204 = vadd.f32 %v1744, %v2203
      %v2205 = vpop.f32.mrf.mxu0
      %v2206 = vadd.f32 %v1746, %v2205
      %2207 = vmatmul.bf16.gmra.mxu0 %v1969
      %v2208 = vpop.f32.mrf.mxu0
      %v2209 = vadd.f32 %v1749, %v2208
      %v2210 = vpop.f32.mrf.mxu0
      %v2211 = vadd.f32 %v1751, %v2210
      %2212 = vmatmul.bf16.gmra.mxu0 %v1971
      %v2213 = vpop.f32.mrf.mxu0
      %v2214 = vadd.f32 %v1754, %v2213
      %v2215 = vpop.f32.mrf.mxu0
      %v2216 = vadd.f32 %v1756, %v2215
      %2217 = vmatmul.bf16.gmra.mxu0 %v1973
      %v2218 = vpop.f32.mrf.mxu0
      %v2219 = vadd.f32 %v1759, %v2218
      %v2220 = vpop.f32.mrf.mxu0
      %v2221 = vadd.f32 %v1761, %v2220
      %2222 = vmatmul.bf16.gmra.mxu0 %v1975
      %v2223 = vpop.f32.mrf.mxu0
      %v2224 = vadd.f32 %v1764, %v2223
      %v2225 = vpop.f32.mrf.mxu0
      %v2226 = vadd.f32 %v1766, %v2225
      %2227 = vmatmul.bf16.gmra.mxu0 %v1977
      %v2228 = vpop.f32.mrf.mxu0
      %v2229 = vadd.f32 %v1769, %v2228
      %v2230 = vpop.f32.mrf.mxu0
      %v2231 = vadd.f32 %v1771, %v2230
      %2232 = vmatmul.bf16.gmra.mxu0 %v1979
      %v2233 = vpop.f32.mrf.mxu0
      %v2234 = vadd.f32 %v1774, %v2233
      %v2235 = vpop.f32.mrf.mxu0
      %v2236 = vadd.f32 %v1776, %v2235
      %2237 = vmatmul.bf16.gmra.mxu0 %v1981
      %v2238 = vpop.f32.mrf.mxu0
      %v2239 = vadd.f32 %v1779, %v2238
      %v2240 = vpop.f32.mrf.mxu0
      %v2241 = vadd.f32 %v1781, %v2240
      %2242 = vmatmul.bf16.gmra.mxu0 %v1983
      %v2243 = vpop.f32.mrf.mxu0
      %v2244 = vadd.f32 %v1784, %v2243
      %v2245 = vpop.f32.mrf.mxu0
      %v2246 = vadd.f32 %v1786, %v2245
      %2247 = vmatmul.bf16.gmra.mxu0 %v1985
      %v2248 = vpop.f32.mrf.mxu0
      %v2249 = vadd.f32 %v1789, %v2248
      %v2250 = vpop.f32.mrf.mxu0
      %v2251 = vadd.f32 %v1791, %v2250
      %2252 = vmatmul.bf16.gmra.mxu0 %v1987
      %v2253 = vpop.f32.mrf.mxu0
      %v2254 = vadd.f32 %v1794, %v2253
      %v2255 = vpop.f32.mrf.mxu0
      %v2256 = vadd.f32 %v1796, %v2255
      %2257 = vmatmul.bf16.gmra.mxu0 %v1989
      %v2258 = vpop.f32.mrf.mxu0
      %v2259 = vadd.f32 %v1799, %v2258
      %v2260 = vpop.f32.mrf.mxu0
      %v2261 = vadd.f32 %v1801, %v2260
      %2262 = vmatmul.bf16.gmra.mxu0 %v1991
      %v2263 = vpop.f32.mrf.mxu0
      %v2264 = vadd.f32 %v1804, %v2263
      %v2265 = vpop.f32.mrf.mxu0
      %v2266 = vadd.f32 %v1806, %v2265
      %2267 = vmatmul.bf16.gmra.mxu0 %v1993
      %v2268 = vpop.f32.mrf.mxu0
      %v2269 = vadd.f32 %v1809, %v2268
      %v2270 = vpop.f32.mrf.mxu0
      %v2271 = vadd.f32 %v1811, %v2270
      %2272 = vmatmul.bf16.gmra.mxu0 %v1995
      %v2273 = vpop.f32.mrf.mxu0
      %v2274 = vadd.f32 %v1814, %v2273
      %v2275 = vpop.f32.mrf.mxu0
      %v2276 = vadd.f32 %v1816, %v2275
      %2277 = vmatmul.bf16.gmra.mxu0 %v1997
      %v2278 = vpop.f32.mrf.mxu0
      %v2279 = vadd.f32 %v1819, %v2278
      %v2280 = vpop.f32.mrf.mxu0
      %v2281 = vadd.f32 %v1821, %v2280
      %2282 = vmatmul.bf16.gmra.mxu0 %v1999
      %v2283 = vpop.f32.mrf.mxu0
      %v2284 = vadd.f32 %v1824, %v2283
      %v2285 = vpop.f32.mrf.mxu0
      %v2286 = vadd.f32 %v1826, %v2285
      %2287 = vmatmul.bf16.gmra.mxu0 %v2001
      %v2288 = vpop.f32.mrf.mxu0
      %v2289 = vadd.f32 %v1829, %v2288
      %v2290 = vpop.f32.mrf.mxu0
      %v2291 = vadd.f32 %v1831, %v2290
      %2292 = vmatmul.bf16.gmra.mxu0 %v2003
      %v2293 = vpop.f32.mrf.mxu0
      %v2294 = vadd.f32 %v1834, %v2293
      %v2295 = vpop.f32.mrf.mxu0
      %v2296 = vadd.f32 %v1836, %v2295
      %2297 = vmatmul.bf16.gmra.mxu0 %v2005
      %v2298 = vpop.f32.mrf.mxu0
      %v2299 = vadd.f32 %v1839, %v2298
      %v2300 = vpop.f32.mrf.mxu0
      %v2301 = vadd.f32 %v1841, %v2300
      %2302 = vmatmul.bf16.gmra.mxu0 %v2007
      %v2303 = vpop.f32.mrf.mxu0
      %v2304 = vadd.f32 %v1844, %v2303
      %v2305 = vpop.f32.mrf.mxu0
      %v2306 = vadd.f32 %v1846, %v2305
      %2307 = vmatmul.bf16.gmra.mxu0 %v2009
      %v2308 = vpop.f32.mrf.mxu0
      %v2309 = vadd.f32 %v1849, %v2308
      %v2310 = vpop.f32.mrf.mxu0
      %v2311 = vadd.f32 %v1851, %v2310
      %2312 = vmatmul.bf16.gmra.mxu0 %v2011
      %v2313 = vpop.f32.mrf.mxu0
      %v2314 = vadd.f32 %v1854, %v2313
      %v2315 = vpop.f32.mrf.mxu0
      %v2316 = vadd.f32 %v1856, %v2315
      %2317 = vmatmul.bf16.gmra.mxu0 %v2013
      %v2318 = vpop.f32.mrf.mxu0
      %v2319 = vadd.f32 %v1859, %v2318
      %v2320 = vpop.f32.mrf.mxu0
      %v2321 = vadd.f32 %v1861, %v2320
      %2322 = vmatmul.bf16.gmra.mxu0 %v2015
      %v2323 = vpop.f32.mrf.mxu0
      %v2324 = vadd.f32 %v1864, %v2323
      %v2325 = vpop.f32.mrf.mxu0
      %v2326 = vadd.f32 %v1866, %v2325
      %2327 = vmatmul.bf16.gmra.mxu0 %v2017
      %v2328 = vpop.f32.mrf.mxu0
      %v2329 = vadd.f32 %v1869, %v2328
      %v2330 = vpop.f32.mrf.mxu0
      %v2331 = vadd.f32 %v1871, %v2330
      %2332 = vmatmul.bf16.gmra.mxu0 %v2019
      %v2333 = vpop.f32.mrf.mxu0
      %v2334 = vadd.f32 %v1874, %v2333
      %v2335 = vpop.f32.mrf.mxu0
      %v2336 = vadd.f32 %v1876, %v2335
      %2337 = vmatmul.bf16.gmra.mxu0 %v2021
      %v2338 = vpop.f32.mrf.mxu0
      %v2339 = vadd.f32 %v1879, %v2338
      %v2340 = vpop.f32.mrf.mxu0
      %v2341 = vadd.f32 %v1881, %v2340
      %2342 = vmatmul.bf16.gmra.mxu0 %v2023
      %v2343 = vpop.f32.mrf.mxu0
      %v2344 = vadd.f32 %v1884, %v2343
      %v2345 = vpop.f32.mrf.mxu0
      %v2346 = vadd.f32 %v1886, %v2345
      %2347 = vmatmul.bf16.gmra.mxu0 %v2025
      %v2348 = vpop.f32.mrf.mxu0
      %v2349 = vadd.f32 %v1889, %v2348
      %v2350 = vpop.f32.mrf.mxu0
      %v2351 = vadd.f32 %v1891, %v2350
      %2352 = vmatmul.bf16.gmra.mxu0 %v2027
      %v2353 = vpop.f32.mrf.mxu0
      %v2354 = vadd.f32 %v1894, %v2353
      %v2355 = vpop.f32.mrf.mxu0
      %v2356 = vadd.f32 %v1896, %v2355
      %2357 = vmatmul.bf16.gmra.mxu0 %v2029
      %v2358 = vpop.f32.mrf.mxu0
      %v2359 = vadd.f32 %v1899, %v2358
      %v2360 = vpop.f32.mrf.mxu0
      %v2361 = vadd.f32 %v1901, %v2360
      %2362 = vdwg.mxu0
      %v2364 = vsel %vm1377, %v854, 0
      %v2367 = vsel %vm1377, %v855, 0
      %v2370 = vsel %vm1570, %v858, 0
      %2372 = vmatpush.bf16.msra.mxu0 0
      %2373 = vmatpush.bf16.msra.mxu0 0
      %2374 = vmatpush.bf16.msra.mxu0 0
      %2375 = vmatpush.bf16.msra.mxu0 0
      %2376 = vmatpush.bf16.msra.mxu0 0
      %2377 = vmatpush.bf16.msra.mxu0 0
      %2378 = vmatpush.bf16.msra.mxu0 0
      %2379 = vmatpush.bf16.msra.mxu0 %v2370
      %2380 = vmatmul.bf16.gmra.mxu0 %v1907
      %v2381 = vpop.f32.mrf.mxu0
      %v2382 = vadd.f32 0.0, %v2381
      %v2383 = vpop.f32.mrf.mxu0
      %v2384 = vadd.f32 0.0, %v2383
      %2385 = vmatmul.bf16.gmra.mxu0 %v1909
      %v2386 = vpop.f32.mrf.mxu0
      %v2387 = vadd.f32 0.0, %v2386
      %v2388 = vpop.f32.mrf.mxu0
      %v2389 = vadd.f32 0.0, %v2388
      %2390 = vmatmul.bf16.gmra.mxu0 %v1911
      %v2391 = vpop.f32.mrf.mxu0
      %v2392 = vadd.f32 0.0, %v2391
      %v2393 = vpop.f32.mrf.mxu0
      %v2394 = vadd.f32 0.0, %v2393
      %2395 = vmatmul.bf16.gmra.mxu0 %v1913
      %v2396 = vpop.f32.mrf.mxu0
      %v2397 = vadd.f32 0.0, %v2396
      %v2398 = vpop.f32.mrf.mxu0
      %v2399 = vadd.f32 0.0, %v2398
      %2400 = vmatmul.bf16.gmra.mxu0 %v1915
      %v2401 = vpop.f32.mrf.mxu0
      %v2402 = vadd.f32 0.0, %v2401
      %v2403 = vpop.f32.mrf.mxu0
      %v2404 = vadd.f32 0.0, %v2403
      %2405 = vmatmul.bf16.gmra.mxu0 %v1917
      %v2406 = vpop.f32.mrf.mxu0
      %v2407 = vadd.f32 0.0, %v2406
      %v2408 = vpop.f32.mrf.mxu0
      %v2409 = vadd.f32 0.0, %v2408
      %2410 = vmatmul.bf16.gmra.mxu0 %v1919
      %v2411 = vpop.f32.mrf.mxu0
      %v2412 = vadd.f32 0.0, %v2411
      %v2413 = vpop.f32.mrf.mxu0
      %v2414 = vadd.f32 0.0, %v2413
      %2415 = vmatmul.bf16.gmra.mxu0 %v1921
      %v2416 = vpop.f32.mrf.mxu0
      %v2417 = vadd.f32 0.0, %v2416
      %v2418 = vpop.f32.mrf.mxu0
      %v2419 = vadd.f32 0.0, %v2418
      %2420 = vmatmul.bf16.gmra.mxu0 %v1923
      %v2421 = vpop.f32.mrf.mxu0
      %v2422 = vadd.f32 0.0, %v2421
      %v2423 = vpop.f32.mrf.mxu0
      %v2424 = vadd.f32 0.0, %v2423
      %2425 = vmatmul.bf16.gmra.mxu0 %v1925
      %v2426 = vpop.f32.mrf.mxu0
      %v2427 = vadd.f32 0.0, %v2426
      %v2428 = vpop.f32.mrf.mxu0
      %v2429 = vadd.f32 0.0, %v2428
      %2430 = vmatmul.bf16.gmra.mxu0 %v1927
      %v2431 = vpop.f32.mrf.mxu0
      %v2432 = vadd.f32 0.0, %v2431
      %v2433 = vpop.f32.mrf.mxu0
      %v2434 = vadd.f32 0.0, %v2433
      %2435 = vmatmul.bf16.gmra.mxu0 %v1929
      %v2436 = vpop.f32.mrf.mxu0
      %v2437 = vadd.f32 0.0, %v2436
      %v2438 = vpop.f32.mrf.mxu0
      %v2439 = vadd.f32 0.0, %v2438
      %2440 = vmatmul.bf16.gmra.mxu0 %v1931
      %v2441 = vpop.f32.mrf.mxu0
      %v2442 = vadd.f32 0.0, %v2441
      %v2443 = vpop.f32.mrf.mxu0
      %v2444 = vadd.f32 0.0, %v2443
      %2445 = vmatmul.bf16.gmra.mxu0 %v1933
      %v2446 = vpop.f32.mrf.mxu0
      %v2447 = vadd.f32 0.0, %v2446
      %v2448 = vpop.f32.mrf.mxu0
      %v2449 = vadd.f32 0.0, %v2448
      %2450 = vmatmul.bf16.gmra.mxu0 %v1935
      %v2451 = vpop.f32.mrf.mxu0
      %v2452 = vadd.f32 0.0, %v2451
      %v2453 = vpop.f32.mrf.mxu0
      %v2454 = vadd.f32 0.0, %v2453
      %2455 = vmatmul.bf16.gmra.mxu0 %v1937
      %v2456 = vpop.f32.mrf.mxu0
      %v2457 = vadd.f32 0.0, %v2456
      %v2458 = vpop.f32.mrf.mxu0
      %v2459 = vadd.f32 0.0, %v2458
      %2460 = vmatmul.bf16.gmra.mxu0 %v1939
      %v2461 = vpop.f32.mrf.mxu0
      %v2462 = vadd.f32 0.0, %v2461
      %v2463 = vpop.f32.mrf.mxu0
      %v2464 = vadd.f32 0.0, %v2463
      %2465 = vmatmul.bf16.gmra.mxu0 %v1941
      %v2466 = vpop.f32.mrf.mxu0
      %v2467 = vadd.f32 0.0, %v2466
      %v2468 = vpop.f32.mrf.mxu0
      %v2469 = vadd.f32 0.0, %v2468
      %2470 = vmatmul.bf16.gmra.mxu0 %v1943
      %v2471 = vpop.f32.mrf.mxu0
      %v2472 = vadd.f32 0.0, %v2471
      %v2473 = vpop.f32.mrf.mxu0
      %v2474 = vadd.f32 0.0, %v2473
      %2475 = vmatmul.bf16.gmra.mxu0 %v1945
      %v2476 = vpop.f32.mrf.mxu0
      %v2477 = vadd.f32 0.0, %v2476
      %v2478 = vpop.f32.mrf.mxu0
      %v2479 = vadd.f32 0.0, %v2478
      %2480 = vmatmul.bf16.gmra.mxu0 %v1947
      %v2481 = vpop.f32.mrf.mxu0
      %v2482 = vadd.f32 0.0, %v2481
      %v2483 = vpop.f32.mrf.mxu0
      %v2484 = vadd.f32 0.0, %v2483
      %2485 = vmatmul.bf16.gmra.mxu0 %v1949
      %v2486 = vpop.f32.mrf.mxu0
      %v2487 = vadd.f32 0.0, %v2486
      %v2488 = vpop.f32.mrf.mxu0
      %v2489 = vadd.f32 0.0, %v2488
      %2490 = vmatmul.bf16.gmra.mxu0 %v1951
      %v2491 = vpop.f32.mrf.mxu0
      %v2492 = vadd.f32 0.0, %v2491
      %v2493 = vpop.f32.mrf.mxu0
      %v2494 = vadd.f32 0.0, %v2493
      %2495 = vmatmul.bf16.gmra.mxu0 %v1953
      %v2496 = vpop.f32.mrf.mxu0
      %v2497 = vadd.f32 0.0, %v2496
      %v2498 = vpop.f32.mrf.mxu0
      %v2499 = vadd.f32 0.0, %v2498
      %2500 = vmatmul.bf16.gmra.mxu0 %v1955
      %v2501 = vpop.f32.mrf.mxu0
      %v2502 = vadd.f32 0.0, %v2501
      %v2503 = vpop.f32.mrf.mxu0
      %v2504 = vadd.f32 0.0, %v2503
      %2505 = vmatmul.bf16.gmra.mxu0 %v1957
      %v2506 = vpop.f32.mrf.mxu0
      %v2507 = vadd.f32 0.0, %v2506
      %v2508 = vpop.f32.mrf.mxu0
      %v2509 = vadd.f32 0.0, %v2508
      %2510 = vmatmul.bf16.gmra.mxu0 %v1959
      %v2511 = vpop.f32.mrf.mxu0
      %v2512 = vadd.f32 0.0, %v2511
      %v2513 = vpop.f32.mrf.mxu0
      %v2514 = vadd.f32 0.0, %v2513
      %2515 = vmatmul.bf16.gmra.mxu0 %v1961
      %v2516 = vpop.f32.mrf.mxu0
      %v2517 = vadd.f32 0.0, %v2516
      %v2518 = vpop.f32.mrf.mxu0
      %v2519 = vadd.f32 0.0, %v2518
      %2520 = vmatmul.bf16.gmra.mxu0 %v1963
      %v2521 = vpop.f32.mrf.mxu0
      %v2522 = vadd.f32 0.0, %v2521
      %v2523 = vpop.f32.mrf.mxu0
      %v2524 = vadd.f32 0.0, %v2523
      %2525 = vmatmul.bf16.gmra.mxu0 %v1965
      %v2526 = vpop.f32.mrf.mxu0
      %v2527 = vadd.f32 0.0, %v2526
      %v2528 = vpop.f32.mrf.mxu0
      %v2529 = vadd.f32 0.0, %v2528
      %2530 = vmatmul.bf16.gmra.mxu0 %v1967
      %v2531 = vpop.f32.mrf.mxu0
      %v2532 = vadd.f32 0.0, %v2531
      %v2533 = vpop.f32.mrf.mxu0
      %v2534 = vadd.f32 0.0, %v2533
      %2535 = vmatmul.bf16.gmra.mxu0 %v1969
      %v2536 = vpop.f32.mrf.mxu0
      %v2537 = vadd.f32 0.0, %v2536
      %v2538 = vpop.f32.mrf.mxu0
      %v2539 = vadd.f32 0.0, %v2538
      %2540 = vmatmul.bf16.gmra.mxu0 %v1971
      %v2541 = vpop.f32.mrf.mxu0
      %v2542 = vadd.f32 0.0, %v2541
      %v2543 = vpop.f32.mrf.mxu0
      %v2544 = vadd.f32 0.0, %v2543
      %2545 = vmatmul.bf16.gmra.mxu0 %v1973
      %v2546 = vpop.f32.mrf.mxu0
      %v2547 = vadd.f32 0.0, %v2546
      %v2548 = vpop.f32.mrf.mxu0
      %v2549 = vadd.f32 0.0, %v2548
      %2550 = vmatmul.bf16.gmra.mxu0 %v1975
      %v2551 = vpop.f32.mrf.mxu0
      %v2552 = vadd.f32 0.0, %v2551
      %v2553 = vpop.f32.mrf.mxu0
      %v2554 = vadd.f32 0.0, %v2553
      %2555 = vmatmul.bf16.gmra.mxu0 %v1977
      %v2556 = vpop.f32.mrf.mxu0
      %v2557 = vadd.f32 0.0, %v2556
      %v2558 = vpop.f32.mrf.mxu0
      %v2559 = vadd.f32 0.0, %v2558
      %2560 = vmatmul.bf16.gmra.mxu0 %v1979
      %v2561 = vpop.f32.mrf.mxu0
      %v2562 = vadd.f32 0.0, %v2561
      %v2563 = vpop.f32.mrf.mxu0
      %v2564 = vadd.f32 0.0, %v2563
      %2565 = vmatmul.bf16.gmra.mxu0 %v1981
      %v2566 = vpop.f32.mrf.mxu0
      %v2567 = vadd.f32 0.0, %v2566
      %v2568 = vpop.f32.mrf.mxu0
      %v2569 = vadd.f32 0.0, %v2568
      %2570 = vmatmul.bf16.gmra.mxu0 %v1983
      %v2571 = vpop.f32.mrf.mxu0
      %v2572 = vadd.f32 0.0, %v2571
      %v2573 = vpop.f32.mrf.mxu0
      %v2574 = vadd.f32 0.0, %v2573
      %2575 = vmatmul.bf16.gmra.mxu0 %v1985
      %v2576 = vpop.f32.mrf.mxu0
      %v2577 = vadd.f32 0.0, %v2576
      %v2578 = vpop.f32.mrf.mxu0
      %v2579 = vadd.f32 0.0, %v2578
      %2580 = vmatmul.bf16.gmra.mxu0 %v1987
      %v2581 = vpop.f32.mrf.mxu0
      %v2582 = vadd.f32 0.0, %v2581
      %v2583 = vpop.f32.mrf.mxu0
      %v2584 = vadd.f32 0.0, %v2583
      %2585 = vmatmul.bf16.gmra.mxu0 %v1989
      %v2586 = vpop.f32.mrf.mxu0
      %v2587 = vadd.f32 0.0, %v2586
      %v2588 = vpop.f32.mrf.mxu0
      %v2589 = vadd.f32 0.0, %v2588
      %2590 = vmatmul.bf16.gmra.mxu0 %v1991
      %v2591 = vpop.f32.mrf.mxu0
      %v2592 = vadd.f32 0.0, %v2591
      %v2593 = vpop.f32.mrf.mxu0
      %v2594 = vadd.f32 0.0, %v2593
      %2595 = vmatmul.bf16.gmra.mxu0 %v1993
      %v2596 = vpop.f32.mrf.mxu0
      %v2597 = vadd.f32 0.0, %v2596
      %v2598 = vpop.f32.mrf.mxu0
      %v2599 = vadd.f32 0.0, %v2598
      %2600 = vmatmul.bf16.gmra.mxu0 %v1995
      %v2601 = vpop.f32.mrf.mxu0
      %v2602 = vadd.f32 0.0, %v2601
      %v2603 = vpop.f32.mrf.mxu0
      %v2604 = vadd.f32 0.0, %v2603
      %2605 = vmatmul.bf16.gmra.mxu0 %v1997
      %v2606 = vpop.f32.mrf.mxu0
      %v2607 = vadd.f32 0.0, %v2606
      %v2608 = vpop.f32.mrf.mxu0
      %v2609 = vadd.f32 0.0, %v2608
      %2610 = vmatmul.bf16.gmra.mxu0 %v1999
      %v2611 = vpop.f32.mrf.mxu0
      %v2612 = vadd.f32 0.0, %v2611
      %v2613 = vpop.f32.mrf.mxu0
      %v2614 = vadd.f32 0.0, %v2613
      %2615 = vmatmul.bf16.gmra.mxu0 %v2001
      %v2616 = vpop.f32.mrf.mxu0
      %v2617 = vadd.f32 0.0, %v2616
      %v2618 = vpop.f32.mrf.mxu0
      %v2619 = vadd.f32 0.0, %v2618
      %2620 = vmatmul.bf16.gmra.mxu0 %v2003
      %v2621 = vpop.f32.mrf.mxu0
      %v2622 = vadd.f32 0.0, %v2621
      %v2623 = vpop.f32.mrf.mxu0
      %v2624 = vadd.f32 0.0, %v2623
      %2625 = vmatmul.bf16.gmra.mxu0 %v2005
      %v2626 = vpop.f32.mrf.mxu0
      %v2627 = vadd.f32 0.0, %v2626
      %v2628 = vpop.f32.mrf.mxu0
      %v2629 = vadd.f32 0.0, %v2628
      %2630 = vmatmul.bf16.gmra.mxu0 %v2007
      %v2631 = vpop.f32.mrf.mxu0
      %v2632 = vadd.f32 0.0, %v2631
      %v2633 = vpop.f32.mrf.mxu0
      %v2634 = vadd.f32 0.0, %v2633
      %2635 = vmatmul.bf16.gmra.mxu0 %v2009
      %v2636 = vpop.f32.mrf.mxu0
      %v2637 = vadd.f32 0.0, %v2636
      %v2638 = vpop.f32.mrf.mxu0
      %v2639 = vadd.f32 0.0, %v2638
      %2640 = vmatmul.bf16.gmra.mxu0 %v2011
      %v2641 = vpop.f32.mrf.mxu0
      %v2642 = vadd.f32 0.0, %v2641
      %v2643 = vpop.f32.mrf.mxu0
      %v2644 = vadd.f32 0.0, %v2643
      %2645 = vmatmul.bf16.gmra.mxu0 %v2013
      %v2646 = vpop.f32.mrf.mxu0
      %v2647 = vadd.f32 0.0, %v2646
      %v2648 = vpop.f32.mrf.mxu0
      %v2649 = vadd.f32 0.0, %v2648
      %2650 = vmatmul.bf16.gmra.mxu0 %v2015
      %v2651 = vpop.f32.mrf.mxu0
      %v2652 = vadd.f32 0.0, %v2651
      %v2653 = vpop.f32.mrf.mxu0
      %v2654 = vadd.f32 0.0, %v2653
      %2655 = vmatmul.bf16.gmra.mxu0 %v2017
      %v2656 = vpop.f32.mrf.mxu0
      %v2657 = vadd.f32 0.0, %v2656
      %v2658 = vpop.f32.mrf.mxu0
      %v2659 = vadd.f32 0.0, %v2658
      %2660 = vmatmul.bf16.gmra.mxu0 %v2019
      %v2661 = vpop.f32.mrf.mxu0
      %v2662 = vadd.f32 0.0, %v2661
      %v2663 = vpop.f32.mrf.mxu0
      %v2664 = vadd.f32 0.0, %v2663
      %2665 = vmatmul.bf16.gmra.mxu0 %v2021
      %v2666 = vpop.f32.mrf.mxu0
      %v2667 = vadd.f32 0.0, %v2666
      %v2668 = vpop.f32.mrf.mxu0
      %v2669 = vadd.f32 0.0, %v2668
      %2670 = vmatmul.bf16.gmra.mxu0 %v2023
      %v2671 = vpop.f32.mrf.mxu0
      %v2672 = vadd.f32 0.0, %v2671
      %v2673 = vpop.f32.mrf.mxu0
      %v2674 = vadd.f32 0.0, %v2673
      %2675 = vmatmul.bf16.gmra.mxu0 %v2025
      %v2676 = vpop.f32.mrf.mxu0
      %v2677 = vadd.f32 0.0, %v2676
      %v2678 = vpop.f32.mrf.mxu0
      %v2679 = vadd.f32 0.0, %v2678
      %2680 = vmatmul.bf16.gmra.mxu0 %v2027
      %v2681 = vpop.f32.mrf.mxu0
      %v2682 = vadd.f32 0.0, %v2681
      %v2683 = vpop.f32.mrf.mxu0
      %v2684 = vadd.f32 0.0, %v2683
      %2685 = vmatmul.bf16.gmra.mxu0 %v2029
      %v2686 = vpop.f32.mrf.mxu0
      %v2687 = vadd.f32 0.0, %v2686
      %v2688 = vpop.f32.mrf.mxu0
      %v2689 = vadd.f32 0.0, %v2688
      %2690 = vmatmul.bf16.gmra.mxu0 %v2364
      %v2691 = vpop.f32.mrf.mxu0
      %v2692 = vadd.f32 0.0, %v2691
      %v2693 = vpop.f32.mrf.mxu0
      %v2694 = vadd.f32 0.0, %v2693
      %2695 = vmatmul.bf16.gmra.mxu0 %v2367
      %v2696 = vpop.f32.mrf.mxu0
      %v2697 = vadd.f32 0.0, %v2696
      %v2698 = vpop.f32.mrf.mxu0
      %v2699 = vadd.f32 0.0, %v2698
      %2700 = vdwg.mxu0
      %v2701 = vadd.f32 %v2044, %v2382
      %v2702 = vadd.f32 %v2046, %v2384
      %v2703 = vadd.f32 %v2049, %v2387
      %v2704 = vadd.f32 %v2051, %v2389
      %v2705 = vadd.f32 %v2054, %v2392
      %v2706 = vadd.f32 %v2056, %v2394
      %v2707 = vadd.f32 %v2059, %v2397
      %v2708 = vadd.f32 %v2061, %v2399
      %v2709 = vadd.f32 %v2064, %v2402
      %v2710 = vadd.f32 %v2066, %v2404
      %v2711 = vadd.f32 %v2069, %v2407
      %v2712 = vadd.f32 %v2071, %v2409
      %v2713 = vadd.f32 %v2074, %v2412
      %v2714 = vadd.f32 %v2076, %v2414
      %v2715 = vadd.f32 %v2079, %v2417
      %v2716 = vadd.f32 %v2081, %v2419
      %v2717 = vadd.f32 %v2084, %v2422
      %v2718 = vadd.f32 %v2086, %v2424
      %v2719 = vadd.f32 %v2089, %v2427
      %v2720 = vadd.f32 %v2091, %v2429
      %v2721 = vadd.f32 %v2094, %v2432
      %v2722 = vadd.f32 %v2096, %v2434
      %v2723 = vadd.f32 %v2099, %v2437
      %v2724 = vadd.f32 %v2101, %v2439
      %v2725 = vadd.f32 %v2104, %v2442
      %v2726 = vadd.f32 %v2106, %v2444
      %v2727 = vadd.f32 %v2109, %v2447
      %v2728 = vadd.f32 %v2111, %v2449
      %v2729 = vadd.f32 %v2114, %v2452
      %v2730 = vadd.f32 %v2116, %v2454
      %v2731 = vadd.f32 %v2119, %v2457
      %v2732 = vadd.f32 %v2121, %v2459
      %v2733 = vadd.f32 %v2124, %v2462
      %v2734 = vadd.f32 %v2126, %v2464
      %v2735 = vadd.f32 %v2129, %v2467
      %v2736 = vadd.f32 %v2131, %v2469
      %v2737 = vadd.f32 %v2134, %v2472
      %v2738 = vadd.f32 %v2136, %v2474
      %v2739 = vadd.f32 %v2139, %v2477
      %v2740 = vadd.f32 %v2141, %v2479
      %v2741 = vadd.f32 %v2144, %v2482
      %v2742 = vadd.f32 %v2146, %v2484
      %v2743 = vadd.f32 %v2149, %v2487
      %v2744 = vadd.f32 %v2151, %v2489
      %v2745 = vadd.f32 %v2154, %v2492
      %v2746 = vadd.f32 %v2156, %v2494
      %v2747 = vadd.f32 %v2159, %v2497
      %v2748 = vadd.f32 %v2161, %v2499
      %v2749 = vadd.f32 %v2164, %v2502
      %v2750 = vadd.f32 %v2166, %v2504
      %v2751 = vadd.f32 %v2169, %v2507
      %v2752 = vadd.f32 %v2171, %v2509
      %v2753 = vadd.f32 %v2174, %v2512
      %v2754 = vadd.f32 %v2176, %v2514
      %v2755 = vadd.f32 %v2179, %v2517
      %v2756 = vadd.f32 %v2181, %v2519
      %v2757 = vadd.f32 %v2184, %v2522
      %v2758 = vadd.f32 %v2186, %v2524
      %v2759 = vadd.f32 %v2189, %v2527
      %v2760 = vadd.f32 %v2191, %v2529
      %v2761 = vadd.f32 %v2194, %v2532
      %v2762 = vadd.f32 %v2196, %v2534
      %v2763 = vadd.f32 %v2199, %v2537
      %v2764 = vadd.f32 %v2201, %v2539
      %v2765 = vadd.f32 %v2204, %v2542
      %v2766 = vadd.f32 %v2206, %v2544
      %v2767 = vadd.f32 %v2209, %v2547
      %v2768 = vadd.f32 %v2211, %v2549
      %v2769 = vadd.f32 %v2214, %v2552
      %v2770 = vadd.f32 %v2216, %v2554
      %v2771 = vadd.f32 %v2219, %v2557
      %v2772 = vadd.f32 %v2221, %v2559
      %v2773 = vadd.f32 %v2224, %v2562
      %v2774 = vadd.f32 %v2226, %v2564
      %v2775 = vadd.f32 %v2229, %v2567
      %v2776 = vadd.f32 %v2231, %v2569
      %v2777 = vadd.f32 %v2234, %v2572
      %v2778 = vadd.f32 %v2236, %v2574
      %v2779 = vadd.f32 %v2239, %v2577
      %v2780 = vadd.f32 %v2241, %v2579
      %v2781 = vadd.f32 %v2244, %v2582
      %v2782 = vadd.f32 %v2246, %v2584
      %v2783 = vadd.f32 %v2249, %v2587
      %v2784 = vadd.f32 %v2251, %v2589
      %v2785 = vadd.f32 %v2254, %v2592
      %v2786 = vadd.f32 %v2256, %v2594
      %v2787 = vadd.f32 %v2259, %v2597
      %v2788 = vadd.f32 %v2261, %v2599
      %v2789 = vadd.f32 %v2264, %v2602
      %v2790 = vadd.f32 %v2266, %v2604
      %v2791 = vadd.f32 %v2269, %v2607
      %v2792 = vadd.f32 %v2271, %v2609
      %v2793 = vadd.f32 %v2274, %v2612
      %v2794 = vadd.f32 %v2276, %v2614
      %v2795 = vadd.f32 %v2279, %v2617
      %v2796 = vadd.f32 %v2281, %v2619
      %v2797 = vadd.f32 %v2284, %v2622
      %v2798 = vadd.f32 %v2286, %v2624
      %v2799 = vadd.f32 %v2289, %v2627
      %v2800 = vadd.f32 %v2291, %v2629
      %v2801 = vadd.f32 %v2294, %v2632
      %v2802 = vadd.f32 %v2296, %v2634
      %v2803 = vadd.f32 %v2299, %v2637
      %v2804 = vadd.f32 %v2301, %v2639
      %v2805 = vadd.f32 %v2304, %v2642
      %v2806 = vadd.f32 %v2306, %v2644
      %v2807 = vadd.f32 %v2309, %v2647
      %v2808 = vadd.f32 %v2311, %v2649
      %v2809 = vadd.f32 %v2314, %v2652
      %v2810 = vadd.f32 %v2316, %v2654
      %v2811 = vadd.f32 %v2319, %v2657
      %v2812 = vadd.f32 %v2321, %v2659
      %v2813 = vadd.f32 %v2324, %v2662
      %v2814 = vadd.f32 %v2326, %v2664
      %v2815 = vadd.f32 %v2329, %v2667
      %v2816 = vadd.f32 %v2331, %v2669
      %v2817 = vadd.f32 %v2334, %v2672
      %v2818 = vadd.f32 %v2336, %v2674
      %v2819 = vadd.f32 %v2339, %v2677
      %v2820 = vadd.f32 %v2341, %v2679
      %v2821 = vadd.f32 %v2344, %v2682
      %v2822 = vadd.f32 %v2346, %v2684
      %v2823 = vadd.f32 %v2349, %v2687
      %v2824 = vadd.f32 %v2351, %v2689
      %v2825 = vadd.f32 %v2354, %v2692
      %v2826 = vadd.f32 %v2356, %v2694
      %v2827 = vadd.f32 %v2359, %v2697
      %v2828 = vadd.f32 %v2361, %v2699
      %v2829 = vshrl.u32 %v854, 16
      %v2831 = vshll.u32 %v854, 16
      %v2833 = vrot.slane %v2831, 1
      %v2834 = vor.u32 %v2829, %v2833
      %v2835 = vshll.u32 %v855, 16
      %v2837 = vrot.slane %v2835, 1
      %v2838 = vsel %vm860, %v2834, %v2837
      %v2839 = vshrl.u32 %v855, 16
      %v2841 = vor.u32 %v2839, %v2837
      %v2842 = vsel %vm860, %v2841, %v879
      %v2844 = vsel %vm1377, %v2838, 0
      %v2847 = vsel %vm1377, %v2842, 0
      %v2850 = vsel %vm1570, %v859, 0
      %2852 = vmatpush.bf16.msra.mxu0 0
      %2853 = vmatpush.bf16.msra.mxu0 0
      %2854 = vmatpush.bf16.msra.mxu0 0
      %2855 = vmatpush.bf16.msra.mxu0 0
      %2856 = vmatpush.bf16.msra.mxu0 0
      %2857 = vmatpush.bf16.msra.mxu0 0
      %2858 = vmatpush.bf16.msra.mxu0 0
      %2859 = vmatpush.bf16.msra.mxu0 %v2850
      %2860 = vmatmul.bf16.gmra.mxu0 %v1385
      %v2861 = vpop.f32.mrf.mxu0
      %v2862 = vadd.f32 0.0, %v2861
      %v2863 = vpop.f32.mrf.mxu0
      %v2864 = vadd.f32 0.0, %v2863
      %2865 = vmatmul.bf16.gmra.mxu0 %v1388
      %v2866 = vpop.f32.mrf.mxu0
      %v2867 = vadd.f32 0.0, %v2866
      %v2868 = vpop.f32.mrf.mxu0
      %v2869 = vadd.f32 0.0, %v2868
      %2870 = vmatmul.bf16.gmra.mxu0 %v1391
      %v2871 = vpop.f32.mrf.mxu0
      %v2872 = vadd.f32 0.0, %v2871
      %v2873 = vpop.f32.mrf.mxu0
      %v2874 = vadd.f32 0.0, %v2873
      %2875 = vmatmul.bf16.gmra.mxu0 %v1394
      %v2876 = vpop.f32.mrf.mxu0
      %v2877 = vadd.f32 0.0, %v2876
      %v2878 = vpop.f32.mrf.mxu0
      %v2879 = vadd.f32 0.0, %v2878
      %2880 = vmatmul.bf16.gmra.mxu0 %v1397
      %v2881 = vpop.f32.mrf.mxu0
      %v2882 = vadd.f32 0.0, %v2881
      %v2883 = vpop.f32.mrf.mxu0
      %v2884 = vadd.f32 0.0, %v2883
      %2885 = vmatmul.bf16.gmra.mxu0 %v1400
      %v2886 = vpop.f32.mrf.mxu0
      %v2887 = vadd.f32 0.0, %v2886
      %v2888 = vpop.f32.mrf.mxu0
      %v2889 = vadd.f32 0.0, %v2888
      %2890 = vmatmul.bf16.gmra.mxu0 %v1403
      %v2891 = vpop.f32.mrf.mxu0
      %v2892 = vadd.f32 0.0, %v2891
      %v2893 = vpop.f32.mrf.mxu0
      %v2894 = vadd.f32 0.0, %v2893
      %2895 = vmatmul.bf16.gmra.mxu0 %v1406
      %v2896 = vpop.f32.mrf.mxu0
      %v2897 = vadd.f32 0.0, %v2896
      %v2898 = vpop.f32.mrf.mxu0
      %v2899 = vadd.f32 0.0, %v2898
      %2900 = vmatmul.bf16.gmra.mxu0 %v1409
      %v2901 = vpop.f32.mrf.mxu0
      %v2902 = vadd.f32 0.0, %v2901
      %v2903 = vpop.f32.mrf.mxu0
      %v2904 = vadd.f32 0.0, %v2903
      %2905 = vmatmul.bf16.gmra.mxu0 %v1412
      %v2906 = vpop.f32.mrf.mxu0
      %v2907 = vadd.f32 0.0, %v2906
      %v2908 = vpop.f32.mrf.mxu0
      %v2909 = vadd.f32 0.0, %v2908
      %2910 = vmatmul.bf16.gmra.mxu0 %v1415
      %v2911 = vpop.f32.mrf.mxu0
      %v2912 = vadd.f32 0.0, %v2911
      %v2913 = vpop.f32.mrf.mxu0
      %v2914 = vadd.f32 0.0, %v2913
      %2915 = vmatmul.bf16.gmra.mxu0 %v1418
      %v2916 = vpop.f32.mrf.mxu0
      %v2917 = vadd.f32 0.0, %v2916
      %v2918 = vpop.f32.mrf.mxu0
      %v2919 = vadd.f32 0.0, %v2918
      %2920 = vmatmul.bf16.gmra.mxu0 %v1421
      %v2921 = vpop.f32.mrf.mxu0
      %v2922 = vadd.f32 0.0, %v2921
      %v2923 = vpop.f32.mrf.mxu0
      %v2924 = vadd.f32 0.0, %v2923
      %2925 = vmatmul.bf16.gmra.mxu0 %v1424
      %v2926 = vpop.f32.mrf.mxu0
      %v2927 = vadd.f32 0.0, %v2926
      %v2928 = vpop.f32.mrf.mxu0
      %v2929 = vadd.f32 0.0, %v2928
      %2930 = vmatmul.bf16.gmra.mxu0 %v1427
      %v2931 = vpop.f32.mrf.mxu0
      %v2932 = vadd.f32 0.0, %v2931
      %v2933 = vpop.f32.mrf.mxu0
      %v2934 = vadd.f32 0.0, %v2933
      %2935 = vmatmul.bf16.gmra.mxu0 %v1430
      %v2936 = vpop.f32.mrf.mxu0
      %v2937 = vadd.f32 0.0, %v2936
      %v2938 = vpop.f32.mrf.mxu0
      %v2939 = vadd.f32 0.0, %v2938
      %2940 = vmatmul.bf16.gmra.mxu0 %v1433
      %v2941 = vpop.f32.mrf.mxu0
      %v2942 = vadd.f32 0.0, %v2941
      %v2943 = vpop.f32.mrf.mxu0
      %v2944 = vadd.f32 0.0, %v2943
      %2945 = vmatmul.bf16.gmra.mxu0 %v1436
      %v2946 = vpop.f32.mrf.mxu0
      %v2947 = vadd.f32 0.0, %v2946
      %v2948 = vpop.f32.mrf.mxu0
      %v2949 = vadd.f32 0.0, %v2948
      %2950 = vmatmul.bf16.gmra.mxu0 %v1439
      %v2951 = vpop.f32.mrf.mxu0
      %v2952 = vadd.f32 0.0, %v2951
      %v2953 = vpop.f32.mrf.mxu0
      %v2954 = vadd.f32 0.0, %v2953
      %2955 = vmatmul.bf16.gmra.mxu0 %v1442
      %v2956 = vpop.f32.mrf.mxu0
      %v2957 = vadd.f32 0.0, %v2956
      %v2958 = vpop.f32.mrf.mxu0
      %v2959 = vadd.f32 0.0, %v2958
      %2960 = vmatmul.bf16.gmra.mxu0 %v1445
      %v2961 = vpop.f32.mrf.mxu0
      %v2962 = vadd.f32 0.0, %v2961
      %v2963 = vpop.f32.mrf.mxu0
      %v2964 = vadd.f32 0.0, %v2963
      %2965 = vmatmul.bf16.gmra.mxu0 %v1448
      %v2966 = vpop.f32.mrf.mxu0
      %v2967 = vadd.f32 0.0, %v2966
      %v2968 = vpop.f32.mrf.mxu0
      %v2969 = vadd.f32 0.0, %v2968
      %2970 = vmatmul.bf16.gmra.mxu0 %v1451
      %v2971 = vpop.f32.mrf.mxu0
      %v2972 = vadd.f32 0.0, %v2971
      %v2973 = vpop.f32.mrf.mxu0
      %v2974 = vadd.f32 0.0, %v2973
      %2975 = vmatmul.bf16.gmra.mxu0 %v1454
      %v2976 = vpop.f32.mrf.mxu0
      %v2977 = vadd.f32 0.0, %v2976
      %v2978 = vpop.f32.mrf.mxu0
      %v2979 = vadd.f32 0.0, %v2978
      %2980 = vmatmul.bf16.gmra.mxu0 %v1457
      %v2981 = vpop.f32.mrf.mxu0
      %v2982 = vadd.f32 0.0, %v2981
      %v2983 = vpop.f32.mrf.mxu0
      %v2984 = vadd.f32 0.0, %v2983
      %2985 = vmatmul.bf16.gmra.mxu0 %v1460
      %v2986 = vpop.f32.mrf.mxu0
      %v2987 = vadd.f32 0.0, %v2986
      %v2988 = vpop.f32.mrf.mxu0
      %v2989 = vadd.f32 0.0, %v2988
      %2990 = vmatmul.bf16.gmra.mxu0 %v1463
      %v2991 = vpop.f32.mrf.mxu0
      %v2992 = vadd.f32 0.0, %v2991
      %v2993 = vpop.f32.mrf.mxu0
      %v2994 = vadd.f32 0.0, %v2993
      %2995 = vmatmul.bf16.gmra.mxu0 %v1466
      %v2996 = vpop.f32.mrf.mxu0
      %v2997 = vadd.f32 0.0, %v2996
      %v2998 = vpop.f32.mrf.mxu0
      %v2999 = vadd.f32 0.0, %v2998
      %3000 = vmatmul.bf16.gmra.mxu0 %v1469
      %v3001 = vpop.f32.mrf.mxu0
      %v3002 = vadd.f32 0.0, %v3001
      %v3003 = vpop.f32.mrf.mxu0
      %v3004 = vadd.f32 0.0, %v3003
      %3005 = vmatmul.bf16.gmra.mxu0 %v1472
      %v3006 = vpop.f32.mrf.mxu0
      %v3007 = vadd.f32 0.0, %v3006
      %v3008 = vpop.f32.mrf.mxu0
      %v3009 = vadd.f32 0.0, %v3008
      %3010 = vmatmul.bf16.gmra.mxu0 %v1475
      %v3011 = vpop.f32.mrf.mxu0
      %v3012 = vadd.f32 0.0, %v3011
      %v3013 = vpop.f32.mrf.mxu0
      %v3014 = vadd.f32 0.0, %v3013
      %3015 = vmatmul.bf16.gmra.mxu0 %v1478
      %v3016 = vpop.f32.mrf.mxu0
      %v3017 = vadd.f32 0.0, %v3016
      %v3018 = vpop.f32.mrf.mxu0
      %v3019 = vadd.f32 0.0, %v3018
      %3020 = vmatmul.bf16.gmra.mxu0 %v1481
      %v3021 = vpop.f32.mrf.mxu0
      %v3022 = vadd.f32 0.0, %v3021
      %v3023 = vpop.f32.mrf.mxu0
      %v3024 = vadd.f32 0.0, %v3023
      %3025 = vmatmul.bf16.gmra.mxu0 %v1484
      %v3026 = vpop.f32.mrf.mxu0
      %v3027 = vadd.f32 0.0, %v3026
      %v3028 = vpop.f32.mrf.mxu0
      %v3029 = vadd.f32 0.0, %v3028
      %3030 = vmatmul.bf16.gmra.mxu0 %v1487
      %v3031 = vpop.f32.mrf.mxu0
      %v3032 = vadd.f32 0.0, %v3031
      %v3033 = vpop.f32.mrf.mxu0
      %v3034 = vadd.f32 0.0, %v3033
      %3035 = vmatmul.bf16.gmra.mxu0 %v1490
      %v3036 = vpop.f32.mrf.mxu0
      %v3037 = vadd.f32 0.0, %v3036
      %v3038 = vpop.f32.mrf.mxu0
      %v3039 = vadd.f32 0.0, %v3038
      %3040 = vmatmul.bf16.gmra.mxu0 %v1493
      %v3041 = vpop.f32.mrf.mxu0
      %v3042 = vadd.f32 0.0, %v3041
      %v3043 = vpop.f32.mrf.mxu0
      %v3044 = vadd.f32 0.0, %v3043
      %3045 = vmatmul.bf16.gmra.mxu0 %v1496
      %v3046 = vpop.f32.mrf.mxu0
      %v3047 = vadd.f32 0.0, %v3046
      %v3048 = vpop.f32.mrf.mxu0
      %v3049 = vadd.f32 0.0, %v3048
      %3050 = vmatmul.bf16.gmra.mxu0 %v1499
      %v3051 = vpop.f32.mrf.mxu0
      %v3052 = vadd.f32 0.0, %v3051
      %v3053 = vpop.f32.mrf.mxu0
      %v3054 = vadd.f32 0.0, %v3053
      %3055 = vmatmul.bf16.gmra.mxu0 %v1502
      %v3056 = vpop.f32.mrf.mxu0
      %v3057 = vadd.f32 0.0, %v3056
      %v3058 = vpop.f32.mrf.mxu0
      %v3059 = vadd.f32 0.0, %v3058
      %3060 = vmatmul.bf16.gmra.mxu0 %v1505
      %v3061 = vpop.f32.mrf.mxu0
      %v3062 = vadd.f32 0.0, %v3061
      %v3063 = vpop.f32.mrf.mxu0
      %v3064 = vadd.f32 0.0, %v3063
      %3065 = vmatmul.bf16.gmra.mxu0 %v1508
      %v3066 = vpop.f32.mrf.mxu0
      %v3067 = vadd.f32 0.0, %v3066
      %v3068 = vpop.f32.mrf.mxu0
      %v3069 = vadd.f32 0.0, %v3068
      %3070 = vmatmul.bf16.gmra.mxu0 %v1511
      %v3071 = vpop.f32.mrf.mxu0
      %v3072 = vadd.f32 0.0, %v3071
      %v3073 = vpop.f32.mrf.mxu0
      %v3074 = vadd.f32 0.0, %v3073
      %3075 = vmatmul.bf16.gmra.mxu0 %v1514
      %v3076 = vpop.f32.mrf.mxu0
      %v3077 = vadd.f32 0.0, %v3076
      %v3078 = vpop.f32.mrf.mxu0
      %v3079 = vadd.f32 0.0, %v3078
      %3080 = vmatmul.bf16.gmra.mxu0 %v1517
      %v3081 = vpop.f32.mrf.mxu0
      %v3082 = vadd.f32 0.0, %v3081
      %v3083 = vpop.f32.mrf.mxu0
      %v3084 = vadd.f32 0.0, %v3083
      %3085 = vmatmul.bf16.gmra.mxu0 %v1520
      %v3086 = vpop.f32.mrf.mxu0
      %v3087 = vadd.f32 0.0, %v3086
      %v3088 = vpop.f32.mrf.mxu0
      %v3089 = vadd.f32 0.0, %v3088
      %3090 = vmatmul.bf16.gmra.mxu0 %v1523
      %v3091 = vpop.f32.mrf.mxu0
      %v3092 = vadd.f32 0.0, %v3091
      %v3093 = vpop.f32.mrf.mxu0
      %v3094 = vadd.f32 0.0, %v3093
      %3095 = vmatmul.bf16.gmra.mxu0 %v1526
      %v3096 = vpop.f32.mrf.mxu0
      %v3097 = vadd.f32 0.0, %v3096
      %v3098 = vpop.f32.mrf.mxu0
      %v3099 = vadd.f32 0.0, %v3098
      %3100 = vmatmul.bf16.gmra.mxu0 %v1529
      %v3101 = vpop.f32.mrf.mxu0
      %v3102 = vadd.f32 0.0, %v3101
      %v3103 = vpop.f32.mrf.mxu0
      %v3104 = vadd.f32 0.0, %v3103
      %3105 = vmatmul.bf16.gmra.mxu0 %v1532
      %v3106 = vpop.f32.mrf.mxu0
      %v3107 = vadd.f32 0.0, %v3106
      %v3108 = vpop.f32.mrf.mxu0
      %v3109 = vadd.f32 0.0, %v3108
      %3110 = vmatmul.bf16.gmra.mxu0 %v1535
      %v3111 = vpop.f32.mrf.mxu0
      %v3112 = vadd.f32 0.0, %v3111
      %v3113 = vpop.f32.mrf.mxu0
      %v3114 = vadd.f32 0.0, %v3113
      %3115 = vmatmul.bf16.gmra.mxu0 %v1538
      %v3116 = vpop.f32.mrf.mxu0
      %v3117 = vadd.f32 0.0, %v3116
      %v3118 = vpop.f32.mrf.mxu0
      %v3119 = vadd.f32 0.0, %v3118
      %3120 = vmatmul.bf16.gmra.mxu0 %v1541
      %v3121 = vpop.f32.mrf.mxu0
      %v3122 = vadd.f32 0.0, %v3121
      %v3123 = vpop.f32.mrf.mxu0
      %v3124 = vadd.f32 0.0, %v3123
      %3125 = vmatmul.bf16.gmra.mxu0 %v1544
      %v3126 = vpop.f32.mrf.mxu0
      %v3127 = vadd.f32 0.0, %v3126
      %v3128 = vpop.f32.mrf.mxu0
      %v3129 = vadd.f32 0.0, %v3128
      %3130 = vmatmul.bf16.gmra.mxu0 %v1547
      %v3131 = vpop.f32.mrf.mxu0
      %v3132 = vadd.f32 0.0, %v3131
      %v3133 = vpop.f32.mrf.mxu0
      %v3134 = vadd.f32 0.0, %v3133
      %3135 = vmatmul.bf16.gmra.mxu0 %v1550
      %v3136 = vpop.f32.mrf.mxu0
      %v3137 = vadd.f32 0.0, %v3136
      %v3138 = vpop.f32.mrf.mxu0
      %v3139 = vadd.f32 0.0, %v3138
      %3140 = vmatmul.bf16.gmra.mxu0 %v1553
      %v3141 = vpop.f32.mrf.mxu0
      %v3142 = vadd.f32 0.0, %v3141
      %v3143 = vpop.f32.mrf.mxu0
      %v3144 = vadd.f32 0.0, %v3143
      %3145 = vmatmul.bf16.gmra.mxu0 %v1556
      %v3146 = vpop.f32.mrf.mxu0
      %v3147 = vadd.f32 0.0, %v3146
      %v3148 = vpop.f32.mrf.mxu0
      %v3149 = vadd.f32 0.0, %v3148
      %3150 = vmatmul.bf16.gmra.mxu0 %v1559
      %v3151 = vpop.f32.mrf.mxu0
      %v3152 = vadd.f32 0.0, %v3151
      %v3153 = vpop.f32.mrf.mxu0
      %v3154 = vadd.f32 0.0, %v3153
      %3155 = vmatmul.bf16.gmra.mxu0 %v1562
      %v3156 = vpop.f32.mrf.mxu0
      %v3157 = vadd.f32 0.0, %v3156
      %v3158 = vpop.f32.mrf.mxu0
      %v3159 = vadd.f32 0.0, %v3158
      %3160 = vmatmul.bf16.gmra.mxu0 %v1565
      %v3161 = vpop.f32.mrf.mxu0
      %v3162 = vadd.f32 0.0, %v3161
      %v3163 = vpop.f32.mrf.mxu0
      %v3164 = vadd.f32 0.0, %v3163
      %3165 = vmatmul.bf16.gmra.mxu0 %v1568
      %v3166 = vpop.f32.mrf.mxu0
      %v3167 = vadd.f32 0.0, %v3166
      %v3168 = vpop.f32.mrf.mxu0
      %v3169 = vadd.f32 0.0, %v3168
      %3170 = vmatmul.bf16.gmra.mxu0 %v2844
      %v3171 = vpop.f32.mrf.mxu0
      %v3172 = vadd.f32 0.0, %v3171
      %v3173 = vpop.f32.mrf.mxu0
      %v3174 = vadd.f32 0.0, %v3173
      %3175 = vmatmul.bf16.gmra.mxu0 %v2847
      %v3176 = vpop.f32.mrf.mxu0
      %v3177 = vadd.f32 0.0, %v3176
      %v3178 = vpop.f32.mrf.mxu0
      %v3179 = vadd.f32 0.0, %v3178
      %3180 = vdwg.mxu0
      %v3181 = vadd.f32 %v2701, %v2862
      %v3182 = vadd.f32 %v2702, %v2864
      %v3183 = vadd.f32 %v2703, %v2867
      %v3184 = vadd.f32 %v2704, %v2869
      %v3185 = vadd.f32 %v2705, %v2872
      %v3186 = vadd.f32 %v2706, %v2874
      %v3187 = vadd.f32 %v2707, %v2877
      %v3188 = vadd.f32 %v2708, %v2879
      %v3189 = vadd.f32 %v2709, %v2882
      %v3190 = vadd.f32 %v2710, %v2884
      %v3191 = vadd.f32 %v2711, %v2887
      %v3192 = vadd.f32 %v2712, %v2889
      %v3193 = vadd.f32 %v2713, %v2892
      %v3194 = vadd.f32 %v2714, %v2894
      %v3195 = vadd.f32 %v2715, %v2897
      %v3196 = vadd.f32 %v2716, %v2899
      %v3197 = vadd.f32 %v2717, %v2902
      %v3198 = vadd.f32 %v2718, %v2904
      %v3199 = vadd.f32 %v2719, %v2907
      %v3200 = vadd.f32 %v2720, %v2909
      %v3201 = vadd.f32 %v2721, %v2912
      %v3202 = vadd.f32 %v2722, %v2914
      %v3203 = vadd.f32 %v2723, %v2917
      %v3204 = vadd.f32 %v2724, %v2919
      %v3205 = vadd.f32 %v2725, %v2922
      %v3206 = vadd.f32 %v2726, %v2924
      %v3207 = vadd.f32 %v2727, %v2927
      %v3208 = vadd.f32 %v2728, %v2929
      %v3209 = vadd.f32 %v2729, %v2932
      %v3210 = vadd.f32 %v2730, %v2934
      %v3211 = vadd.f32 %v2731, %v2937
      %v3212 = vadd.f32 %v2732, %v2939
      %v3213 = vadd.f32 %v2733, %v2942
      %v3214 = vadd.f32 %v2734, %v2944
      %v3215 = vadd.f32 %v2735, %v2947
      %v3216 = vadd.f32 %v2736, %v2949
      %v3217 = vadd.f32 %v2737, %v2952
      %v3218 = vadd.f32 %v2738, %v2954
      %v3219 = vadd.f32 %v2739, %v2957
      %v3220 = vadd.f32 %v2740, %v2959
      %v3221 = vadd.f32 %v2741, %v2962
      %v3222 = vadd.f32 %v2742, %v2964
      %v3223 = vadd.f32 %v2743, %v2967
      %v3224 = vadd.f32 %v2744, %v2969
      %v3225 = vadd.f32 %v2745, %v2972
      %v3226 = vadd.f32 %v2746, %v2974
      %v3227 = vadd.f32 %v2747, %v2977
      %v3228 = vadd.f32 %v2748, %v2979
      %v3229 = vadd.f32 %v2749, %v2982
      %v3230 = vadd.f32 %v2750, %v2984
      %v3231 = vadd.f32 %v2751, %v2987
      %v3232 = vadd.f32 %v2752, %v2989
      %v3233 = vadd.f32 %v2753, %v2992
      %v3234 = vadd.f32 %v2754, %v2994
      %v3235 = vadd.f32 %v2755, %v2997
      %v3236 = vadd.f32 %v2756, %v2999
      %v3237 = vadd.f32 %v2757, %v3002
      %v3238 = vadd.f32 %v2758, %v3004
      %v3239 = vadd.f32 %v2759, %v3007
      %v3240 = vadd.f32 %v2760, %v3009
      %v3241 = vadd.f32 %v2761, %v3012
      %v3242 = vadd.f32 %v2762, %v3014
      %v3243 = vadd.f32 %v2763, %v3017
      %v3244 = vadd.f32 %v2764, %v3019
      %v3245 = vadd.f32 %v2765, %v3022
      %v3246 = vadd.f32 %v2766, %v3024
      %v3247 = vadd.f32 %v2767, %v3027
      %v3248 = vadd.f32 %v2768, %v3029
      %v3249 = vadd.f32 %v2769, %v3032
      %v3250 = vadd.f32 %v2770, %v3034
      %v3251 = vadd.f32 %v2771, %v3037
      %v3252 = vadd.f32 %v2772, %v3039
      %v3253 = vadd.f32 %v2773, %v3042
      %v3254 = vadd.f32 %v2774, %v3044
      %v3255 = vadd.f32 %v2775, %v3047
      %v3256 = vadd.f32 %v2776, %v3049
      %v3257 = vadd.f32 %v2777, %v3052
      %v3258 = vadd.f32 %v2778, %v3054
      %v3259 = vadd.f32 %v2779, %v3057
      %v3260 = vadd.f32 %v2780, %v3059
      %v3261 = vadd.f32 %v2781, %v3062
      %v3262 = vadd.f32 %v2782, %v3064
      %v3263 = vadd.f32 %v2783, %v3067
      %v3264 = vadd.f32 %v2784, %v3069
      %v3265 = vadd.f32 %v2785, %v3072
      %v3266 = vadd.f32 %v2786, %v3074
      %v3267 = vadd.f32 %v2787, %v3077
      %v3268 = vadd.f32 %v2788, %v3079
      %v3269 = vadd.f32 %v2789, %v3082
      %v3270 = vadd.f32 %v2790, %v3084
      %v3271 = vadd.f32 %v2791, %v3087
      %v3272 = vadd.f32 %v2792, %v3089
      %v3273 = vadd.f32 %v2793, %v3092
      %v3274 = vadd.f32 %v2794, %v3094
      %v3275 = vadd.f32 %v2795, %v3097
      %v3276 = vadd.f32 %v2796, %v3099
      %v3277 = vadd.f32 %v2797, %v3102
      %v3278 = vadd.f32 %v2798, %v3104
      %v3279 = vadd.f32 %v2799, %v3107
      %v3280 = vadd.f32 %v2800, %v3109
      %v3281 = vadd.f32 %v2801, %v3112
      %v3282 = vadd.f32 %v2802, %v3114
      %v3283 = vadd.f32 %v2803, %v3117
      %v3284 = vadd.f32 %v2804, %v3119
      %v3285 = vadd.f32 %v2805, %v3122
      %v3286 = vadd.f32 %v2806, %v3124
      %v3287 = vadd.f32 %v2807, %v3127
      %v3288 = vadd.f32 %v2808, %v3129
      %v3289 = vadd.f32 %v2809, %v3132
      %v3290 = vadd.f32 %v2810, %v3134
      %v3291 = vadd.f32 %v2811, %v3137
      %v3292 = vadd.f32 %v2812, %v3139
      %v3293 = vadd.f32 %v2813, %v3142
      %v3294 = vadd.f32 %v2814, %v3144
      %v3295 = vadd.f32 %v2815, %v3147
      %v3296 = vadd.f32 %v2816, %v3149
      %v3297 = vadd.f32 %v2817, %v3152
      %v3298 = vadd.f32 %v2818, %v3154
      %v3299 = vadd.f32 %v2819, %v3157
      %v3300 = vadd.f32 %v2820, %v3159
      %v3301 = vadd.f32 %v2821, %v3162
      %v3302 = vadd.f32 %v2822, %v3164
      %v3303 = vadd.f32 %v2823, %v3167
      %v3304 = vadd.f32 %v2824, %v3169
      %v3305 = vadd.f32 %v2825, %v3172
      %v3306 = vadd.f32 %v2826, %v3174
      %v3307 = vadd.f32 %v2827, %v3177
      %v3308 = vadd.f32 %v2828, %v3179
      %v3309 = vld [vmem:[%s3] sm:$0x1]
      %v3311 = vperm.slane %v3309, 0
      %v3313 = vmul.f32 %v3181, %v3311
      %v3314 = vmul.f32 %v3182, %v3311
      %v3315 = vmul.f32 %v3183, %v3311
      %v3316 = vmul.f32 %v3184, %v3311
      %v3317 = vmul.f32 %v3185, %v3311
      %v3318 = vmul.f32 %v3186, %v3311
      %v3319 = vmul.f32 %v3187, %v3311
      %v3320 = vmul.f32 %v3188, %v3311
      %v3321 = vmul.f32 %v3189, %v3311
      %v3322 = vmul.f32 %v3190, %v3311
      %v3323 = vmul.f32 %v3191, %v3311
      %v3324 = vmul.f32 %v3192, %v3311
      %v3325 = vmul.f32 %v3193, %v3311
      %v3326 = vmul.f32 %v3194, %v3311
      %v3327 = vmul.f32 %v3195, %v3311
      %v3328 = vmul.f32 %v3196, %v3311
      %v3329 = vmul.f32 %v3197, %v3311
      %v3330 = vmul.f32 %v3198, %v3311
      %v3331 = vmul.f32 %v3199, %v3311
      %v3332 = vmul.f32 %v3200, %v3311
      %v3333 = vmul.f32 %v3201, %v3311
      %v3334 = vmul.f32 %v3202, %v3311
      %v3335 = vmul.f32 %v3203, %v3311
      %v3336 = vmul.f32 %v3204, %v3311
      %v3337 = vmul.f32 %v3205, %v3311
      %v3338 = vmul.f32 %v3206, %v3311
      %v3339 = vmul.f32 %v3207, %v3311
      %v3340 = vmul.f32 %v3208, %v3311
      %v3341 = vmul.f32 %v3209, %v3311
      %v3342 = vmul.f32 %v3210, %v3311
      %v3343 = vmul.f32 %v3211, %v3311
      %v3344 = vmul.f32 %v3212, %v3311
      %v3345 = vmul.f32 %v3213, %v3311
      %v3346 = vmul.f32 %v3214, %v3311
      %v3347 = vmul.f32 %v3215, %v3311
      %v3348 = vmul.f32 %v3216, %v3311
      %v3349 = vmul.f32 %v3217, %v3311
      %v3350 = vmul.f32 %v3218, %v3311
      %v3351 = vmul.f32 %v3219, %v3311
      %v3352 = vmul.f32 %v3220, %v3311
      %v3353 = vmul.f32 %v3221, %v3311
      %v3354 = vmul.f32 %v3222, %v3311
      %v3355 = vmul.f32 %v3223, %v3311
      %v3356 = vmul.f32 %v3224, %v3311
      %v3357 = vmul.f32 %v3225, %v3311
      %v3358 = vmul.f32 %v3226, %v3311
      %v3359 = vmul.f32 %v3227, %v3311
      %v3360 = vmul.f32 %v3228, %v3311
      %v3361 = vmul.f32 %v3229, %v3311
      %v3362 = vmul.f32 %v3230, %v3311
      %v3363 = vmul.f32 %v3231, %v3311
      %v3364 = vmul.f32 %v3232, %v3311
      %v3365 = vmul.f32 %v3233, %v3311
      %v3366 = vmul.f32 %v3234, %v3311
      %v3367 = vmul.f32 %v3235, %v3311
      %v3368 = vmul.f32 %v3236, %v3311
      %v3369 = vmul.f32 %v3237, %v3311
      %v3370 = vmul.f32 %v3238, %v3311
      %v3371 = vmul.f32 %v3239, %v3311
      %v3372 = vmul.f32 %v3240, %v3311
      %v3373 = vmul.f32 %v3241, %v3311
      %v3374 = vmul.f32 %v3242, %v3311
      %v3375 = vmul.f32 %v3243, %v3311
      %v3376 = vmul.f32 %v3244, %v3311
      %v3377 = vmul.f32 %v3245, %v3311
      %v3378 = vmul.f32 %v3246, %v3311
      %v3379 = vmul.f32 %v3247, %v3311
      %v3380 = vmul.f32 %v3248, %v3311
      %v3381 = vmul.f32 %v3249, %v3311
      %v3382 = vmul.f32 %v3250, %v3311
      %v3383 = vmul.f32 %v3251, %v3311
      %v3384 = vmul.f32 %v3252, %v3311
      %v3385 = vmul.f32 %v3253, %v3311
      %v3386 = vmul.f32 %v3254, %v3311
      %v3387 = vmul.f32 %v3255, %v3311
      %v3388 = vmul.f32 %v3256, %v3311
      %v3389 = vmul.f32 %v3257, %v3311
      %v3390 = vmul.f32 %v3258, %v3311
      %v3391 = vmul.f32 %v3259, %v3311
      %v3392 = vmul.f32 %v3260, %v3311
      %v3393 = vmul.f32 %v3261, %v3311
      %v3394 = vmul.f32 %v3262, %v3311
      %v3395 = vmul.f32 %v3263, %v3311
      %v3396 = vmul.f32 %v3264, %v3311
      %v3397 = vmul.f32 %v3265, %v3311
      %v3398 = vmul.f32 %v3266, %v3311
      %v3399 = vmul.f32 %v3267, %v3311
      %v3400 = vmul.f32 %v3268, %v3311
      %v3401 = vmul.f32 %v3269, %v3311
      %v3402 = vmul.f32 %v3270, %v3311
      %v3403 = vmul.f32 %v3271, %v3311
      %v3404 = vmul.f32 %v3272, %v3311
      %v3405 = vmul.f32 %v3273, %v3311
      %v3406 = vmul.f32 %v3274, %v3311
      %v3407 = vmul.f32 %v3275, %v3311
      %v3408 = vmul.f32 %v3276, %v3311
      %v3409 = vmul.f32 %v3277, %v3311
      %v3410 = vmul.f32 %v3278, %v3311
      %v3411 = vmul.f32 %v3279, %v3311
      %v3412 = vmul.f32 %v3280, %v3311
      %v3413 = vmul.f32 %v3281, %v3311
      %v3414 = vmul.f32 %v3282, %v3311
      %v3415 = vmul.f32 %v3283, %v3311
      %v3416 = vmul.f32 %v3284, %v3311
      %v3417 = vmul.f32 %v3285, %v3311
      %v3418 = vmul.f32 %v3286, %v3311
      %v3419 = vmul.f32 %v3287, %v3311
      %v3420 = vmul.f32 %v3288, %v3311
      %v3421 = vmul.f32 %v3289, %v3311
      %v3422 = vmul.f32 %v3290, %v3311
      %v3423 = vmul.f32 %v3291, %v3311
      %v3424 = vmul.f32 %v3292, %v3311
      %v3425 = vmul.f32 %v3293, %v3311
      %v3426 = vmul.f32 %v3294, %v3311
      %v3427 = vmul.f32 %v3295, %v3311
      %v3428 = vmul.f32 %v3296, %v3311
      %v3429 = vmul.f32 %v3297, %v3311
      %v3430 = vmul.f32 %v3298, %v3311
      %v3431 = vmul.f32 %v3299, %v3311
      %v3432 = vmul.f32 %v3300, %v3311
      %v3433 = vmul.f32 %v3301, %v3311
      %v3434 = vmul.f32 %v3302, %v3311
      %v3435 = vmul.f32 %v3303, %v3311
      %v3436 = vmul.f32 %v3304, %v3311
      %v3437 = vmul.f32 %v3305, %v3311
      %v3438 = vmul.f32 %v3306, %v3311
      %v3439 = vmul.f32 %v3307, %v3311
      %v3440 = vmul.f32 %v3308, %v3311
      %v3441 = vld [vmem:[%s4] sm:$0x1]
      %v3443 = vperm.slane %v3441, 0
      %v3445 = vadd.f32 %v3313, %v3443
      %v3446 = vadd.f32 %v3314, %v3443
      %v3447 = vadd.f32 %v3315, %v3443
      %v3448 = vadd.f32 %v3316, %v3443
      %v3449 = vadd.f32 %v3317, %v3443
      %v3450 = vadd.f32 %v3318, %v3443
      %v3451 = vadd.f32 %v3319, %v3443
      %v3452 = vadd.f32 %v3320, %v3443
      %v3453 = vadd.f32 %v3321, %v3443
      %v3454 = vadd.f32 %v3322, %v3443
      %v3455 = vadd.f32 %v3323, %v3443
      %v3456 = vadd.f32 %v3324, %v3443
      %v3457 = vadd.f32 %v3325, %v3443
      %v3458 = vadd.f32 %v3326, %v3443
      %v3459 = vadd.f32 %v3327, %v3443
      %v3460 = vadd.f32 %v3328, %v3443
      %v3461 = vadd.f32 %v3329, %v3443
      %v3462 = vadd.f32 %v3330, %v3443
      %v3463 = vadd.f32 %v3331, %v3443
      %v3464 = vadd.f32 %v3332, %v3443
      %v3465 = vadd.f32 %v3333, %v3443
      %v3466 = vadd.f32 %v3334, %v3443
      %v3467 = vadd.f32 %v3335, %v3443
      %v3468 = vadd.f32 %v3336, %v3443
      %v3469 = vadd.f32 %v3337, %v3443
      %v3470 = vadd.f32 %v3338, %v3443
      %v3471 = vadd.f32 %v3339, %v3443
      %v3472 = vadd.f32 %v3340, %v3443
      %v3473 = vadd.f32 %v3341, %v3443
      %v3474 = vadd.f32 %v3342, %v3443
      %v3475 = vadd.f32 %v3343, %v3443
      %v3476 = vadd.f32 %v3344, %v3443
      %v3477 = vadd.f32 %v3345, %v3443
      %v3478 = vadd.f32 %v3346, %v3443
      %v3479 = vadd.f32 %v3347, %v3443
      %v3480 = vadd.f32 %v3348, %v3443
      %v3481 = vadd.f32 %v3349, %v3443
      %v3482 = vadd.f32 %v3350, %v3443
      %v3483 = vadd.f32 %v3351, %v3443
      %v3484 = vadd.f32 %v3352, %v3443
      %v3485 = vadd.f32 %v3353, %v3443
      %v3486 = vadd.f32 %v3354, %v3443
      %v3487 = vadd.f32 %v3355, %v3443
      %v3488 = vadd.f32 %v3356, %v3443
      %v3489 = vadd.f32 %v3357, %v3443
      %v3490 = vadd.f32 %v3358, %v3443
      %v3491 = vadd.f32 %v3359, %v3443
      %v3492 = vadd.f32 %v3360, %v3443
      %v3493 = vadd.f32 %v3361, %v3443
      %v3494 = vadd.f32 %v3362, %v3443
      %v3495 = vadd.f32 %v3363, %v3443
      %v3496 = vadd.f32 %v3364, %v3443
      %v3497 = vadd.f32 %v3365, %v3443
      %v3498 = vadd.f32 %v3366, %v3443
      %v3499 = vadd.f32 %v3367, %v3443
      %v3500 = vadd.f32 %v3368, %v3443
      %v3501 = vadd.f32 %v3369, %v3443
      %v3502 = vadd.f32 %v3370, %v3443
      %v3503 = vadd.f32 %v3371, %v3443
      %v3504 = vadd.f32 %v3372, %v3443
      %v3505 = vadd.f32 %v3373, %v3443
      %v3506 = vadd.f32 %v3374, %v3443
      %v3507 = vadd.f32 %v3375, %v3443
      %v3508 = vadd.f32 %v3376, %v3443
      %v3509 = vadd.f32 %v3377, %v3443
      %v3510 = vadd.f32 %v3378, %v3443
      %v3511 = vadd.f32 %v3379, %v3443
      %v3512 = vadd.f32 %v3380, %v3443
      %v3513 = vadd.f32 %v3381, %v3443
      %v3514 = vadd.f32 %v3382, %v3443
      %v3515 = vadd.f32 %v3383, %v3443
      %v3516 = vadd.f32 %v3384, %v3443
      %v3517 = vadd.f32 %v3385, %v3443
      %v3518 = vadd.f32 %v3386, %v3443
      %v3519 = vadd.f32 %v3387, %v3443
      %v3520 = vadd.f32 %v3388, %v3443
      %v3521 = vadd.f32 %v3389, %v3443
      %v3522 = vadd.f32 %v3390, %v3443
      %v3523 = vadd.f32 %v3391, %v3443
      %v3524 = vadd.f32 %v3392, %v3443
      %v3525 = vadd.f32 %v3393, %v3443
      %v3526 = vadd.f32 %v3394, %v3443
      %v3527 = vadd.f32 %v3395, %v3443
      %v3528 = vadd.f32 %v3396, %v3443
      %v3529 = vadd.f32 %v3397, %v3443
      %v3530 = vadd.f32 %v3398, %v3443
      %v3531 = vadd.f32 %v3399, %v3443
      %v3532 = vadd.f32 %v3400, %v3443
      %v3533 = vadd.f32 %v3401, %v3443
      %v3534 = vadd.f32 %v3402, %v3443
      %v3535 = vadd.f32 %v3403, %v3443
      %v3536 = vadd.f32 %v3404, %v3443
      %v3537 = vadd.f32 %v3405, %v3443
      %v3538 = vadd.f32 %v3406, %v3443
      %v3539 = vadd.f32 %v3407, %v3443
      %v3540 = vadd.f32 %v3408, %v3443
      %v3541 = vadd.f32 %v3409, %v3443
      %v3542 = vadd.f32 %v3410, %v3443
      %v3543 = vadd.f32 %v3411, %v3443
      %v3544 = vadd.f32 %v3412, %v3443
      %v3545 = vadd.f32 %v3413, %v3443
      %v3546 = vadd.f32 %v3414, %v3443
      %v3547 = vadd.f32 %v3415, %v3443
      %v3548 = vadd.f32 %v3416, %v3443
      %v3549 = vadd.f32 %v3417, %v3443
      %v3550 = vadd.f32 %v3418, %v3443
      %v3551 = vadd.f32 %v3419, %v3443
      %v3552 = vadd.f32 %v3420, %v3443
      %v3553 = vadd.f32 %v3421, %v3443
      %v3554 = vadd.f32 %v3422, %v3443
      %v3555 = vadd.f32 %v3423, %v3443
      %v3556 = vadd.f32 %v3424, %v3443
      %v3557 = vadd.f32 %v3425, %v3443
      %v3558 = vadd.f32 %v3426, %v3443
      %v3559 = vadd.f32 %v3427, %v3443
      %v3560 = vadd.f32 %v3428, %v3443
      %v3561 = vadd.f32 %v3429, %v3443
      %v3562 = vadd.f32 %v3430, %v3443
      %v3563 = vadd.f32 %v3431, %v3443
      %v3564 = vadd.f32 %v3432, %v3443
      %v3565 = vadd.f32 %v3433, %v3443
      %v3566 = vadd.f32 %v3434, %v3443
      %v3567 = vadd.f32 %v3435, %v3443
      %v3568 = vadd.f32 %v3436, %v3443
      %v3569 = vadd.f32 %v3437, %v3443
      %v3570 = vadd.f32 %v3438, %v3443
      %v3571 = vadd.f32 %v3439, %v3443
      %v3572 = vadd.f32 %v3440, %v3443
      %v3573 = vmax.f32 %v3445, 0.0
      %v3574 = vmax.f32 %v3446, 0.0
      %v3575 = vmax.f32 %v3447, 0.0
      %v3576 = vmax.f32 %v3448, 0.0
      %v3577 = vmax.f32 %v3449, 0.0
      %v3578 = vmax.f32 %v3450, 0.0
      %v3579 = vmax.f32 %v3451, 0.0
      %v3580 = vmax.f32 %v3452, 0.0
      %v3581 = vmax.f32 %v3453, 0.0
      %v3582 = vmax.f32 %v3454, 0.0
      %v3583 = vmax.f32 %v3455, 0.0
      %v3584 = vmax.f32 %v3456, 0.0
      %v3585 = vmax.f32 %v3457, 0.0
      %v3586 = vmax.f32 %v3458, 0.0
      %v3587 = vmax.f32 %v3459, 0.0
      %v3588 = vmax.f32 %v3460, 0.0
      %v3589 = vmax.f32 %v3461, 0.0
      %v3590 = vmax.f32 %v3462, 0.0
      %v3591 = vmax.f32 %v3463, 0.0
      %v3592 = vmax.f32 %v3464, 0.0
      %v3593 = vmax.f32 %v3465, 0.0
      %v3594 = vmax.f32 %v3466, 0.0
      %v3595 = vmax.f32 %v3467, 0.0
      %v3596 = vmax.f32 %v3468, 0.0
      %v3597 = vmax.f32 %v3469, 0.0
      %v3598 = vmax.f32 %v3470, 0.0
      %v3599 = vmax.f32 %v3471, 0.0
      %v3600 = vmax.f32 %v3472, 0.0
      %v3601 = vmax.f32 %v3473, 0.0
      %v3602 = vmax.f32 %v3474, 0.0
      %v3603 = vmax.f32 %v3475, 0.0
      %v3604 = vmax.f32 %v3476, 0.0
      %v3605 = vmax.f32 %v3477, 0.0
      %v3606 = vmax.f32 %v3478, 0.0
      %v3607 = vmax.f32 %v3479, 0.0
      %v3608 = vmax.f32 %v3480, 0.0
      %v3609 = vmax.f32 %v3481, 0.0
      %v3610 = vmax.f32 %v3482, 0.0
      %v3611 = vmax.f32 %v3483, 0.0
      %v3612 = vmax.f32 %v3484, 0.0
      %v3613 = vmax.f32 %v3485, 0.0
      %v3614 = vmax.f32 %v3486, 0.0
      %v3615 = vmax.f32 %v3487, 0.0
      %v3616 = vmax.f32 %v3488, 0.0
      %v3617 = vmax.f32 %v3489, 0.0
      %v3618 = vmax.f32 %v3490, 0.0
      %v3619 = vmax.f32 %v3491, 0.0
      %v3620 = vmax.f32 %v3492, 0.0
      %v3621 = vmax.f32 %v3493, 0.0
      %v3622 = vmax.f32 %v3494, 0.0
      %v3623 = vmax.f32 %v3495, 0.0
      %v3624 = vmax.f32 %v3496, 0.0
      %v3625 = vmax.f32 %v3497, 0.0
      %v3626 = vmax.f32 %v3498, 0.0
      %v3627 = vmax.f32 %v3499, 0.0
      %v3628 = vmax.f32 %v3500, 0.0
      %v3629 = vmax.f32 %v3501, 0.0
      %v3630 = vmax.f32 %v3502, 0.0
      %v3631 = vmax.f32 %v3503, 0.0
      %v3632 = vmax.f32 %v3504, 0.0
      %v3633 = vmax.f32 %v3505, 0.0
      %v3634 = vmax.f32 %v3506, 0.0
      %v3635 = vmax.f32 %v3507, 0.0
      %v3636 = vmax.f32 %v3508, 0.0
      %v3637 = vmax.f32 %v3509, 0.0
      %v3638 = vmax.f32 %v3510, 0.0
      %v3639 = vmax.f32 %v3511, 0.0
      %v3640 = vmax.f32 %v3512, 0.0
      %v3641 = vmax.f32 %v3513, 0.0
      %v3642 = vmax.f32 %v3514, 0.0
      %v3643 = vmax.f32 %v3515, 0.0
      %v3644 = vmax.f32 %v3516, 0.0
      %v3645 = vmax.f32 %v3517, 0.0
      %v3646 = vmax.f32 %v3518, 0.0
      %v3647 = vmax.f32 %v3519, 0.0
      %v3648 = vmax.f32 %v3520, 0.0
      %v3649 = vmax.f32 %v3521, 0.0
      %v3650 = vmax.f32 %v3522, 0.0
      %v3651 = vmax.f32 %v3523, 0.0
      %v3652 = vmax.f32 %v3524, 0.0
      %v3653 = vmax.f32 %v3525, 0.0
      %v3654 = vmax.f32 %v3526, 0.0
      %v3655 = vmax.f32 %v3527, 0.0
      %v3656 = vmax.f32 %v3528, 0.0
      %v3657 = vmax.f32 %v3529, 0.0
      %v3658 = vmax.f32 %v3530, 0.0
      %v3659 = vmax.f32 %v3531, 0.0
      %v3660 = vmax.f32 %v3532, 0.0
      %v3661 = vmax.f32 %v3533, 0.0
      %v3662 = vmax.f32 %v3534, 0.0
      %v3663 = vmax.f32 %v3535, 0.0
      %v3664 = vmax.f32 %v3536, 0.0
      %v3665 = vmax.f32 %v3537, 0.0
      %v3666 = vmax.f32 %v3538, 0.0
      %v3667 = vmax.f32 %v3539, 0.0
      %v3668 = vmax.f32 %v3540, 0.0
      %v3669 = vmax.f32 %v3541, 0.0
      %v3670 = vmax.f32 %v3542, 0.0
      %v3671 = vmax.f32 %v3543, 0.0
      %v3672 = vmax.f32 %v3544, 0.0
      %v3673 = vmax.f32 %v3545, 0.0
      %v3674 = vmax.f32 %v3546, 0.0
      %v3675 = vmax.f32 %v3547, 0.0
      %v3676 = vmax.f32 %v3548, 0.0
      %v3677 = vmax.f32 %v3549, 0.0
      %v3678 = vmax.f32 %v3550, 0.0
      %v3679 = vmax.f32 %v3551, 0.0
      %v3680 = vmax.f32 %v3552, 0.0
      %v3681 = vmax.f32 %v3553, 0.0
      %v3682 = vmax.f32 %v3554, 0.0
      %v3683 = vmax.f32 %v3555, 0.0
      %v3684 = vmax.f32 %v3556, 0.0
      %v3685 = vmax.f32 %v3557, 0.0
      %v3686 = vmax.f32 %v3558, 0.0
      %v3687 = vmax.f32 %v3559, 0.0
      %v3688 = vmax.f32 %v3560, 0.0
      %v3689 = vmax.f32 %v3561, 0.0
      %v3690 = vmax.f32 %v3562, 0.0
      %v3691 = vmax.f32 %v3563, 0.0
      %v3692 = vmax.f32 %v3564, 0.0
      %v3693 = vmax.f32 %v3565, 0.0
      %v3694 = vmax.f32 %v3566, 0.0
      %v3695 = vmax.f32 %v3567, 0.0
      %v3696 = vmax.f32 %v3568, 0.0
      %v3697 = vmax.f32 %v3569, 0.0
      %v3698 = vmax.f32 %v3570, 0.0
      %v3699 = vmax.f32 %v3571, 0.0
      %v3700 = vmax.f32 %v3572, 0.0
      %v3701 = vpack.c.bf16 %v3574, %v3573
      %v3702 = vpack.c.bf16 %v3576, %v3575
      %v3703 = vpack.c.bf16 %v3578, %v3577
      %v3704 = vpack.c.bf16 %v3580, %v3579
      %v3705 = vpack.c.bf16 %v3582, %v3581
      %v3706 = vpack.c.bf16 %v3584, %v3583
      %v3707 = vpack.c.bf16 %v3586, %v3585
      %v3708 = vpack.c.bf16 %v3588, %v3587
      %v3709 = vpack.c.bf16 %v3590, %v3589
      %v3710 = vpack.c.bf16 %v3592, %v3591
      %v3711 = vpack.c.bf16 %v3594, %v3593
      %v3712 = vpack.c.bf16 %v3596, %v3595
      %v3713 = vpack.c.bf16 %v3598, %v3597
      %v3714 = vpack.c.bf16 %v3600, %v3599
      %v3715 = vpack.c.bf16 %v3602, %v3601
      %v3716 = vpack.c.bf16 %v3604, %v3603
      %v3717 = vpack.c.bf16 %v3606, %v3605
      %v3718 = vpack.c.bf16 %v3608, %v3607
      %v3719 = vpack.c.bf16 %v3610, %v3609
      %v3720 = vpack.c.bf16 %v3612, %v3611
      %v3721 = vpack.c.bf16 %v3614, %v3613
      %v3722 = vpack.c.bf16 %v3616, %v3615
      %v3723 = vpack.c.bf16 %v3618, %v3617
      %v3724 = vpack.c.bf16 %v3620, %v3619
      %v3725 = vpack.c.bf16 %v3622, %v3621
      %v3726 = vpack.c.bf16 %v3624, %v3623
      %v3727 = vpack.c.bf16 %v3626, %v3625
      %v3728 = vpack.c.bf16 %v3628, %v3627
      %v3729 = vpack.c.bf16 %v3630, %v3629
      %v3730 = vpack.c.bf16 %v3632, %v3631
      %v3731 = vpack.c.bf16 %v3634, %v3633
      %v3732 = vpack.c.bf16 %v3636, %v3635
      %v3733 = vpack.c.bf16 %v3638, %v3637
      %v3734 = vpack.c.bf16 %v3640, %v3639
      %v3735 = vpack.c.bf16 %v3642, %v3641
      %v3736 = vpack.c.bf16 %v3644, %v3643
      %v3737 = vpack.c.bf16 %v3646, %v3645
      %v3738 = vpack.c.bf16 %v3648, %v3647
      %v3739 = vpack.c.bf16 %v3650, %v3649
      %v3740 = vpack.c.bf16 %v3652, %v3651
      %v3741 = vpack.c.bf16 %v3654, %v3653
      %v3742 = vpack.c.bf16 %v3656, %v3655
      %v3743 = vpack.c.bf16 %v3658, %v3657
      %v3744 = vpack.c.bf16 %v3660, %v3659
      %v3745 = vpack.c.bf16 %v3662, %v3661
      %v3746 = vpack.c.bf16 %v3664, %v3663
      %v3747 = vpack.c.bf16 %v3666, %v3665
      %v3748 = vpack.c.bf16 %v3668, %v3667
      %v3749 = vpack.c.bf16 %v3670, %v3669
      %v3750 = vpack.c.bf16 %v3672, %v3671
      %v3751 = vpack.c.bf16 %v3674, %v3673
      %v3752 = vpack.c.bf16 %v3676, %v3675
      %v3753 = vpack.c.bf16 %v3678, %v3677
      %v3754 = vpack.c.bf16 %v3680, %v3679
      %v3755 = vpack.c.bf16 %v3682, %v3681
      %v3756 = vpack.c.bf16 %v3684, %v3683
      %v3757 = vpack.c.bf16 %v3686, %v3685
      %v3758 = vpack.c.bf16 %v3688, %v3687
      %v3759 = vpack.c.bf16 %v3690, %v3689
      %v3760 = vpack.c.bf16 %v3692, %v3691
      %v3761 = vpack.c.bf16 %v3694, %v3693
      %v3762 = vpack.c.bf16 %v3696, %v3695
      %v3763 = vpack.c.bf16 %v3698, %v3697
      %v3764 = vpack.c.bf16 %v3700, %v3699
      %v3765 = vld [vmem:[%s5] sm:$0xf]
      %v3766 = vld [vmem:[%s5 + $0x4] sm:$0xf]
      %v3767 = vld [vmem:[%s6] sm:$0x1]
      %v3769 = vperm.slane %v3767, 0
      %v3773 = vunpack.c.l.b16 %v3765
      %v3774 = vunpack.c.l.b16 %v3766
      %v3775 = vpack.c.b16 %v3774, %v3773
      %vm3777 = vcmask 130048
      %v3779 = vsel %vm3777, %v3701, 0
      %v3782 = vsel %vm3777, %v3702, 0
      %v3785 = vsel %vm3777, %v3703, 0
      %v3788 = vsel %vm3777, %v3704, 0
      %v3791 = vsel %vm3777, %v3705, 0
      %v3794 = vsel %vm3777, %v3706, 0
      %v3797 = vsel %vm3777, %v3707, 0
      %v3800 = vsel %vm3777, %v3708, 0
      %v3803 = vsel %vm3777, %v3709, 0
      %v3806 = vsel %vm3777, %v3710, 0
      %v3809 = vsel %vm3777, %v3711, 0
      %v3812 = vsel %vm3777, %v3712, 0
      %v3815 = vsel %vm3777, %v3713, 0
      %v3818 = vsel %vm3777, %v3714, 0
      %v3821 = vsel %vm3777, %v3715, 0
      %v3824 = vsel %vm3777, %v3716, 0
      %v3827 = vsel %vm3777, %v3717, 0
      %v3830 = vsel %vm3777, %v3718, 0
      %v3833 = vsel %vm3777, %v3719, 0
      %v3836 = vsel %vm3777, %v3720, 0
      %v3839 = vsel %vm3777, %v3721, 0
      %v3842 = vsel %vm3777, %v3722, 0
      %v3845 = vsel %vm3777, %v3723, 0
      %v3848 = vsel %vm3777, %v3724, 0
      %v3851 = vsel %vm3777, %v3725, 0
      %v3854 = vsel %vm3777, %v3726, 0
      %v3857 = vsel %vm3777, %v3727, 0
      %v3860 = vsel %vm3777, %v3728, 0
      %v3863 = vsel %vm3777, %v3729, 0
      %v3866 = vsel %vm3777, %v3730, 0
      %v3869 = vsel %vm3777, %v3731, 0
      %v3872 = vsel %vm3777, %v3732, 0
      %v3875 = vsel %vm3777, %v3733, 0
      %v3878 = vsel %vm3777, %v3734, 0
      %v3881 = vsel %vm3777, %v3735, 0
      %v3884 = vsel %vm3777, %v3736, 0
      %v3887 = vsel %vm3777, %v3737, 0
      %v3890 = vsel %vm3777, %v3738, 0
      %v3893 = vsel %vm3777, %v3739, 0
      %v3896 = vsel %vm3777, %v3740, 0
      %v3899 = vsel %vm3777, %v3741, 0
      %v3902 = vsel %vm3777, %v3742, 0
      %v3905 = vsel %vm3777, %v3743, 0
      %v3908 = vsel %vm3777, %v3744, 0
      %v3911 = vsel %vm3777, %v3745, 0
      %v3914 = vsel %vm3777, %v3746, 0
      %v3917 = vsel %vm3777, %v3747, 0
      %v3920 = vsel %vm3777, %v3748, 0
      %v3923 = vsel %vm3777, %v3749, 0
      %v3926 = vsel %vm3777, %v3750, 0
      %v3929 = vsel %vm3777, %v3751, 0
      %v3932 = vsel %vm3777, %v3752, 0
      %v3935 = vsel %vm3777, %v3753, 0
      %v3938 = vsel %vm3777, %v3754, 0
      %v3941 = vsel %vm3777, %v3755, 0
      %v3944 = vsel %vm3777, %v3756, 0
      %v3947 = vsel %vm3777, %v3757, 0
      %v3950 = vsel %vm3777, %v3758, 0
      %v3953 = vsel %vm3777, %v3759, 0
      %v3956 = vsel %vm3777, %v3760, 0
      %v3959 = vsel %vm3777, %v3761, 0
      %v3962 = vsel %vm3777, %v3762, 0
      %v3965 = vsel %vm3777, %v3763, 0
      %v3968 = vsel %vm3777, %v3764, 0
      %3970 = vmatpush.bf16.msra.mxu0 0
      %3971 = vmatpush.bf16.msra.mxu0 0
      %3972 = vmatpush.bf16.msra.mxu0 0
      %3973 = vmatpush.bf16.msra.mxu0 0
      %3974 = vmatpush.bf16.msra.mxu0 0
      %3975 = vmatpush.bf16.msra.mxu0 0
      %3976 = vmatpush.bf16.msra.mxu0 0
      %3977 = vmatpush.bf16.msra.mxu0 %v3775
      %3978 = vmatmul.bf16.gmra.mxu0 %v3779
      %v3979 = vpop.f32.mrf.mxu0
      %v3980 = vadd.f32 %v3769, %v3979
      %v3981 = vpop.f32.mrf.mxu0
      %v3982 = vadd.f32 %v3769, %v3981
      %3983 = vmatmul.bf16.gmra.mxu0 %v3782
      %v3984 = vpop.f32.mrf.mxu0
      %v3985 = vadd.f32 %v3769, %v3984
      %v3986 = vpop.f32.mrf.mxu0
      %v3987 = vadd.f32 %v3769, %v3986
      %3988 = vmatmul.bf16.gmra.mxu0 %v3785
      %v3989 = vpop.f32.mrf.mxu0
      %v3990 = vadd.f32 %v3769, %v3989
      %v3991 = vpop.f32.mrf.mxu0
      %v3992 = vadd.f32 %v3769, %v3991
      %3993 = vmatmul.bf16.gmra.mxu0 %v3788
      %v3994 = vpop.f32.mrf.mxu0
      %v3995 = vadd.f32 %v3769, %v3994
      %v3996 = vpop.f32.mrf.mxu0
      %v3997 = vadd.f32 %v3769, %v3996
      %3998 = vmatmul.bf16.gmra.mxu0 %v3791
      %v3999 = vpop.f32.mrf.mxu0
      %v4000 = vadd.f32 %v3769, %v3999
      %v4001 = vpop.f32.mrf.mxu0
      %v4002 = vadd.f32 %v3769, %v4001
      %4003 = vmatmul.bf16.gmra.mxu0 %v3794
      %v4004 = vpop.f32.mrf.mxu0
      %v4005 = vadd.f32 %v3769, %v4004
      %v4006 = vpop.f32.mrf.mxu0
      %v4007 = vadd.f32 %v3769, %v4006
      %4008 = vmatmul.bf16.gmra.mxu0 %v3797
      %v4009 = vpop.f32.mrf.mxu0
      %v4010 = vadd.f32 %v3769, %v4009
      %v4011 = vpop.f32.mrf.mxu0
      %v4012 = vadd.f32 %v3769, %v4011
      %4013 = vmatmul.bf16.gmra.mxu0 %v3800
      %v4014 = vpop.f32.mrf.mxu0
      %v4015 = vadd.f32 %v3769, %v4014
      %v4016 = vpop.f32.mrf.mxu0
      %v4017 = vadd.f32 %v3769, %v4016
      %4018 = vmatmul.bf16.gmra.mxu0 %v3803
      %v4019 = vpop.f32.mrf.mxu0
      %v4020 = vadd.f32 %v3769, %v4019
      %v4021 = vpop.f32.mrf.mxu0
      %v4022 = vadd.f32 %v3769, %v4021
      %4023 = vmatmul.bf16.gmra.mxu0 %v3806
      %v4024 = vpop.f32.mrf.mxu0
      %v4025 = vadd.f32 %v3769, %v4024
      %v4026 = vpop.f32.mrf.mxu0
      %v4027 = vadd.f32 %v3769, %v4026
      %4028 = vmatmul.bf16.gmra.mxu0 %v3809
      %v4029 = vpop.f32.mrf.mxu0
      %v4030 = vadd.f32 %v3769, %v4029
      %v4031 = vpop.f32.mrf.mxu0
      %v4032 = vadd.f32 %v3769, %v4031
      %4033 = vmatmul.bf16.gmra.mxu0 %v3812
      %v4034 = vpop.f32.mrf.mxu0
      %v4035 = vadd.f32 %v3769, %v4034
      %v4036 = vpop.f32.mrf.mxu0
      %v4037 = vadd.f32 %v3769, %v4036
      %4038 = vmatmul.bf16.gmra.mxu0 %v3815
      %v4039 = vpop.f32.mrf.mxu0
      %v4040 = vadd.f32 %v3769, %v4039
      %v4041 = vpop.f32.mrf.mxu0
      %v4042 = vadd.f32 %v3769, %v4041
      %4043 = vmatmul.bf16.gmra.mxu0 %v3818
      %v4044 = vpop.f32.mrf.mxu0
      %v4045 = vadd.f32 %v3769, %v4044
      %v4046 = vpop.f32.mrf.mxu0
      %v4047 = vadd.f32 %v3769, %v4046
      %4048 = vmatmul.bf16.gmra.mxu0 %v3821
      %v4049 = vpop.f32.mrf.mxu0
      %v4050 = vadd.f32 %v3769, %v4049
      %v4051 = vpop.f32.mrf.mxu0
      %v4052 = vadd.f32 %v3769, %v4051
      %4053 = vmatmul.bf16.gmra.mxu0 %v3824
      %v4054 = vpop.f32.mrf.mxu0
      %v4055 = vadd.f32 %v3769, %v4054
      %v4056 = vpop.f32.mrf.mxu0
      %v4057 = vadd.f32 %v3769, %v4056
      %4058 = vmatmul.bf16.gmra.mxu0 %v3827
      %v4059 = vpop.f32.mrf.mxu0
      %v4060 = vadd.f32 %v3769, %v4059
      %v4061 = vpop.f32.mrf.mxu0
      %v4062 = vadd.f32 %v3769, %v4061
      %4063 = vmatmul.bf16.gmra.mxu0 %v3830
      %v4064 = vpop.f32.mrf.mxu0
      %v4065 = vadd.f32 %v3769, %v4064
      %v4066 = vpop.f32.mrf.mxu0
      %v4067 = vadd.f32 %v3769, %v4066
      %4068 = vmatmul.bf16.gmra.mxu0 %v3833
      %v4069 = vpop.f32.mrf.mxu0
      %v4070 = vadd.f32 %v3769, %v4069
      %v4071 = vpop.f32.mrf.mxu0
      %v4072 = vadd.f32 %v3769, %v4071
      %4073 = vmatmul.bf16.gmra.mxu0 %v3836
      %v4074 = vpop.f32.mrf.mxu0
      %v4075 = vadd.f32 %v3769, %v4074
      %v4076 = vpop.f32.mrf.mxu0
      %v4077 = vadd.f32 %v3769, %v4076
      %4078 = vmatmul.bf16.gmra.mxu0 %v3839
      %v4079 = vpop.f32.mrf.mxu0
      %v4080 = vadd.f32 %v3769, %v4079
      %v4081 = vpop.f32.mrf.mxu0
      %v4082 = vadd.f32 %v3769, %v4081
      %4083 = vmatmul.bf16.gmra.mxu0 %v3842
      %v4084 = vpop.f32.mrf.mxu0
      %v4085 = vadd.f32 %v3769, %v4084
      %v4086 = vpop.f32.mrf.mxu0
      %v4087 = vadd.f32 %v3769, %v4086
      %4088 = vmatmul.bf16.gmra.mxu0 %v3845
      %v4089 = vpop.f32.mrf.mxu0
      %v4090 = vadd.f32 %v3769, %v4089
      %v4091 = vpop.f32.mrf.mxu0
      %v4092 = vadd.f32 %v3769, %v4091
      %4093 = vmatmul.bf16.gmra.mxu0 %v3848
      %v4094 = vpop.f32.mrf.mxu0
      %v4095 = vadd.f32 %v3769, %v4094
      %v4096 = vpop.f32.mrf.mxu0
      %v4097 = vadd.f32 %v3769, %v4096
      %4098 = vmatmul.bf16.gmra.mxu0 %v3851
      %v4099 = vpop.f32.mrf.mxu0
      %v4100 = vadd.f32 %v3769, %v4099
      %v4101 = vpop.f32.mrf.mxu0
      %v4102 = vadd.f32 %v3769, %v4101
      %4103 = vmatmul.bf16.gmra.mxu0 %v3854
      %v4104 = vpop.f32.mrf.mxu0
      %v4105 = vadd.f32 %v3769, %v4104
      %v4106 = vpop.f32.mrf.mxu0
      %v4107 = vadd.f32 %v3769, %v4106
      %4108 = vmatmul.bf16.gmra.mxu0 %v3857
      %v4109 = vpop.f32.mrf.mxu0
      %v4110 = vadd.f32 %v3769, %v4109
      %v4111 = vpop.f32.mrf.mxu0
      %v4112 = vadd.f32 %v3769, %v4111
      %4113 = vmatmul.bf16.gmra.mxu0 %v3860
      %v4114 = vpop.f32.mrf.mxu0
      %v4115 = vadd.f32 %v3769, %v4114
      %v4116 = vpop.f32.mrf.mxu0
      %v4117 = vadd.f32 %v3769, %v4116
      %4118 = vmatmul.bf16.gmra.mxu0 %v3863
      %v4119 = vpop.f32.mrf.mxu0
      %v4120 = vadd.f32 %v3769, %v4119
      %v4121 = vpop.f32.mrf.mxu0
      %v4122 = vadd.f32 %v3769, %v4121
      %4123 = vmatmul.bf16.gmra.mxu0 %v3866
      %v4124 = vpop.f32.mrf.mxu0
      %v4125 = vadd.f32 %v3769, %v4124
      %v4126 = vpop.f32.mrf.mxu0
      %v4127 = vadd.f32 %v3769, %v4126
      %4128 = vmatmul.bf16.gmra.mxu0 %v3869
      %v4129 = vpop.f32.mrf.mxu0
      %v4130 = vadd.f32 %v3769, %v4129
      %v4131 = vpop.f32.mrf.mxu0
      %v4132 = vadd.f32 %v3769, %v4131
      %4133 = vmatmul.bf16.gmra.mxu0 %v3872
      %v4134 = vpop.f32.mrf.mxu0
      %v4135 = vadd.f32 %v3769, %v4134
      %v4136 = vpop.f32.mrf.mxu0
      %v4137 = vadd.f32 %v3769, %v4136
      %4138 = vmatmul.bf16.gmra.mxu0 %v3875
      %v4139 = vpop.f32.mrf.mxu0
      %v4140 = vadd.f32 %v3769, %v4139
      %v4141 = vpop.f32.mrf.mxu0
      %v4142 = vadd.f32 %v3769, %v4141
      %4143 = vmatmul.bf16.gmra.mxu0 %v3878
      %v4144 = vpop.f32.mrf.mxu0
      %v4145 = vadd.f32 %v3769, %v4144
      %v4146 = vpop.f32.mrf.mxu0
      %v4147 = vadd.f32 %v3769, %v4146
      %4148 = vmatmul.bf16.gmra.mxu0 %v3881
      %v4149 = vpop.f32.mrf.mxu0
      %v4150 = vadd.f32 %v3769, %v4149
      %v4151 = vpop.f32.mrf.mxu0
      %v4152 = vadd.f32 %v3769, %v4151
      %4153 = vmatmul.bf16.gmra.mxu0 %v3884
      %v4154 = vpop.f32.mrf.mxu0
      %v4155 = vadd.f32 %v3769, %v4154
      %v4156 = vpop.f32.mrf.mxu0
      %v4157 = vadd.f32 %v3769, %v4156
      %4158 = vmatmul.bf16.gmra.mxu0 %v3887
      %v4159 = vpop.f32.mrf.mxu0
      %v4160 = vadd.f32 %v3769, %v4159
      %v4161 = vpop.f32.mrf.mxu0
      %v4162 = vadd.f32 %v3769, %v4161
      %4163 = vmatmul.bf16.gmra.mxu0 %v3890
      %v4164 = vpop.f32.mrf.mxu0
      %v4165 = vadd.f32 %v3769, %v4164
      %v4166 = vpop.f32.mrf.mxu0
      %v4167 = vadd.f32 %v3769, %v4166
      %4168 = vmatmul.bf16.gmra.mxu0 %v3893
      %v4169 = vpop.f32.mrf.mxu0
      %v4170 = vadd.f32 %v3769, %v4169
      %v4171 = vpop.f32.mrf.mxu0
      %v4172 = vadd.f32 %v3769, %v4171
      %4173 = vmatmul.bf16.gmra.mxu0 %v3896
      %v4174 = vpop.f32.mrf.mxu0
      %v4175 = vadd.f32 %v3769, %v4174
      %v4176 = vpop.f32.mrf.mxu0
      %v4177 = vadd.f32 %v3769, %v4176
      %4178 = vmatmul.bf16.gmra.mxu0 %v3899
      %v4179 = vpop.f32.mrf.mxu0
      %v4180 = vadd.f32 %v3769, %v4179
      %v4181 = vpop.f32.mrf.mxu0
      %v4182 = vadd.f32 %v3769, %v4181
      %4183 = vmatmul.bf16.gmra.mxu0 %v3902
      %v4184 = vpop.f32.mrf.mxu0
      %v4185 = vadd.f32 %v3769, %v4184
      %v4186 = vpop.f32.mrf.mxu0
      %v4187 = vadd.f32 %v3769, %v4186
      %4188 = vmatmul.bf16.gmra.mxu0 %v3905
      %v4189 = vpop.f32.mrf.mxu0
      %v4190 = vadd.f32 %v3769, %v4189
      %v4191 = vpop.f32.mrf.mxu0
      %v4192 = vadd.f32 %v3769, %v4191
      %4193 = vmatmul.bf16.gmra.mxu0 %v3908
      %v4194 = vpop.f32.mrf.mxu0
      %v4195 = vadd.f32 %v3769, %v4194
      %v4196 = vpop.f32.mrf.mxu0
      %v4197 = vadd.f32 %v3769, %v4196
      %4198 = vmatmul.bf16.gmra.mxu0 %v3911
      %v4199 = vpop.f32.mrf.mxu0
      %v4200 = vadd.f32 %v3769, %v4199
      %v4201 = vpop.f32.mrf.mxu0
      %v4202 = vadd.f32 %v3769, %v4201
      %4203 = vmatmul.bf16.gmra.mxu0 %v3914
      %v4204 = vpop.f32.mrf.mxu0
      %v4205 = vadd.f32 %v3769, %v4204
      %v4206 = vpop.f32.mrf.mxu0
      %v4207 = vadd.f32 %v3769, %v4206
      %4208 = vmatmul.bf16.gmra.mxu0 %v3917
      %v4209 = vpop.f32.mrf.mxu0
      %v4210 = vadd.f32 %v3769, %v4209
      %v4211 = vpop.f32.mrf.mxu0
      %v4212 = vadd.f32 %v3769, %v4211
      %4213 = vmatmul.bf16.gmra.mxu0 %v3920
      %v4214 = vpop.f32.mrf.mxu0
      %v4215 = vadd.f32 %v3769, %v4214
      %v4216 = vpop.f32.mrf.mxu0
      %v4217 = vadd.f32 %v3769, %v4216
      %4218 = vmatmul.bf16.gmra.mxu0 %v3923
      %v4219 = vpop.f32.mrf.mxu0
      %v4220 = vadd.f32 %v3769, %v4219
      %v4221 = vpop.f32.mrf.mxu0
      %v4222 = vadd.f32 %v3769, %v4221
      %4223 = vmatmul.bf16.gmra.mxu0 %v3926
      %v4224 = vpop.f32.mrf.mxu0
      %v4225 = vadd.f32 %v3769, %v4224
      %v4226 = vpop.f32.mrf.mxu0
      %v4227 = vadd.f32 %v3769, %v4226
      %4228 = vmatmul.bf16.gmra.mxu0 %v3929
      %v4229 = vpop.f32.mrf.mxu0
      %v4230 = vadd.f32 %v3769, %v4229
      %v4231 = vpop.f32.mrf.mxu0
      %v4232 = vadd.f32 %v3769, %v4231
      %4233 = vmatmul.bf16.gmra.mxu0 %v3932
      %v4234 = vpop.f32.mrf.mxu0
      %v4235 = vadd.f32 %v3769, %v4234
      %v4236 = vpop.f32.mrf.mxu0
      %v4237 = vadd.f32 %v3769, %v4236
      %4238 = vmatmul.bf16.gmra.mxu0 %v3935
      %v4239 = vpop.f32.mrf.mxu0
      %v4240 = vadd.f32 %v3769, %v4239
      %v4241 = vpop.f32.mrf.mxu0
      %v4242 = vadd.f32 %v3769, %v4241
      %4243 = vmatmul.bf16.gmra.mxu0 %v3938
      %v4244 = vpop.f32.mrf.mxu0
      %v4245 = vadd.f32 %v3769, %v4244
      %v4246 = vpop.f32.mrf.mxu0
      %v4247 = vadd.f32 %v3769, %v4246
      %4248 = vmatmul.bf16.gmra.mxu0 %v3941
      %v4249 = vpop.f32.mrf.mxu0
      %v4250 = vadd.f32 %v3769, %v4249
      %v4251 = vpop.f32.mrf.mxu0
      %v4252 = vadd.f32 %v3769, %v4251
      %4253 = vmatmul.bf16.gmra.mxu0 %v3944
      %v4254 = vpop.f32.mrf.mxu0
      %v4255 = vadd.f32 %v3769, %v4254
      %v4256 = vpop.f32.mrf.mxu0
      %v4257 = vadd.f32 %v3769, %v4256
      %4258 = vmatmul.bf16.gmra.mxu0 %v3947
      %v4259 = vpop.f32.mrf.mxu0
      %v4260 = vadd.f32 %v3769, %v4259
      %v4261 = vpop.f32.mrf.mxu0
      %v4262 = vadd.f32 %v3769, %v4261
      %4263 = vmatmul.bf16.gmra.mxu0 %v3950
      %v4264 = vpop.f32.mrf.mxu0
      %v4265 = vadd.f32 %v3769, %v4264
      %v4266 = vpop.f32.mrf.mxu0
      %v4267 = vadd.f32 %v3769, %v4266
      %4268 = vmatmul.bf16.gmra.mxu0 %v3953
      %v4269 = vpop.f32.mrf.mxu0
      %v4270 = vadd.f32 %v3769, %v4269
      %v4271 = vpop.f32.mrf.mxu0
      %v4272 = vadd.f32 %v3769, %v4271
      %4273 = vmatmul.bf16.gmra.mxu0 %v3956
      %v4274 = vpop.f32.mrf.mxu0
      %v4275 = vadd.f32 %v3769, %v4274
      %v4276 = vpop.f32.mrf.mxu0
      %v4277 = vadd.f32 %v3769, %v4276
      %4278 = vmatmul.bf16.gmra.mxu0 %v3959
      %v4279 = vpop.f32.mrf.mxu0
      %v4280 = vadd.f32 %v3769, %v4279
      %v4281 = vpop.f32.mrf.mxu0
      %v4282 = vadd.f32 %v3769, %v4281
      %4283 = vmatmul.bf16.gmra.mxu0 %v3962
      %v4284 = vpop.f32.mrf.mxu0
      %v4285 = vadd.f32 %v3769, %v4284
      %v4286 = vpop.f32.mrf.mxu0
      %v4287 = vadd.f32 %v3769, %v4286
      %4288 = vmatmul.bf16.gmra.mxu0 %v3965
      %v4289 = vpop.f32.mrf.mxu0
      %v4290 = vadd.f32 %v3769, %v4289
      %v4291 = vpop.f32.mrf.mxu0
      %v4292 = vadd.f32 %v3769, %v4291
      %4293 = vmatmul.bf16.gmra.mxu0 %v3968
      %v4294 = vpop.f32.mrf.mxu0
      %v4295 = vadd.f32 %v3769, %v4294
      %v4296 = vpop.f32.mrf.mxu0
      %v4297 = vadd.f32 %v3769, %v4296
      %4298 = vdwg.mxu0
      %vm4299 = vcmask 48128
      %4300 = vst.msk [vmem:[%s383] sm:$0xff] %vm4299, %v3980
      %4301 = vst.msk [vmem:[%s383 + $0x8] sm:$0xff] %vm4299, %v3982
      %4302 = vst.msk [vmem:[%s383 + $0x10] sm:$0xff] %vm4299, %v3985
      %4303 = vst.msk [vmem:[%s383 + $0x18] sm:$0xff] %vm4299, %v3987
      %4304 = vst.msk [vmem:[%s383 + $0x40] sm:$0xff] %vm4299, %v3990
      %4305 = vst.msk [vmem:[%s383 + $0x48] sm:$0xff] %vm4299, %v3992
      %4306 = vst.msk [vmem:[%s383 + $0x50] sm:$0xff] %vm4299, %v3995
      %4307 = vst.msk [vmem:[%s383 + $0x58] sm:$0xff] %vm4299, %v3997
      %4308 = vst.msk [vmem:[%s383 + $0x80] sm:$0xff] %vm4299, %v4000
      %4309 = vst.msk [vmem:[%s383 + $0x88] sm:$0xff] %vm4299, %v4002
      %4310 = vst.msk [vmem:[%s383 + $0x90] sm:$0xff] %vm4299, %v4005
      %4311 = vst.msk [vmem:[%s383 + $0x98] sm:$0xff] %vm4299, %v4007
      %4312 = vst.msk [vmem:[%s383 + $0xc0] sm:$0xff] %vm4299, %v4010
      %4313 = vst.msk [vmem:[%s383 + $0xc8] sm:$0xff] %vm4299, %v4012
      %4314 = vst.msk [vmem:[%s383 + $0xd0] sm:$0xff] %vm4299, %v4015
      %4315 = vst.msk [vmem:[%s383 + $0xd8] sm:$0xff] %vm4299, %v4017
      %4316 = vst.msk [vmem:[%s383 + $0x100] sm:$0xff] %vm4299, %v4020
      %4317 = vst.msk [vmem:[%s383 + $0x108] sm:$0xff] %vm4299, %v4022
      %4318 = vst.msk [vmem:[%s383 + $0x110] sm:$0xff] %vm4299, %v4025
      %4319 = vst.msk [vmem:[%s383 + $0x118] sm:$0xff] %vm4299, %v4027
      %4320 = vst.msk [vmem:[%s383 + $0x140] sm:$0xff] %vm4299, %v4030
      %4321 = vst.msk [vmem:[%s383 + $0x148] sm:$0xff] %vm4299, %v4032
      %4322 = vst.msk [vmem:[%s383 + $0x150] sm:$0xff] %vm4299, %v4035
      %4323 = vst.msk [vmem:[%s383 + $0x158] sm:$0xff] %vm4299, %v4037
      %4324 = vst.msk [vmem:[%s383 + $0x180] sm:$0xff] %vm4299, %v4040
      %4325 = vst.msk [vmem:[%s383 + $0x188] sm:$0xff] %vm4299, %v4042
      %4326 = vst.msk [vmem:[%s383 + $0x190] sm:$0xff] %vm4299, %v4045
      %4327 = vst.msk [vmem:[%s383 + $0x198] sm:$0xff] %vm4299, %v4047
      %4328 = vst.msk [vmem:[%s383 + $0x1c0] sm:$0xff] %vm4299, %v4050
      %4329 = vst.msk [vmem:[%s383 + $0x1c8] sm:$0xff] %vm4299, %v4052
      %4330 = vst.msk [vmem:[%s383 + $0x1d0] sm:$0xff] %vm4299, %v4055
      %4331 = vst.msk [vmem:[%s383 + $0x1d8] sm:$0xff] %vm4299, %v4057
      %4332 = vst.msk [vmem:[%s383 + $0x200] sm:$0xff] %vm4299, %v4060
      %4333 = vst.msk [vmem:[%s383 + $0x208] sm:$0xff] %vm4299, %v4062
      %4334 = vst.msk [vmem:[%s383 + $0x210] sm:$0xff] %vm4299, %v4065
      %4335 = vst.msk [vmem:[%s383 + $0x218] sm:$0xff] %vm4299, %v4067
      %4336 = vst.msk [vmem:[%s383 + $0x240] sm:$0xff] %vm4299, %v4070
      %4337 = vst.msk [vmem:[%s383 + $0x248] sm:$0xff] %vm4299, %v4072
      %4338 = vst.msk [vmem:[%s383 + $0x250] sm:$0xff] %vm4299, %v4075
      %4339 = vst.msk [vmem:[%s383 + $0x258] sm:$0xff] %vm4299, %v4077
      %4340 = vst.msk [vmem:[%s383 + $0x280] sm:$0xff] %vm4299, %v4080
      %4341 = vst.msk [vmem:[%s383 + $0x288] sm:$0xff] %vm4299, %v4082
      %4342 = vst.msk [vmem:[%s383 + $0x290] sm:$0xff] %vm4299, %v4085
      %4343 = vst.msk [vmem:[%s383 + $0x298] sm:$0xff] %vm4299, %v4087
      %4344 = vst.msk [vmem:[%s383 + $0x2c0] sm:$0xff] %vm4299, %v4090
      %4345 = vst.msk [vmem:[%s383 + $0x2c8] sm:$0xff] %vm4299, %v4092
      %4346 = vst.msk [vmem:[%s383 + $0x2d0] sm:$0xff] %vm4299, %v4095
      %4347 = vst.msk [vmem:[%s383 + $0x2d8] sm:$0xff] %vm4299, %v4097
      %4348 = vst.msk [vmem:[%s383 + $0x300] sm:$0xff] %vm4299, %v4100
      %4349 = vst.msk [vmem:[%s383 + $0x308] sm:$0xff] %vm4299, %v4102
      %4350 = vst.msk [vmem:[%s383 + $0x310] sm:$0xff] %vm4299, %v4105
      %4351 = vst.msk [vmem:[%s383 + $0x318] sm:$0xff] %vm4299, %v4107
      %4352 = vst.msk [vmem:[%s383 + $0x340] sm:$0xff] %vm4299, %v4110
      %4353 = vst.msk [vmem:[%s383 + $0x348] sm:$0xff] %vm4299, %v4112
      %4354 = vst.msk [vmem:[%s383 + $0x350] sm:$0xff] %vm4299, %v4115
      %4355 = vst.msk [vmem:[%s383 + $0x358] sm:$0xff] %vm4299, %v4117
      %4356 = vst.msk [vmem:[%s383 + $0x380] sm:$0xff] %vm4299, %v4120
      %4357 = vst.msk [vmem:[%s383 + $0x388] sm:$0xff] %vm4299, %v4122
      %4358 = vst.msk [vmem:[%s383 + $0x390] sm:$0xff] %vm4299, %v4125
      %4359 = vst.msk [vmem:[%s383 + $0x398] sm:$0xff] %vm4299, %v4127
      %4360 = vst.msk [vmem:[%s383 + $0x3c0] sm:$0xff] %vm4299, %v4130
      %4361 = vst.msk [vmem:[%s383 + $0x3c8] sm:$0xff] %vm4299, %v4132
      %4362 = vst.msk [vmem:[%s383 + $0x3d0] sm:$0xff] %vm4299, %v4135
      %4363 = vst.msk [vmem:[%s383 + $0x3d8] sm:$0xff] %vm4299, %v4137
      %4364 = vst.msk [vmem:[%s383 + $0x400] sm:$0xff] %vm4299, %v4140
      %4365 = vst.msk [vmem:[%s383 + $0x408] sm:$0xff] %vm4299, %v4142
      %4366 = vst.msk [vmem:[%s383 + $0x410] sm:$0xff] %vm4299, %v4145
      %4367 = vst.msk [vmem:[%s383 + $0x418] sm:$0xff] %vm4299, %v4147
      %4368 = vst.msk [vmem:[%s383 + $0x440] sm:$0xff] %vm4299, %v4150
      %4369 = vst.msk [vmem:[%s383 + $0x448] sm:$0xff] %vm4299, %v4152
      %4370 = vst.msk [vmem:[%s383 + $0x450] sm:$0xff] %vm4299, %v4155
      %4371 = vst.msk [vmem:[%s383 + $0x458] sm:$0xff] %vm4299, %v4157
      %4372 = vst.msk [vmem:[%s383 + $0x480] sm:$0xff] %vm4299, %v4160
      %4373 = vst.msk [vmem:[%s383 + $0x488] sm:$0xff] %vm4299, %v4162
      %4374 = vst.msk [vmem:[%s383 + $0x490] sm:$0xff] %vm4299, %v4165
      %4375 = vst.msk [vmem:[%s383 + $0x498] sm:$0xff] %vm4299, %v4167
      %4376 = vst.msk [vmem:[%s383 + $0x4c0] sm:$0xff] %vm4299, %v4170
      %4377 = vst.msk [vmem:[%s383 + $0x4c8] sm:$0xff] %vm4299, %v4172
      %4378 = vst.msk [vmem:[%s383 + $0x4d0] sm:$0xff] %vm4299, %v4175
      %4379 = vst.msk [vmem:[%s383 + $0x4d8] sm:$0xff] %vm4299, %v4177
      %4380 = vst.msk [vmem:[%s383 + $0x500] sm:$0xff] %vm4299, %v4180
      %4381 = vst.msk [vmem:[%s383 + $0x508] sm:$0xff] %vm4299, %v4182
      %4382 = vst.msk [vmem:[%s383 + $0x510] sm:$0xff] %vm4299, %v4185
      %4383 = vst.msk [vmem:[%s383 + $0x518] sm:$0xff] %vm4299, %v4187
      %4384 = vst.msk [vmem:[%s383 + $0x540] sm:$0xff] %vm4299, %v4190
      %4385 = vst.msk [vmem:[%s383 + $0x548] sm:$0xff] %vm4299, %v4192
      %4386 = vst.msk [vmem:[%s383 + $0x550] sm:$0xff] %vm4299, %v4195
      %4387 = vst.msk [vmem:[%s383 + $0x558] sm:$0xff] %vm4299, %v4197
      %4388 = vst.msk [vmem:[%s383 + $0x580] sm:$0xff] %vm4299, %v4200
      %4389 = vst.msk [vmem:[%s383 + $0x588] sm:$0xff] %vm4299, %v4202
      %4390 = vst.msk [vmem:[%s383 + $0x590] sm:$0xff] %vm4299, %v4205
      %4391 = vst.msk [vmem:[%s383 + $0x598] sm:$0xff] %vm4299, %v4207
      %4392 = vst.msk [vmem:[%s383 + $0x5c0] sm:$0xff] %vm4299, %v4210
      %4393 = vst.msk [vmem:[%s383 + $0x5c8] sm:$0xff] %vm4299, %v4212
      %4394 = vst.msk [vmem:[%s383 + $0x5d0] sm:$0xff] %vm4299, %v4215
      %4395 = vst.msk [vmem:[%s383 + $0x5d8] sm:$0xff] %vm4299, %v4217
      %4396 = vst.msk [vmem:[%s383 + $0x600] sm:$0xff] %vm4299, %v4220
      %4397 = vst.msk [vmem:[%s383 + $0x608] sm:$0xff] %vm4299, %v4222
      %4398 = vst.msk [vmem:[%s383 + $0x610] sm:$0xff] %vm4299, %v4225
      %4399 = vst.msk [vmem:[%s383 + $0x618] sm:$0xff] %vm4299, %v4227
      %4400 = vst.msk [vmem:[%s383 + $0x640] sm:$0xff] %vm4299, %v4230
      %4401 = vst.msk [vmem:[%s383 + $0x648] sm:$0xff] %vm4299, %v4232
      %4402 = vst.msk [vmem:[%s383 + $0x650] sm:$0xff] %vm4299, %v4235
      %4403 = vst.msk [vmem:[%s383 + $0x658] sm:$0xff] %vm4299, %v4237
      %4404 = vst.msk [vmem:[%s383 + $0x680] sm:$0xff] %vm4299, %v4240
      %4405 = vst.msk [vmem:[%s383 + $0x688] sm:$0xff] %vm4299, %v4242
      %4406 = vst.msk [vmem:[%s383 + $0x690] sm:$0xff] %vm4299, %v4245
      %4407 = vst.msk [vmem:[%s383 + $0x698] sm:$0xff] %vm4299, %v4247
      %4408 = vst.msk [vmem:[%s383 + $0x6c0] sm:$0xff] %vm4299, %v4250
      %4409 = vst.msk [vmem:[%s383 + $0x6c8] sm:$0xff] %vm4299, %v4252
      %4410 = vst.msk [vmem:[%s383 + $0x6d0] sm:$0xff] %vm4299, %v4255
      %4411 = vst.msk [vmem:[%s383 + $0x6d8] sm:$0xff] %vm4299, %v4257
      %4412 = vst.msk [vmem:[%s383 + $0x700] sm:$0xff] %vm4299, %v4260
      %4413 = vst.msk [vmem:[%s383 + $0x708] sm:$0xff] %vm4299, %v4262
      %4414 = vst.msk [vmem:[%s383 + $0x710] sm:$0xff] %vm4299, %v4265
      %4415 = vst.msk [vmem:[%s383 + $0x718] sm:$0xff] %vm4299, %v4267
      %4416 = vst.msk [vmem:[%s383 + $0x740] sm:$0xff] %vm4299, %v4270
      %4417 = vst.msk [vmem:[%s383 + $0x748] sm:$0xff] %vm4299, %v4272
      %4418 = vst.msk [vmem:[%s383 + $0x750] sm:$0xff] %vm4299, %v4275
      %4419 = vst.msk [vmem:[%s383 + $0x758] sm:$0xff] %vm4299, %v4277
      %4420 = vst.msk [vmem:[%s383 + $0x780] sm:$0xff] %vm4299, %v4280
      %4421 = vst.msk [vmem:[%s383 + $0x788] sm:$0xff] %vm4299, %v4282
      %4422 = vst.msk [vmem:[%s383 + $0x790] sm:$0xff] %vm4299, %v4285
      %4423 = vst.msk [vmem:[%s383 + $0x798] sm:$0xff] %vm4299, %v4287
      %4424 = vst.msk [vmem:[%s383 + $0x7c0] sm:$0xff] %vm4299, %v4290
      %4425 = vst.msk [vmem:[%s383 + $0x7c8] sm:$0xff] %vm4299, %v4292
      %4426 = vst.msk [vmem:[%s383 + $0x7d0] sm:$0xff] %vm4299, %v4295
      %4427 = vst.msk [vmem:[%s383 + $0x7d8] sm:$0xff] %vm4299, %v4297
      %4556 = vrot.lane.b32.xlu0 %v3980, 122
      %v4557 = vpop.permute.xlu0 %4556
      %4558 = vrot.lane.b32.xlu0 %v3982, 122
      %v4559 = vpop.permute.xlu0 %4558
      %4560 = vrot.lane.b32.xlu0 %v3985, 122
      %v4561 = vpop.permute.xlu0 %4560
      %4562 = vrot.lane.b32.xlu0 %v3987, 122
      %v4563 = vpop.permute.xlu0 %4562
      %4564 = vrot.lane.b32.xlu0 %v3990, 122
      %v4565 = vpop.permute.xlu0 %4564
      %4566 = vrot.lane.b32.xlu0 %v3992, 122
      %v4567 = vpop.permute.xlu0 %4566
      %4568 = vrot.lane.b32.xlu0 %v3995, 122
      %v4569 = vpop.permute.xlu0 %4568
      %4570 = vrot.lane.b32.xlu0 %v3997, 122
      %v4571 = vpop.permute.xlu0 %4570
      %4572 = vrot.lane.b32.xlu0 %v4000, 122
      %v4573 = vpop.permute.xlu0 %4572
      %4574 = vrot.lane.b32.xlu0 %v4002, 122
      %v4575 = vpop.permute.xlu0 %4574
      %4576 = vrot.lane.b32.xlu0 %v4005, 122
      %v4577 = vpop.permute.xlu0 %4576
      %4578 = vrot.lane.b32.xlu0 %v4007, 122
      %v4579 = vpop.permute.xlu0 %4578
      %4580 = vrot.lane.b32.xlu0 %v4010, 122
      %v4581 = vpop.permute.xlu0 %4580
      %4582 = vrot.lane.b32.xlu0 %v4012, 122
      %v4583 = vpop.permute.xlu0 %4582
      %4584 = vrot.lane.b32.xlu0 %v4015, 122
      %v4585 = vpop.permute.xlu0 %4584
      %4586 = vrot.lane.b32.xlu0 %v4017, 122
      %v4587 = vpop.permute.xlu0 %4586
      %4588 = vrot.lane.b32.xlu0 %v4020, 122
      %v4589 = vpop.permute.xlu0 %4588
      %4590 = vrot.lane.b32.xlu0 %v4022, 122
      %v4591 = vpop.permute.xlu0 %4590
      %4592 = vrot.lane.b32.xlu0 %v4025, 122
      %v4593 = vpop.permute.xlu0 %4592
      %4594 = vrot.lane.b32.xlu0 %v4027, 122
      %v4595 = vpop.permute.xlu0 %4594
      %4596 = vrot.lane.b32.xlu0 %v4030, 122
      %v4597 = vpop.permute.xlu0 %4596
      %4598 = vrot.lane.b32.xlu0 %v4032, 122
      %v4599 = vpop.permute.xlu0 %4598
      %4600 = vrot.lane.b32.xlu0 %v4035, 122
      %v4601 = vpop.permute.xlu0 %4600
      %4602 = vrot.lane.b32.xlu0 %v4037, 122
      %v4603 = vpop.permute.xlu0 %4602
      %4604 = vrot.lane.b32.xlu0 %v4040, 122
      %v4605 = vpop.permute.xlu0 %4604
      %4606 = vrot.lane.b32.xlu0 %v4042, 122
      %v4607 = vpop.permute.xlu0 %4606
      %4608 = vrot.lane.b32.xlu0 %v4045, 122
      %v4609 = vpop.permute.xlu0 %4608
      %4610 = vrot.lane.b32.xlu0 %v4047, 122
      %v4611 = vpop.permute.xlu0 %4610
      %4612 = vrot.lane.b32.xlu0 %v4050, 122
      %v4613 = vpop.permute.xlu0 %4612
      %4614 = vrot.lane.b32.xlu0 %v4052, 122
      %v4615 = vpop.permute.xlu0 %4614
      %4616 = vrot.lane.b32.xlu0 %v4055, 122
      %v4617 = vpop.permute.xlu0 %4616
      %4618 = vrot.lane.b32.xlu0 %v4057, 122
      %v4619 = vpop.permute.xlu0 %4618
      %4620 = vrot.lane.b32.xlu0 %v4060, 122
      %v4621 = vpop.permute.xlu0 %4620
      %4622 = vrot.lane.b32.xlu0 %v4062, 122
      %v4623 = vpop.permute.xlu0 %4622
      %4624 = vrot.lane.b32.xlu0 %v4065, 122
      %v4625 = vpop.permute.xlu0 %4624
      %4626 = vrot.lane.b32.xlu0 %v4067, 122
      %v4627 = vpop.permute.xlu0 %4626
      %4628 = vrot.lane.b32.xlu0 %v4070, 122
      %v4629 = vpop.permute.xlu0 %4628
      %4630 = vrot.lane.b32.xlu0 %v4072, 122
      %v4631 = vpop.permute.xlu0 %4630
      %4632 = vrot.lane.b32.xlu0 %v4075, 122
      %v4633 = vpop.permute.xlu0 %4632
      %4634 = vrot.lane.b32.xlu0 %v4077, 122
      %v4635 = vpop.permute.xlu0 %4634
      %4636 = vrot.lane.b32.xlu0 %v4080, 122
      %v4637 = vpop.permute.xlu0 %4636
      %4638 = vrot.lane.b32.xlu0 %v4082, 122
      %v4639 = vpop.permute.xlu0 %4638
      %4640 = vrot.lane.b32.xlu0 %v4085, 122
      %v4641 = vpop.permute.xlu0 %4640
      %4642 = vrot.lane.b32.xlu0 %v4087, 122
      %v4643 = vpop.permute.xlu0 %4642
      %4644 = vrot.lane.b32.xlu0 %v4090, 122
      %v4645 = vpop.permute.xlu0 %4644
      %4646 = vrot.lane.b32.xlu0 %v4092, 122
      %v4647 = vpop.permute.xlu0 %4646
      %4648 = vrot.lane.b32.xlu0 %v4095, 122
      %v4649 = vpop.permute.xlu0 %4648
      %4650 = vrot.lane.b32.xlu0 %v4097, 122
      %v4651 = vpop.permute.xlu0 %4650
      %4652 = vrot.lane.b32.xlu0 %v4100, 122
      %v4653 = vpop.permute.xlu0 %4652
      %4654 = vrot.lane.b32.xlu0 %v4102, 122
      %v4655 = vpop.permute.xlu0 %4654
      %4656 = vrot.lane.b32.xlu0 %v4105, 122
      %v4657 = vpop.permute.xlu0 %4656
      %4658 = vrot.lane.b32.xlu0 %v4107, 122
      %v4659 = vpop.permute.xlu0 %4658
      %4660 = vrot.lane.b32.xlu0 %v4110, 122
      %v4661 = vpop.permute.xlu0 %4660
      %4662 = vrot.lane.b32.xlu0 %v4112, 122
      %v4663 = vpop.permute.xlu0 %4662
      %4664 = vrot.lane.b32.xlu0 %v4115, 122
      %v4665 = vpop.permute.xlu0 %4664
      %4666 = vrot.lane.b32.xlu0 %v4117, 122
      %v4667 = vpop.permute.xlu0 %4666
      %4668 = vrot.lane.b32.xlu0 %v4120, 122
      %v4669 = vpop.permute.xlu0 %4668
      %4670 = vrot.lane.b32.xlu0 %v4122, 122
      %v4671 = vpop.permute.xlu0 %4670
      %4672 = vrot.lane.b32.xlu0 %v4125, 122
      %v4673 = vpop.permute.xlu0 %4672
      %4674 = vrot.lane.b32.xlu0 %v4127, 122
      %v4675 = vpop.permute.xlu0 %4674
      %4676 = vrot.lane.b32.xlu0 %v4130, 122
      %v4677 = vpop.permute.xlu0 %4676
      %4678 = vrot.lane.b32.xlu0 %v4132, 122
      %v4679 = vpop.permute.xlu0 %4678
      %4680 = vrot.lane.b32.xlu0 %v4135, 122
      %v4681 = vpop.permute.xlu0 %4680
      %4682 = vrot.lane.b32.xlu0 %v4137, 122
      %v4683 = vpop.permute.xlu0 %4682
      %4684 = vrot.lane.b32.xlu0 %v4140, 122
      %v4685 = vpop.permute.xlu0 %4684
      %4686 = vrot.lane.b32.xlu0 %v4142, 122
      %v4687 = vpop.permute.xlu0 %4686
      %4688 = vrot.lane.b32.xlu0 %v4145, 122
      %v4689 = vpop.permute.xlu0 %4688
      %4690 = vrot.lane.b32.xlu0 %v4147, 122
      %v4691 = vpop.permute.xlu0 %4690
      %4692 = vrot.lane.b32.xlu0 %v4150, 122
      %v4693 = vpop.permute.xlu0 %4692
      %4694 = vrot.lane.b32.xlu0 %v4152, 122
      %v4695 = vpop.permute.xlu0 %4694
      %4696 = vrot.lane.b32.xlu0 %v4155, 122
      %v4697 = vpop.permute.xlu0 %4696
      %4698 = vrot.lane.b32.xlu0 %v4157, 122
      %v4699 = vpop.permute.xlu0 %4698
      %4700 = vrot.lane.b32.xlu0 %v4160, 122
      %v4701 = vpop.permute.xlu0 %4700
      %4702 = vrot.lane.b32.xlu0 %v4162, 122
      %v4703 = vpop.permute.xlu0 %4702
      %4704 = vrot.lane.b32.xlu0 %v4165, 122
      %v4705 = vpop.permute.xlu0 %4704
      %4706 = vrot.lane.b32.xlu0 %v4167, 122
      %v4707 = vpop.permute.xlu0 %4706
      %4708 = vrot.lane.b32.xlu0 %v4170, 122
      %v4709 = vpop.permute.xlu0 %4708
      %4710 = vrot.lane.b32.xlu0 %v4172, 122
      %v4711 = vpop.permute.xlu0 %4710
      %4712 = vrot.lane.b32.xlu0 %v4175, 122
      %v4713 = vpop.permute.xlu0 %4712
      %4714 = vrot.lane.b32.xlu0 %v4177, 122
      %v4715 = vpop.permute.xlu0 %4714
      %4716 = vrot.lane.b32.xlu0 %v4180, 122
      %v4717 = vpop.permute.xlu0 %4716
      %4718 = vrot.lane.b32.xlu0 %v4182, 122
      %v4719 = vpop.permute.xlu0 %4718
      %4720 = vrot.lane.b32.xlu0 %v4185, 122
      %v4721 = vpop.permute.xlu0 %4720
      %4722 = vrot.lane.b32.xlu0 %v4187, 122
      %v4723 = vpop.permute.xlu0 %4722
      %4724 = vrot.lane.b32.xlu0 %v4190, 122
      %v4725 = vpop.permute.xlu0 %4724
      %4726 = vrot.lane.b32.xlu0 %v4192, 122
      %v4727 = vpop.permute.xlu0 %4726
      %4728 = vrot.lane.b32.xlu0 %v4195, 122
      %v4729 = vpop.permute.xlu0 %4728
      %4730 = vrot.lane.b32.xlu0 %v4197, 122
      %v4731 = vpop.permute.xlu0 %4730
      %4732 = vrot.lane.b32.xlu0 %v4200, 122
      %v4733 = vpop.permute.xlu0 %4732
      %4734 = vrot.lane.b32.xlu0 %v4202, 122
      %v4735 = vpop.permute.xlu0 %4734
      %4736 = vrot.lane.b32.xlu0 %v4205, 122
      %v4737 = vpop.permute.xlu0 %4736
      %4738 = vrot.lane.b32.xlu0 %v4207, 122
      %v4739 = vpop.permute.xlu0 %4738
      %4740 = vrot.lane.b32.xlu0 %v4210, 122
      %v4741 = vpop.permute.xlu0 %4740
      %4742 = vrot.lane.b32.xlu0 %v4212, 122
      %v4743 = vpop.permute.xlu0 %4742
      %4744 = vrot.lane.b32.xlu0 %v4215, 122
      %v4745 = vpop.permute.xlu0 %4744
      %4746 = vrot.lane.b32.xlu0 %v4217, 122
      %v4747 = vpop.permute.xlu0 %4746
      %4748 = vrot.lane.b32.xlu0 %v4220, 122
      %v4749 = vpop.permute.xlu0 %4748
      %4750 = vrot.lane.b32.xlu0 %v4222, 122
      %v4751 = vpop.permute.xlu0 %4750
      %4752 = vrot.lane.b32.xlu0 %v4225, 122
      %v4753 = vpop.permute.xlu0 %4752
      %4754 = vrot.lane.b32.xlu0 %v4227, 122
      %v4755 = vpop.permute.xlu0 %4754
      %4756 = vrot.lane.b32.xlu0 %v4230, 122
      %v4757 = vpop.permute.xlu0 %4756
      %4758 = vrot.lane.b32.xlu0 %v4232, 122
      %v4759 = vpop.permute.xlu0 %4758
      %4760 = vrot.lane.b32.xlu0 %v4235, 122
      %v4761 = vpop.permute.xlu0 %4760
      %4762 = vrot.lane.b32.xlu0 %v4237, 122
      %v4763 = vpop.permute.xlu0 %4762
      %4764 = vrot.lane.b32.xlu0 %v4240, 122
      %v4765 = vpop.permute.xlu0 %4764
      %4766 = vrot.lane.b32.xlu0 %v4242, 122
      %v4767 = vpop.permute.xlu0 %4766
      %4768 = vrot.lane.b32.xlu0 %v4245, 122
      %v4769 = vpop.permute.xlu0 %4768
      %4770 = vrot.lane.b32.xlu0 %v4247, 122
      %v4771 = vpop.permute.xlu0 %4770
      %4772 = vrot.lane.b32.xlu0 %v4250, 122
      %v4773 = vpop.permute.xlu0 %4772
      %4774 = vrot.lane.b32.xlu0 %v4252, 122
      %v4775 = vpop.permute.xlu0 %4774
      %4776 = vrot.lane.b32.xlu0 %v4255, 122
      %v4777 = vpop.permute.xlu0 %4776
      %4778 = vrot.lane.b32.xlu0 %v4257, 122
      %v4779 = vpop.permute.xlu0 %4778
      %4780 = vrot.lane.b32.xlu0 %v4260, 122
      %v4781 = vpop.permute.xlu0 %4780
      %4782 = vrot.lane.b32.xlu0 %v4262, 122
      %v4783 = vpop.permute.xlu0 %4782
      %4784 = vrot.lane.b32.xlu0 %v4265, 122
      %v4785 = vpop.permute.xlu0 %4784
      %4786 = vrot.lane.b32.xlu0 %v4267, 122
      %v4787 = vpop.permute.xlu0 %4786
      %4788 = vrot.lane.b32.xlu0 %v4270, 122
      %v4789 = vpop.permute.xlu0 %4788
      %4790 = vrot.lane.b32.xlu0 %v4272, 122
      %v4791 = vpop.permute.xlu0 %4790
      %4792 = vrot.lane.b32.xlu0 %v4275, 122
      %v4793 = vpop.permute.xlu0 %4792
      %4794 = vrot.lane.b32.xlu0 %v4277, 122
      %v4795 = vpop.permute.xlu0 %4794
      %4796 = vrot.lane.b32.xlu0 %v4280, 122
      %v4797 = vpop.permute.xlu0 %4796
      %4798 = vrot.lane.b32.xlu0 %v4282, 122
      %v4799 = vpop.permute.xlu0 %4798
      %4800 = vrot.lane.b32.xlu0 %v4285, 122
      %v4801 = vpop.permute.xlu0 %4800
      %4802 = vrot.lane.b32.xlu0 %v4287, 122
      %v4803 = vpop.permute.xlu0 %4802
      %4804 = vrot.lane.b32.xlu0 %v4290, 122
      %v4805 = vpop.permute.xlu0 %4804
      %4806 = vrot.lane.b32.xlu0 %v4292, 122
      %v4807 = vpop.permute.xlu0 %4806
      %4808 = vrot.lane.b32.xlu0 %v4295, 122
      %v4809 = vpop.permute.xlu0 %4808
      %4810 = vrot.lane.b32.xlu0 %v4297, 122
      %v4811 = vpop.permute.xlu0 %4810
      %s4940 = scalar_lea.vmem %s383, 32
      %4941 = vst.msk [vmem:[%s4940] sm:$0xff] %vm4299, %v4557
      %4942 = vst.msk [vmem:[%s4940 + $0x8] sm:$0xff] %vm4299, %v4559
      %4943 = vst.msk [vmem:[%s4940 + $0x10] sm:$0xff] %vm4299, %v4561
      %4944 = vst.msk [vmem:[%s4940 + $0x18] sm:$0xff] %vm4299, %v4563
      %4945 = vst.msk [vmem:[%s4940 + $0x40] sm:$0xff] %vm4299, %v4565
      %4946 = vst.msk [vmem:[%s4940 + $0x48] sm:$0xff] %vm4299, %v4567
      %4947 = vst.msk [vmem:[%s4940 + $0x50] sm:$0xff] %vm4299, %v4569
      %4948 = vst.msk [vmem:[%s4940 + $0x58] sm:$0xff] %vm4299, %v4571
      %4949 = vst.msk [vmem:[%s4940 + $0x80] sm:$0xff] %vm4299, %v4573
      %4950 = vst.msk [vmem:[%s4940 + $0x88] sm:$0xff] %vm4299, %v4575
      %4951 = vst.msk [vmem:[%s4940 + $0x90] sm:$0xff] %vm4299, %v4577
      %4952 = vst.msk [vmem:[%s4940 + $0x98] sm:$0xff] %vm4299, %v4579
      %4953 = vst.msk [vmem:[%s4940 + $0xc0] sm:$0xff] %vm4299, %v4581
      %4954 = vst.msk [vmem:[%s4940 + $0xc8] sm:$0xff] %vm4299, %v4583
      %4955 = vst.msk [vmem:[%s4940 + $0xd0] sm:$0xff] %vm4299, %v4585
      %4956 = vst.msk [vmem:[%s4940 + $0xd8] sm:$0xff] %vm4299, %v4587
      %4957 = vst.msk [vmem:[%s4940 + $0x100] sm:$0xff] %vm4299, %v4589
      %4958 = vst.msk [vmem:[%s4940 + $0x108] sm:$0xff] %vm4299, %v4591
      %4959 = vst.msk [vmem:[%s4940 + $0x110] sm:$0xff] %vm4299, %v4593
      %4960 = vst.msk [vmem:[%s4940 + $0x118] sm:$0xff] %vm4299, %v4595
      %4961 = vst.msk [vmem:[%s4940 + $0x140] sm:$0xff] %vm4299, %v4597
      %4962 = vst.msk [vmem:[%s4940 + $0x148] sm:$0xff] %vm4299, %v4599
      %4963 = vst.msk [vmem:[%s4940 + $0x150] sm:$0xff] %vm4299, %v4601
      %4964 = vst.msk [vmem:[%s4940 + $0x158] sm:$0xff] %vm4299, %v4603
      %4965 = vst.msk [vmem:[%s4940 + $0x180] sm:$0xff] %vm4299, %v4605
      %4966 = vst.msk [vmem:[%s4940 + $0x188] sm:$0xff] %vm4299, %v4607
      %4967 = vst.msk [vmem:[%s4940 + $0x190] sm:$0xff] %vm4299, %v4609
      %4968 = vst.msk [vmem:[%s4940 + $0x198] sm:$0xff] %vm4299, %v4611
      %4969 = vst.msk [vmem:[%s4940 + $0x1c0] sm:$0xff] %vm4299, %v4613
      %4970 = vst.msk [vmem:[%s4940 + $0x1c8] sm:$0xff] %vm4299, %v4615
      %4971 = vst.msk [vmem:[%s4940 + $0x1d0] sm:$0xff] %vm4299, %v4617
      %4972 = vst.msk [vmem:[%s4940 + $0x1d8] sm:$0xff] %vm4299, %v4619
      %4973 = vst.msk [vmem:[%s4940 + $0x200] sm:$0xff] %vm4299, %v4621
      %4974 = vst.msk [vmem:[%s4940 + $0x208] sm:$0xff] %vm4299, %v4623
      %4975 = vst.msk [vmem:[%s4940 + $0x210] sm:$0xff] %vm4299, %v4625
      %4976 = vst.msk [vmem:[%s4940 + $0x218] sm:$0xff] %vm4299, %v4627
      %4977 = vst.msk [vmem:[%s4940 + $0x240] sm:$0xff] %vm4299, %v4629
      %4978 = vst.msk [vmem:[%s4940 + $0x248] sm:$0xff] %vm4299, %v4631
      %4979 = vst.msk [vmem:[%s4940 + $0x250] sm:$0xff] %vm4299, %v4633
      %4980 = vst.msk [vmem:[%s4940 + $0x258] sm:$0xff] %vm4299, %v4635
      %4981 = vst.msk [vmem:[%s4940 + $0x280] sm:$0xff] %vm4299, %v4637
      %4982 = vst.msk [vmem:[%s4940 + $0x288] sm:$0xff] %vm4299, %v4639
      %4983 = vst.msk [vmem:[%s4940 + $0x290] sm:$0xff] %vm4299, %v4641
      %4984 = vst.msk [vmem:[%s4940 + $0x298] sm:$0xff] %vm4299, %v4643
      %4985 = vst.msk [vmem:[%s4940 + $0x2c0] sm:$0xff] %vm4299, %v4645
      %4986 = vst.msk [vmem:[%s4940 + $0x2c8] sm:$0xff] %vm4299, %v4647
      %4987 = vst.msk [vmem:[%s4940 + $0x2d0] sm:$0xff] %vm4299, %v4649
      %4988 = vst.msk [vmem:[%s4940 + $0x2d8] sm:$0xff] %vm4299, %v4651
      %4989 = vst.msk [vmem:[%s4940 + $0x300] sm:$0xff] %vm4299, %v4653
      %4990 = vst.msk [vmem:[%s4940 + $0x308] sm:$0xff] %vm4299, %v4655
      %4991 = vst.msk [vmem:[%s4940 + $0x310] sm:$0xff] %vm4299, %v4657
      %4992 = vst.msk [vmem:[%s4940 + $0x318] sm:$0xff] %vm4299, %v4659
      %4993 = vst.msk [vmem:[%s4940 + $0x340] sm:$0xff] %vm4299, %v4661
      %4994 = vst.msk [vmem:[%s4940 + $0x348] sm:$0xff] %vm4299, %v4663
      %4995 = vst.msk [vmem:[%s4940 + $0x350] sm:$0xff] %vm4299, %v4665
      %4996 = vst.msk [vmem:[%s4940 + $0x358] sm:$0xff] %vm4299, %v4667
      %4997 = vst.msk [vmem:[%s4940 + $0x380] sm:$0xff] %vm4299, %v4669
      %4998 = vst.msk [vmem:[%s4940 + $0x388] sm:$0xff] %vm4299, %v4671
      %4999 = vst.msk [vmem:[%s4940 + $0x390] sm:$0xff] %vm4299, %v4673
      %5000 = vst.msk [vmem:[%s4940 + $0x398] sm:$0xff] %vm4299, %v4675
      %5001 = vst.msk [vmem:[%s4940 + $0x3c0] sm:$0xff] %vm4299, %v4677
      %5002 = vst.msk [vmem:[%s4940 + $0x3c8] sm:$0xff] %vm4299, %v4679
      %5003 = vst.msk [vmem:[%s4940 + $0x3d0] sm:$0xff] %vm4299, %v4681
      %5004 = vst.msk [vmem:[%s4940 + $0x3d8] sm:$0xff] %vm4299, %v4683
      %5005 = vst.msk [vmem:[%s4940 + $0x400] sm:$0xff] %vm4299, %v4685
      %5006 = vst.msk [vmem:[%s4940 + $0x408] sm:$0xff] %vm4299, %v4687
      %5007 = vst.msk [vmem:[%s4940 + $0x410] sm:$0xff] %vm4299, %v4689
      %5008 = vst.msk [vmem:[%s4940 + $0x418] sm:$0xff] %vm4299, %v4691
      %5009 = vst.msk [vmem:[%s4940 + $0x440] sm:$0xff] %vm4299, %v4693
      %5010 = vst.msk [vmem:[%s4940 + $0x448] sm:$0xff] %vm4299, %v4695
      %5011 = vst.msk [vmem:[%s4940 + $0x450] sm:$0xff] %vm4299, %v4697
      %5012 = vst.msk [vmem:[%s4940 + $0x458] sm:$0xff] %vm4299, %v4699
      %5013 = vst.msk [vmem:[%s4940 + $0x480] sm:$0xff] %vm4299, %v4701
      %5014 = vst.msk [vmem:[%s4940 + $0x488] sm:$0xff] %vm4299, %v4703
      %5015 = vst.msk [vmem:[%s4940 + $0x490] sm:$0xff] %vm4299, %v4705
      %5016 = vst.msk [vmem:[%s4940 + $0x498] sm:$0xff] %vm4299, %v4707
      %5017 = vst.msk [vmem:[%s4940 + $0x4c0] sm:$0xff] %vm4299, %v4709
      %5018 = vst.msk [vmem:[%s4940 + $0x4c8] sm:$0xff] %vm4299, %v4711
      %5019 = vst.msk [vmem:[%s4940 + $0x4d0] sm:$0xff] %vm4299, %v4713
      %5020 = vst.msk [vmem:[%s4940 + $0x4d8] sm:$0xff] %vm4299, %v4715
      %5021 = vst.msk [vmem:[%s4940 + $0x500] sm:$0xff] %vm4299, %v4717
      %5022 = vst.msk [vmem:[%s4940 + $0x508] sm:$0xff] %vm4299, %v4719
      %5023 = vst.msk [vmem:[%s4940 + $0x510] sm:$0xff] %vm4299, %v4721
      %5024 = vst.msk [vmem:[%s4940 + $0x518] sm:$0xff] %vm4299, %v4723
      %5025 = vst.msk [vmem:[%s4940 + $0x540] sm:$0xff] %vm4299, %v4725
      %5026 = vst.msk [vmem:[%s4940 + $0x548] sm:$0xff] %vm4299, %v4727
      %5027 = vst.msk [vmem:[%s4940 + $0x550] sm:$0xff] %vm4299, %v4729
      %5028 = vst.msk [vmem:[%s4940 + $0x558] sm:$0xff] %vm4299, %v4731
      %5029 = vst.msk [vmem:[%s4940 + $0x580] sm:$0xff] %vm4299, %v4733
      %5030 = vst.msk [vmem:[%s4940 + $0x588] sm:$0xff] %vm4299, %v4735
      %5031 = vst.msk [vmem:[%s4940 + $0x590] sm:$0xff] %vm4299, %v4737
      %5032 = vst.msk [vmem:[%s4940 + $0x598] sm:$0xff] %vm4299, %v4739
      %5033 = vst.msk [vmem:[%s4940 + $0x5c0] sm:$0xff] %vm4299, %v4741
      %5034 = vst.msk [vmem:[%s4940 + $0x5c8] sm:$0xff] %vm4299, %v4743
      %5035 = vst.msk [vmem:[%s4940 + $0x5d0] sm:$0xff] %vm4299, %v4745
      %5036 = vst.msk [vmem:[%s4940 + $0x5d8] sm:$0xff] %vm4299, %v4747
      %5037 = vst.msk [vmem:[%s4940 + $0x600] sm:$0xff] %vm4299, %v4749
      %5038 = vst.msk [vmem:[%s4940 + $0x608] sm:$0xff] %vm4299, %v4751
      %5039 = vst.msk [vmem:[%s4940 + $0x610] sm:$0xff] %vm4299, %v4753
      %5040 = vst.msk [vmem:[%s4940 + $0x618] sm:$0xff] %vm4299, %v4755
      %5041 = vst.msk [vmem:[%s4940 + $0x640] sm:$0xff] %vm4299, %v4757
      %5042 = vst.msk [vmem:[%s4940 + $0x648] sm:$0xff] %vm4299, %v4759
      %5043 = vst.msk [vmem:[%s4940 + $0x650] sm:$0xff] %vm4299, %v4761
      %5044 = vst.msk [vmem:[%s4940 + $0x658] sm:$0xff] %vm4299, %v4763
      %5045 = vst.msk [vmem:[%s4940 + $0x680] sm:$0xff] %vm4299, %v4765
      %5046 = vst.msk [vmem:[%s4940 + $0x688] sm:$0xff] %vm4299, %v4767
      %5047 = vst.msk [vmem:[%s4940 + $0x690] sm:$0xff] %vm4299, %v4769
      %5048 = vst.msk [vmem:[%s4940 + $0x698] sm:$0xff] %vm4299, %v4771
      %5049 = vst.msk [vmem:[%s4940 + $0x6c0] sm:$0xff] %vm4299, %v4773
      %5050 = vst.msk [vmem:[%s4940 + $0x6c8] sm:$0xff] %vm4299, %v4775
      %5051 = vst.msk [vmem:[%s4940 + $0x6d0] sm:$0xff] %vm4299, %v4777
      %5052 = vst.msk [vmem:[%s4940 + $0x6d8] sm:$0xff] %vm4299, %v4779
      %5053 = vst.msk [vmem:[%s4940 + $0x700] sm:$0xff] %vm4299, %v4781
      %5054 = vst.msk [vmem:[%s4940 + $0x708] sm:$0xff] %vm4299, %v4783
      %5055 = vst.msk [vmem:[%s4940 + $0x710] sm:$0xff] %vm4299, %v4785
      %5056 = vst.msk [vmem:[%s4940 + $0x718] sm:$0xff] %vm4299, %v4787
      %5057 = vst.msk [vmem:[%s4940 + $0x740] sm:$0xff] %vm4299, %v4789
      %5058 = vst.msk [vmem:[%s4940 + $0x748] sm:$0xff] %vm4299, %v4791
      %5059 = vst.msk [vmem:[%s4940 + $0x750] sm:$0xff] %vm4299, %v4793
      %5060 = vst.msk [vmem:[%s4940 + $0x758] sm:$0xff] %vm4299, %v4795
      %5061 = vst.msk [vmem:[%s4940 + $0x780] sm:$0xff] %vm4299, %v4797
      %5062 = vst.msk [vmem:[%s4940 + $0x788] sm:$0xff] %vm4299, %v4799
      %5063 = vst.msk [vmem:[%s4940 + $0x790] sm:$0xff] %vm4299, %v4801
      %5064 = vst.msk [vmem:[%s4940 + $0x798] sm:$0xff] %vm4299, %v4803
      %5065 = vst.msk [vmem:[%s4940 + $0x7c0] sm:$0xff] %vm4299, %v4805
      %5066 = vst.msk [vmem:[%s4940 + $0x7c8] sm:$0xff] %vm4299, %v4807
      %5067 = vst.msk [vmem:[%s4940 + $0x7d0] sm:$0xff] %vm4299, %v4809
      %5068 = vst.msk [vmem:[%s4940 + $0x7d8] sm:$0xff] %vm4299, %v4811
      %s5069 = smul.u32 32, %s23
      %p5070 = scmp.lt.s32.totalorder %s22, 1
      %s5071 = scalar_select %p5070, %s22, 1
      %p5072 = scmp.lt.s32.totalorder %s5069, 31
      %s5073 = scalar_select %p5072, %s5069, 31
      %s5074 = smul.addr %s5073, 8
      %s5075 = smul.addr %s5071, 256
      %s5076 = sadd.s32 %s5074, %s5075
      %s5077 = smul.addr %s5076, 8
      %s5078 = scalar_lea.vmem %s7, %s5077
      // Predicated region
      $region49: #{unet_decoder_forward.7} parent=47 // pred_check
        %p5079 = pneg %p219
      $region50: #{unet_decoder_forward.7} parent=47 // pred_check_branch
        %5081 = sbr.rel (%p5079) target = $region52
      $region51: #{unet_decoder_forward.7} parent=47 // pred_region
        %s5082 = smul.u32 32, %s23
      $region52: #{unet_decoder_forward.7} parent=47 // pred_fallthru
        _
    $region48: #{unet_decoder_forward.7} parent=5 // pred_fallthru
      _
    %p5083 = scmp.le.s32.totalorder 2, %s13
    // Predicated region
    $region53: #{unet_decoder_forward.7} parent=5 // pred_check
      %p5084 = pneg %p5083
    $region54: #{unet_decoder_forward.7} parent=5 // pred_check_branch
      %5086 = sbr.rel (%p5084) target = $region56
    $region55: #{unet_decoder_forward.7} parent=5 // pred_region
      %s5087 = ssub.s32 %s13, 2
      // Predicated region
      $region57: #{unet_decoder_forward.7} parent=55 // pred_check
        %p5088 = pneg %p225
      $region58: #{unet_decoder_forward.7} parent=55 // pred_check_branch
        %5090 = sbr.rel (%p5088) target = $region60
      $region59: #{unet_decoder_forward.7} parent=55 // pred_region
        %s5091 = smul.u32 32, %s25
        %p5092 = scmp.lt.s32.totalorder %s24, 1
        %s5093 = scalar_select %p5092, %s24, 1
        %p5094 = scmp.lt.s32.totalorder %s5091, 31
        %s5095 = scalar_select %p5094, %s5091, 31
        %s5096 = smul.addr %s5095, 8
        %s5097 = smul.addr %s5093, 256
        %s5098 = sadd.s32 %s5096, %s5097
        %s5099 = smul.addr %s5098, 8
        %s5100 = scalar_lea.vmem %s7, %s5099
      $region60: #{unet_decoder_forward.7} parent=55 // pred_fallthru
        _
    $region56: #{unet_decoder_forward.7} parent=5 // pred_fallthru
      _
  $region6: #{unet_decoder_forward.7} parent=0 // loop_footer
    %s17 = sadd.s32 1, %s13
  $region7: #{unet_decoder_forward.7} parent=0 // loop_footer_branch
    %12 = sbr.rel target = $region3
  $region8: #{unet_decoder_forward.7} parent=0 // loop_exit
    _

</llo_original>
